<compile_context>
chip_gen: v7x
topology: tpu7x:2x2x1
jax: 0.10.0
libtpu: 0.0.40
codegen_flags: <defaults>
</compile_context>

<pallas_src>
import jax
import jax.numpy as jnp
from jax.experimental import pallas as pl
from jax.experimental.pallas import tpu as pltpu


def _round_up(x, m):
    return (x + m - 1) // m * m


# ----------------------------------------------------------------------------
# Pallas kernels
# ----------------------------------------------------------------------------
def _conv_pool_kernel(a_ref, w_ref, b_ref, o_ref):
    """o = relu(max_p(a[p] @ w) + b)   (max over pooling taps, then bias+ReLU).

    a: (P, tm, K) bf16   -- P = 4 pooling taps (or 1: plain conv, no pool)
    w: (K, N)     bf16   -- N is a multiple of 128 (lane dense)
    b: (1, N)     f32
    o: (tm, N)           -- bf16 activation for the next layer
    """
    w = w_ref[...]
    acc = jnp.dot(a_ref[0], w, preferred_element_type=jnp.float32)
    for p in range(1, a_ref.shape[0]):        # static unroll over pool taps
        acc = jnp.maximum(
            acc, jnp.dot(a_ref[p], w, preferred_element_type=jnp.float32))
    o_ref[...] = jnp.maximum(acc + b_ref[...], 0.0).astype(o_ref.dtype)


def _mlp_kernel(x_ref, w4_ref, b4_ref, w5_ref, b5_ref, o_ref):
    """Fused Linear+ReLU -> Linear+ReLU.  Dropout = identity (eval mode)."""
    h = jnp.dot(x_ref[...], w4_ref[...], preferred_element_type=jnp.float32)
    h = jnp.maximum(h + b4_ref[...], 0.0)
    y = jnp.dot(h.astype(w5_ref.dtype), w5_ref[...],
                preferred_element_type=jnp.float32)
    o_ref[...] = jnp.maximum(y + b5_ref[...], 0.0).astype(o_ref.dtype)


# ----------------------------------------------------------------------------
# Pallas wrappers
# ----------------------------------------------------------------------------
def _fused_matmul_pool(a, w, b, out_dtype=jnp.bfloat16):
    """relu(max over leading axis of (a[p] @ w) + b).

    a: (P, M, K); w: (K, N) with N % 128 == 0; b: (N,) f32.
    Returns (M, N) in out_dtype.
    """
    P, M, K = a.shape
    N = w.shape[1]

    # Lane-dense contraction dim (zero padding is exact).
    Kp = _round_up(K, 128)
    if Kp != K:
        a = jnp.pad(a, ((0, 0), (0, 0), (0, Kp - K)))
        w = jnp.pad(w, ((0, Kp - K), (0, 0)))

    # M tiling: single block for small M, aligned 256-row tiles otherwise
    # (bounded VMEM instead of one huge fallback block).
    if M > 256:
        tm = 256
        Mp = _round_up(M, tm)
    else:
        tm = M
        Mp = M
    if Mp != M:
        a = jnp.pad(a, ((0, 0), (0, Mp - M), (0, 0)))

    a = a.astype(jnp.bfloat16)
    w = w.astype(jnp.bfloat16)
    b = b.reshape(1, N).astype(jnp.float32)

    out = pl.pallas_call(
        _conv_pool_kernel,
        out_shape=jax.ShapeDtypeStruct((Mp, N), out_dtype),
        grid=(Mp // tm,),
        in_specs=[
            pl.BlockSpec((P, tm, Kp), lambda i: (0, i, 0)),
            pl.BlockSpec((Kp, N), lambda i: (0, 0)),
            pl.BlockSpec((1, N), lambda i: (0, 0)),
        ],
        out_specs=pl.BlockSpec((tm, N), lambda i: (i, 0)),
        compiler_params=pltpu.CompilerParams(
            dimension_semantics=("parallel",)),
    )(a, w, b)
    return out[:M] if Mp != M else out


def conv_relu_pool(x, w, b, k, pad, pool):
    """Conv2d(kxk, padding=pad) + ReLU (+ optional 2x2 MaxPool), NHWC.

    x: (B, H, W, Cin_act) with Cin_act >= w.shape[1]; extra channels are zero.
    w: PyTorch layout (Cout, Cin, kH, kW);  b: (Cout,).
    Returns (B, Ho, Wo, Cout_pad) bf16 with Cout padded up to a 128 multiple.
    """
    B, H, W, C = x.shape
    Cout, Cin_w = w.shape[0], w.shape[1]
    Np = _round_up(Cout, 128)

    # (Cout, Cin, kH, kW) -> (kH, kW, Cin, Cout); zero-pad input channels up to
    # the (padded) activation channel count and Cout up to Np.
    wt = jnp.transpose(w, (2, 3, 1, 0))
    wt = jnp.pad(wt, ((0, 0), (0, 0), (0, C - Cin_w), (0, Np - Cout)))
    wm = wt.reshape(k * k * C, Np)
    bm = jnp.pad(b, (0, Np - Cout))

    # im2col patches in (ki, kj, cin) order -- matches the wm row order.
    xp = jnp.pad(x, ((0, 0), (pad, pad), (pad, pad), (0, 0)))
    taps = [xp[:, di:di + H, dj:dj + W, :] for di in range(k) for dj in range(k)]
    pat = jnp.stack(taps, axis=3).reshape(B, H, W, k * k * C)

    if pool:
        Ho, Wo = H // 2, W // 2
        # Group the 4 pooling taps onto a leading axis: (4, B*Ho*Wo, K).
        pat = pat.reshape(B, Ho, 2, Wo, 2, k * k * C)
        pat = jnp.transpose(pat, (2, 4, 0, 1, 3, 5))
        pat = pat.reshape(4, B * Ho * Wo, k * k * C)
    else:
        Ho, Wo = H, W
        pat = pat.reshape(1, B * H * W, k * k * C)

    out = _fused_matmul_pool(pat, wm, bm)
    return out.reshape(B, Ho, Wo, Np)


def mlp_fused(x_flat, w4, b4, w5, b5, H, W, Cp, C_real):
    """relu(relu(x @ W4.T + b4) @ W5.T + b5); dropout is identity (eval).

    x_flat: (B, H*W*Cp) bf16 -- NHWC-flattened conv3 output, channels padded to
            Cp (pad channels are exactly zero).
    w4: (fc4, C_real*H*W) in PyTorch NCHW-flatten column order.
    """
    B = x_flat.shape[0]
    fc4, fc5 = w4.shape[0], w5.shape[0]
    fc4p, fc5p = _round_up(fc4, 128), _round_up(fc5, 128)

    # Reorder W4 columns from NCHW-flatten order to the NHWC / padded-channel
    # order of x_flat; zero-pad the padded channels and padded hidden units.
    w4r = w4.reshape(fc4, C_real, H, W)
    w4r = jnp.transpose(w4r, (2, 3, 1, 0))                    # (H, W, C, fc4)
    w4r = jnp.pad(w4r, ((0, 0), (0, 0), (0, Cp - C_real), (0, fc4p - fc4)))
    w4m = w4r.reshape(H * W * Cp, fc4p).astype(jnp.bfloat16)
    b4m = jnp.pad(b4, (0, fc4p - fc4)).reshape(1, fc4p).astype(jnp.float32)

    w5m = jnp.pad(jnp.transpose(w5), ((0, fc4p - fc4), (0, fc5p - fc5)))
    w5m = w5m.astype(jnp.bfloat16)
    b5m = jnp.pad(b5, (0, fc5p - fc5)).reshape(1, fc5p).astype(jnp.float32)

    Mb = _round_up(B, 8)
    xb = jnp.pad(x_flat, ((0, Mb - B), (0, 0))).astype(jnp.bfloat16)

    out = pl.pallas_call(
        _mlp_kernel,
        out_shape=jax.ShapeDtypeStruct((Mb, fc5p), jnp.float32),
    )(xb, w4m, b4m, w5m, b5m)
    return out[:B, :fc5]


# ----------------------------------------------------------------------------
# Encoder forward
# ----------------------------------------------------------------------------
def encoder_forward(x_nchw, params):
    x = jnp.transpose(x_nchw, (0, 2, 3, 1)).astype(jnp.bfloat16)  # NCHW -> NHWC
    x = conv_relu_pool(x, params["w1"], params["b1"], k=5, pad=2, pool=True)
    x = conv_relu_pool(x, params["w2"], params["b2"], k=5, pad=2, pool=True)
    x = conv_relu_pool(x, params["w3"], params["b3"], k=3, pad=1, pool=False)
    B, H, W, Cp = x.shape
    # NHWC flatten; the FC4 weight columns are permuted/padded so this matches
    # PyTorch's NCHW x.view(bs, -1) semantics exactly.
    x_flat = x.reshape(B, H * W * Cp)
    # TODO(synk): nn.Dropout (training-mode stochastic masking) implemented as
    # identity (eval-mode semantics).
    return mlp_fused(x_flat, params["w4"], params["b4"],
                     params["w5"], params["b5"],
                     H=H, W=W, Cp=Cp, C_real=params["w3"].shape[0])


def init_params(key, img_size, in_channels, fc4, fc5):
    ks = jax.random.split(key, 10)
    flat = (img_size // 4) ** 2 * 200

    def w(k, shape, fan_in):
        return jax.random.normal(k, shape, jnp.float32) * (1.0 / jnp.sqrt(fan_in))

    return {
        "w1": w(ks[0], (100, in_channels, 5, 5), in_channels * 25),
        "b1": w(ks[1], (100,), in_channels * 25),
        "w2": w(ks[2], (150, 100, 5, 5), 100 * 25),
        "b2": w(ks[3], (150,), 100 * 25),
        "w3": w(ks[4], (200, 150, 3, 3), 150 * 9),
        "b3": w(ks[5], (200,), 150 * 9),
        "w4": w(ks[6], (fc4, flat), flat),
        "b4": w(ks[7], (fc4,), flat),
        "w5": w(ks[8], (fc5, fc4), fc4),
        "b5": w(ks[9], (fc5,), fc4),
    }


if __name__ == "__main__":
    img_size, in_channels, fc4, fc5, batch = 16, 4, 32, 16, 2

    key = jax.random.PRNGKey(0)
    kx, kp = jax.random.split(key)
    x = jax.random.normal(kx, (batch, in_channels, img_size, img_size), jnp.float32)
    params = init_params(kp, img_size, in_channels, fc4, fc5)

    fwd = jax.jit(encoder_forward)
    out = jax.block_until_ready(fwd(x, params))
    assert out.shape == (batch, fc5), out.shape
    assert bool(jnp.all(jnp.isfinite(out)))
    print("KERNEL_OK")
</pallas_src>

<mosaic_0001>
module attributes {stable_mosaic.version = 11 : i64} {
  func.func @_conv_pool_kernel(%arg0: i32, %arg1: memref<4x128x128xbf16, #tpu.memory_space<vmem>>, %arg2: memref<128x128xbf16, #tpu.memory_space<vmem>>, %arg3: memref<1x128xf32, #tpu.memory_space<vmem>>, %arg4: memref<128x128xbf16, #tpu.memory_space<vmem>>) attributes {dimension_semantics = [#tpu.dimension_semantics<parallel>], iteration_bounds = array<i64: 1>, scalar_prefetch = 0 : i64, scratch_operands = 0 : i64, tpu.core_type = #tpu.core_type<tc>, window_params = [{transform_indices = @transform_0, window_bounds = array<i64: 4, 128, 128>}, {pipeline_mode = #tpu.pipeline_mode<synchronous>, transform_indices = @transform_1, window_bounds = array<i64: 128, 128>}, {pipeline_mode = #tpu.pipeline_mode<synchronous>, transform_indices = @transform_2, window_bounds = array<i64: 1, 128>}, {transform_indices = @transform_3, window_bounds = array<i64: 128, 128>}]} {
    %c0 = arith.constant 0 : index
    %c0_0 = arith.constant 0 : index
    %0 = vector.load %arg2[%c0, %c0_0] : memref<128x128xbf16, #tpu.memory_space<vmem>>, vector<128x128xbf16>
    %c0_1 = arith.constant 0 : index
    %c0_2 = arith.constant 0 : index
    %c0_3 = arith.constant 0 : index
    %1 = vector.load %arg1[%c0_1, %c0_2, %c0_3] : memref<4x128x128xbf16, #tpu.memory_space<vmem>>, vector<1x128x128xbf16>
    %2 = vector.shape_cast %1 : vector<1x128x128xbf16> to vector<128x128xbf16>
    %cst = arith.constant dense<0.000000e+00> : vector<128x128xf32>
    %3 = tpu.matmul %2, %0, %cst {dimension_numbers = #tpu.dot_dimension_numbers<[1], [0], [0], [1], [0, 0, 1, 1], [], []>} : vector<128x128xbf16>, vector<128x128xbf16>, vector<128x128xf32> -> vector<128x128xf32>
    %c1 = arith.constant 1 : index
    %c0_4 = arith.constant 0 : index
    %c0_5 = arith.constant 0 : index
    %4 = vector.load %arg1[%c1, %c0_4, %c0_5] : memref<4x128x128xbf16, #tpu.memory_space<vmem>>, vector<1x128x128xbf16>
    %5 = vector.shape_cast %4 : vector<1x128x128xbf16> to vector<128x128xbf16>
    %cst_6 = arith.constant dense<0.000000e+00> : vector<128x128xf32>
    %6 = tpu.matmul %5, %0, %cst_6 {dimension_numbers = #tpu.dot_dimension_numbers<[1], [0], [0], [1], [0, 0, 1, 1], [], []>} : vector<128x128xbf16>, vector<128x128xbf16>, vector<128x128xf32> -> vector<128x128xf32>
    %7 = arith.maximumf %3, %6 : vector<128x128xf32>
    %c2 = arith.constant 2 : index
    %c0_7 = arith.constant 0 : index
    %c0_8 = arith.constant 0 : index
    %8 = vector.load %arg1[%c2, %c0_7, %c0_8] : memref<4x128x128xbf16, #tpu.memory_space<vmem>>, vector<1x128x128xbf16>
    %9 = vector.shape_cast %8 : vector<1x128x128xbf16> to vector<128x128xbf16>
    %cst_9 = arith.constant dense<0.000000e+00> : vector<128x128xf32>
    %10 = tpu.matmul %9, %0, %cst_9 {dimension_numbers = #tpu.dot_dimension_numbers<[1], [0], [0], [1], [0, 0, 1, 1], [], []>} : vector<128x128xbf16>, vector<128x128xbf16>, vector<128x128xf32> -> vector<128x128xf32>
    %11 = arith.maximumf %7, %10 : vector<128x128xf32>
    %c3 = arith.constant 3 : index
    %c0_10 = arith.constant 0 : index
    %c0_11 = arith.constant 0 : index
    %12 = vector.load %arg1[%c3, %c0_10, %c0_11] : memref<4x128x128xbf16, #tpu.memory_space<vmem>>, vector<1x128x128xbf16>
    %13 = vector.shape_cast %12 : vector<1x128x128xbf16> to vector<128x128xbf16>
    %cst_12 = arith.constant dense<0.000000e+00> : vector<128x128xf32>
    %14 = tpu.matmul %13, %0, %cst_12 {dimension_numbers = #tpu.dot_dimension_numbers<[1], [0], [0], [1], [0, 0, 1, 1], [], []>} : vector<128x128xbf16>, vector<128x128xbf16>, vector<128x128xf32> -> vector<128x128xf32>
    %15 = arith.maximumf %11, %14 : vector<128x128xf32>
    %c0_13 = arith.constant 0 : index
    %c0_14 = arith.constant 0 : index
    %16 = vector.load %arg3[%c0_13, %c0_14] : memref<1x128xf32, #tpu.memory_space<vmem>>, vector<1x128xf32>
    %17 = vector.broadcast %16 : vector<1x128xf32> to vector<128x128xf32>
    %18 = arith.addf %15, %17 : vector<128x128xf32>
    %cst_15 = arith.constant 0.000000e+00 : f32
    %19 = vector.broadcast %cst_15 : f32 to vector<128x128xf32>
    %20 = arith.maximumf %18, %19 : vector<128x128xf32>
    %21 = arith.truncf %20 : vector<128x128xf32> to vector<128x128xbf16>
    %c0_16 = arith.constant 0 : index
    %c0_17 = arith.constant 0 : index
    %22 = vector.load %arg4[%c0_16, %c0_17] : memref<128x128xbf16, #tpu.memory_space<vmem>>, vector<128x128xbf16>
    tpu.vector_store %arg4[%c0_16, %c0_17], %21 {strides = array<i32>} : memref<128x128xbf16, #tpu.memory_space<vmem>>, vector<128x128xbf16>,
    return
  }
  func.func @transform_0(%arg0: i32) -> (i32, i32, i32) {
    %c0_i32 = arith.constant 0 : i32
    %c0_i32_0 = arith.constant 0 : i32
    %c0_i32_1 = arith.constant 0 : i32
    return %c0_i32, %arg0, %c0_i32_0 : i32, i32, i32
  }
  func.func @transform_1(%arg0: i32) -> (i32, i32) {
    %c0_i32 = arith.constant 0 : i32
    %c0_i32_0 = arith.constant 0 : i32
    %c0_i32_1 = arith.constant 0 : i32
    return %c0_i32, %c0_i32_0 : i32, i32
  }
  func.func @transform_2(%arg0: i32) -> (i32, i32) {
    %c0_i32 = arith.constant 0 : i32
    %c0_i32_0 = arith.constant 0 : i32
    %c0_i32_1 = arith.constant 0 : i32
    return %c0_i32, %c0_i32_0 : i32, i32
  }
  func.func @transform_3(%arg0: i32) -> (i32, i32) {
    %c0_i32 = arith.constant 0 : i32
    %c0_i32_0 = arith.constant 0 : i32
    return %arg0, %c0_i32 : i32, i32
  }
}

module attributes {stable_mosaic.version = 11 : i64} {
  func.func @_conv_pool_kernel(%arg0: i32, %arg1: memref<4x32x3200xbf16, #tpu.memory_space<vmem>>, %arg2: memref<3200x256xbf16, #tpu.memory_space<vmem>>, %arg3: memref<1x256xf32, #tpu.memory_space<vmem>>, %arg4: memref<32x256xbf16, #tpu.memory_space<vmem>>) attributes {dimension_semantics = [#tpu.dimension_semantics<parallel>], iteration_bounds = array<i64: 1>, scalar_prefetch = 0 : i64, scratch_operands = 0 : i64, tpu.core_type = #tpu.core_type<tc>, window_params = [{transform_indices = @transform_0, window_bounds = array<i64: 4, 32, 3200>}, {pipeline_mode = #tpu.pipeline_mode<synchronous>, transform_indices = @transform_1, window_bounds = array<i64: 3200, 256>}, {pipeline_mode = #tpu.pipeline_mode<synchronous>, transform_indices = @transform_2, window_bounds = array<i64: 1, 256>}, {transform_indices = @transform_3, window_bounds = array<i64: 32, 256>}]} {
    %c0 = arith.constant 0 : index
    %c0_0 = arith.constant 0 : index
    %0 = vector.load %arg2[%c0, %c0_0] : memref<3200x256xbf16, #tpu.memory_space<vmem>>, vector<3200x256xbf16>
    %c0_1 = arith.constant 0 : index
    %c0_2 = arith.constant 0 : index
    %c0_3 = arith.constant 0 : index
    %1 = vector.load %arg1[%c0_1, %c0_2, %c0_3] : memref<4x32x3200xbf16, #tpu.memory_space<vmem>>, vector<1x32x3200xbf16>
    %2 = vector.shape_cast %1 : vector<1x32x3200xbf16> to vector<32x3200xbf16>
    %cst = arith.constant dense<0.000000e+00> : vector<32x256xf32>
    %3 = tpu.matmul %2, %0, %cst {dimension_numbers = #tpu.dot_dimension_numbers<[1], [0], [0], [1], [0, 0, 1, 1], [], []>} : vector<32x3200xbf16>, vector<3200x256xbf16>, vector<32x256xf32> -> vector<32x256xf32>
    %c1 = arith.constant 1 : index
    %c0_4 = arith.constant 0 : index
    %c0_5 = arith.constant 0 : index
    %4 = vector.load %arg1[%c1, %c0_4, %c0_5] : memref<4x32x3200xbf16, #tpu.memory_space<vmem>>, vector<1x32x3200xbf16>
    %5 = vector.shape_cast %4 : vector<1x32x3200xbf16> to vector<32x3200xbf16>
    %cst_6 = arith.constant dense<0.000000e+00> : vector<32x256xf32>
    %6 = tpu.matmul %5, %0, %cst_6 {dimension_numbers = #tpu.dot_dimension_numbers<[1], [0], [0], [1], [0, 0, 1, 1], [], []>} : vector<32x3200xbf16>, vector<3200x256xbf16>, vector<32x256xf32> -> vector<32x256xf32>
    %7 = arith.maximumf %3, %6 : vector<32x256xf32>
    %c2 = arith.constant 2 : index
    %c0_7 = arith.constant 0 : index
    %c0_8 = arith.constant 0 : index
    %8 = vector.load %arg1[%c2, %c0_7, %c0_8] : memref<4x32x3200xbf16, #tpu.memory_space<vmem>>, vector<1x32x3200xbf16>
    %9 = vector.shape_cast %8 : vector<1x32x3200xbf16> to vector<32x3200xbf16>
    %cst_9 = arith.constant dense<0.000000e+00> : vector<32x256xf32>
    %10 = tpu.matmul %9, %0, %cst_9 {dimension_numbers = #tpu.dot_dimension_numbers<[1], [0], [0], [1], [0, 0, 1, 1], [], []>} : vector<32x3200xbf16>, vector<3200x256xbf16>, vector<32x256xf32> -> vector<32x256xf32>
    %11 = arith.maximumf %7, %10 : vector<32x256xf32>
    %c3 = arith.constant 3 : index
    %c0_10 = arith.constant 0 : index
    %c0_11 = arith.constant 0 : index
    %12 = vector.load %arg1[%c3, %c0_10, %c0_11] : memref<4x32x3200xbf16, #tpu.memory_space<vmem>>, vector<1x32x3200xbf16>
    %13 = vector.shape_cast %12 : vector<1x32x3200xbf16> to vector<32x3200xbf16>
    %cst_12 = arith.constant dense<0.000000e+00> : vector<32x256xf32>
    %14 = tpu.matmul %13, %0, %cst_12 {dimension_numbers = #tpu.dot_dimension_numbers<[1], [0], [0], [1], [0, 0, 1, 1], [], []>} : vector<32x3200xbf16>, vector<3200x256xbf16>, vector<32x256xf32> -> vector<32x256xf32>
    %15 = arith.maximumf %11, %14 : vector<32x256xf32>
    %c0_13 = arith.constant 0 : index
    %c0_14 = arith.constant 0 : index
    %16 = vector.load %arg3[%c0_13, %c0_14] : memref<1x256xf32, #tpu.memory_space<vmem>>, vector<1x256xf32>
    %17 = vector.broadcast %16 : vector<1x256xf32> to vector<32x256xf32>
    %18 = arith.addf %15, %17 : vector<32x256xf32>
    %cst_15 = arith.constant 0.000000e+00 : f32
    %19 = vector.broadcast %cst_15 : f32 to vector<32x256xf32>
    %20 = arith.maximumf %18, %19 : vector<32x256xf32>
    %21 = arith.truncf %20 : vector<32x256xf32> to vector<32x256xbf16>
    %c0_16 = arith.constant 0 : index
    %c0_17 = arith.constant 0 : index
    %22 = vector.load %arg4[%c0_16, %c0_17] : memref<32x256xbf16, #tpu.memory_space<vmem>>, vector<32x256xbf16>
    tpu.vector_store %arg4[%c0_16, %c0_17], %21 {strides = array<i32>} : memref<32x256xbf16, #tpu.memory_space<vmem>>, vector<32x256xbf16>,
    return
  }
  func.func @transform_0(%arg0: i32) -> (i32, i32, i32) {
    %c0_i32 = arith.constant 0 : i32
    %c0_i32_0 = arith.constant 0 : i32
    %c0_i32_1 = arith.constant 0 : i32
    return %c0_i32, %arg0, %c0_i32_0 : i32, i32, i32
  }
  func.func @transform_1(%arg0: i32) -> (i32, i32) {
    %c0_i32 = arith.constant 0 : i32
    %c0_i32_0 = arith.constant 0 : i32
    %c0_i32_1 = arith.constant 0 : i32
    return %c0_i32, %c0_i32_0 : i32, i32
  }
  func.func @transform_2(%arg0: i32) -> (i32, i32) {
    %c0_i32 = arith.constant 0 : i32
    %c0_i32_0 = arith.constant 0 : i32
    %c0_i32_1 = arith.constant 0 : i32
    return %c0_i32, %c0_i32_0 : i32, i32
  }
  func.func @transform_3(%arg0: i32) -> (i32, i32) {
    %c0_i32 = arith.constant 0 : i32
    %c0_i32_0 = arith.constant 0 : i32
    return %arg0, %c0_i32 : i32, i32
  }
}

module attributes {stable_mosaic.version = 11 : i64} {
  func.func @_conv_pool_kernel(%arg0: i32, %arg1: memref<1x32x2304xbf16, #tpu.memory_space<vmem>>, %arg2: memref<2304x256xbf16, #tpu.memory_space<vmem>>, %arg3: memref<1x256xf32, #tpu.memory_space<vmem>>, %arg4: memref<32x256xbf16, #tpu.memory_space<vmem>>) attributes {dimension_semantics = [#tpu.dimension_semantics<parallel>], iteration_bounds = array<i64: 1>, scalar_prefetch = 0 : i64, scratch_operands = 0 : i64, tpu.core_type = #tpu.core_type<tc>, window_params = [{transform_indices = @transform_0, window_bounds = array<i64: 1, 32, 2304>}, {pipeline_mode = #tpu.pipeline_mode<synchronous>, transform_indices = @transform_1, window_bounds = array<i64: 2304, 256>}, {pipeline_mode = #tpu.pipeline_mode<synchronous>, transform_indices = @transform_2, window_bounds = array<i64: 1, 256>}, {transform_indices = @transform_3, window_bounds = array<i64: 32, 256>}]} {
    %c0 = arith.constant 0 : index
    %c0_0 = arith.constant 0 : index
    %0 = vector.load %arg2[%c0, %c0_0] : memref<2304x256xbf16, #tpu.memory_space<vmem>>, vector<2304x256xbf16>
    %c0_1 = arith.constant 0 : index
    %c0_2 = arith.constant 0 : index
    %c0_3 = arith.constant 0 : index
    %1 = vector.load %arg1[%c0_1, %c0_2, %c0_3] : memref<1x32x2304xbf16, #tpu.memory_space<vmem>>, vector<1x32x2304xbf16>
    %2 = vector.shape_cast %1 : vector<1x32x2304xbf16> to vector<32x2304xbf16>
    %cst = arith.constant dense<0.000000e+00> : vector<32x256xf32>
    %3 = tpu.matmul %2, %0, %cst {dimension_numbers = #tpu.dot_dimension_numbers<[1], [0], [0], [1], [0, 0, 1, 1], [], []>} : vector<32x2304xbf16>, vector<2304x256xbf16>, vector<32x256xf32> -> vector<32x256xf32>
    %c0_4 = arith.constant 0 : index
    %c0_5 = arith.constant 0 : index
    %4 = vector.load %arg3[%c0_4, %c0_5] : memref<1x256xf32, #tpu.memory_space<vmem>>, vector<1x256xf32>
    %5 = vector.broadcast %4 : vector<1x256xf32> to vector<32x256xf32>
    %6 = arith.addf %3, %5 : vector<32x256xf32>
    %cst_6 = arith.constant 0.000000e+00 : f32
    %7 = vector.broadcast %cst_6 : f32 to vector<32x256xf32>
    %8 = arith.maximumf %6, %7 : vector<32x256xf32>
    %9 = arith.truncf %8 : vector<32x256xf32> to vector<32x256xbf16>
    %c0_7 = arith.constant 0 : index
    %c0_8 = arith.constant 0 : index
    %10 = vector.load %arg4[%c0_7, %c0_8] : memref<32x256xbf16, #tpu.memory_space<vmem>>, vector<32x256xbf16>
    tpu.vector_store %arg4[%c0_7, %c0_8], %9 {strides = array<i32>} : memref<32x256xbf16, #tpu.memory_space<vmem>>, vector<32x256xbf16>,
    return
  }
  func.func @transform_0(%arg0: i32) -> (i32, i32, i32) {
    %c0_i32 = arith.constant 0 : i32
    %c0_i32_0 = arith.constant 0 : i32
    %c0_i32_1 = arith.constant 0 : i32
    return %c0_i32, %arg0, %c0_i32_0 : i32, i32, i32
  }
  func.func @transform_1(%arg0: i32) -> (i32, i32) {
    %c0_i32 = arith.constant 0 : i32
    %c0_i32_0 = arith.constant 0 : i32
    %c0_i32_1 = arith.constant 0 : i32
    return %c0_i32, %c0_i32_0 : i32, i32
  }
  func.func @transform_2(%arg0: i32) -> (i32, i32) {
    %c0_i32 = arith.constant 0 : i32
    %c0_i32_0 = arith.constant 0 : i32
    %c0_i32_1 = arith.constant 0 : i32
    return %c0_i32, %c0_i32_0 : i32, i32
  }
  func.func @transform_3(%arg0: i32) -> (i32, i32) {
    %c0_i32 = arith.constant 0 : i32
    %c0_i32_0 = arith.constant 0 : i32
    return %arg0, %c0_i32 : i32, i32
  }
}

module attributes {stable_mosaic.version = 11 : i64} {
  func.func @_mlp_kernel(%arg0: memref<8x4096xbf16, #tpu.memory_space<vmem>>, %arg1: memref<4096x128xbf16, #tpu.memory_space<vmem>>, %arg2: memref<1x128xf32, #tpu.memory_space<vmem>>, %arg3: memref<128x128xbf16, #tpu.memory_space<vmem>>, %arg4: memref<1x128xf32, #tpu.memory_space<vmem>>, %arg5: memref<8x128xf32, #tpu.memory_space<vmem>>) attributes {dimension_semantics = [], scalar_prefetch = 0 : i64, scratch_operands = 0 : i64, tpu.core_type = #tpu.core_type<tc>} {
    %c0 = arith.constant 0 : index
    %c0_0 = arith.constant 0 : index
    %0 = vector.load %arg0[%c0, %c0_0] : memref<8x4096xbf16, #tpu.memory_space<vmem>>, vector<8x4096xbf16>
    %c0_1 = arith.constant 0 : index
    %c0_2 = arith.constant 0 : index
    %1 = vector.load %arg1[%c0_1, %c0_2] : memref<4096x128xbf16, #tpu.memory_space<vmem>>, vector<4096x128xbf16>
    %cst = arith.constant dense<0.000000e+00> : vector<8x128xf32>
    %2 = tpu.matmul %0, %1, %cst {dimension_numbers = #tpu.dot_dimension_numbers<[1], [0], [0], [1], [0, 0, 1, 1], [], []>} : vector<8x4096xbf16>, vector<4096x128xbf16>, vector<8x128xf32> -> vector<8x128xf32>
    %c0_3 = arith.constant 0 : index
    %c0_4 = arith.constant 0 : index
    %3 = vector.load %arg2[%c0_3, %c0_4] : memref<1x128xf32, #tpu.memory_space<vmem>>, vector<1x128xf32>
    %4 = vector.broadcast %3 : vector<1x128xf32> to vector<8x128xf32>
    %5 = arith.addf %2, %4 : vector<8x128xf32>
    %cst_5 = arith.constant 0.000000e+00 : f32
    %6 = vector.broadcast %cst_5 : f32 to vector<8x128xf32>
    %7 = arith.maximumf %5, %6 : vector<8x128xf32>
    %8 = arith.truncf %7 : vector<8x128xf32> to vector<8x128xbf16>
    %c0_6 = arith.constant 0 : index
    %c0_7 = arith.constant 0 : index
    %9 = vector.load %arg3[%c0_6, %c0_7] : memref<128x128xbf16, #tpu.memory_space<vmem>>, vector<128x128xbf16>
    %cst_8 = arith.constant dense<0.000000e+00> : vector<8x128xf32>
    %10 = tpu.matmul %8, %9, %cst_8 {dimension_numbers = #tpu.dot_dimension_numbers<[1], [0], [0], [1], [0, 0, 1, 1], [], []>} : vector<8x128xbf16>, vector<128x128xbf16>, vector<8x128xf32> -> vector<8x128xf32>
    %c0_9 = arith.constant 0 : index
    %c0_10 = arith.constant 0 : index
    %11 = vector.load %arg4[%c0_9, %c0_10] : memref<1x128xf32, #tpu.memory_space<vmem>>, vector<1x128xf32>
    %12 = vector.broadcast %11 : vector<1x128xf32> to vector<8x128xf32>
    %13 = arith.addf %10, %12 : vector<8x128xf32>
    %cst_11 = arith.constant 0.000000e+00 : f32
    %14 = vector.broadcast %cst_11 : f32 to vector<8x128xf32>
    %15 = arith.maximumf %13, %14 : vector<8x128xf32>
    %c0_12 = arith.constant 0 : index
    %c0_13 = arith.constant 0 : index
    %16 = vector.load %arg5[%c0_12, %c0_13] : memref<8x128xf32, #tpu.memory_space<vmem>>, vector<8x128xf32>
    tpu.vector_store %arg5[%c0_12, %c0_13], %15 {strides = array<i32>} : memref<8x128xf32, #tpu.memory_space<vmem>>, vector<8x128xf32>,
    return
  }
}

</mosaic_0001>

<llo_original>
// kernel: encoder_forward.4
$region0: #{encoder_forward.4}
  #allocation0 [shape = 'u32[]', space=smem, size = 0x4, offset = 0x4, fixed_abs, tag = 'smem constant byte address 0x4 - core index']
  #allocation1 [shape = 'u32[144,128]{1,0:T(1,128)}', space=vmem, size = 0x12000, scoped, tag = 'internal scratch']
  %s0 = inlined_call_operand.vmem [shape: bf16[4,128,128], index: 0, kind: input, shape index: {}]
  %s1 = inlined_call_operand.vmem [shape: bf16[128,128], index: 1, kind: input, shape index: {}]
  %s2 = inlined_call_operand.vmem [shape: f32[1,128], index: 2, kind: input, shape index: {}]
  %s3 = inlined_call_operand.vmem [shape: bf16[128,128], index: 3, kind: output, shape index: {}]
  %s4 = sld [smem:[#allocation0]]
  $region22: #{encoder_forward.4} parent=0
    _
  %s6 = ssub.s32 1, %s4
  %s7 = scalar_select 0, %s6, %s4
  // Predicated region
  $region2: #{encoder_forward.4} parent=0 // pred_check
    _
  $region3: #{encoder_forward.4} parent=0 // pred_check_branch
    %9 = sbr.rel (0) target = $region5
  $region4: #{encoder_forward.4} parent=0 // pred_region
    _
  $region5: #{encoder_forward.4} parent=0 // pred_fallthru
    _
  // Predicated region
  $region6: #{encoder_forward.4} parent=0 // pred_check
    _
  $region7: #{encoder_forward.4} parent=0 // pred_check_branch
    %11 = sbr.rel (0) target = $region9
  $region8: #{encoder_forward.4} parent=0 // pred_region
    _
  $region9: #{encoder_forward.4} parent=0 // pred_fallthru
    _
  // Predicated region
  $region10: #{encoder_forward.4} parent=0 // pred_check
    _
  $region11: #{encoder_forward.4} parent=0 // pred_check_branch
    %13 = sbr.rel (0) target = $region13
  $region12: #{encoder_forward.4} parent=0 // pred_region
    _
  $region13: #{encoder_forward.4} parent=0 // pred_fallthru
    _
  %v15 = vld [vmem:[%s1] sm:$0xf]
  %v16 = vld [vmem:[%s1 + $0x4] sm:$0xf]
  %v17 = vld [vmem:[%s1 + $0x8] sm:$0xf]
  %v18 = vld [vmem:[%s1 + $0xc] sm:$0xf]
  %v19 = vld [vmem:[%s1 + $0x10] sm:$0xf]
  %v20 = vld [vmem:[%s1 + $0x14] sm:$0xf]
  %v21 = vld [vmem:[%s1 + $0x18] sm:$0xf]
  %v22 = vld [vmem:[%s1 + $0x1c] sm:$0xf]
  %v23 = vld [vmem:[%s1 + $0x20] sm:$0xf]
  %v24 = vld [vmem:[%s1 + $0x24] sm:$0xf]
  %v25 = vld [vmem:[%s1 + $0x28] sm:$0xf]
  %v26 = vld [vmem:[%s1 + $0x2c] sm:$0xf]
  %v27 = vld [vmem:[%s1 + $0x30] sm:$0xf]
  %v28 = vld [vmem:[%s1 + $0x34] sm:$0xf]
  %v29 = vld [vmem:[%s1 + $0x38] sm:$0xf]
  %v30 = vld [vmem:[%s1 + $0x3c] sm:$0xf]
  %v31 = vld [vmem:[%s0] sm:$0xf]
  %v32 = vld [vmem:[%s0 + $0x4] sm:$0xf]
  %v33 = vld [vmem:[%s0 + $0x8] sm:$0xf]
  %v34 = vld [vmem:[%s0 + $0xc] sm:$0xf]
  %v35 = vld [vmem:[%s0 + $0x10] sm:$0xf]
  %v36 = vld [vmem:[%s0 + $0x14] sm:$0xf]
  %v37 = vld [vmem:[%s0 + $0x18] sm:$0xf]
  %v38 = vld [vmem:[%s0 + $0x1c] sm:$0xf]
  %v39 = vld [vmem:[%s0 + $0x20] sm:$0xf]
  %v40 = vld [vmem:[%s0 + $0x24] sm:$0xf]
  %v41 = vld [vmem:[%s0 + $0x28] sm:$0xf]
  %v42 = vld [vmem:[%s0 + $0x2c] sm:$0xf]
  %v43 = vld [vmem:[%s0 + $0x30] sm:$0xf]
  %v44 = vld [vmem:[%s0 + $0x34] sm:$0xf]
  %v45 = vld [vmem:[%s0 + $0x38] sm:$0xf]
  %v46 = vld [vmem:[%s0 + $0x3c] sm:$0xf]
  %v63 = vunpack.c.l.b16 %v31
  %v64 = vunpack.c.l.b16 %v32
  %v65 = vunpack.c.l.b16 %v33
  %v66 = vunpack.c.l.b16 %v34
  %v67 = vunpack.c.l.b16 %v35
  %v68 = vunpack.c.l.b16 %v36
  %v69 = vunpack.c.l.b16 %v37
  %v70 = vunpack.c.l.b16 %v38
  %v71 = vunpack.c.l.b16 %v39
  %v72 = vunpack.c.l.b16 %v40
  %v73 = vunpack.c.l.b16 %v41
  %v74 = vunpack.c.l.b16 %v42
  %v75 = vunpack.c.l.b16 %v43
  %v76 = vunpack.c.l.b16 %v44
  %v77 = vunpack.c.l.b16 %v45
  %v78 = vunpack.c.l.b16 %v46
  %v79 = vpack.c.b16 %v64, %v63
  %v80 = vpack.c.b16 %v66, %v65
  %v81 = vpack.c.b16 %v68, %v67
  %v82 = vpack.c.b16 %v70, %v69
  %v83 = vpack.c.b16 %v72, %v71
  %v84 = vpack.c.b16 %v74, %v73
  %v85 = vpack.c.b16 %v76, %v75
  %v86 = vpack.c.b16 %v78, %v77
  %v111 = vunpack.c.l.b16 %v15
  %v112 = vunpack.c.l.b16 %v16
  %v113 = vunpack.c.l.b16 %v17
  %v114 = vunpack.c.l.b16 %v18
  %v115 = vunpack.c.l.b16 %v19
  %v116 = vunpack.c.l.b16 %v20
  %v117 = vunpack.c.l.b16 %v21
  %v118 = vunpack.c.l.b16 %v22
  %v119 = vunpack.c.l.b16 %v23
  %v120 = vunpack.c.l.b16 %v24
  %v121 = vunpack.c.l.b16 %v25
  %v122 = vunpack.c.l.b16 %v26
  %v123 = vunpack.c.l.b16 %v27
  %v124 = vunpack.c.l.b16 %v28
  %v125 = vunpack.c.l.b16 %v29
  %v126 = vunpack.c.l.b16 %v30
  %v127 = vpack.c.b16 %v112, %v111
  %v128 = vpack.c.b16 %v114, %v113
  %v129 = vpack.c.b16 %v116, %v115
  %v130 = vpack.c.b16 %v118, %v117
  %v131 = vpack.c.b16 %v120, %v119
  %v132 = vpack.c.b16 %v122, %v121
  %v133 = vpack.c.b16 %v124, %v123
  %v134 = vpack.c.b16 %v126, %v125
  %143 = vmatprep.subr.bf16.mxu0 0
  %144 = vmatpush1.bf16.msra.mxu0 %v127
  %145 = vmatprep.subr.bf16.mxu0 0
  %146 = vmatpush1.bf16.msra.mxu0 %v128
  %147 = vmatprep.subr.bf16.mxu0 0
  %148 = vmatpush1.bf16.msra.mxu0 %v129
  %149 = vmatprep.subr.bf16.mxu0 0
  %150 = vmatpush1.bf16.msra.mxu0 %v130
  %151 = vmatprep.subr.bf16.mxu0 0
  %152 = vmatpush1.bf16.msra.mxu0 %v131
  %153 = vmatprep.subr.bf16.mxu0 0
  %154 = vmatpush1.bf16.msra.mxu0 %v132
  %155 = vmatprep.subr.bf16.mxu0 0
  %156 = vmatpush1.bf16.msra.mxu0 %v133
  %157 = vmatprep.subr.bf16.mxu0 0
  %158 = vmatpush1.bf16.msra.mxu0 %v134
  %159 = vmatprep.subr.bf16.mxu0 0
  %160 = vmatpush1.bf16.msra.mxu0 0
  %161 = vmatprep.subr.bf16.mxu0 0
  %162 = vmatpush1.bf16.msra.mxu0 0
  %163 = vmatprep.subr.bf16.mxu0 0
  %164 = vmatpush1.bf16.msra.mxu0 0
  %165 = vmatprep.subr.bf16.mxu0 0
  %166 = vmatpush1.bf16.msra.mxu0 0
  %167 = vmatprep.subr.bf16.mxu0 0
  %168 = vmatpush1.bf16.msra.mxu0 0
  %169 = vmatprep.subr.bf16.mxu0 0
  %170 = vmatpush1.bf16.msra.mxu0 0
  %171 = vmatprep.subr.bf16.mxu0 0
  %172 = vmatpush1.bf16.msra.mxu0 0
  %173 = vmatprep.subr.bf16.mxu0 0
  %174 = vmatpush1.bf16.msra.mxu0 0
  %175 = vmatprep.mubr.bf16.mxu0 0
  %176 = vmatmul.mubr.bf16.gmra.mrb[0].mxu0 %v79
  %v177 = vpop.f32.mrb[0].mxu0
  %v178 = vadd.f32 0.0, %v177
  %v179 = vpop.f32.mrb[0].mxu0
  %v180 = vpop.f32.mrb[0].mxu0
  %v181 = vadd.f32 0.0, %v180
  %v182 = vpop.f32.mrb[0].mxu0
  %183 = vmatprep.mubr.bf16.mxu0 0
  %184 = vmatmul.mubr.bf16.gmra.mrb[0].mxu0 %v80
  %v185 = vpop.f32.mrb[0].mxu0
  %v186 = vadd.f32 0.0, %v185
  %v187 = vpop.f32.mrb[0].mxu0
  %v188 = vpop.f32.mrb[0].mxu0
  %v189 = vadd.f32 0.0, %v188
  %v190 = vpop.f32.mrb[0].mxu0
  %191 = vmatprep.mubr.bf16.mxu0 0
  %192 = vmatmul.mubr.bf16.gmra.mrb[0].mxu0 %v81
  %v193 = vpop.f32.mrb[0].mxu0
  %v194 = vadd.f32 0.0, %v193
  %v195 = vpop.f32.mrb[0].mxu0
  %v196 = vpop.f32.mrb[0].mxu0
  %v197 = vadd.f32 0.0, %v196
  %v198 = vpop.f32.mrb[0].mxu0
  %199 = vmatprep.mubr.bf16.mxu0 0
  %200 = vmatmul.mubr.bf16.gmra.mrb[0].mxu0 %v82
  %v201 = vpop.f32.mrb[0].mxu0
  %v202 = vadd.f32 0.0, %v201
  %v203 = vpop.f32.mrb[0].mxu0
  %v204 = vpop.f32.mrb[0].mxu0
  %v205 = vadd.f32 0.0, %v204
  %v206 = vpop.f32.mrb[0].mxu0
  %207 = vmatprep.mubr.bf16.mxu0 0
  %208 = vmatmul.mubr.bf16.gmra.mrb[0].mxu0 %v83
  %v209 = vpop.f32.mrb[0].mxu0
  %v210 = vadd.f32 0.0, %v209
  %v211 = vpop.f32.mrb[0].mxu0
  %v212 = vpop.f32.mrb[0].mxu0
  %v213 = vadd.f32 0.0, %v212
  %v214 = vpop.f32.mrb[0].mxu0
  %215 = vmatprep.mubr.bf16.mxu0 0
  %216 = vmatmul.mubr.bf16.gmra.mrb[0].mxu0 %v84
  %v217 = vpop.f32.mrb[0].mxu0
  %v218 = vadd.f32 0.0, %v217
  %v219 = vpop.f32.mrb[0].mxu0
  %v220 = vpop.f32.mrb[0].mxu0
  %v221 = vadd.f32 0.0, %v220
  %v222 = vpop.f32.mrb[0].mxu0
  %223 = vmatprep.mubr.bf16.mxu0 0
  %224 = vmatmul.mubr.bf16.gmra.mrb[0].mxu0 %v85
  %v225 = vpop.f32.mrb[0].mxu0
  %v226 = vadd.f32 0.0, %v225
  %v227 = vpop.f32.mrb[0].mxu0
  %v228 = vpop.f32.mrb[0].mxu0
  %v229 = vadd.f32 0.0, %v228
  %v230 = vpop.f32.mrb[0].mxu0
  %231 = vmatprep.mubr.bf16.mxu0 0
  %232 = vmatmul.mubr.bf16.gmra.mrb[0].mxu0 %v86
  %v233 = vpop.f32.mrb[0].mxu0
  %v234 = vadd.f32 0.0, %v233
  %v235 = vpop.f32.mrb[0].mxu0
  %v236 = vpop.f32.mrb[0].mxu0
  %v237 = vadd.f32 0.0, %v236
  %v238 = vpop.f32.mrb[0].mxu0
  %239 = vdwg.mxu0
  %s240 = scalar_lea.vmem %s0, 64
  %v241 = vld [vmem:[%s240] sm:$0xf]
  %v242 = vld [vmem:[%s240 + $0x4] sm:$0xf]
  %v243 = vld [vmem:[%s240 + $0x8] sm:$0xf]
  %v244 = vld [vmem:[%s240 + $0xc] sm:$0xf]
  %v245 = vld [vmem:[%s240 + $0x10] sm:$0xf]
  %v246 = vld [vmem:[%s240 + $0x14] sm:$0xf]
  %v247 = vld [vmem:[%s240 + $0x18] sm:$0xf]
  %v248 = vld [vmem:[%s240 + $0x1c] sm:$0xf]
  %v249 = vld [vmem:[%s240 + $0x20] sm:$0xf]
  %v250 = vld [vmem:[%s240 + $0x24] sm:$0xf]
  %v251 = vld [vmem:[%s240 + $0x28] sm:$0xf]
  %v252 = vld [vmem:[%s240 + $0x2c] sm:$0xf]
  %v253 = vld [vmem:[%s240 + $0x30] sm:$0xf]
  %v254 = vld [vmem:[%s240 + $0x34] sm:$0xf]
  %v255 = vld [vmem:[%s240 + $0x38] sm:$0xf]
  %v256 = vld [vmem:[%s240 + $0x3c] sm:$0xf]
  %v273 = vunpack.c.l.b16 %v241
  %v274 = vunpack.c.l.b16 %v242
  %v275 = vunpack.c.l.b16 %v243
  %v276 = vunpack.c.l.b16 %v244
  %v277 = vunpack.c.l.b16 %v245
  %v278 = vunpack.c.l.b16 %v246
  %v279 = vunpack.c.l.b16 %v247
  %v280 = vunpack.c.l.b16 %v248
  %v281 = vunpack.c.l.b16 %v249
  %v282 = vunpack.c.l.b16 %v250
  %v283 = vunpack.c.l.b16 %v251
  %v284 = vunpack.c.l.b16 %v252
  %v285 = vunpack.c.l.b16 %v253
  %v286 = vunpack.c.l.b16 %v254
  %v287 = vunpack.c.l.b16 %v255
  %v288 = vunpack.c.l.b16 %v256
  %v289 = vpack.c.b16 %v274, %v273
  %v290 = vpack.c.b16 %v276, %v275
  %v291 = vpack.c.b16 %v278, %v277
  %v292 = vpack.c.b16 %v280, %v279
  %v293 = vpack.c.b16 %v282, %v281
  %v294 = vpack.c.b16 %v284, %v283
  %v295 = vpack.c.b16 %v286, %v285
  %v296 = vpack.c.b16 %v288, %v287
  %305 = vmatprep.subr.bf16.mxu0 0
  %306 = vmatpush1.bf16.msra.mxu0 %v127
  %307 = vmatprep.subr.bf16.mxu0 0
  %308 = vmatpush1.bf16.msra.mxu0 %v128
  %309 = vmatprep.subr.bf16.mxu0 0
  %310 = vmatpush1.bf16.msra.mxu0 %v129
  %311 = vmatprep.subr.bf16.mxu0 0
  %312 = vmatpush1.bf16.msra.mxu0 %v130
  %313 = vmatprep.subr.bf16.mxu0 0
  %314 = vmatpush1.bf16.msra.mxu0 %v131
  %315 = vmatprep.subr.bf16.mxu0 0
  %316 = vmatpush1.bf16.msra.mxu0 %v132
  %317 = vmatprep.subr.bf16.mxu0 0
  %318 = vmatpush1.bf16.msra.mxu0 %v133
  %319 = vmatprep.subr.bf16.mxu0 0
  %320 = vmatpush1.bf16.msra.mxu0 %v134
  %321 = vmatprep.subr.bf16.mxu0 0
  %322 = vmatpush1.bf16.msra.mxu0 0
  %323 = vmatprep.subr.bf16.mxu0 0
  %324 = vmatpush1.bf16.msra.mxu0 0
  %325 = vmatprep.subr.bf16.mxu0 0
  %326 = vmatpush1.bf16.msra.mxu0 0
  %327 = vmatprep.subr.bf16.mxu0 0
  %328 = vmatpush1.bf16.msra.mxu0 0
  %329 = vmatprep.subr.bf16.mxu0 0
  %330 = vmatpush1.bf16.msra.mxu0 0
  %331 = vmatprep.subr.bf16.mxu0 0
  %332 = vmatpush1.bf16.msra.mxu0 0
  %333 = vmatprep.subr.bf16.mxu0 0
  %334 = vmatpush1.bf16.msra.mxu0 0
  %335 = vmatprep.subr.bf16.mxu0 0
  %336 = vmatpush1.bf16.msra.mxu0 0
  %337 = vmatprep.mubr.bf16.mxu0 0
  %338 = vmatmul.mubr.bf16.gmra.mrb[0].mxu0 %v289
  %v339 = vpop.f32.mrb[0].mxu0
  %v340 = vadd.f32 0.0, %v339
  %v341 = vpop.f32.mrb[0].mxu0
  %v342 = vpop.f32.mrb[0].mxu0
  %v343 = vadd.f32 0.0, %v342
  %v344 = vpop.f32.mrb[0].mxu0
  %345 = vmatprep.mubr.bf16.mxu0 0
  %346 = vmatmul.mubr.bf16.gmra.mrb[0].mxu0 %v290
  %v347 = vpop.f32.mrb[0].mxu0
  %v348 = vadd.f32 0.0, %v347
  %v349 = vpop.f32.mrb[0].mxu0
  %v350 = vpop.f32.mrb[0].mxu0
  %v351 = vadd.f32 0.0, %v350
  %v352 = vpop.f32.mrb[0].mxu0
  %353 = vmatprep.mubr.bf16.mxu0 0
  %354 = vmatmul.mubr.bf16.gmra.mrb[0].mxu0 %v291
  %v355 = vpop.f32.mrb[0].mxu0
  %v356 = vadd.f32 0.0, %v355
  %v357 = vpop.f32.mrb[0].mxu0
  %v358 = vpop.f32.mrb[0].mxu0
  %v359 = vadd.f32 0.0, %v358
  %v360 = vpop.f32.mrb[0].mxu0
  %361 = vmatprep.mubr.bf16.mxu0 0
  %362 = vmatmul.mubr.bf16.gmra.mrb[0].mxu0 %v292
  %v363 = vpop.f32.mrb[0].mxu0
  %v364 = vadd.f32 0.0, %v363
  %v365 = vpop.f32.mrb[0].mxu0
  %v366 = vpop.f32.mrb[0].mxu0
  %v367 = vadd.f32 0.0, %v366
  %v368 = vpop.f32.mrb[0].mxu0
  %369 = vmatprep.mubr.bf16.mxu0 0
  %370 = vmatmul.mubr.bf16.gmra.mrb[0].mxu0 %v293
  %v371 = vpop.f32.mrb[0].mxu0
  %v372 = vadd.f32 0.0, %v371
  %v373 = vpop.f32.mrb[0].mxu0
  %v374 = vpop.f32.mrb[0].mxu0
  %v375 = vadd.f32 0.0, %v374
  %v376 = vpop.f32.mrb[0].mxu0
  %377 = vmatprep.mubr.bf16.mxu0 0
  %378 = vmatmul.mubr.bf16.gmra.mrb[0].mxu0 %v294
  %v379 = vpop.f32.mrb[0].mxu0
  %v380 = vadd.f32 0.0, %v379
  %v381 = vpop.f32.mrb[0].mxu0
  %v382 = vpop.f32.mrb[0].mxu0
  %v383 = vadd.f32 0.0, %v382
  %v384 = vpop.f32.mrb[0].mxu0
  %385 = vmatprep.mubr.bf16.mxu0 0
  %386 = vmatmul.mubr.bf16.gmra.mrb[0].mxu0 %v295
  %v387 = vpop.f32.mrb[0].mxu0
  %v388 = vadd.f32 0.0, %v387
  %v389 = vpop.f32.mrb[0].mxu0
  %v390 = vpop.f32.mrb[0].mxu0
  %v391 = vadd.f32 0.0, %v390
  %v392 = vpop.f32.mrb[0].mxu0
  %393 = vmatprep.mubr.bf16.mxu0 0
  %394 = vmatmul.mubr.bf16.gmra.mrb[0].mxu0 %v296
  %v395 = vpop.f32.mrb[0].mxu0
  %v396 = vadd.f32 0.0, %v395
  %v397 = vpop.f32.mrb[0].mxu0
  %v398 = vpop.f32.mrb[0].mxu0
  %v399 = vadd.f32 0.0, %v398
  %v400 = vpop.f32.mrb[0].mxu0
  %401 = vdwg.mxu0
  %v402 = vmax.f32 %v178, %v340
  %v403 = vmax.f32 %v181, %v343
  %v404 = vmax.f32 %v186, %v348
  %v405 = vmax.f32 %v189, %v351
  %v406 = vmax.f32 %v194, %v356
  %v407 = vmax.f32 %v197, %v359
  %v408 = vmax.f32 %v202, %v364
  %v409 = vmax.f32 %v205, %v367
  %v410 = vmax.f32 %v210, %v372
  %v411 = vmax.f32 %v213, %v375
  %v412 = vmax.f32 %v218, %v380
  %v413 = vmax.f32 %v221, %v383
  %v414 = vmax.f32 %v226, %v388
  %v415 = vmax.f32 %v229, %v391
  %v416 = vmax.f32 %v234, %v396
  %v417 = vmax.f32 %v237, %v399
  %s418 = scalar_lea.vmem %s0, 128
  %v419 = vld [vmem:[%s418] sm:$0xf]
  %v420 = vld [vmem:[%s418 + $0x4] sm:$0xf]
  %v421 = vld [vmem:[%s418 + $0x8] sm:$0xf]
  %v422 = vld [vmem:[%s418 + $0xc] sm:$0xf]
  %v423 = vld [vmem:[%s418 + $0x10] sm:$0xf]
  %v424 = vld [vmem:[%s418 + $0x14] sm:$0xf]
  %v425 = vld [vmem:[%s418 + $0x18] sm:$0xf]
  %v426 = vld [vmem:[%s418 + $0x1c] sm:$0xf]
  %v427 = vld [vmem:[%s418 + $0x20] sm:$0xf]
  %v428 = vld [vmem:[%s418 + $0x24] sm:$0xf]
  %v429 = vld [vmem:[%s418 + $0x28] sm:$0xf]
  %v430 = vld [vmem:[%s418 + $0x2c] sm:$0xf]
  %v431 = vld [vmem:[%s418 + $0x30] sm:$0xf]
  %v432 = vld [vmem:[%s418 + $0x34] sm:$0xf]
  %v433 = vld [vmem:[%s418 + $0x38] sm:$0xf]
  %v434 = vld [vmem:[%s418 + $0x3c] sm:$0xf]
  %v451 = vunpack.c.l.b16 %v419
  %v452 = vunpack.c.l.b16 %v420
  %v453 = vunpack.c.l.b16 %v421
  %v454 = vunpack.c.l.b16 %v422
  %v455 = vunpack.c.l.b16 %v423
  %v456 = vunpack.c.l.b16 %v424
  %v457 = vunpack.c.l.b16 %v425
  %v458 = vunpack.c.l.b16 %v426
  %v459 = vunpack.c.l.b16 %v427
  %v460 = vunpack.c.l.b16 %v428
  %v461 = vunpack.c.l.b16 %v429
  %v462 = vunpack.c.l.b16 %v430
  %v463 = vunpack.c.l.b16 %v431
  %v464 = vunpack.c.l.b16 %v432
  %v465 = vunpack.c.l.b16 %v433
  %v466 = vunpack.c.l.b16 %v434
  %v467 = vpack.c.b16 %v452, %v451
  %v468 = vpack.c.b16 %v454, %v453
  %v469 = vpack.c.b16 %v456, %v455
  %v470 = vpack.c.b16 %v458, %v457
  %v471 = vpack.c.b16 %v460, %v459
  %v472 = vpack.c.b16 %v462, %v461
  %v473 = vpack.c.b16 %v464, %v463
  %v474 = vpack.c.b16 %v466, %v465
  %483 = vmatprep.subr.bf16.mxu0 0
  %484 = vmatpush1.bf16.msra.mxu0 %v127
  %485 = vmatprep.subr.bf16.mxu0 0
  %486 = vmatpush1.bf16.msra.mxu0 %v128
  %487 = vmatprep.subr.bf16.mxu0 0
  %488 = vmatpush1.bf16.msra.mxu0 %v129
  %489 = vmatprep.subr.bf16.mxu0 0
  %490 = vmatpush1.bf16.msra.mxu0 %v130
  %491 = vmatprep.subr.bf16.mxu0 0
  %492 = vmatpush1.bf16.msra.mxu0 %v131
  %493 = vmatprep.subr.bf16.mxu0 0
  %494 = vmatpush1.bf16.msra.mxu0 %v132
  %495 = vmatprep.subr.bf16.mxu0 0
  %496 = vmatpush1.bf16.msra.mxu0 %v133
  %497 = vmatprep.subr.bf16.mxu0 0
  %498 = vmatpush1.bf16.msra.mxu0 %v134
  %499 = vmatprep.subr.bf16.mxu0 0
  %500 = vmatpush1.bf16.msra.mxu0 0
  %501 = vmatprep.subr.bf16.mxu0 0
  %502 = vmatpush1.bf16.msra.mxu0 0
  %503 = vmatprep.subr.bf16.mxu0 0
  %504 = vmatpush1.bf16.msra.mxu0 0
  %505 = vmatprep.subr.bf16.mxu0 0
  %506 = vmatpush1.bf16.msra.mxu0 0
  %507 = vmatprep.subr.bf16.mxu0 0
  %508 = vmatpush1.bf16.msra.mxu0 0
  %509 = vmatprep.subr.bf16.mxu0 0
  %510 = vmatpush1.bf16.msra.mxu0 0
  %511 = vmatprep.subr.bf16.mxu0 0
  %512 = vmatpush1.bf16.msra.mxu0 0
  %513 = vmatprep.subr.bf16.mxu0 0
  %514 = vmatpush1.bf16.msra.mxu0 0
  %515 = vmatprep.mubr.bf16.mxu0 0
  %516 = vmatmul.mubr.bf16.gmra.mrb[0].mxu0 %v467
  %v517 = vpop.f32.mrb[0].mxu0
  %v518 = vadd.f32 0.0, %v517
  %v519 = vpop.f32.mrb[0].mxu0
  %v520 = vpop.f32.mrb[0].mxu0
  %v521 = vadd.f32 0.0, %v520
  %v522 = vpop.f32.mrb[0].mxu0
  %523 = vmatprep.mubr.bf16.mxu0 0
  %524 = vmatmul.mubr.bf16.gmra.mrb[0].mxu0 %v468
  %v525 = vpop.f32.mrb[0].mxu0
  %v526 = vadd.f32 0.0, %v525
  %v527 = vpop.f32.mrb[0].mxu0
  %v528 = vpop.f32.mrb[0].mxu0
  %v529 = vadd.f32 0.0, %v528
  %v530 = vpop.f32.mrb[0].mxu0
  %531 = vmatprep.mubr.bf16.mxu0 0
  %532 = vmatmul.mubr.bf16.gmra.mrb[0].mxu0 %v469
  %v533 = vpop.f32.mrb[0].mxu0
  %v534 = vadd.f32 0.0, %v533
  %v535 = vpop.f32.mrb[0].mxu0
  %v536 = vpop.f32.mrb[0].mxu0
  %v537 = vadd.f32 0.0, %v536
  %v538 = vpop.f32.mrb[0].mxu0
  %539 = vmatprep.mubr.bf16.mxu0 0
  %540 = vmatmul.mubr.bf16.gmra.mrb[0].mxu0 %v470
  %v541 = vpop.f32.mrb[0].mxu0
  %v542 = vadd.f32 0.0, %v541
  %v543 = vpop.f32.mrb[0].mxu0
  %v544 = vpop.f32.mrb[0].mxu0
  %v545 = vadd.f32 0.0, %v544
  %v546 = vpop.f32.mrb[0].mxu0
  %547 = vmatprep.mubr.bf16.mxu0 0
  %548 = vmatmul.mubr.bf16.gmra.mrb[0].mxu0 %v471
  %v549 = vpop.f32.mrb[0].mxu0
  %v550 = vadd.f32 0.0, %v549
  %v551 = vpop.f32.mrb[0].mxu0
  %v552 = vpop.f32.mrb[0].mxu0
  %v553 = vadd.f32 0.0, %v552
  %v554 = vpop.f32.mrb[0].mxu0
  %555 = vmatprep.mubr.bf16.mxu0 0
  %556 = vmatmul.mubr.bf16.gmra.mrb[0].mxu0 %v472
  %v557 = vpop.f32.mrb[0].mxu0
  %v558 = vadd.f32 0.0, %v557
  %v559 = vpop.f32.mrb[0].mxu0
  %v560 = vpop.f32.mrb[0].mxu0
  %v561 = vadd.f32 0.0, %v560
  %v562 = vpop.f32.mrb[0].mxu0
  %563 = vmatprep.mubr.bf16.mxu0 0
  %564 = vmatmul.mubr.bf16.gmra.mrb[0].mxu0 %v473
  %v565 = vpop.f32.mrb[0].mxu0
  %v566 = vadd.f32 0.0, %v565
  %v567 = vpop.f32.mrb[0].mxu0
  %v568 = vpop.f32.mrb[0].mxu0
  %v569 = vadd.f32 0.0, %v568
  %v570 = vpop.f32.mrb[0].mxu0
  %571 = vmatprep.mubr.bf16.mxu0 0
  %572 = vmatmul.mubr.bf16.gmra.mrb[0].mxu0 %v474
  %v573 = vpop.f32.mrb[0].mxu0
  %v574 = vadd.f32 0.0, %v573
  %v575 = vpop.f32.mrb[0].mxu0
  %v576 = vpop.f32.mrb[0].mxu0
  %v577 = vadd.f32 0.0, %v576
  %v578 = vpop.f32.mrb[0].mxu0
  %579 = vdwg.mxu0
  %v580 = vmax.f32 %v402, %v518
  %v581 = vmax.f32 %v403, %v521
  %v582 = vmax.f32 %v404, %v526
  %v583 = vmax.f32 %v405, %v529
  %v584 = vmax.f32 %v406, %v534
  %v585 = vmax.f32 %v407, %v537
  %v586 = vmax.f32 %v408, %v542
  %v587 = vmax.f32 %v409, %v545
  %v588 = vmax.f32 %v410, %v550
  %v589 = vmax.f32 %v411, %v553
  %v590 = vmax.f32 %v412, %v558
  %v591 = vmax.f32 %v413, %v561
  %v592 = vmax.f32 %v414, %v566
  %v593 = vmax.f32 %v415, %v569
  %v594 = vmax.f32 %v416, %v574
  %v595 = vmax.f32 %v417, %v577
  %s596 = scalar_lea.vmem %s0, 192
  %v597 = vld [vmem:[%s596] sm:$0xf]
  %v598 = vld [vmem:[%s596 + $0x4] sm:$0xf]
  %v599 = vld [vmem:[%s596 + $0x8] sm:$0xf]
  %v600 = vld [vmem:[%s596 + $0xc] sm:$0xf]
  %v601 = vld [vmem:[%s596 + $0x10] sm:$0xf]
  %v602 = vld [vmem:[%s596 + $0x14] sm:$0xf]
  %v603 = vld [vmem:[%s596 + $0x18] sm:$0xf]
  %v604 = vld [vmem:[%s596 + $0x1c] sm:$0xf]
  %v605 = vld [vmem:[%s596 + $0x20] sm:$0xf]
  %v606 = vld [vmem:[%s596 + $0x24] sm:$0xf]
  %v607 = vld [vmem:[%s596 + $0x28] sm:$0xf]
  %v608 = vld [vmem:[%s596 + $0x2c] sm:$0xf]
  %v609 = vld [vmem:[%s596 + $0x30] sm:$0xf]
  %v610 = vld [vmem:[%s596 + $0x34] sm:$0xf]
  %v611 = vld [vmem:[%s596 + $0x38] sm:$0xf]
  %v612 = vld [vmem:[%s596 + $0x3c] sm:$0xf]
  %v629 = vunpack.c.l.b16 %v597
  %v630 = vunpack.c.l.b16 %v598
  %v631 = vunpack.c.l.b16 %v599
  %v632 = vunpack.c.l.b16 %v600
  %v633 = vunpack.c.l.b16 %v601
  %v634 = vunpack.c.l.b16 %v602
  %v635 = vunpack.c.l.b16 %v603
  %v636 = vunpack.c.l.b16 %v604
  %v637 = vunpack.c.l.b16 %v605
  %v638 = vunpack.c.l.b16 %v606
  %v639 = vunpack.c.l.b16 %v607
  %v640 = vunpack.c.l.b16 %v608
  %v641 = vunpack.c.l.b16 %v609
  %v642 = vunpack.c.l.b16 %v610
  %v643 = vunpack.c.l.b16 %v611
  %v644 = vunpack.c.l.b16 %v612
  %v645 = vpack.c.b16 %v630, %v629
  %v646 = vpack.c.b16 %v632, %v631
  %v647 = vpack.c.b16 %v634, %v633
  %v648 = vpack.c.b16 %v636, %v635
  %v649 = vpack.c.b16 %v638, %v637
  %v650 = vpack.c.b16 %v640, %v639
  %v651 = vpack.c.b16 %v642, %v641
  %v652 = vpack.c.b16 %v644, %v643
  %661 = vmatprep.subr.bf16.mxu0 0
  %662 = vmatpush1.bf16.msra.mxu0 %v127
  %663 = vmatprep.subr.bf16.mxu0 0
  %664 = vmatpush1.bf16.msra.mxu0 %v128
  %665 = vmatprep.subr.bf16.mxu0 0
  %666 = vmatpush1.bf16.msra.mxu0 %v129
  %667 = vmatprep.subr.bf16.mxu0 0
  %668 = vmatpush1.bf16.msra.mxu0 %v130
  %669 = vmatprep.subr.bf16.mxu0 0
  %670 = vmatpush1.bf16.msra.mxu0 %v131
  %671 = vmatprep.subr.bf16.mxu0 0
  %672 = vmatpush1.bf16.msra.mxu0 %v132
  %673 = vmatprep.subr.bf16.mxu0 0
  %674 = vmatpush1.bf16.msra.mxu0 %v133
  %675 = vmatprep.subr.bf16.mxu0 0
  %676 = vmatpush1.bf16.msra.mxu0 %v134
  %677 = vmatprep.subr.bf16.mxu0 0
  %678 = vmatpush1.bf16.msra.mxu0 0
  %679 = vmatprep.subr.bf16.mxu0 0
  %680 = vmatpush1.bf16.msra.mxu0 0
  %681 = vmatprep.subr.bf16.mxu0 0
  %682 = vmatpush1.bf16.msra.mxu0 0
  %683 = vmatprep.subr.bf16.mxu0 0
  %684 = vmatpush1.bf16.msra.mxu0 0
  %685 = vmatprep.subr.bf16.mxu0 0
  %686 = vmatpush1.bf16.msra.mxu0 0
  %687 = vmatprep.subr.bf16.mxu0 0
  %688 = vmatpush1.bf16.msra.mxu0 0
  %689 = vmatprep.subr.bf16.mxu0 0
  %690 = vmatpush1.bf16.msra.mxu0 0
  %691 = vmatprep.subr.bf16.mxu0 0
  %692 = vmatpush1.bf16.msra.mxu0 0
  %693 = vmatprep.mubr.bf16.mxu0 0
  %694 = vmatmul.mubr.bf16.gmra.mrb[0].mxu0 %v645
  %v695 = vpop.f32.mrb[0].mxu0
  %v696 = vadd.f32 0.0, %v695
  %v697 = vpop.f32.mrb[0].mxu0
  %v698 = vpop.f32.mrb[0].mxu0
  %v699 = vadd.f32 0.0, %v698
  %v700 = vpop.f32.mrb[0].mxu0
  %701 = vmatprep.mubr.bf16.mxu0 0
  %702 = vmatmul.mubr.bf16.gmra.mrb[0].mxu0 %v646
  %v703 = vpop.f32.mrb[0].mxu0
  %v704 = vadd.f32 0.0, %v703
  %v705 = vpop.f32.mrb[0].mxu0
  %v706 = vpop.f32.mrb[0].mxu0
  %v707 = vadd.f32 0.0, %v706
  %v708 = vpop.f32.mrb[0].mxu0
  %709 = vmatprep.mubr.bf16.mxu0 0
  %710 = vmatmul.mubr.bf16.gmra.mrb[0].mxu0 %v647
  %v711 = vpop.f32.mrb[0].mxu0
  %v712 = vadd.f32 0.0, %v711
  %v713 = vpop.f32.mrb[0].mxu0
  %v714 = vpop.f32.mrb[0].mxu0
  %v715 = vadd.f32 0.0, %v714
  %v716 = vpop.f32.mrb[0].mxu0
  %717 = vmatprep.mubr.bf16.mxu0 0
  %718 = vmatmul.mubr.bf16.gmra.mrb[0].mxu0 %v648
  %v719 = vpop.f32.mrb[0].mxu0
  %v720 = vadd.f32 0.0, %v719
  %v721 = vpop.f32.mrb[0].mxu0
  %v722 = vpop.f32.mrb[0].mxu0
  %v723 = vadd.f32 0.0, %v722
  %v724 = vpop.f32.mrb[0].mxu0
  %725 = vmatprep.mubr.bf16.mxu0 0
  %726 = vmatmul.mubr.bf16.gmra.mrb[0].mxu0 %v649
  %v727 = vpop.f32.mrb[0].mxu0
  %v728 = vadd.f32 0.0, %v727
  %v729 = vpop.f32.mrb[0].mxu0
  %v730 = vpop.f32.mrb[0].mxu0
  %v731 = vadd.f32 0.0, %v730
  %v732 = vpop.f32.mrb[0].mxu0
  %733 = vmatprep.mubr.bf16.mxu0 0
  %734 = vmatmul.mubr.bf16.gmra.mrb[0].mxu0 %v650
  %v735 = vpop.f32.mrb[0].mxu0
  %v736 = vadd.f32 0.0, %v735
  %v737 = vpop.f32.mrb[0].mxu0
  %v738 = vpop.f32.mrb[0].mxu0
  %v739 = vadd.f32 0.0, %v738
  %v740 = vpop.f32.mrb[0].mxu0
  %741 = vmatprep.mubr.bf16.mxu0 0
  %742 = vmatmul.mubr.bf16.gmra.mrb[0].mxu0 %v651
  %v743 = vpop.f32.mrb[0].mxu0
  %v744 = vadd.f32 0.0, %v743
  %v745 = vpop.f32.mrb[0].mxu0
  %v746 = vpop.f32.mrb[0].mxu0
  %v747 = vadd.f32 0.0, %v746
  %v748 = vpop.f32.mrb[0].mxu0
  %749 = vmatprep.mubr.bf16.mxu0 0
  %750 = vmatmul.mubr.bf16.gmra.mrb[0].mxu0 %v652
  %v751 = vpop.f32.mrb[0].mxu0
  %v752 = vadd.f32 0.0, %v751
  %v753 = vpop.f32.mrb[0].mxu0
  %v754 = vpop.f32.mrb[0].mxu0
  %v755 = vadd.f32 0.0, %v754
  %v756 = vpop.f32.mrb[0].mxu0
  %757 = vdwg.mxu0
  %v758 = vmax.f32 %v580, %v696
  %v759 = vmax.f32 %v581, %v699
  %v760 = vmax.f32 %v582, %v704
  %v761 = vmax.f32 %v583, %v707
  %v762 = vmax.f32 %v584, %v712
  %v763 = vmax.f32 %v585, %v715
  %v764 = vmax.f32 %v586, %v720
  %v765 = vmax.f32 %v587, %v723
  %v766 = vmax.f32 %v588, %v728
  %v767 = vmax.f32 %v589, %v731
  %v768 = vmax.f32 %v590, %v736
  %v769 = vmax.f32 %v591, %v739
  %v770 = vmax.f32 %v592, %v744
  %v771 = vmax.f32 %v593, %v747
  %v772 = vmax.f32 %v594, %v752
  %v773 = vmax.f32 %v595, %v755
  %v774 = vld [vmem:[%s2] sm:$0x1]
  %v776 = vlaneseq
  %v777 = vshrl.u32 %v776, 7
  %v778 = vsub.s32 0, %v777
  %v779 = vrot.slane %v774, %v778
  %v781 = vadd.f32 %v758, %v779
  %v782 = vadd.f32 %v759, %v779
  %v783 = vadd.f32 %v760, %v779
  %v784 = vadd.f32 %v761, %v779
  %v785 = vadd.f32 %v762, %v779
  %v786 = vadd.f32 %v763, %v779
  %v787 = vadd.f32 %v764, %v779
  %v788 = vadd.f32 %v765, %v779
  %v789 = vadd.f32 %v766, %v779
  %v790 = vadd.f32 %v767, %v779
  %v791 = vadd.f32 %v768, %v779
  %v792 = vadd.f32 %v769, %v779
  %v793 = vadd.f32 %v770, %v779
  %v794 = vadd.f32 %v771, %v779
  %v795 = vadd.f32 %v772, %v779
  %v796 = vadd.f32 %v773, %v779
  %v797 = vmax.f32 %v781, 0.0
  %v798 = vmax.f32 %v782, 0.0
  %v799 = vmax.f32 %v783, 0.0
  %v800 = vmax.f32 %v784, 0.0
  %v801 = vmax.f32 %v785, 0.0
  %v802 = vmax.f32 %v786, 0.0
  %v803 = vmax.f32 %v787, 0.0
  %v804 = vmax.f32 %v788, 0.0
  %v805 = vmax.f32 %v789, 0.0
  %v806 = vmax.f32 %v790, 0.0
  %v807 = vmax.f32 %v791, 0.0
  %v808 = vmax.f32 %v792, 0.0
  %v809 = vmax.f32 %v793, 0.0
  %v810 = vmax.f32 %v794, 0.0
  %v811 = vmax.f32 %v795, 0.0
  %v812 = vmax.f32 %v796, 0.0
  %v813 = vpack.c.bf16 %v798, %v797
  %v814 = vpack.c.bf16 %v800, %v799
  %v815 = vpack.c.bf16 %v802, %v801
  %v816 = vpack.c.bf16 %v804, %v803
  %v817 = vpack.c.bf16 %v806, %v805
  %v818 = vpack.c.bf16 %v808, %v807
  %v819 = vpack.c.bf16 %v810, %v809
  %v820 = vpack.c.bf16 %v812, %v811
  %v829 = vunpack.c.l.b16 %v813
  %v830 = vunpack.c.h.b16 %v813
  %v831 = vunpack.c.l.b16 %v814
  %v832 = vunpack.c.h.b16 %v814
  %v833 = vunpack.c.l.b16 %v815
  %v834 = vunpack.c.h.b16 %v815
  %v835 = vunpack.c.l.b16 %v816
  %v836 = vunpack.c.h.b16 %v816
  %v837 = vunpack.c.l.b16 %v817
  %v838 = vunpack.c.h.b16 %v817
  %v839 = vunpack.c.l.b16 %v818
  %v840 = vunpack.c.h.b16 %v818
  %v841 = vunpack.c.l.b16 %v819
  %v842 = vunpack.c.h.b16 %v819
  %v843 = vunpack.c.l.b16 %v820
  %v844 = vunpack.c.h.b16 %v820
  %v845 = vpack.c.b16 %v829, %v829
  %v846 = vpack.c.b16 %v830, %v830
  %v847 = vpack.c.b16 %v831, %v831
  %v848 = vpack.c.b16 %v832, %v832
  %v849 = vpack.c.b16 %v833, %v833
  %v850 = vpack.c.b16 %v834, %v834
  %v851 = vpack.c.b16 %v835, %v835
  %v852 = vpack.c.b16 %v836, %v836
  %v853 = vpack.c.b16 %v837, %v837
  %v854 = vpack.c.b16 %v838, %v838
  %v855 = vpack.c.b16 %v839, %v839
  %v856 = vpack.c.b16 %v840, %v840
  %v857 = vpack.c.b16 %v841, %v841
  %v858 = vpack.c.b16 %v842, %v842
  %v859 = vpack.c.b16 %v843, %v843
  %v860 = vpack.c.b16 %v844, %v844
  %877 = vst [vmem:[%s3] sm:$0xf] %v845
  %878 = vst [vmem:[%s3 + $0x4] sm:$0xf] %v846
  %879 = vst [vmem:[%s3 + $0x8] sm:$0xf] %v847
  %880 = vst [vmem:[%s3 + $0xc] sm:$0xf] %v848
  %881 = vst [vmem:[%s3 + $0x10] sm:$0xf] %v849
  %882 = vst [vmem:[%s3 + $0x14] sm:$0xf] %v850
  %883 = vst [vmem:[%s3 + $0x18] sm:$0xf] %v851
  %884 = vst [vmem:[%s3 + $0x1c] sm:$0xf] %v852
  %885 = vst [vmem:[%s3 + $0x20] sm:$0xf] %v853
  %886 = vst [vmem:[%s3 + $0x24] sm:$0xf] %v854
  %887 = vst [vmem:[%s3 + $0x28] sm:$0xf] %v855
  %888 = vst [vmem:[%s3 + $0x2c] sm:$0xf] %v856
  %889 = vst [vmem:[%s3 + $0x30] sm:$0xf] %v857
  %890 = vst [vmem:[%s3 + $0x34] sm:$0xf] %v858
  %891 = vst [vmem:[%s3 + $0x38] sm:$0xf] %v859
  %892 = vst [vmem:[%s3 + $0x3c] sm:$0xf] %v860
  // Predicated region
  $region14: #{encoder_forward.4} parent=0 // pred_check
    _
  $region15: #{encoder_forward.4} parent=0 // pred_check_branch
    %894 = sbr.rel (0) target = $region17
  $region16: #{encoder_forward.4} parent=0 // pred_region
    _
  $region17: #{encoder_forward.4} parent=0 // pred_fallthru
    _
  // Predicated region
  $region18: #{encoder_forward.4} parent=0 // pred_check
    _
  $region19: #{encoder_forward.4} parent=0 // pred_check_branch
    %896 = sbr.rel (0) target = $region21
  $region20: #{encoder_forward.4} parent=0 // pred_region
    _
  $region21: #{encoder_forward.4} parent=0 // pred_fallthru
    _

// kernel: encoder_forward.5
$region0: #{encoder_forward.5}
  #allocation0 [shape = 'u32[]', space=smem, size = 0x4, offset = 0x4, fixed_abs, tag = 'smem constant byte address 0x4 - core index']
  #allocation1 [shape = 'u32[144,128]{1,0:T(1,128)}', space=vmem, size = 0x12000, scoped, tag = 'internal scratch']
  %s0 = inlined_call_operand.vmem [shape: bf16[4,32,3200], index: 0, kind: input, shape index: {}]
  %s1 = inlined_call_operand.vmem [shape: bf16[3200,256], index: 1, kind: input, shape index: {}]
  %s2 = inlined_call_operand.vmem [shape: f32[1,256], index: 2, kind: input, shape index: {}]
  %s3 = inlined_call_operand.vmem [shape: bf16[32,256], index: 3, kind: output, shape index: {}]
  %s4 = sld [smem:[#allocation0]]
  $region22: #{encoder_forward.5} parent=0
    _
  %s6 = ssub.s32 1, %s4
  %s7 = scalar_select 0, %s6, %s4
  // Predicated region
  $region2: #{encoder_forward.5} parent=0 // pred_check
    _
  $region3: #{encoder_forward.5} parent=0 // pred_check_branch
    %9 = sbr.rel (0) target = $region5
  $region4: #{encoder_forward.5} parent=0 // pred_region
    _
  $region5: #{encoder_forward.5} parent=0 // pred_fallthru
    _
  // Predicated region
  $region6: #{encoder_forward.5} parent=0 // pred_check
    _
  $region7: #{encoder_forward.5} parent=0 // pred_check_branch
    %11 = sbr.rel (0) target = $region9
  $region8: #{encoder_forward.5} parent=0 // pred_region
    _
  $region9: #{encoder_forward.5} parent=0 // pred_fallthru
    _
  // Predicated region
  $region10: #{encoder_forward.5} parent=0 // pred_check
    _
  $region11: #{encoder_forward.5} parent=0 // pred_check_branch
    %13 = sbr.rel (0) target = $region13
  $region12: #{encoder_forward.5} parent=0 // pred_region
    _
  $region13: #{encoder_forward.5} parent=0 // pred_fallthru
    _
  %v15 = vld [vmem:[%s1] sm:$0xff]
  %v16 = vld [vmem:[%s1 + $0x8] sm:$0xff]
  %v17 = vld [vmem:[%s1 + $0x10] sm:$0xff]
  %v18 = vld [vmem:[%s1 + $0x18] sm:$0xff]
  %v19 = vld [vmem:[%s1 + $0x20] sm:$0xff]
  %v20 = vld [vmem:[%s1 + $0x28] sm:$0xff]
  %v21 = vld [vmem:[%s1 + $0x30] sm:$0xff]
  %v22 = vld [vmem:[%s1 + $0x38] sm:$0xff]
  %v23 = vld [vmem:[%s1 + $0x40] sm:$0xff]
  %v24 = vld [vmem:[%s1 + $0x48] sm:$0xff]
  %v25 = vld [vmem:[%s1 + $0x50] sm:$0xff]
  %v26 = vld [vmem:[%s1 + $0x58] sm:$0xff]
  %v27 = vld [vmem:[%s1 + $0x60] sm:$0xff]
  %v28 = vld [vmem:[%s1 + $0x68] sm:$0xff]
  %v29 = vld [vmem:[%s1 + $0x70] sm:$0xff]
  %v30 = vld [vmem:[%s1 + $0x78] sm:$0xff]
  %v31 = vld [vmem:[%s1 + $0x80] sm:$0xff]
  %v32 = vld [vmem:[%s1 + $0x88] sm:$0xff]
  %v33 = vld [vmem:[%s1 + $0x90] sm:$0xff]
  %v34 = vld [vmem:[%s1 + $0x98] sm:$0xff]
  %v35 = vld [vmem:[%s1 + $0xa0] sm:$0xff]
  %v36 = vld [vmem:[%s1 + $0xa8] sm:$0xff]
  %v37 = vld [vmem:[%s1 + $0xb0] sm:$0xff]
  %v38 = vld [vmem:[%s1 + $0xb8] sm:$0xff]
  %v39 = vld [vmem:[%s1 + $0xc0] sm:$0xff]
  %v40 = vld [vmem:[%s1 + $0xc8] sm:$0xff]
  %v41 = vld [vmem:[%s1 + $0xd0] sm:$0xff]
  %v42 = vld [vmem:[%s1 + $0xd8] sm:$0xff]
  %v43 = vld [vmem:[%s1 + $0xe0] sm:$0xff]
  %v44 = vld [vmem:[%s1 + $0xe8] sm:$0xff]
  %v45 = vld [vmem:[%s1 + $0xf0] sm:$0xff]
  %v46 = vld [vmem:[%s1 + $0xf8] sm:$0xff]
  %v47 = vld [vmem:[%s1 + $0x100] sm:$0xff]
  %v48 = vld [vmem:[%s1 + $0x108] sm:$0xff]
  %v49 = vld [vmem:[%s1 + $0x110] sm:$0xff]
  %v50 = vld [vmem:[%s1 + $0x118] sm:$0xff]
  %v51 = vld [vmem:[%s1 + $0x120] sm:$0xff]
  %v52 = vld [vmem:[%s1 + $0x128] sm:$0xff]
  %v53 = vld [vmem:[%s1 + $0x130] sm:$0xff]
  %v54 = vld [vmem:[%s1 + $0x138] sm:$0xff]
  %v55 = vld [vmem:[%s1 + $0x140] sm:$0xff]
  %v56 = vld [vmem:[%s1 + $0x148] sm:$0xff]
  %v57 = vld [vmem:[%s1 + $0x150] sm:$0xff]
  %v58 = vld [vmem:[%s1 + $0x158] sm:$0xff]
  %v59 = vld [vmem:[%s1 + $0x160] sm:$0xff]
  %v60 = vld [vmem:[%s1 + $0x168] sm:$0xff]
  %v61 = vld [vmem:[%s1 + $0x170] sm:$0xff]
  %v62 = vld [vmem:[%s1 + $0x178] sm:$0xff]
  %v63 = vld [vmem:[%s1 + $0x180] sm:$0xff]
  %v64 = vld [vmem:[%s1 + $0x188] sm:$0xff]
  %v65 = vld [vmem:[%s1 + $0x190] sm:$0xff]
  %v66 = vld [vmem:[%s1 + $0x198] sm:$0xff]
  %v67 = vld [vmem:[%s1 + $0x1a0] sm:$0xff]
  %v68 = vld [vmem:[%s1 + $0x1a8] sm:$0xff]
  %v69 = vld [vmem:[%s1 + $0x1b0] sm:$0xff]
  %v70 = vld [vmem:[%s1 + $0x1b8] sm:$0xff]
  %v71 = vld [vmem:[%s1 + $0x1c0] sm:$0xff]
  %v72 = vld [vmem:[%s1 + $0x1c8] sm:$0xff]
  %v73 = vld [vmem:[%s1 + $0x1d0] sm:$0xff]
  %v74 = vld [vmem:[%s1 + $0x1d8] sm:$0xff]
  %v75 = vld [vmem:[%s1 + $0x1e0] sm:$0xff]
  %v76 = vld [vmem:[%s1 + $0x1e8] sm:$0xff]
  %v77 = vld [vmem:[%s1 + $0x1f0] sm:$0xff]
  %v78 = vld [vmem:[%s1 + $0x1f8] sm:$0xff]
  %v79 = vld [vmem:[%s1 + $0x200] sm:$0xff]
  %v80 = vld [vmem:[%s1 + $0x208] sm:$0xff]
  %v81 = vld [vmem:[%s1 + $0x210] sm:$0xff]
  %v82 = vld [vmem:[%s1 + $0x218] sm:$0xff]
  %v83 = vld [vmem:[%s1 + $0x220] sm:$0xff]
  %v84 = vld [vmem:[%s1 + $0x228] sm:$0xff]
  %v85 = vld [vmem:[%s1 + $0x230] sm:$0xff]
  %v86 = vld [vmem:[%s1 + $0x238] sm:$0xff]
  %v87 = vld [vmem:[%s1 + $0x240] sm:$0xff]
  %v88 = vld [vmem:[%s1 + $0x248] sm:$0xff]
  %v89 = vld [vmem:[%s1 + $0x250] sm:$0xff]
  %v90 = vld [vmem:[%s1 + $0x258] sm:$0xff]
  %v91 = vld [vmem:[%s1 + $0x260] sm:$0xff]
  %v92 = vld [vmem:[%s1 + $0x268] sm:$0xff]
  %v93 = vld [vmem:[%s1 + $0x270] sm:$0xff]
  %v94 = vld [vmem:[%s1 + $0x278] sm:$0xff]
  %v95 = vld [vmem:[%s1 + $0x280] sm:$0xff]
  %v96 = vld [vmem:[%s1 + $0x288] sm:$0xff]
  %v97 = vld [vmem:[%s1 + $0x290] sm:$0xff]
  %v98 = vld [vmem:[%s1 + $0x298] sm:$0xff]
  %v99 = vld [vmem:[%s1 + $0x2a0] sm:$0xff]
  %v100 = vld [vmem:[%s1 + $0x2a8] sm:$0xff]
  %v101 = vld [vmem:[%s1 + $0x2b0] sm:$0xff]
  %v102 = vld [vmem:[%s1 + $0x2b8] sm:$0xff]
  %v103 = vld [vmem:[%s1 + $0x2c0] sm:$0xff]
  %v104 = vld [vmem:[%s1 + $0x2c8] sm:$0xff]
  %v105 = vld [vmem:[%s1 + $0x2d0] sm:$0xff]
  %v106 = vld [vmem:[%s1 + $0x2d8] sm:$0xff]
  %v107 = vld [vmem:[%s1 + $0x2e0] sm:$0xff]
  %v108 = vld [vmem:[%s1 + $0x2e8] sm:$0xff]
  %v109 = vld [vmem:[%s1 + $0x2f0] sm:$0xff]
  %v110 = vld [vmem:[%s1 + $0x2f8] sm:$0xff]
  %v111 = vld [vmem:[%s1 + $0x300] sm:$0xff]
  %v112 = vld [vmem:[%s1 + $0x308] sm:$0xff]
  %v113 = vld [vmem:[%s1 + $0x310] sm:$0xff]
  %v114 = vld [vmem:[%s1 + $0x318] sm:$0xff]
  %v115 = vld [vmem:[%s1 + $0x320] sm:$0xff]
  %v116 = vld [vmem:[%s1 + $0x328] sm:$0xff]
  %v117 = vld [vmem:[%s1 + $0x330] sm:$0xff]
  %v118 = vld [vmem:[%s1 + $0x338] sm:$0xff]
  %v119 = vld [vmem:[%s1 + $0x340] sm:$0xff]
  %v120 = vld [vmem:[%s1 + $0x348] sm:$0xff]
  %v121 = vld [vmem:[%s1 + $0x350] sm:$0xff]
  %v122 = vld [vmem:[%s1 + $0x358] sm:$0xff]
  %v123 = vld [vmem:[%s1 + $0x360] sm:$0xff]
  %v124 = vld [vmem:[%s1 + $0x368] sm:$0xff]
  %v125 = vld [vmem:[%s1 + $0x370] sm:$0xff]
  %v126 = vld [vmem:[%s1 + $0x378] sm:$0xff]
  %v127 = vld [vmem:[%s1 + $0x380] sm:$0xff]
  %v128 = vld [vmem:[%s1 + $0x388] sm:$0xff]
  %v129 = vld [vmem:[%s1 + $0x390] sm:$0xff]
  %v130 = vld [vmem:[%s1 + $0x398] sm:$0xff]
  %v131 = vld [vmem:[%s1 + $0x3a0] sm:$0xff]
  %v132 = vld [vmem:[%s1 + $0x3a8] sm:$0xff]
  %v133 = vld [vmem:[%s1 + $0x3b0] sm:$0xff]
  %v134 = vld [vmem:[%s1 + $0x3b8] sm:$0xff]
  %v135 = vld [vmem:[%s1 + $0x3c0] sm:$0xff]
  %v136 = vld [vmem:[%s1 + $0x3c8] sm:$0xff]
  %v137 = vld [vmem:[%s1 + $0x3d0] sm:$0xff]
  %v138 = vld [vmem:[%s1 + $0x3d8] sm:$0xff]
  %v139 = vld [vmem:[%s1 + $0x3e0] sm:$0xff]
  %v140 = vld [vmem:[%s1 + $0x3e8] sm:$0xff]
  %v141 = vld [vmem:[%s1 + $0x3f0] sm:$0xff]
  %v142 = vld [vmem:[%s1 + $0x3f8] sm:$0xff]
  %v143 = vld [vmem:[%s1 + $0x400] sm:$0xff]
  %v144 = vld [vmem:[%s1 + $0x408] sm:$0xff]
  %v145 = vld [vmem:[%s1 + $0x410] sm:$0xff]
  %v146 = vld [vmem:[%s1 + $0x418] sm:$0xff]
  %v147 = vld [vmem:[%s1 + $0x420] sm:$0xff]
  %v148 = vld [vmem:[%s1 + $0x428] sm:$0xff]
  %v149 = vld [vmem:[%s1 + $0x430] sm:$0xff]
  %v150 = vld [vmem:[%s1 + $0x438] sm:$0xff]
  %v151 = vld [vmem:[%s1 + $0x440] sm:$0xff]
  %v152 = vld [vmem:[%s1 + $0x448] sm:$0xff]
  %v153 = vld [vmem:[%s1 + $0x450] sm:$0xff]
  %v154 = vld [vmem:[%s1 + $0x458] sm:$0xff]
  %v155 = vld [vmem:[%s1 + $0x460] sm:$0xff]
  %v156 = vld [vmem:[%s1 + $0x468] sm:$0xff]
  %v157 = vld [vmem:[%s1 + $0x470] sm:$0xff]
  %v158 = vld [vmem:[%s1 + $0x478] sm:$0xff]
  %v159 = vld [vmem:[%s1 + $0x480] sm:$0xff]
  %v160 = vld [vmem:[%s1 + $0x488] sm:$0xff]
  %v161 = vld [vmem:[%s1 + $0x490] sm:$0xff]
  %v162 = vld [vmem:[%s1 + $0x498] sm:$0xff]
  %v163 = vld [vmem:[%s1 + $0x4a0] sm:$0xff]
  %v164 = vld [vmem:[%s1 + $0x4a8] sm:$0xff]
  %v165 = vld [vmem:[%s1 + $0x4b0] sm:$0xff]
  %v166 = vld [vmem:[%s1 + $0x4b8] sm:$0xff]
  %v167 = vld [vmem:[%s1 + $0x4c0] sm:$0xff]
  %v168 = vld [vmem:[%s1 + $0x4c8] sm:$0xff]
  %v169 = vld [vmem:[%s1 + $0x4d0] sm:$0xff]
  %v170 = vld [vmem:[%s1 + $0x4d8] sm:$0xff]
  %v171 = vld [vmem:[%s1 + $0x4e0] sm:$0xff]
  %v172 = vld [vmem:[%s1 + $0x4e8] sm:$0xff]
  %v173 = vld [vmem:[%s1 + $0x4f0] sm:$0xff]
  %v174 = vld [vmem:[%s1 + $0x4f8] sm:$0xff]
  %v175 = vld [vmem:[%s1 + $0x500] sm:$0xff]
  %v176 = vld [vmem:[%s1 + $0x508] sm:$0xff]
  %v177 = vld [vmem:[%s1 + $0x510] sm:$0xff]
  %v178 = vld [vmem:[%s1 + $0x518] sm:$0xff]
  %v179 = vld [vmem:[%s1 + $0x520] sm:$0xff]
  %v180 = vld [vmem:[%s1 + $0x528] sm:$0xff]
  %v181 = vld [vmem:[%s1 + $0x530] sm:$0xff]
  %v182 = vld [vmem:[%s1 + $0x538] sm:$0xff]
  %v183 = vld [vmem:[%s1 + $0x540] sm:$0xff]
  %v184 = vld [vmem:[%s1 + $0x548] sm:$0xff]
  %v185 = vld [vmem:[%s1 + $0x550] sm:$0xff]
  %v186 = vld [vmem:[%s1 + $0x558] sm:$0xff]
  %v187 = vld [vmem:[%s1 + $0x560] sm:$0xff]
  %v188 = vld [vmem:[%s1 + $0x568] sm:$0xff]
  %v189 = vld [vmem:[%s1 + $0x570] sm:$0xff]
  %v190 = vld [vmem:[%s1 + $0x578] sm:$0xff]
  %v191 = vld [vmem:[%s1 + $0x580] sm:$0xff]
  %v192 = vld [vmem:[%s1 + $0x588] sm:$0xff]
  %v193 = vld [vmem:[%s1 + $0x590] sm:$0xff]
  %v194 = vld [vmem:[%s1 + $0x598] sm:$0xff]
  %v195 = vld [vmem:[%s1 + $0x5a0] sm:$0xff]
  %v196 = vld [vmem:[%s1 + $0x5a8] sm:$0xff]
  %v197 = vld [vmem:[%s1 + $0x5b0] sm:$0xff]
  %v198 = vld [vmem:[%s1 + $0x5b8] sm:$0xff]
  %v199 = vld [vmem:[%s1 + $0x5c0] sm:$0xff]
  %v200 = vld [vmem:[%s1 + $0x5c8] sm:$0xff]
  %v201 = vld [vmem:[%s1 + $0x5d0] sm:$0xff]
  %v202 = vld [vmem:[%s1 + $0x5d8] sm:$0xff]
  %v203 = vld [vmem:[%s1 + $0x5e0] sm:$0xff]
  %v204 = vld [vmem:[%s1 + $0x5e8] sm:$0xff]
  %v205 = vld [vmem:[%s1 + $0x5f0] sm:$0xff]
  %v206 = vld [vmem:[%s1 + $0x5f8] sm:$0xff]
  %v207 = vld [vmem:[%s1 + $0x600] sm:$0xff]
  %v208 = vld [vmem:[%s1 + $0x608] sm:$0xff]
  %v209 = vld [vmem:[%s1 + $0x610] sm:$0xff]
  %v210 = vld [vmem:[%s1 + $0x618] sm:$0xff]
  %v211 = vld [vmem:[%s1 + $0x620] sm:$0xff]
  %v212 = vld [vmem:[%s1 + $0x628] sm:$0xff]
  %v213 = vld [vmem:[%s1 + $0x630] sm:$0xff]
  %v214 = vld [vmem:[%s1 + $0x638] sm:$0xff]
  %v215 = vld [vmem:[%s1 + $0x640] sm:$0xff]
  %v216 = vld [vmem:[%s1 + $0x648] sm:$0xff]
  %v217 = vld [vmem:[%s1 + $0x650] sm:$0xff]
  %v218 = vld [vmem:[%s1 + $0x658] sm:$0xff]
  %v219 = vld [vmem:[%s1 + $0x660] sm:$0xff]
  %v220 = vld [vmem:[%s1 + $0x668] sm:$0xff]
  %v221 = vld [vmem:[%s1 + $0x670] sm:$0xff]
  %v222 = vld [vmem:[%s1 + $0x678] sm:$0xff]
  %v223 = vld [vmem:[%s1 + $0x680] sm:$0xff]
  %v224 = vld [vmem:[%s1 + $0x688] sm:$0xff]
  %v225 = vld [vmem:[%s1 + $0x690] sm:$0xff]
  %v226 = vld [vmem:[%s1 + $0x698] sm:$0xff]
  %v227 = vld [vmem:[%s1 + $0x6a0] sm:$0xff]
  %v228 = vld [vmem:[%s1 + $0x6a8] sm:$0xff]
  %v229 = vld [vmem:[%s1 + $0x6b0] sm:$0xff]
  %v230 = vld [vmem:[%s1 + $0x6b8] sm:$0xff]
  %v231 = vld [vmem:[%s1 + $0x6c0] sm:$0xff]
  %v232 = vld [vmem:[%s1 + $0x6c8] sm:$0xff]
  %v233 = vld [vmem:[%s1 + $0x6d0] sm:$0xff]
  %v234 = vld [vmem:[%s1 + $0x6d8] sm:$0xff]
  %v235 = vld [vmem:[%s1 + $0x6e0] sm:$0xff]
  %v236 = vld [vmem:[%s1 + $0x6e8] sm:$0xff]
  %v237 = vld [vmem:[%s1 + $0x6f0] sm:$0xff]
  %v238 = vld [vmem:[%s1 + $0x6f8] sm:$0xff]
  %v239 = vld [vmem:[%s1 + $0x700] sm:$0xff]
  %v240 = vld [vmem:[%s1 + $0x708] sm:$0xff]
  %v241 = vld [vmem:[%s1 + $0x710] sm:$0xff]
  %v242 = vld [vmem:[%s1 + $0x718] sm:$0xff]
  %v243 = vld [vmem:[%s1 + $0x720] sm:$0xff]
  %v244 = vld [vmem:[%s1 + $0x728] sm:$0xff]
  %v245 = vld [vmem:[%s1 + $0x730] sm:$0xff]
  %v246 = vld [vmem:[%s1 + $0x738] sm:$0xff]
  %v247 = vld [vmem:[%s1 + $0x740] sm:$0xff]
  %v248 = vld [vmem:[%s1 + $0x748] sm:$0xff]
  %v249 = vld [vmem:[%s1 + $0x750] sm:$0xff]
  %v250 = vld [vmem:[%s1 + $0x758] sm:$0xff]
  %v251 = vld [vmem:[%s1 + $0x760] sm:$0xff]
  %v252 = vld [vmem:[%s1 + $0x768] sm:$0xff]
  %v253 = vld [vmem:[%s1 + $0x770] sm:$0xff]
  %v254 = vld [vmem:[%s1 + $0x778] sm:$0xff]
  %v255 = vld [vmem:[%s1 + $0x780] sm:$0xff]
  %v256 = vld [vmem:[%s1 + $0x788] sm:$0xff]
  %v257 = vld [vmem:[%s1 + $0x790] sm:$0xff]
  %v258 = vld [vmem:[%s1 + $0x798] sm:$0xff]
  %v259 = vld [vmem:[%s1 + $0x7a0] sm:$0xff]
  %v260 = vld [vmem:[%s1 + $0x7a8] sm:$0xff]
  %v261 = vld [vmem:[%s1 + $0x7b0] sm:$0xff]
  %v262 = vld [vmem:[%s1 + $0x7b8] sm:$0xff]
  %v263 = vld [vmem:[%s1 + $0x7c0] sm:$0xff]
  %v264 = vld [vmem:[%s1 + $0x7c8] sm:$0xff]
  %v265 = vld [vmem:[%s1 + $0x7d0] sm:$0xff]
  %v266 = vld [vmem:[%s1 + $0x7d8] sm:$0xff]
  %v267 = vld [vmem:[%s1 + $0x7e0] sm:$0xff]
  %v268 = vld [vmem:[%s1 + $0x7e8] sm:$0xff]
  %v269 = vld [vmem:[%s1 + $0x7f0] sm:$0xff]
  %v270 = vld [vmem:[%s1 + $0x7f8] sm:$0xff]
  %v271 = vld [vmem:[%s1 + $0x800] sm:$0xff]
  %v272 = vld [vmem:[%s1 + $0x808] sm:$0xff]
  %v273 = vld [vmem:[%s1 + $0x810] sm:$0xff]
  %v274 = vld [vmem:[%s1 + $0x818] sm:$0xff]
  %v275 = vld [vmem:[%s1 + $0x820] sm:$0xff]
  %v276 = vld [vmem:[%s1 + $0x828] sm:$0xff]
  %v277 = vld [vmem:[%s1 + $0x830] sm:$0xff]
  %v278 = vld [vmem:[%s1 + $0x838] sm:$0xff]
  %v279 = vld [vmem:[%s1 + $0x840] sm:$0xff]
  %v280 = vld [vmem:[%s1 + $0x848] sm:$0xff]
  %v281 = vld [vmem:[%s1 + $0x850] sm:$0xff]
  %v282 = vld [vmem:[%s1 + $0x858] sm:$0xff]
  %v283 = vld [vmem:[%s1 + $0x860] sm:$0xff]
  %v284 = vld [vmem:[%s1 + $0x868] sm:$0xff]
  %v285 = vld [vmem:[%s1 + $0x870] sm:$0xff]
  %v286 = vld [vmem:[%s1 + $0x878] sm:$0xff]
  %v287 = vld [vmem:[%s1 + $0x880] sm:$0xff]
  %v288 = vld [vmem:[%s1 + $0x888] sm:$0xff]
  %v289 = vld [vmem:[%s1 + $0x890] sm:$0xff]
  %v290 = vld [vmem:[%s1 + $0x898] sm:$0xff]
  %v291 = vld [vmem:[%s1 + $0x8a0] sm:$0xff]
  %v292 = vld [vmem:[%s1 + $0x8a8] sm:$0xff]
  %v293 = vld [vmem:[%s1 + $0x8b0] sm:$0xff]
  %v294 = vld [vmem:[%s1 + $0x8b8] sm:$0xff]
  %v295 = vld [vmem:[%s1 + $0x8c0] sm:$0xff]
  %v296 = vld [vmem:[%s1 + $0x8c8] sm:$0xff]
  %v297 = vld [vmem:[%s1 + $0x8d0] sm:$0xff]
  %v298 = vld [vmem:[%s1 + $0x8d8] sm:$0xff]
  %v299 = vld [vmem:[%s1 + $0x8e0] sm:$0xff]
  %v300 = vld [vmem:[%s1 + $0x8e8] sm:$0xff]
  %v301 = vld [vmem:[%s1 + $0x8f0] sm:$0xff]
  %v302 = vld [vmem:[%s1 + $0x8f8] sm:$0xff]
  %v303 = vld [vmem:[%s1 + $0x900] sm:$0xff]
  %v304 = vld [vmem:[%s1 + $0x908] sm:$0xff]
  %v305 = vld [vmem:[%s1 + $0x910] sm:$0xff]
  %v306 = vld [vmem:[%s1 + $0x918] sm:$0xff]
  %v307 = vld [vmem:[%s1 + $0x920] sm:$0xff]
  %v308 = vld [vmem:[%s1 + $0x928] sm:$0xff]
  %v309 = vld [vmem:[%s1 + $0x930] sm:$0xff]
  %v310 = vld [vmem:[%s1 + $0x938] sm:$0xff]
  %v311 = vld [vmem:[%s1 + $0x940] sm:$0xff]
  %v312 = vld [vmem:[%s1 + $0x948] sm:$0xff]
  %v313 = vld [vmem:[%s1 + $0x950] sm:$0xff]
  %v314 = vld [vmem:[%s1 + $0x958] sm:$0xff]
  %v315 = vld [vmem:[%s1 + $0x960] sm:$0xff]
  %v316 = vld [vmem:[%s1 + $0x968] sm:$0xff]
  %v317 = vld [vmem:[%s1 + $0x970] sm:$0xff]
  %v318 = vld [vmem:[%s1 + $0x978] sm:$0xff]
  %v319 = vld [vmem:[%s1 + $0x980] sm:$0xff]
  %v320 = vld [vmem:[%s1 + $0x988] sm:$0xff]
  %v321 = vld [vmem:[%s1 + $0x990] sm:$0xff]
  %v322 = vld [vmem:[%s1 + $0x998] sm:$0xff]
  %v323 = vld [vmem:[%s1 + $0x9a0] sm:$0xff]
  %v324 = vld [vmem:[%s1 + $0x9a8] sm:$0xff]
  %v325 = vld [vmem:[%s1 + $0x9b0] sm:$0xff]
  %v326 = vld [vmem:[%s1 + $0x9b8] sm:$0xff]
  %v327 = vld [vmem:[%s1 + $0x9c0] sm:$0xff]
  %v328 = vld [vmem:[%s1 + $0x9c8] sm:$0xff]
  %v329 = vld [vmem:[%s1 + $0x9d0] sm:$0xff]
  %v330 = vld [vmem:[%s1 + $0x9d8] sm:$0xff]
  %v331 = vld [vmem:[%s1 + $0x9e0] sm:$0xff]
  %v332 = vld [vmem:[%s1 + $0x9e8] sm:$0xff]
  %v333 = vld [vmem:[%s1 + $0x9f0] sm:$0xff]
  %v334 = vld [vmem:[%s1 + $0x9f8] sm:$0xff]
  %v335 = vld [vmem:[%s1 + $0xa00] sm:$0xff]
  %v336 = vld [vmem:[%s1 + $0xa08] sm:$0xff]
  %v337 = vld [vmem:[%s1 + $0xa10] sm:$0xff]
  %v338 = vld [vmem:[%s1 + $0xa18] sm:$0xff]
  %v339 = vld [vmem:[%s1 + $0xa20] sm:$0xff]
  %v340 = vld [vmem:[%s1 + $0xa28] sm:$0xff]
  %v341 = vld [vmem:[%s1 + $0xa30] sm:$0xff]
  %v342 = vld [vmem:[%s1 + $0xa38] sm:$0xff]
  %v343 = vld [vmem:[%s1 + $0xa40] sm:$0xff]
  %v344 = vld [vmem:[%s1 + $0xa48] sm:$0xff]
  %v345 = vld [vmem:[%s1 + $0xa50] sm:$0xff]
  %v346 = vld [vmem:[%s1 + $0xa58] sm:$0xff]
  %v347 = vld [vmem:[%s1 + $0xa60] sm:$0xff]
  %v348 = vld [vmem:[%s1 + $0xa68] sm:$0xff]
  %v349 = vld [vmem:[%s1 + $0xa70] sm:$0xff]
  %v350 = vld [vmem:[%s1 + $0xa78] sm:$0xff]
  %v351 = vld [vmem:[%s1 + $0xa80] sm:$0xff]
  %v352 = vld [vmem:[%s1 + $0xa88] sm:$0xff]
  %v353 = vld [vmem:[%s1 + $0xa90] sm:$0xff]
  %v354 = vld [vmem:[%s1 + $0xa98] sm:$0xff]
  %v355 = vld [vmem:[%s1 + $0xaa0] sm:$0xff]
  %v356 = vld [vmem:[%s1 + $0xaa8] sm:$0xff]
  %v357 = vld [vmem:[%s1 + $0xab0] sm:$0xff]
  %v358 = vld [vmem:[%s1 + $0xab8] sm:$0xff]
  %v359 = vld [vmem:[%s1 + $0xac0] sm:$0xff]
  %v360 = vld [vmem:[%s1 + $0xac8] sm:$0xff]
  %v361 = vld [vmem:[%s1 + $0xad0] sm:$0xff]
  %v362 = vld [vmem:[%s1 + $0xad8] sm:$0xff]
  %v363 = vld [vmem:[%s1 + $0xae0] sm:$0xff]
  %v364 = vld [vmem:[%s1 + $0xae8] sm:$0xff]
  %v365 = vld [vmem:[%s1 + $0xaf0] sm:$0xff]
  %v366 = vld [vmem:[%s1 + $0xaf8] sm:$0xff]
  %v367 = vld [vmem:[%s1 + $0xb00] sm:$0xff]
  %v368 = vld [vmem:[%s1 + $0xb08] sm:$0xff]
  %v369 = vld [vmem:[%s1 + $0xb10] sm:$0xff]
  %v370 = vld [vmem:[%s1 + $0xb18] sm:$0xff]
  %v371 = vld [vmem:[%s1 + $0xb20] sm:$0xff]
  %v372 = vld [vmem:[%s1 + $0xb28] sm:$0xff]
  %v373 = vld [vmem:[%s1 + $0xb30] sm:$0xff]
  %v374 = vld [vmem:[%s1 + $0xb38] sm:$0xff]
  %v375 = vld [vmem:[%s1 + $0xb40] sm:$0xff]
  %v376 = vld [vmem:[%s1 + $0xb48] sm:$0xff]
  %v377 = vld [vmem:[%s1 + $0xb50] sm:$0xff]
  %v378 = vld [vmem:[%s1 + $0xb58] sm:$0xff]
  %v379 = vld [vmem:[%s1 + $0xb60] sm:$0xff]
  %v380 = vld [vmem:[%s1 + $0xb68] sm:$0xff]
  %v381 = vld [vmem:[%s1 + $0xb70] sm:$0xff]
  %v382 = vld [vmem:[%s1 + $0xb78] sm:$0xff]
  %v383 = vld [vmem:[%s1 + $0xb80] sm:$0xff]
  %v384 = vld [vmem:[%s1 + $0xb88] sm:$0xff]
  %v385 = vld [vmem:[%s1 + $0xb90] sm:$0xff]
  %v386 = vld [vmem:[%s1 + $0xb98] sm:$0xff]
  %v387 = vld [vmem:[%s1 + $0xba0] sm:$0xff]
  %v388 = vld [vmem:[%s1 + $0xba8] sm:$0xff]
  %v389 = vld [vmem:[%s1 + $0xbb0] sm:$0xff]
  %v390 = vld [vmem:[%s1 + $0xbb8] sm:$0xff]
  %v391 = vld [vmem:[%s1 + $0xbc0] sm:$0xff]
  %v392 = vld [vmem:[%s1 + $0xbc8] sm:$0xff]
  %v393 = vld [vmem:[%s1 + $0xbd0] sm:$0xff]
  %v394 = vld [vmem:[%s1 + $0xbd8] sm:$0xff]
  %v395 = vld [vmem:[%s1 + $0xbe0] sm:$0xff]
  %v396 = vld [vmem:[%s1 + $0xbe8] sm:$0xff]
  %v397 = vld [vmem:[%s1 + $0xbf0] sm:$0xff]
  %v398 = vld [vmem:[%s1 + $0xbf8] sm:$0xff]
  %v399 = vld [vmem:[%s1 + $0xc00] sm:$0xff]
  %v400 = vld [vmem:[%s1 + $0xc08] sm:$0xff]
  %v401 = vld [vmem:[%s1 + $0xc10] sm:$0xff]
  %v402 = vld [vmem:[%s1 + $0xc18] sm:$0xff]
  %v403 = vld [vmem:[%s1 + $0xc20] sm:$0xff]
  %v404 = vld [vmem:[%s1 + $0xc28] sm:$0xff]
  %v405 = vld [vmem:[%s1 + $0xc30] sm:$0xff]
  %v406 = vld [vmem:[%s1 + $0xc38] sm:$0xff]
  %v407 = vld [vmem:[%s1 + $0xc40] sm:$0xff]
  %v408 = vld [vmem:[%s1 + $0xc48] sm:$0xff]
  %v409 = vld [vmem:[%s1 + $0xc50] sm:$0xff]
  %v410 = vld [vmem:[%s1 + $0xc58] sm:$0xff]
  %v411 = vld [vmem:[%s1 + $0xc60] sm:$0xff]
  %v412 = vld [vmem:[%s1 + $0xc68] sm:$0xff]
  %v413 = vld [vmem:[%s1 + $0xc70] sm:$0xff]
  %v414 = vld [vmem:[%s1 + $0xc78] sm:$0xff]
  %v415 = vld [vmem:[%s0] sm:$0xff]
  %v416 = vld [vmem:[%s0 + $0x8] sm:$0xff]
  %v417 = vld [vmem:[%s0 + $0x10] sm:$0xff]
  %v418 = vld [vmem:[%s0 + $0x18] sm:$0xff]
  %v419 = vld [vmem:[%s0 + $0x20] sm:$0xff]
  %v420 = vld [vmem:[%s0 + $0x28] sm:$0xff]
  %v421 = vld [vmem:[%s0 + $0x30] sm:$0xff]
  %v422 = vld [vmem:[%s0 + $0x38] sm:$0xff]
  %v423 = vld [vmem:[%s0 + $0x40] sm:$0xff]
  %v424 = vld [vmem:[%s0 + $0x48] sm:$0xff]
  %v425 = vld [vmem:[%s0 + $0x50] sm:$0xff]
  %v426 = vld [vmem:[%s0 + $0x58] sm:$0xff]
  %v427 = vld [vmem:[%s0 + $0x60] sm:$0xf]
  %v428 = vld [vmem:[%s0 + $0x64] sm:$0xff]
  %v429 = vld [vmem:[%s0 + $0x6c] sm:$0xff]
  %v430 = vld [vmem:[%s0 + $0x74] sm:$0xff]
  %v431 = vld [vmem:[%s0 + $0x7c] sm:$0xff]
  %v432 = vld [vmem:[%s0 + $0x84] sm:$0xff]
  %v433 = vld [vmem:[%s0 + $0x8c] sm:$0xff]
  %v434 = vld [vmem:[%s0 + $0x94] sm:$0xff]
  %v435 = vld [vmem:[%s0 + $0x9c] sm:$0xff]
  %v436 = vld [vmem:[%s0 + $0xa4] sm:$0xff]
  %v437 = vld [vmem:[%s0 + $0xac] sm:$0xff]
  %v438 = vld [vmem:[%s0 + $0xb4] sm:$0xff]
  %v439 = vld [vmem:[%s0 + $0xbc] sm:$0xff]
  %v440 = vld [vmem:[%s0 + $0xc4] sm:$0xf]
  %v441 = vld [vmem:[%s0 + $0xc8] sm:$0xff]
  %v442 = vld [vmem:[%s0 + $0xd0] sm:$0xff]
  %v443 = vld [vmem:[%s0 + $0xd8] sm:$0xff]
  %v444 = vld [vmem:[%s0 + $0xe0] sm:$0xff]
  %v445 = vld [vmem:[%s0 + $0xe8] sm:$0xff]
  %v446 = vld [vmem:[%s0 + $0xf0] sm:$0xff]
  %v447 = vld [vmem:[%s0 + $0xf8] sm:$0xff]
  %v448 = vld [vmem:[%s0 + $0x100] sm:$0xff]
  %v449 = vld [vmem:[%s0 + $0x108] sm:$0xff]
  %v450 = vld [vmem:[%s0 + $0x110] sm:$0xff]
  %v451 = vld [vmem:[%s0 + $0x118] sm:$0xff]
  %v452 = vld [vmem:[%s0 + $0x120] sm:$0xff]
  %v453 = vld [vmem:[%s0 + $0x128] sm:$0xf]
  %v454 = vld [vmem:[%s0 + $0x12c] sm:$0xff]
  %v455 = vld [vmem:[%s0 + $0x134] sm:$0xff]
  %v456 = vld [vmem:[%s0 + $0x13c] sm:$0xff]
  %v457 = vld [vmem:[%s0 + $0x144] sm:$0xff]
  %v458 = vld [vmem:[%s0 + $0x14c] sm:$0xff]
  %v459 = vld [vmem:[%s0 + $0x154] sm:$0xff]
  %v460 = vld [vmem:[%s0 + $0x15c] sm:$0xff]
  %v461 = vld [vmem:[%s0 + $0x164] sm:$0xff]
  %v462 = vld [vmem:[%s0 + $0x16c] sm:$0xff]
  %v463 = vld [vmem:[%s0 + $0x174] sm:$0xff]
  %v464 = vld [vmem:[%s0 + $0x17c] sm:$0xff]
  %v465 = vld [vmem:[%s0 + $0x184] sm:$0xff]
  %v466 = vld [vmem:[%s0 + $0x18c] sm:$0xf]
  %v519 = vunpack.c.l.b16 %v415
  %v520 = vunpack.c.h.b16 %v415
  %v521 = vunpack.c.l.b16 %v416
  %v522 = vunpack.c.h.b16 %v416
  %v523 = vunpack.c.l.b16 %v417
  %v524 = vunpack.c.h.b16 %v417
  %v525 = vunpack.c.l.b16 %v418
  %v526 = vunpack.c.h.b16 %v418
  %v527 = vunpack.c.l.b16 %v419
  %v528 = vunpack.c.h.b16 %v419
  %v529 = vunpack.c.l.b16 %v420
  %v530 = vunpack.c.h.b16 %v420
  %v531 = vunpack.c.l.b16 %v421
  %v532 = vunpack.c.h.b16 %v421
  %v533 = vunpack.c.l.b16 %v422
  %v534 = vunpack.c.h.b16 %v422
  %v535 = vunpack.c.l.b16 %v423
  %v536 = vunpack.c.h.b16 %v423
  %v537 = vunpack.c.l.b16 %v424
  %v538 = vunpack.c.h.b16 %v424
  %v539 = vunpack.c.l.b16 %v425
  %v540 = vunpack.c.h.b16 %v425
  %v541 = vunpack.c.l.b16 %v426
  %v542 = vunpack.c.h.b16 %v426
  %v543 = vunpack.c.l.b16 %v427
  %v544 = vunpack.c.l.b16 %v428
  %v545 = vunpack.c.h.b16 %v428
  %v546 = vunpack.c.l.b16 %v429
  %v547 = vunpack.c.h.b16 %v429
  %v548 = vunpack.c.l.b16 %v430
  %v549 = vunpack.c.h.b16 %v430
  %v550 = vunpack.c.l.b16 %v431
  %v551 = vunpack.c.h.b16 %v431
  %v552 = vunpack.c.l.b16 %v432
  %v553 = vunpack.c.h.b16 %v432
  %v554 = vunpack.c.l.b16 %v433
  %v555 = vunpack.c.h.b16 %v433
  %v556 = vunpack.c.l.b16 %v434
  %v557 = vunpack.c.h.b16 %v434
  %v558 = vunpack.c.l.b16 %v435
  %v559 = vunpack.c.h.b16 %v435
  %v560 = vunpack.c.l.b16 %v436
  %v561 = vunpack.c.h.b16 %v436
  %v562 = vunpack.c.l.b16 %v437
  %v563 = vunpack.c.h.b16 %v437
  %v564 = vunpack.c.l.b16 %v438
  %v565 = vunpack.c.h.b16 %v438
  %v566 = vunpack.c.l.b16 %v439
  %v567 = vunpack.c.h.b16 %v439
  %v568 = vunpack.c.l.b16 %v440
  %v569 = vunpack.c.l.b16 %v441
  %v570 = vunpack.c.h.b16 %v441
  %v571 = vunpack.c.l.b16 %v442
  %v572 = vunpack.c.h.b16 %v442
  %v573 = vunpack.c.l.b16 %v443
  %v574 = vunpack.c.h.b16 %v443
  %v575 = vunpack.c.l.b16 %v444
  %v576 = vunpack.c.h.b16 %v444
  %v577 = vunpack.c.l.b16 %v445
  %v578 = vunpack.c.h.b16 %v445
  %v579 = vunpack.c.l.b16 %v446
  %v580 = vunpack.c.h.b16 %v446
  %v581 = vunpack.c.l.b16 %v447
  %v582 = vunpack.c.h.b16 %v447
  %v583 = vunpack.c.l.b16 %v448
  %v584 = vunpack.c.h.b16 %v448
  %v585 = vunpack.c.l.b16 %v449
  %v586 = vunpack.c.h.b16 %v449
  %v587 = vunpack.c.l.b16 %v450
  %v588 = vunpack.c.h.b16 %v450
  %v589 = vunpack.c.l.b16 %v451
  %v590 = vunpack.c.h.b16 %v451
  %v591 = vunpack.c.l.b16 %v452
  %v592 = vunpack.c.h.b16 %v452
  %v593 = vunpack.c.l.b16 %v453
  %v594 = vunpack.c.l.b16 %v454
  %v595 = vunpack.c.h.b16 %v454
  %v596 = vunpack.c.l.b16 %v455
  %v597 = vunpack.c.h.b16 %v455
  %v598 = vunpack.c.l.b16 %v456
  %v599 = vunpack.c.h.b16 %v456
  %v600 = vunpack.c.l.b16 %v457
  %v601 = vunpack.c.h.b16 %v457
  %v602 = vunpack.c.l.b16 %v458
  %v603 = vunpack.c.h.b16 %v458
  %v604 = vunpack.c.l.b16 %v459
  %v605 = vunpack.c.h.b16 %v459
  %v606 = vunpack.c.l.b16 %v460
  %v607 = vunpack.c.h.b16 %v460
  %v608 = vunpack.c.l.b16 %v461
  %v609 = vunpack.c.h.b16 %v461
  %v610 = vunpack.c.l.b16 %v462
  %v611 = vunpack.c.h.b16 %v462
  %v612 = vunpack.c.l.b16 %v463
  %v613 = vunpack.c.h.b16 %v463
  %v614 = vunpack.c.l.b16 %v464
  %v615 = vunpack.c.h.b16 %v464
  %v616 = vunpack.c.l.b16 %v465
  %v617 = vunpack.c.h.b16 %v465
  %v618 = vunpack.c.l.b16 %v466
  %v619 = vpack.c.b16 %v544, %v519
  %v620 = vpack.c.b16 %v545, %v520
  %v621 = vpack.c.b16 %v546, %v521
  %v622 = vpack.c.b16 %v547, %v522
  %v623 = vpack.c.b16 %v548, %v523
  %v624 = vpack.c.b16 %v549, %v524
  %v625 = vpack.c.b16 %v550, %v525
  %v626 = vpack.c.b16 %v551, %v526
  %v627 = vpack.c.b16 %v552, %v527
  %v628 = vpack.c.b16 %v553, %v528
  %v629 = vpack.c.b16 %v554, %v529
  %v630 = vpack.c.b16 %v555, %v530
  %v631 = vpack.c.b16 %v556, %v531
  %v632 = vpack.c.b16 %v557, %v532
  %v633 = vpack.c.b16 %v558, %v533
  %v634 = vpack.c.b16 %v559, %v534
  %v635 = vpack.c.b16 %v560, %v535
  %v636 = vpack.c.b16 %v561, %v536
  %v637 = vpack.c.b16 %v562, %v537
  %v638 = vpack.c.b16 %v563, %v538
  %v639 = vpack.c.b16 %v564, %v539
  %v640 = vpack.c.b16 %v565, %v540
  %v641 = vpack.c.b16 %v566, %v541
  %v642 = vpack.c.b16 %v567, %v542
  %v643 = vpack.c.b16 %v568, %v543
  %v644 = vpack.c.b16 %v594, %v569
  %v645 = vpack.c.b16 %v595, %v570
  %v646 = vpack.c.b16 %v596, %v571
  %v647 = vpack.c.b16 %v597, %v572
  %v648 = vpack.c.b16 %v598, %v573
  %v649 = vpack.c.b16 %v599, %v574
  %v650 = vpack.c.b16 %v600, %v575
  %v651 = vpack.c.b16 %v601, %v576
  %v652 = vpack.c.b16 %v602, %v577
  %v653 = vpack.c.b16 %v603, %v578
  %v654 = vpack.c.b16 %v604, %v579
  %v655 = vpack.c.b16 %v605, %v580
  %v656 = vpack.c.b16 %v606, %v581
  %v657 = vpack.c.b16 %v607, %v582
  %v658 = vpack.c.b16 %v608, %v583
  %v659 = vpack.c.b16 %v609, %v584
  %v660 = vpack.c.b16 %v610, %v585
  %v661 = vpack.c.b16 %v611, %v586
  %v662 = vpack.c.b16 %v612, %v587
  %v663 = vpack.c.b16 %v613, %v588
  %v664 = vpack.c.b16 %v614, %v589
  %v665 = vpack.c.b16 %v615, %v590
  %v666 = vpack.c.b16 %v616, %v591
  %v667 = vpack.c.b16 %v617, %v592
  %v668 = vpack.c.b16 %v618, %v593
  %v1119 = vunpack.c.l.b16 %v15
  %v1120 = vunpack.c.h.b16 %v15
  %v1121 = vunpack.c.l.b16 %v16
  %v1122 = vunpack.c.h.b16 %v16
  %v1123 = vunpack.c.l.b16 %v17
  %v1124 = vunpack.c.h.b16 %v17
  %v1125 = vunpack.c.l.b16 %v18
  %v1126 = vunpack.c.h.b16 %v18
  %v1127 = vunpack.c.l.b16 %v19
  %v1128 = vunpack.c.h.b16 %v19
  %v1129 = vunpack.c.l.b16 %v20
  %v1130 = vunpack.c.h.b16 %v20
  %v1131 = vunpack.c.l.b16 %v21
  %v1132 = vunpack.c.h.b16 %v21
  %v1133 = vunpack.c.l.b16 %v22
  %v1134 = vunpack.c.h.b16 %v22
  %v1135 = vunpack.c.l.b16 %v23
  %v1136 = vunpack.c.h.b16 %v23
  %v1137 = vunpack.c.l.b16 %v24
  %v1138 = vunpack.c.h.b16 %v24
  %v1139 = vunpack.c.l.b16 %v25
  %v1140 = vunpack.c.h.b16 %v25
  %v1141 = vunpack.c.l.b16 %v26
  %v1142 = vunpack.c.h.b16 %v26
  %v1143 = vunpack.c.l.b16 %v27
  %v1144 = vunpack.c.h.b16 %v27
  %v1145 = vunpack.c.l.b16 %v28
  %v1146 = vunpack.c.h.b16 %v28
  %v1147 = vunpack.c.l.b16 %v29
  %v1148 = vunpack.c.h.b16 %v29
  %v1149 = vunpack.c.l.b16 %v30
  %v1150 = vunpack.c.h.b16 %v30
  %v1151 = vunpack.c.l.b16 %v31
  %v1152 = vunpack.c.h.b16 %v31
  %v1153 = vunpack.c.l.b16 %v32
  %v1154 = vunpack.c.h.b16 %v32
  %v1155 = vunpack.c.l.b16 %v33
  %v1156 = vunpack.c.h.b16 %v33
  %v1157 = vunpack.c.l.b16 %v34
  %v1158 = vunpack.c.h.b16 %v34
  %v1159 = vunpack.c.l.b16 %v35
  %v1160 = vunpack.c.h.b16 %v35
  %v1161 = vunpack.c.l.b16 %v36
  %v1162 = vunpack.c.h.b16 %v36
  %v1163 = vunpack.c.l.b16 %v37
  %v1164 = vunpack.c.h.b16 %v37
  %v1165 = vunpack.c.l.b16 %v38
  %v1166 = vunpack.c.h.b16 %v38
  %v1167 = vunpack.c.l.b16 %v39
  %v1168 = vunpack.c.h.b16 %v39
  %v1169 = vunpack.c.l.b16 %v40
  %v1170 = vunpack.c.h.b16 %v40
  %v1171 = vunpack.c.l.b16 %v41
  %v1172 = vunpack.c.h.b16 %v41
  %v1173 = vunpack.c.l.b16 %v42
  %v1174 = vunpack.c.h.b16 %v42
  %v1175 = vunpack.c.l.b16 %v43
  %v1176 = vunpack.c.h.b16 %v43
  %v1177 = vunpack.c.l.b16 %v44
  %v1178 = vunpack.c.h.b16 %v44
  %v1179 = vunpack.c.l.b16 %v45
  %v1180 = vunpack.c.h.b16 %v45
  %v1181 = vunpack.c.l.b16 %v46
  %v1182 = vunpack.c.h.b16 %v46
  %v1183 = vunpack.c.l.b16 %v47
  %v1184 = vunpack.c.h.b16 %v47
  %v1185 = vunpack.c.l.b16 %v48
  %v1186 = vunpack.c.h.b16 %v48
  %v1187 = vunpack.c.l.b16 %v49
  %v1188 = vunpack.c.h.b16 %v49
  %v1189 = vunpack.c.l.b16 %v50
  %v1190 = vunpack.c.h.b16 %v50
  %v1191 = vunpack.c.l.b16 %v51
  %v1192 = vunpack.c.h.b16 %v51
  %v1193 = vunpack.c.l.b16 %v52
  %v1194 = vunpack.c.h.b16 %v52
  %v1195 = vunpack.c.l.b16 %v53
  %v1196 = vunpack.c.h.b16 %v53
  %v1197 = vunpack.c.l.b16 %v54
  %v1198 = vunpack.c.h.b16 %v54
  %v1199 = vunpack.c.l.b16 %v55
  %v1200 = vunpack.c.h.b16 %v55
  %v1201 = vunpack.c.l.b16 %v56
  %v1202 = vunpack.c.h.b16 %v56
  %v1203 = vunpack.c.l.b16 %v57
  %v1204 = vunpack.c.h.b16 %v57
  %v1205 = vunpack.c.l.b16 %v58
  %v1206 = vunpack.c.h.b16 %v58
  %v1207 = vunpack.c.l.b16 %v59
  %v1208 = vunpack.c.h.b16 %v59
  %v1209 = vunpack.c.l.b16 %v60
  %v1210 = vunpack.c.h.b16 %v60
  %v1211 = vunpack.c.l.b16 %v61
  %v1212 = vunpack.c.h.b16 %v61
  %v1213 = vunpack.c.l.b16 %v62
  %v1214 = vunpack.c.h.b16 %v62
  %v1215 = vunpack.c.l.b16 %v63
  %v1216 = vunpack.c.h.b16 %v63
  %v1217 = vunpack.c.l.b16 %v64
  %v1218 = vunpack.c.h.b16 %v64
  %v1219 = vunpack.c.l.b16 %v65
  %v1220 = vunpack.c.h.b16 %v65
  %v1221 = vunpack.c.l.b16 %v66
  %v1222 = vunpack.c.h.b16 %v66
  %v1223 = vunpack.c.l.b16 %v67
  %v1224 = vunpack.c.h.b16 %v67
  %v1225 = vunpack.c.l.b16 %v68
  %v1226 = vunpack.c.h.b16 %v68
  %v1227 = vunpack.c.l.b16 %v69
  %v1228 = vunpack.c.h.b16 %v69
  %v1229 = vunpack.c.l.b16 %v70
  %v1230 = vunpack.c.h.b16 %v70
  %v1231 = vunpack.c.l.b16 %v71
  %v1232 = vunpack.c.h.b16 %v71
  %v1233 = vunpack.c.l.b16 %v72
  %v1234 = vunpack.c.h.b16 %v72
  %v1235 = vunpack.c.l.b16 %v73
  %v1236 = vunpack.c.h.b16 %v73
  %v1237 = vunpack.c.l.b16 %v74
  %v1238 = vunpack.c.h.b16 %v74
  %v1239 = vunpack.c.l.b16 %v75
  %v1240 = vunpack.c.h.b16 %v75
  %v1241 = vunpack.c.l.b16 %v76
  %v1242 = vunpack.c.h.b16 %v76
  %v1243 = vunpack.c.l.b16 %v77
  %v1244 = vunpack.c.h.b16 %v77
  %v1245 = vunpack.c.l.b16 %v78
  %v1246 = vunpack.c.h.b16 %v78
  %v1247 = vunpack.c.l.b16 %v79
  %v1248 = vunpack.c.h.b16 %v79
  %v1249 = vunpack.c.l.b16 %v80
  %v1250 = vunpack.c.h.b16 %v80
  %v1251 = vunpack.c.l.b16 %v81
  %v1252 = vunpack.c.h.b16 %v81
  %v1253 = vunpack.c.l.b16 %v82
  %v1254 = vunpack.c.h.b16 %v82
  %v1255 = vunpack.c.l.b16 %v83
  %v1256 = vunpack.c.h.b16 %v83
  %v1257 = vunpack.c.l.b16 %v84
  %v1258 = vunpack.c.h.b16 %v84
  %v1259 = vunpack.c.l.b16 %v85
  %v1260 = vunpack.c.h.b16 %v85
  %v1261 = vunpack.c.l.b16 %v86
  %v1262 = vunpack.c.h.b16 %v86
  %v1263 = vunpack.c.l.b16 %v87
  %v1264 = vunpack.c.h.b16 %v87
  %v1265 = vunpack.c.l.b16 %v88
  %v1266 = vunpack.c.h.b16 %v88
  %v1267 = vunpack.c.l.b16 %v89
  %v1268 = vunpack.c.h.b16 %v89
  %v1269 = vunpack.c.l.b16 %v90
  %v1270 = vunpack.c.h.b16 %v90
  %v1271 = vunpack.c.l.b16 %v91
  %v1272 = vunpack.c.h.b16 %v91
  %v1273 = vunpack.c.l.b16 %v92
  %v1274 = vunpack.c.h.b16 %v92
  %v1275 = vunpack.c.l.b16 %v93
  %v1276 = vunpack.c.h.b16 %v93
  %v1277 = vunpack.c.l.b16 %v94
  %v1278 = vunpack.c.h.b16 %v94
  %v1279 = vunpack.c.l.b16 %v95
  %v1280 = vunpack.c.h.b16 %v95
  %v1281 = vunpack.c.l.b16 %v96
  %v1282 = vunpack.c.h.b16 %v96
  %v1283 = vunpack.c.l.b16 %v97
  %v1284 = vunpack.c.h.b16 %v97
  %v1285 = vunpack.c.l.b16 %v98
  %v1286 = vunpack.c.h.b16 %v98
  %v1287 = vunpack.c.l.b16 %v99
  %v1288 = vunpack.c.h.b16 %v99
  %v1289 = vunpack.c.l.b16 %v100
  %v1290 = vunpack.c.h.b16 %v100
  %v1291 = vunpack.c.l.b16 %v101
  %v1292 = vunpack.c.h.b16 %v101
  %v1293 = vunpack.c.l.b16 %v102
  %v1294 = vunpack.c.h.b16 %v102
  %v1295 = vunpack.c.l.b16 %v103
  %v1296 = vunpack.c.h.b16 %v103
  %v1297 = vunpack.c.l.b16 %v104
  %v1298 = vunpack.c.h.b16 %v104
  %v1299 = vunpack.c.l.b16 %v105
  %v1300 = vunpack.c.h.b16 %v105
  %v1301 = vunpack.c.l.b16 %v106
  %v1302 = vunpack.c.h.b16 %v106
  %v1303 = vunpack.c.l.b16 %v107
  %v1304 = vunpack.c.h.b16 %v107
  %v1305 = vunpack.c.l.b16 %v108
  %v1306 = vunpack.c.h.b16 %v108
  %v1307 = vunpack.c.l.b16 %v109
  %v1308 = vunpack.c.h.b16 %v109
  %v1309 = vunpack.c.l.b16 %v110
  %v1310 = vunpack.c.h.b16 %v110
  %v1311 = vunpack.c.l.b16 %v111
  %v1312 = vunpack.c.h.b16 %v111
  %v1313 = vunpack.c.l.b16 %v112
  %v1314 = vunpack.c.h.b16 %v112
  %v1315 = vunpack.c.l.b16 %v113
  %v1316 = vunpack.c.h.b16 %v113
  %v1317 = vunpack.c.l.b16 %v114
  %v1318 = vunpack.c.h.b16 %v114
  %v1319 = vunpack.c.l.b16 %v115
  %v1320 = vunpack.c.h.b16 %v115
  %v1321 = vunpack.c.l.b16 %v116
  %v1322 = vunpack.c.h.b16 %v116
  %v1323 = vunpack.c.l.b16 %v117
  %v1324 = vunpack.c.h.b16 %v117
  %v1325 = vunpack.c.l.b16 %v118
  %v1326 = vunpack.c.h.b16 %v118
  %v1327 = vunpack.c.l.b16 %v119
  %v1328 = vunpack.c.h.b16 %v119
  %v1329 = vunpack.c.l.b16 %v120
  %v1330 = vunpack.c.h.b16 %v120
  %v1331 = vunpack.c.l.b16 %v121
  %v1332 = vunpack.c.h.b16 %v121
  %v1333 = vunpack.c.l.b16 %v122
  %v1334 = vunpack.c.h.b16 %v122
  %v1335 = vunpack.c.l.b16 %v123
  %v1336 = vunpack.c.h.b16 %v123
  %v1337 = vunpack.c.l.b16 %v124
  %v1338 = vunpack.c.h.b16 %v124
  %v1339 = vunpack.c.l.b16 %v125
  %v1340 = vunpack.c.h.b16 %v125
  %v1341 = vunpack.c.l.b16 %v126
  %v1342 = vunpack.c.h.b16 %v126
  %v1343 = vunpack.c.l.b16 %v127
  %v1344 = vunpack.c.h.b16 %v127
  %v1345 = vunpack.c.l.b16 %v128
  %v1346 = vunpack.c.h.b16 %v128
  %v1347 = vunpack.c.l.b16 %v129
  %v1348 = vunpack.c.h.b16 %v129
  %v1349 = vunpack.c.l.b16 %v130
  %v1350 = vunpack.c.h.b16 %v130
  %v1351 = vunpack.c.l.b16 %v131
  %v1352 = vunpack.c.h.b16 %v131
  %v1353 = vunpack.c.l.b16 %v132
  %v1354 = vunpack.c.h.b16 %v132
  %v1355 = vunpack.c.l.b16 %v133
  %v1356 = vunpack.c.h.b16 %v133
  %v1357 = vunpack.c.l.b16 %v134
  %v1358 = vunpack.c.h.b16 %v134
  %v1359 = vunpack.c.l.b16 %v135
  %v1360 = vunpack.c.h.b16 %v135
  %v1361 = vunpack.c.l.b16 %v136
  %v1362 = vunpack.c.h.b16 %v136
  %v1363 = vunpack.c.l.b16 %v137
  %v1364 = vunpack.c.h.b16 %v137
  %v1365 = vunpack.c.l.b16 %v138
  %v1366 = vunpack.c.h.b16 %v138
  %v1367 = vunpack.c.l.b16 %v139
  %v1368 = vunpack.c.h.b16 %v139
  %v1369 = vunpack.c.l.b16 %v140
  %v1370 = vunpack.c.h.b16 %v140
  %v1371 = vunpack.c.l.b16 %v141
  %v1372 = vunpack.c.h.b16 %v141
  %v1373 = vunpack.c.l.b16 %v142
  %v1374 = vunpack.c.h.b16 %v142
  %v1375 = vunpack.c.l.b16 %v143
  %v1376 = vunpack.c.h.b16 %v143
  %v1377 = vunpack.c.l.b16 %v144
  %v1378 = vunpack.c.h.b16 %v144
  %v1379 = vunpack.c.l.b16 %v145
  %v1380 = vunpack.c.h.b16 %v145
  %v1381 = vunpack.c.l.b16 %v146
  %v1382 = vunpack.c.h.b16 %v146
  %v1383 = vunpack.c.l.b16 %v147
  %v1384 = vunpack.c.h.b16 %v147
  %v1385 = vunpack.c.l.b16 %v148
  %v1386 = vunpack.c.h.b16 %v148
  %v1387 = vunpack.c.l.b16 %v149
  %v1388 = vunpack.c.h.b16 %v149
  %v1389 = vunpack.c.l.b16 %v150
  %v1390 = vunpack.c.h.b16 %v150
  %v1391 = vunpack.c.l.b16 %v151
  %v1392 = vunpack.c.h.b16 %v151
  %v1393 = vunpack.c.l.b16 %v152
  %v1394 = vunpack.c.h.b16 %v152
  %v1395 = vunpack.c.l.b16 %v153
  %v1396 = vunpack.c.h.b16 %v153
  %v1397 = vunpack.c.l.b16 %v154
  %v1398 = vunpack.c.h.b16 %v154
  %v1399 = vunpack.c.l.b16 %v155
  %v1400 = vunpack.c.h.b16 %v155
  %v1401 = vunpack.c.l.b16 %v156
  %v1402 = vunpack.c.h.b16 %v156
  %v1403 = vunpack.c.l.b16 %v157
  %v1404 = vunpack.c.h.b16 %v157
  %v1405 = vunpack.c.l.b16 %v158
  %v1406 = vunpack.c.h.b16 %v158
  %v1407 = vunpack.c.l.b16 %v159
  %v1408 = vunpack.c.h.b16 %v159
  %v1409 = vunpack.c.l.b16 %v160
  %v1410 = vunpack.c.h.b16 %v160
  %v1411 = vunpack.c.l.b16 %v161
  %v1412 = vunpack.c.h.b16 %v161
  %v1413 = vunpack.c.l.b16 %v162
  %v1414 = vunpack.c.h.b16 %v162
  %v1415 = vunpack.c.l.b16 %v163
  %v1416 = vunpack.c.h.b16 %v163
  %v1417 = vunpack.c.l.b16 %v164
  %v1418 = vunpack.c.h.b16 %v164
  %v1419 = vunpack.c.l.b16 %v165
  %v1420 = vunpack.c.h.b16 %v165
  %v1421 = vunpack.c.l.b16 %v166
  %v1422 = vunpack.c.h.b16 %v166
  %v1423 = vunpack.c.l.b16 %v167
  %v1424 = vunpack.c.h.b16 %v167
  %v1425 = vunpack.c.l.b16 %v168
  %v1426 = vunpack.c.h.b16 %v168
  %v1427 = vunpack.c.l.b16 %v169
  %v1428 = vunpack.c.h.b16 %v169
  %v1429 = vunpack.c.l.b16 %v170
  %v1430 = vunpack.c.h.b16 %v170
  %v1431 = vunpack.c.l.b16 %v171
  %v1432 = vunpack.c.h.b16 %v171
  %v1433 = vunpack.c.l.b16 %v172
  %v1434 = vunpack.c.h.b16 %v172
  %v1435 = vunpack.c.l.b16 %v173
  %v1436 = vunpack.c.h.b16 %v173
  %v1437 = vunpack.c.l.b16 %v174
  %v1438 = vunpack.c.h.b16 %v174
  %v1439 = vunpack.c.l.b16 %v175
  %v1440 = vunpack.c.h.b16 %v175
  %v1441 = vunpack.c.l.b16 %v176
  %v1442 = vunpack.c.h.b16 %v176
  %v1443 = vunpack.c.l.b16 %v177
  %v1444 = vunpack.c.h.b16 %v177
  %v1445 = vunpack.c.l.b16 %v178
  %v1446 = vunpack.c.h.b16 %v178
  %v1447 = vunpack.c.l.b16 %v179
  %v1448 = vunpack.c.h.b16 %v179
  %v1449 = vunpack.c.l.b16 %v180
  %v1450 = vunpack.c.h.b16 %v180
  %v1451 = vunpack.c.l.b16 %v181
  %v1452 = vunpack.c.h.b16 %v181
  %v1453 = vunpack.c.l.b16 %v182
  %v1454 = vunpack.c.h.b16 %v182
  %v1455 = vunpack.c.l.b16 %v183
  %v1456 = vunpack.c.h.b16 %v183
  %v1457 = vunpack.c.l.b16 %v184
  %v1458 = vunpack.c.h.b16 %v184
  %v1459 = vunpack.c.l.b16 %v185
  %v1460 = vunpack.c.h.b16 %v185
  %v1461 = vunpack.c.l.b16 %v186
  %v1462 = vunpack.c.h.b16 %v186
  %v1463 = vunpack.c.l.b16 %v187
  %v1464 = vunpack.c.h.b16 %v187
  %v1465 = vunpack.c.l.b16 %v188
  %v1466 = vunpack.c.h.b16 %v188
  %v1467 = vunpack.c.l.b16 %v189
  %v1468 = vunpack.c.h.b16 %v189
  %v1469 = vunpack.c.l.b16 %v190
  %v1470 = vunpack.c.h.b16 %v190
  %v1471 = vunpack.c.l.b16 %v191
  %v1472 = vunpack.c.h.b16 %v191
  %v1473 = vunpack.c.l.b16 %v192
  %v1474 = vunpack.c.h.b16 %v192
  %v1475 = vunpack.c.l.b16 %v193
  %v1476 = vunpack.c.h.b16 %v193
  %v1477 = vunpack.c.l.b16 %v194
  %v1478 = vunpack.c.h.b16 %v194
  %v1479 = vunpack.c.l.b16 %v195
  %v1480 = vunpack.c.h.b16 %v195
  %v1481 = vunpack.c.l.b16 %v196
  %v1482 = vunpack.c.h.b16 %v196
  %v1483 = vunpack.c.l.b16 %v197
  %v1484 = vunpack.c.h.b16 %v197
  %v1485 = vunpack.c.l.b16 %v198
  %v1486 = vunpack.c.h.b16 %v198
  %v1487 = vunpack.c.l.b16 %v199
  %v1488 = vunpack.c.h.b16 %v199
  %v1489 = vunpack.c.l.b16 %v200
  %v1490 = vunpack.c.h.b16 %v200
  %v1491 = vunpack.c.l.b16 %v201
  %v1492 = vunpack.c.h.b16 %v201
  %v1493 = vunpack.c.l.b16 %v202
  %v1494 = vunpack.c.h.b16 %v202
  %v1495 = vunpack.c.l.b16 %v203
  %v1496 = vunpack.c.h.b16 %v203
  %v1497 = vunpack.c.l.b16 %v204
  %v1498 = vunpack.c.h.b16 %v204
  %v1499 = vunpack.c.l.b16 %v205
  %v1500 = vunpack.c.h.b16 %v205
  %v1501 = vunpack.c.l.b16 %v206
  %v1502 = vunpack.c.h.b16 %v206
  %v1503 = vunpack.c.l.b16 %v207
  %v1504 = vunpack.c.h.b16 %v207
  %v1505 = vunpack.c.l.b16 %v208
  %v1506 = vunpack.c.h.b16 %v208
  %v1507 = vunpack.c.l.b16 %v209
  %v1508 = vunpack.c.h.b16 %v209
  %v1509 = vunpack.c.l.b16 %v210
  %v1510 = vunpack.c.h.b16 %v210
  %v1511 = vunpack.c.l.b16 %v211
  %v1512 = vunpack.c.h.b16 %v211
  %v1513 = vunpack.c.l.b16 %v212
  %v1514 = vunpack.c.h.b16 %v212
  %v1515 = vunpack.c.l.b16 %v213
  %v1516 = vunpack.c.h.b16 %v213
  %v1517 = vunpack.c.l.b16 %v214
  %v1518 = vunpack.c.h.b16 %v214
  %v1519 = vunpack.c.l.b16 %v215
  %v1520 = vunpack.c.h.b16 %v215
  %v1521 = vunpack.c.l.b16 %v216
  %v1522 = vunpack.c.h.b16 %v216
  %v1523 = vunpack.c.l.b16 %v217
  %v1524 = vunpack.c.h.b16 %v217
  %v1525 = vunpack.c.l.b16 %v218
  %v1526 = vunpack.c.h.b16 %v218
  %v1527 = vunpack.c.l.b16 %v219
  %v1528 = vunpack.c.h.b16 %v219
  %v1529 = vunpack.c.l.b16 %v220
  %v1530 = vunpack.c.h.b16 %v220
  %v1531 = vunpack.c.l.b16 %v221
  %v1532 = vunpack.c.h.b16 %v221
  %v1533 = vunpack.c.l.b16 %v222
  %v1534 = vunpack.c.h.b16 %v222
  %v1535 = vunpack.c.l.b16 %v223
  %v1536 = vunpack.c.h.b16 %v223
  %v1537 = vunpack.c.l.b16 %v224
  %v1538 = vunpack.c.h.b16 %v224
  %v1539 = vunpack.c.l.b16 %v225
  %v1540 = vunpack.c.h.b16 %v225
  %v1541 = vunpack.c.l.b16 %v226
  %v1542 = vunpack.c.h.b16 %v226
  %v1543 = vunpack.c.l.b16 %v227
  %v1544 = vunpack.c.h.b16 %v227
  %v1545 = vunpack.c.l.b16 %v228
  %v1546 = vunpack.c.h.b16 %v228
  %v1547 = vunpack.c.l.b16 %v229
  %v1548 = vunpack.c.h.b16 %v229
  %v1549 = vunpack.c.l.b16 %v230
  %v1550 = vunpack.c.h.b16 %v230
  %v1551 = vunpack.c.l.b16 %v231
  %v1552 = vunpack.c.h.b16 %v231
  %v1553 = vunpack.c.l.b16 %v232
  %v1554 = vunpack.c.h.b16 %v232
  %v1555 = vunpack.c.l.b16 %v233
  %v1556 = vunpack.c.h.b16 %v233
  %v1557 = vunpack.c.l.b16 %v234
  %v1558 = vunpack.c.h.b16 %v234
  %v1559 = vunpack.c.l.b16 %v235
  %v1560 = vunpack.c.h.b16 %v235
  %v1561 = vunpack.c.l.b16 %v236
  %v1562 = vunpack.c.h.b16 %v236
  %v1563 = vunpack.c.l.b16 %v237
  %v1564 = vunpack.c.h.b16 %v237
  %v1565 = vunpack.c.l.b16 %v238
  %v1566 = vunpack.c.h.b16 %v238
  %v1567 = vunpack.c.l.b16 %v239
  %v1568 = vunpack.c.h.b16 %v239
  %v1569 = vunpack.c.l.b16 %v240
  %v1570 = vunpack.c.h.b16 %v240
  %v1571 = vunpack.c.l.b16 %v241
  %v1572 = vunpack.c.h.b16 %v241
  %v1573 = vunpack.c.l.b16 %v242
  %v1574 = vunpack.c.h.b16 %v242
  %v1575 = vunpack.c.l.b16 %v243
  %v1576 = vunpack.c.h.b16 %v243
  %v1577 = vunpack.c.l.b16 %v244
  %v1578 = vunpack.c.h.b16 %v244
  %v1579 = vunpack.c.l.b16 %v245
  %v1580 = vunpack.c.h.b16 %v245
  %v1581 = vunpack.c.l.b16 %v246
  %v1582 = vunpack.c.h.b16 %v246
  %v1583 = vunpack.c.l.b16 %v247
  %v1584 = vunpack.c.h.b16 %v247
  %v1585 = vunpack.c.l.b16 %v248
  %v1586 = vunpack.c.h.b16 %v248
  %v1587 = vunpack.c.l.b16 %v249
  %v1588 = vunpack.c.h.b16 %v249
  %v1589 = vunpack.c.l.b16 %v250
  %v1590 = vunpack.c.h.b16 %v250
  %v1591 = vunpack.c.l.b16 %v251
  %v1592 = vunpack.c.h.b16 %v251
  %v1593 = vunpack.c.l.b16 %v252
  %v1594 = vunpack.c.h.b16 %v252
  %v1595 = vunpack.c.l.b16 %v253
  %v1596 = vunpack.c.h.b16 %v253
  %v1597 = vunpack.c.l.b16 %v254
  %v1598 = vunpack.c.h.b16 %v254
  %v1599 = vunpack.c.l.b16 %v255
  %v1600 = vunpack.c.h.b16 %v255
  %v1601 = vunpack.c.l.b16 %v256
  %v1602 = vunpack.c.h.b16 %v256
  %v1603 = vunpack.c.l.b16 %v257
  %v1604 = vunpack.c.h.b16 %v257
  %v1605 = vunpack.c.l.b16 %v258
  %v1606 = vunpack.c.h.b16 %v258
  %v1607 = vunpack.c.l.b16 %v259
  %v1608 = vunpack.c.h.b16 %v259
  %v1609 = vunpack.c.l.b16 %v260
  %v1610 = vunpack.c.h.b16 %v260
  %v1611 = vunpack.c.l.b16 %v261
  %v1612 = vunpack.c.h.b16 %v261
  %v1613 = vunpack.c.l.b16 %v262
  %v1614 = vunpack.c.h.b16 %v262
  %v1615 = vunpack.c.l.b16 %v263
  %v1616 = vunpack.c.h.b16 %v263
  %v1617 = vunpack.c.l.b16 %v264
  %v1618 = vunpack.c.h.b16 %v264
  %v1619 = vunpack.c.l.b16 %v265
  %v1620 = vunpack.c.h.b16 %v265
  %v1621 = vunpack.c.l.b16 %v266
  %v1622 = vunpack.c.h.b16 %v266
  %v1623 = vunpack.c.l.b16 %v267
  %v1624 = vunpack.c.h.b16 %v267
  %v1625 = vunpack.c.l.b16 %v268
  %v1626 = vunpack.c.h.b16 %v268
  %v1627 = vunpack.c.l.b16 %v269
  %v1628 = vunpack.c.h.b16 %v269
  %v1629 = vunpack.c.l.b16 %v270
  %v1630 = vunpack.c.h.b16 %v270
  %v1631 = vunpack.c.l.b16 %v271
  %v1632 = vunpack.c.h.b16 %v271
  %v1633 = vunpack.c.l.b16 %v272
  %v1634 = vunpack.c.h.b16 %v272
  %v1635 = vunpack.c.l.b16 %v273
  %v1636 = vunpack.c.h.b16 %v273
  %v1637 = vunpack.c.l.b16 %v274
  %v1638 = vunpack.c.h.b16 %v274
  %v1639 = vunpack.c.l.b16 %v275
  %v1640 = vunpack.c.h.b16 %v275
  %v1641 = vunpack.c.l.b16 %v276
  %v1642 = vunpack.c.h.b16 %v276
  %v1643 = vunpack.c.l.b16 %v277
  %v1644 = vunpack.c.h.b16 %v277
  %v1645 = vunpack.c.l.b16 %v278
  %v1646 = vunpack.c.h.b16 %v278
  %v1647 = vunpack.c.l.b16 %v279
  %v1648 = vunpack.c.h.b16 %v279
  %v1649 = vunpack.c.l.b16 %v280
  %v1650 = vunpack.c.h.b16 %v280
  %v1651 = vunpack.c.l.b16 %v281
  %v1652 = vunpack.c.h.b16 %v281
  %v1653 = vunpack.c.l.b16 %v282
  %v1654 = vunpack.c.h.b16 %v282
  %v1655 = vunpack.c.l.b16 %v283
  %v1656 = vunpack.c.h.b16 %v283
  %v1657 = vunpack.c.l.b16 %v284
  %v1658 = vunpack.c.h.b16 %v284
  %v1659 = vunpack.c.l.b16 %v285
  %v1660 = vunpack.c.h.b16 %v285
  %v1661 = vunpack.c.l.b16 %v286
  %v1662 = vunpack.c.h.b16 %v286
  %v1663 = vunpack.c.l.b16 %v287
  %v1664 = vunpack.c.h.b16 %v287
  %v1665 = vunpack.c.l.b16 %v288
  %v1666 = vunpack.c.h.b16 %v288
  %v1667 = vunpack.c.l.b16 %v289
  %v1668 = vunpack.c.h.b16 %v289
  %v1669 = vunpack.c.l.b16 %v290
  %v1670 = vunpack.c.h.b16 %v290
  %v1671 = vunpack.c.l.b16 %v291
  %v1672 = vunpack.c.h.b16 %v291
  %v1673 = vunpack.c.l.b16 %v292
  %v1674 = vunpack.c.h.b16 %v292
  %v1675 = vunpack.c.l.b16 %v293
  %v1676 = vunpack.c.h.b16 %v293
  %v1677 = vunpack.c.l.b16 %v294
  %v1678 = vunpack.c.h.b16 %v294
  %v1679 = vunpack.c.l.b16 %v295
  %v1680 = vunpack.c.h.b16 %v295
  %v1681 = vunpack.c.l.b16 %v296
  %v1682 = vunpack.c.h.b16 %v296
  %v1683 = vunpack.c.l.b16 %v297
  %v1684 = vunpack.c.h.b16 %v297
  %v1685 = vunpack.c.l.b16 %v298
  %v1686 = vunpack.c.h.b16 %v298
  %v1687 = vunpack.c.l.b16 %v299
  %v1688 = vunpack.c.h.b16 %v299
  %v1689 = vunpack.c.l.b16 %v300
  %v1690 = vunpack.c.h.b16 %v300
  %v1691 = vunpack.c.l.b16 %v301
  %v1692 = vunpack.c.h.b16 %v301
  %v1693 = vunpack.c.l.b16 %v302
  %v1694 = vunpack.c.h.b16 %v302
  %v1695 = vunpack.c.l.b16 %v303
  %v1696 = vunpack.c.h.b16 %v303
  %v1697 = vunpack.c.l.b16 %v304
  %v1698 = vunpack.c.h.b16 %v304
  %v1699 = vunpack.c.l.b16 %v305
  %v1700 = vunpack.c.h.b16 %v305
  %v1701 = vunpack.c.l.b16 %v306
  %v1702 = vunpack.c.h.b16 %v306
  %v1703 = vunpack.c.l.b16 %v307
  %v1704 = vunpack.c.h.b16 %v307
  %v1705 = vunpack.c.l.b16 %v308
  %v1706 = vunpack.c.h.b16 %v308
  %v1707 = vunpack.c.l.b16 %v309
  %v1708 = vunpack.c.h.b16 %v309
  %v1709 = vunpack.c.l.b16 %v310
  %v1710 = vunpack.c.h.b16 %v310
  %v1711 = vunpack.c.l.b16 %v311
  %v1712 = vunpack.c.h.b16 %v311
  %v1713 = vunpack.c.l.b16 %v312
  %v1714 = vunpack.c.h.b16 %v312
  %v1715 = vunpack.c.l.b16 %v313
  %v1716 = vunpack.c.h.b16 %v313
  %v1717 = vunpack.c.l.b16 %v314
  %v1718 = vunpack.c.h.b16 %v314
  %v1719 = vunpack.c.l.b16 %v315
  %v1720 = vunpack.c.h.b16 %v315
  %v1721 = vunpack.c.l.b16 %v316
  %v1722 = vunpack.c.h.b16 %v316
  %v1723 = vunpack.c.l.b16 %v317
  %v1724 = vunpack.c.h.b16 %v317
  %v1725 = vunpack.c.l.b16 %v318
  %v1726 = vunpack.c.h.b16 %v318
  %v1727 = vunpack.c.l.b16 %v319
  %v1728 = vunpack.c.h.b16 %v319
  %v1729 = vunpack.c.l.b16 %v320
  %v1730 = vunpack.c.h.b16 %v320
  %v1731 = vunpack.c.l.b16 %v321
  %v1732 = vunpack.c.h.b16 %v321
  %v1733 = vunpack.c.l.b16 %v322
  %v1734 = vunpack.c.h.b16 %v322
  %v1735 = vunpack.c.l.b16 %v323
  %v1736 = vunpack.c.h.b16 %v323
  %v1737 = vunpack.c.l.b16 %v324
  %v1738 = vunpack.c.h.b16 %v324
  %v1739 = vunpack.c.l.b16 %v325
  %v1740 = vunpack.c.h.b16 %v325
  %v1741 = vunpack.c.l.b16 %v326
  %v1742 = vunpack.c.h.b16 %v326
  %v1743 = vunpack.c.l.b16 %v327
  %v1744 = vunpack.c.h.b16 %v327
  %v1745 = vunpack.c.l.b16 %v328
  %v1746 = vunpack.c.h.b16 %v328
  %v1747 = vunpack.c.l.b16 %v329
  %v1748 = vunpack.c.h.b16 %v329
  %v1749 = vunpack.c.l.b16 %v330
  %v1750 = vunpack.c.h.b16 %v330
  %v1751 = vunpack.c.l.b16 %v331
  %v1752 = vunpack.c.h.b16 %v331
  %v1753 = vunpack.c.l.b16 %v332
  %v1754 = vunpack.c.h.b16 %v332
  %v1755 = vunpack.c.l.b16 %v333
  %v1756 = vunpack.c.h.b16 %v333
  %v1757 = vunpack.c.l.b16 %v334
  %v1758 = vunpack.c.h.b16 %v334
  %v1759 = vunpack.c.l.b16 %v335
  %v1760 = vunpack.c.h.b16 %v335
  %v1761 = vunpack.c.l.b16 %v336
  %v1762 = vunpack.c.h.b16 %v336
  %v1763 = vunpack.c.l.b16 %v337
  %v1764 = vunpack.c.h.b16 %v337
  %v1765 = vunpack.c.l.b16 %v338
  %v1766 = vunpack.c.h.b16 %v338
  %v1767 = vunpack.c.l.b16 %v339
  %v1768 = vunpack.c.h.b16 %v339
  %v1769 = vunpack.c.l.b16 %v340
  %v1770 = vunpack.c.h.b16 %v340
  %v1771 = vunpack.c.l.b16 %v341
  %v1772 = vunpack.c.h.b16 %v341
  %v1773 = vunpack.c.l.b16 %v342
  %v1774 = vunpack.c.h.b16 %v342
  %v1775 = vunpack.c.l.b16 %v343
  %v1776 = vunpack.c.h.b16 %v343
  %v1777 = vunpack.c.l.b16 %v344
  %v1778 = vunpack.c.h.b16 %v344
  %v1779 = vunpack.c.l.b16 %v345
  %v1780 = vunpack.c.h.b16 %v345
  %v1781 = vunpack.c.l.b16 %v346
  %v1782 = vunpack.c.h.b16 %v346
  %v1783 = vunpack.c.l.b16 %v347
  %v1784 = vunpack.c.h.b16 %v347
  %v1785 = vunpack.c.l.b16 %v348
  %v1786 = vunpack.c.h.b16 %v348
  %v1787 = vunpack.c.l.b16 %v349
  %v1788 = vunpack.c.h.b16 %v349
  %v1789 = vunpack.c.l.b16 %v350
  %v1790 = vunpack.c.h.b16 %v350
  %v1791 = vunpack.c.l.b16 %v351
  %v1792 = vunpack.c.h.b16 %v351
  %v1793 = vunpack.c.l.b16 %v352
  %v1794 = vunpack.c.h.b16 %v352
  %v1795 = vunpack.c.l.b16 %v353
  %v1796 = vunpack.c.h.b16 %v353
  %v1797 = vunpack.c.l.b16 %v354
  %v1798 = vunpack.c.h.b16 %v354
  %v1799 = vunpack.c.l.b16 %v355
  %v1800 = vunpack.c.h.b16 %v355
  %v1801 = vunpack.c.l.b16 %v356
  %v1802 = vunpack.c.h.b16 %v356
  %v1803 = vunpack.c.l.b16 %v357
  %v1804 = vunpack.c.h.b16 %v357
  %v1805 = vunpack.c.l.b16 %v358
  %v1806 = vunpack.c.h.b16 %v358
  %v1807 = vunpack.c.l.b16 %v359
  %v1808 = vunpack.c.h.b16 %v359
  %v1809 = vunpack.c.l.b16 %v360
  %v1810 = vunpack.c.h.b16 %v360
  %v1811 = vunpack.c.l.b16 %v361
  %v1812 = vunpack.c.h.b16 %v361
  %v1813 = vunpack.c.l.b16 %v362
  %v1814 = vunpack.c.h.b16 %v362
  %v1815 = vunpack.c.l.b16 %v363
  %v1816 = vunpack.c.h.b16 %v363
  %v1817 = vunpack.c.l.b16 %v364
  %v1818 = vunpack.c.h.b16 %v364
  %v1819 = vunpack.c.l.b16 %v365
  %v1820 = vunpack.c.h.b16 %v365
  %v1821 = vunpack.c.l.b16 %v366
  %v1822 = vunpack.c.h.b16 %v366
  %v1823 = vunpack.c.l.b16 %v367
  %v1824 = vunpack.c.h.b16 %v367
  %v1825 = vunpack.c.l.b16 %v368
  %v1826 = vunpack.c.h.b16 %v368
  %v1827 = vunpack.c.l.b16 %v369
  %v1828 = vunpack.c.h.b16 %v369
  %v1829 = vunpack.c.l.b16 %v370
  %v1830 = vunpack.c.h.b16 %v370
  %v1831 = vunpack.c.l.b16 %v371
  %v1832 = vunpack.c.h.b16 %v371
  %v1833 = vunpack.c.l.b16 %v372
  %v1834 = vunpack.c.h.b16 %v372
  %v1835 = vunpack.c.l.b16 %v373
  %v1836 = vunpack.c.h.b16 %v373
  %v1837 = vunpack.c.l.b16 %v374
  %v1838 = vunpack.c.h.b16 %v374
  %v1839 = vunpack.c.l.b16 %v375
  %v1840 = vunpack.c.h.b16 %v375
  %v1841 = vunpack.c.l.b16 %v376
  %v1842 = vunpack.c.h.b16 %v376
  %v1843 = vunpack.c.l.b16 %v377
  %v1844 = vunpack.c.h.b16 %v377
  %v1845 = vunpack.c.l.b16 %v378
  %v1846 = vunpack.c.h.b16 %v378
  %v1847 = vunpack.c.l.b16 %v379
  %v1848 = vunpack.c.h.b16 %v379
  %v1849 = vunpack.c.l.b16 %v380
  %v1850 = vunpack.c.h.b16 %v380
  %v1851 = vunpack.c.l.b16 %v381
  %v1852 = vunpack.c.h.b16 %v381
  %v1853 = vunpack.c.l.b16 %v382
  %v1854 = vunpack.c.h.b16 %v382
  %v1855 = vunpack.c.l.b16 %v383
  %v1856 = vunpack.c.h.b16 %v383
  %v1857 = vunpack.c.l.b16 %v384
  %v1858 = vunpack.c.h.b16 %v384
  %v1859 = vunpack.c.l.b16 %v385
  %v1860 = vunpack.c.h.b16 %v385
  %v1861 = vunpack.c.l.b16 %v386
  %v1862 = vunpack.c.h.b16 %v386
  %v1863 = vunpack.c.l.b16 %v387
  %v1864 = vunpack.c.h.b16 %v387
  %v1865 = vunpack.c.l.b16 %v388
  %v1866 = vunpack.c.h.b16 %v388
  %v1867 = vunpack.c.l.b16 %v389
  %v1868 = vunpack.c.h.b16 %v389
  %v1869 = vunpack.c.l.b16 %v390
  %v1870 = vunpack.c.h.b16 %v390
  %v1871 = vunpack.c.l.b16 %v391
  %v1872 = vunpack.c.h.b16 %v391
  %v1873 = vunpack.c.l.b16 %v392
  %v1874 = vunpack.c.h.b16 %v392
  %v1875 = vunpack.c.l.b16 %v393
  %v1876 = vunpack.c.h.b16 %v393
  %v1877 = vunpack.c.l.b16 %v394
  %v1878 = vunpack.c.h.b16 %v394
  %v1879 = vunpack.c.l.b16 %v395
  %v1880 = vunpack.c.h.b16 %v395
  %v1881 = vunpack.c.l.b16 %v396
  %v1882 = vunpack.c.h.b16 %v396
  %v1883 = vunpack.c.l.b16 %v397
  %v1884 = vunpack.c.h.b16 %v397
  %v1885 = vunpack.c.l.b16 %v398
  %v1886 = vunpack.c.h.b16 %v398
  %v1887 = vunpack.c.l.b16 %v399
  %v1888 = vunpack.c.h.b16 %v399
  %v1889 = vunpack.c.l.b16 %v400
  %v1890 = vunpack.c.h.b16 %v400
  %v1891 = vunpack.c.l.b16 %v401
  %v1892 = vunpack.c.h.b16 %v401
  %v1893 = vunpack.c.l.b16 %v402
  %v1894 = vunpack.c.h.b16 %v402
  %v1895 = vunpack.c.l.b16 %v403
  %v1896 = vunpack.c.h.b16 %v403
  %v1897 = vunpack.c.l.b16 %v404
  %v1898 = vunpack.c.h.b16 %v404
  %v1899 = vunpack.c.l.b16 %v405
  %v1900 = vunpack.c.h.b16 %v405
  %v1901 = vunpack.c.l.b16 %v406
  %v1902 = vunpack.c.h.b16 %v406
  %v1903 = vunpack.c.l.b16 %v407
  %v1904 = vunpack.c.h.b16 %v407
  %v1905 = vunpack.c.l.b16 %v408
  %v1906 = vunpack.c.h.b16 %v408
  %v1907 = vunpack.c.l.b16 %v409
  %v1908 = vunpack.c.h.b16 %v409
  %v1909 = vunpack.c.l.b16 %v410
  %v1910 = vunpack.c.h.b16 %v410
  %v1911 = vunpack.c.l.b16 %v411
  %v1912 = vunpack.c.h.b16 %v411
  %v1913 = vunpack.c.l.b16 %v412
  %v1914 = vunpack.c.h.b16 %v412
  %v1915 = vunpack.c.l.b16 %v413
  %v1916 = vunpack.c.h.b16 %v413
  %v1917 = vunpack.c.l.b16 %v414
  %v1918 = vunpack.c.h.b16 %v414
  %v1919 = vpack.c.b16 %v1121, %v1119
  %v1920 = vpack.c.b16 %v1122, %v1120
  %v1921 = vpack.c.b16 %v1125, %v1123
  %v1922 = vpack.c.b16 %v1126, %v1124
  %v1923 = vpack.c.b16 %v1129, %v1127
  %v1924 = vpack.c.b16 %v1130, %v1128
  %v1925 = vpack.c.b16 %v1133, %v1131
  %v1926 = vpack.c.b16 %v1134, %v1132
  %v1927 = vpack.c.b16 %v1137, %v1135
  %v1928 = vpack.c.b16 %v1138, %v1136
  %v1929 = vpack.c.b16 %v1141, %v1139
  %v1930 = vpack.c.b16 %v1142, %v1140
  %v1931 = vpack.c.b16 %v1145, %v1143
  %v1932 = vpack.c.b16 %v1146, %v1144
  %v1933 = vpack.c.b16 %v1149, %v1147
  %v1934 = vpack.c.b16 %v1150, %v1148
  %v1935 = vpack.c.b16 %v1153, %v1151
  %v1936 = vpack.c.b16 %v1154, %v1152
  %v1937 = vpack.c.b16 %v1157, %v1155
  %v1938 = vpack.c.b16 %v1158, %v1156
  %v1939 = vpack.c.b16 %v1161, %v1159
  %v1940 = vpack.c.b16 %v1162, %v1160
  %v1941 = vpack.c.b16 %v1165, %v1163
  %v1942 = vpack.c.b16 %v1166, %v1164
  %v1943 = vpack.c.b16 %v1169, %v1167
  %v1944 = vpack.c.b16 %v1170, %v1168
  %v1945 = vpack.c.b16 %v1173, %v1171
  %v1946 = vpack.c.b16 %v1174, %v1172
  %v1947 = vpack.c.b16 %v1177, %v1175
  %v1948 = vpack.c.b16 %v1178, %v1176
  %v1949 = vpack.c.b16 %v1181, %v1179
  %v1950 = vpack.c.b16 %v1182, %v1180
  %v1951 = vpack.c.b16 %v1185, %v1183
  %v1952 = vpack.c.b16 %v1186, %v1184
  %v1953 = vpack.c.b16 %v1189, %v1187
  %v1954 = vpack.c.b16 %v1190, %v1188
  %v1955 = vpack.c.b16 %v1193, %v1191
  %v1956 = vpack.c.b16 %v1194, %v1192
  %v1957 = vpack.c.b16 %v1197, %v1195
  %v1958 = vpack.c.b16 %v1198, %v1196
  %v1959 = vpack.c.b16 %v1201, %v1199
  %v1960 = vpack.c.b16 %v1202, %v1200
  %v1961 = vpack.c.b16 %v1205, %v1203
  %v1962 = vpack.c.b16 %v1206, %v1204
  %v1963 = vpack.c.b16 %v1209, %v1207
  %v1964 = vpack.c.b16 %v1210, %v1208
  %v1965 = vpack.c.b16 %v1213, %v1211
  %v1966 = vpack.c.b16 %v1214, %v1212
  %v1967 = vpack.c.b16 %v1217, %v1215
  %v1968 = vpack.c.b16 %v1218, %v1216
  %v1969 = vpack.c.b16 %v1221, %v1219
  %v1970 = vpack.c.b16 %v1222, %v1220
  %v1971 = vpack.c.b16 %v1225, %v1223
  %v1972 = vpack.c.b16 %v1226, %v1224
  %v1973 = vpack.c.b16 %v1229, %v1227
  %v1974 = vpack.c.b16 %v1230, %v1228
  %v1975 = vpack.c.b16 %v1233, %v1231
  %v1976 = vpack.c.b16 %v1234, %v1232
  %v1977 = vpack.c.b16 %v1237, %v1235
  %v1978 = vpack.c.b16 %v1238, %v1236
  %v1979 = vpack.c.b16 %v1241, %v1239
  %v1980 = vpack.c.b16 %v1242, %v1240
  %v1981 = vpack.c.b16 %v1245, %v1243
  %v1982 = vpack.c.b16 %v1246, %v1244
  %v1983 = vpack.c.b16 %v1249, %v1247
  %v1984 = vpack.c.b16 %v1250, %v1248
  %v1985 = vpack.c.b16 %v1253, %v1251
  %v1986 = vpack.c.b16 %v1254, %v1252
  %v1987 = vpack.c.b16 %v1257, %v1255
  %v1988 = vpack.c.b16 %v1258, %v1256
  %v1989 = vpack.c.b16 %v1261, %v1259
  %v1990 = vpack.c.b16 %v1262, %v1260
  %v1991 = vpack.c.b16 %v1265, %v1263
  %v1992 = vpack.c.b16 %v1266, %v1264
  %v1993 = vpack.c.b16 %v1269, %v1267
  %v1994 = vpack.c.b16 %v1270, %v1268
  %v1995 = vpack.c.b16 %v1273, %v1271
  %v1996 = vpack.c.b16 %v1274, %v1272
  %v1997 = vpack.c.b16 %v1277, %v1275
  %v1998 = vpack.c.b16 %v1278, %v1276
  %v1999 = vpack.c.b16 %v1281, %v1279
  %v2000 = vpack.c.b16 %v1282, %v1280
  %v2001 = vpack.c.b16 %v1285, %v1283
  %v2002 = vpack.c.b16 %v1286, %v1284
  %v2003 = vpack.c.b16 %v1289, %v1287
  %v2004 = vpack.c.b16 %v1290, %v1288
  %v2005 = vpack.c.b16 %v1293, %v1291
  %v2006 = vpack.c.b16 %v1294, %v1292
  %v2007 = vpack.c.b16 %v1297, %v1295
  %v2008 = vpack.c.b16 %v1298, %v1296
  %v2009 = vpack.c.b16 %v1301, %v1299
  %v2010 = vpack.c.b16 %v1302, %v1300
  %v2011 = vpack.c.b16 %v1305, %v1303
  %v2012 = vpack.c.b16 %v1306, %v1304
  %v2013 = vpack.c.b16 %v1309, %v1307
  %v2014 = vpack.c.b16 %v1310, %v1308
  %v2015 = vpack.c.b16 %v1313, %v1311
  %v2016 = vpack.c.b16 %v1314, %v1312
  %v2017 = vpack.c.b16 %v1317, %v1315
  %v2018 = vpack.c.b16 %v1318, %v1316
  %v2019 = vpack.c.b16 %v1321, %v1319
  %v2020 = vpack.c.b16 %v1322, %v1320
  %v2021 = vpack.c.b16 %v1325, %v1323
  %v2022 = vpack.c.b16 %v1326, %v1324
  %v2023 = vpack.c.b16 %v1329, %v1327
  %v2024 = vpack.c.b16 %v1330, %v1328
  %v2025 = vpack.c.b16 %v1333, %v1331
  %v2026 = vpack.c.b16 %v1334, %v1332
  %v2027 = vpack.c.b16 %v1337, %v1335
  %v2028 = vpack.c.b16 %v1338, %v1336
  %v2029 = vpack.c.b16 %v1341, %v1339
  %v2030 = vpack.c.b16 %v1342, %v1340
  %v2031 = vpack.c.b16 %v1345, %v1343
  %v2032 = vpack.c.b16 %v1346, %v1344
  %v2033 = vpack.c.b16 %v1349, %v1347
  %v2034 = vpack.c.b16 %v1350, %v1348
  %v2035 = vpack.c.b16 %v1353, %v1351
  %v2036 = vpack.c.b16 %v1354, %v1352
  %v2037 = vpack.c.b16 %v1357, %v1355
  %v2038 = vpack.c.b16 %v1358, %v1356
  %v2039 = vpack.c.b16 %v1361, %v1359
  %v2040 = vpack.c.b16 %v1362, %v1360
  %v2041 = vpack.c.b16 %v1365, %v1363
  %v2042 = vpack.c.b16 %v1366, %v1364
  %v2043 = vpack.c.b16 %v1369, %v1367
  %v2044 = vpack.c.b16 %v1370, %v1368
  %v2045 = vpack.c.b16 %v1373, %v1371
  %v2046 = vpack.c.b16 %v1374, %v1372
  %v2047 = vpack.c.b16 %v1377, %v1375
  %v2048 = vpack.c.b16 %v1378, %v1376
  %v2049 = vpack.c.b16 %v1381, %v1379
  %v2050 = vpack.c.b16 %v1382, %v1380
  %v2051 = vpack.c.b16 %v1385, %v1383
  %v2052 = vpack.c.b16 %v1386, %v1384
  %v2053 = vpack.c.b16 %v1389, %v1387
  %v2054 = vpack.c.b16 %v1390, %v1388
  %v2055 = vpack.c.b16 %v1393, %v1391
  %v2056 = vpack.c.b16 %v1394, %v1392
  %v2057 = vpack.c.b16 %v1397, %v1395
  %v2058 = vpack.c.b16 %v1398, %v1396
  %v2059 = vpack.c.b16 %v1401, %v1399
  %v2060 = vpack.c.b16 %v1402, %v1400
  %v2061 = vpack.c.b16 %v1405, %v1403
  %v2062 = vpack.c.b16 %v1406, %v1404
  %v2063 = vpack.c.b16 %v1409, %v1407
  %v2064 = vpack.c.b16 %v1410, %v1408
  %v2065 = vpack.c.b16 %v1413, %v1411
  %v2066 = vpack.c.b16 %v1414, %v1412
  %v2067 = vpack.c.b16 %v1417, %v1415
  %v2068 = vpack.c.b16 %v1418, %v1416
  %v2069 = vpack.c.b16 %v1421, %v1419
  %v2070 = vpack.c.b16 %v1422, %v1420
  %v2071 = vpack.c.b16 %v1425, %v1423
  %v2072 = vpack.c.b16 %v1426, %v1424
  %v2073 = vpack.c.b16 %v1429, %v1427
  %v2074 = vpack.c.b16 %v1430, %v1428
  %v2075 = vpack.c.b16 %v1433, %v1431
  %v2076 = vpack.c.b16 %v1434, %v1432
  %v2077 = vpack.c.b16 %v1437, %v1435
  %v2078 = vpack.c.b16 %v1438, %v1436
  %v2079 = vpack.c.b16 %v1441, %v1439
  %v2080 = vpack.c.b16 %v1442, %v1440
  %v2081 = vpack.c.b16 %v1445, %v1443
  %v2082 = vpack.c.b16 %v1446, %v1444
  %v2083 = vpack.c.b16 %v1449, %v1447
  %v2084 = vpack.c.b16 %v1450, %v1448
  %v2085 = vpack.c.b16 %v1453, %v1451
  %v2086 = vpack.c.b16 %v1454, %v1452
  %v2087 = vpack.c.b16 %v1457, %v1455
  %v2088 = vpack.c.b16 %v1458, %v1456
  %v2089 = vpack.c.b16 %v1461, %v1459
  %v2090 = vpack.c.b16 %v1462, %v1460
  %v2091 = vpack.c.b16 %v1465, %v1463
  %v2092 = vpack.c.b16 %v1466, %v1464
  %v2093 = vpack.c.b16 %v1469, %v1467
  %v2094 = vpack.c.b16 %v1470, %v1468
  %v2095 = vpack.c.b16 %v1473, %v1471
  %v2096 = vpack.c.b16 %v1474, %v1472
  %v2097 = vpack.c.b16 %v1477, %v1475
  %v2098 = vpack.c.b16 %v1478, %v1476
  %v2099 = vpack.c.b16 %v1481, %v1479
  %v2100 = vpack.c.b16 %v1482, %v1480
  %v2101 = vpack.c.b16 %v1485, %v1483
  %v2102 = vpack.c.b16 %v1486, %v1484
  %v2103 = vpack.c.b16 %v1489, %v1487
  %v2104 = vpack.c.b16 %v1490, %v1488
  %v2105 = vpack.c.b16 %v1493, %v1491
  %v2106 = vpack.c.b16 %v1494, %v1492
  %v2107 = vpack.c.b16 %v1497, %v1495
  %v2108 = vpack.c.b16 %v1498, %v1496
  %v2109 = vpack.c.b16 %v1501, %v1499
  %v2110 = vpack.c.b16 %v1502, %v1500
  %v2111 = vpack.c.b16 %v1505, %v1503
  %v2112 = vpack.c.b16 %v1506, %v1504
  %v2113 = vpack.c.b16 %v1509, %v1507
  %v2114 = vpack.c.b16 %v1510, %v1508
  %v2115 = vpack.c.b16 %v1513, %v1511
  %v2116 = vpack.c.b16 %v1514, %v1512
  %v2117 = vpack.c.b16 %v1517, %v1515
  %v2118 = vpack.c.b16 %v1518, %v1516
  %v2119 = vpack.c.b16 %v1521, %v1519
  %v2120 = vpack.c.b16 %v1522, %v1520
  %v2121 = vpack.c.b16 %v1525, %v1523
  %v2122 = vpack.c.b16 %v1526, %v1524
  %v2123 = vpack.c.b16 %v1529, %v1527
  %v2124 = vpack.c.b16 %v1530, %v1528
  %v2125 = vpack.c.b16 %v1533, %v1531
  %v2126 = vpack.c.b16 %v1534, %v1532
  %v2127 = vpack.c.b16 %v1537, %v1535
  %v2128 = vpack.c.b16 %v1538, %v1536
  %v2129 = vpack.c.b16 %v1541, %v1539
  %v2130 = vpack.c.b16 %v1542, %v1540
  %v2131 = vpack.c.b16 %v1545, %v1543
  %v2132 = vpack.c.b16 %v1546, %v1544
  %v2133 = vpack.c.b16 %v1549, %v1547
  %v2134 = vpack.c.b16 %v1550, %v1548
  %v2135 = vpack.c.b16 %v1553, %v1551
  %v2136 = vpack.c.b16 %v1554, %v1552
  %v2137 = vpack.c.b16 %v1557, %v1555
  %v2138 = vpack.c.b16 %v1558, %v1556
  %v2139 = vpack.c.b16 %v1561, %v1559
  %v2140 = vpack.c.b16 %v1562, %v1560
  %v2141 = vpack.c.b16 %v1565, %v1563
  %v2142 = vpack.c.b16 %v1566, %v1564
  %v2143 = vpack.c.b16 %v1569, %v1567
  %v2144 = vpack.c.b16 %v1570, %v1568
  %v2145 = vpack.c.b16 %v1573, %v1571
  %v2146 = vpack.c.b16 %v1574, %v1572
  %v2147 = vpack.c.b16 %v1577, %v1575
  %v2148 = vpack.c.b16 %v1578, %v1576
  %v2149 = vpack.c.b16 %v1581, %v1579
  %v2150 = vpack.c.b16 %v1582, %v1580
  %v2151 = vpack.c.b16 %v1585, %v1583
  %v2152 = vpack.c.b16 %v1586, %v1584
  %v2153 = vpack.c.b16 %v1589, %v1587
  %v2154 = vpack.c.b16 %v1590, %v1588
  %v2155 = vpack.c.b16 %v1593, %v1591
  %v2156 = vpack.c.b16 %v1594, %v1592
  %v2157 = vpack.c.b16 %v1597, %v1595
  %v2158 = vpack.c.b16 %v1598, %v1596
  %v2159 = vpack.c.b16 %v1601, %v1599
  %v2160 = vpack.c.b16 %v1602, %v1600
  %v2161 = vpack.c.b16 %v1605, %v1603
  %v2162 = vpack.c.b16 %v1606, %v1604
  %v2163 = vpack.c.b16 %v1609, %v1607
  %v2164 = vpack.c.b16 %v1610, %v1608
  %v2165 = vpack.c.b16 %v1613, %v1611
  %v2166 = vpack.c.b16 %v1614, %v1612
  %v2167 = vpack.c.b16 %v1617, %v1615
  %v2168 = vpack.c.b16 %v1618, %v1616
  %v2169 = vpack.c.b16 %v1621, %v1619
  %v2170 = vpack.c.b16 %v1622, %v1620
  %v2171 = vpack.c.b16 %v1625, %v1623
  %v2172 = vpack.c.b16 %v1626, %v1624
  %v2173 = vpack.c.b16 %v1629, %v1627
  %v2174 = vpack.c.b16 %v1630, %v1628
  %v2175 = vpack.c.b16 %v1633, %v1631
  %v2176 = vpack.c.b16 %v1634, %v1632
  %v2177 = vpack.c.b16 %v1637, %v1635
  %v2178 = vpack.c.b16 %v1638, %v1636
  %v2179 = vpack.c.b16 %v1641, %v1639
  %v2180 = vpack.c.b16 %v1642, %v1640
  %v2181 = vpack.c.b16 %v1645, %v1643
  %v2182 = vpack.c.b16 %v1646, %v1644
  %v2183 = vpack.c.b16 %v1649, %v1647
  %v2184 = vpack.c.b16 %v1650, %v1648
  %v2185 = vpack.c.b16 %v1653, %v1651
  %v2186 = vpack.c.b16 %v1654, %v1652
  %v2187 = vpack.c.b16 %v1657, %v1655
  %v2188 = vpack.c.b16 %v1658, %v1656
  %v2189 = vpack.c.b16 %v1661, %v1659
  %v2190 = vpack.c.b16 %v1662, %v1660
  %v2191 = vpack.c.b16 %v1665, %v1663
  %v2192 = vpack.c.b16 %v1666, %v1664
  %v2193 = vpack.c.b16 %v1669, %v1667
  %v2194 = vpack.c.b16 %v1670, %v1668
  %v2195 = vpack.c.b16 %v1673, %v1671
  %v2196 = vpack.c.b16 %v1674, %v1672
  %v2197 = vpack.c.b16 %v1677, %v1675
  %v2198 = vpack.c.b16 %v1678, %v1676
  %v2199 = vpack.c.b16 %v1681, %v1679
  %v2200 = vpack.c.b16 %v1682, %v1680
  %v2201 = vpack.c.b16 %v1685, %v1683
  %v2202 = vpack.c.b16 %v1686, %v1684
  %v2203 = vpack.c.b16 %v1689, %v1687
  %v2204 = vpack.c.b16 %v1690, %v1688
  %v2205 = vpack.c.b16 %v1693, %v1691
  %v2206 = vpack.c.b16 %v1694, %v1692
  %v2207 = vpack.c.b16 %v1697, %v1695
  %v2208 = vpack.c.b16 %v1698, %v1696
  %v2209 = vpack.c.b16 %v1701, %v1699
  %v2210 = vpack.c.b16 %v1702, %v1700
  %v2211 = vpack.c.b16 %v1705, %v1703
  %v2212 = vpack.c.b16 %v1706, %v1704
  %v2213 = vpack.c.b16 %v1709, %v1707
  %v2214 = vpack.c.b16 %v1710, %v1708
  %v2215 = vpack.c.b16 %v1713, %v1711
  %v2216 = vpack.c.b16 %v1714, %v1712
  %v2217 = vpack.c.b16 %v1717, %v1715
  %v2218 = vpack.c.b16 %v1718, %v1716
  %v2219 = vpack.c.b16 %v1721, %v1719
  %v2220 = vpack.c.b16 %v1722, %v1720
  %v2221 = vpack.c.b16 %v1725, %v1723
  %v2222 = vpack.c.b16 %v1726, %v1724
  %v2223 = vpack.c.b16 %v1729, %v1727
  %v2224 = vpack.c.b16 %v1730, %v1728
  %v2225 = vpack.c.b16 %v1733, %v1731
  %v2226 = vpack.c.b16 %v1734, %v1732
  %v2227 = vpack.c.b16 %v1737, %v1735
  %v2228 = vpack.c.b16 %v1738, %v1736
  %v2229 = vpack.c.b16 %v1741, %v1739
  %v2230 = vpack.c.b16 %v1742, %v1740
  %v2231 = vpack.c.b16 %v1745, %v1743
  %v2232 = vpack.c.b16 %v1746, %v1744
  %v2233 = vpack.c.b16 %v1749, %v1747
  %v2234 = vpack.c.b16 %v1750, %v1748
  %v2235 = vpack.c.b16 %v1753, %v1751
  %v2236 = vpack.c.b16 %v1754, %v1752
  %v2237 = vpack.c.b16 %v1757, %v1755
  %v2238 = vpack.c.b16 %v1758, %v1756
  %v2239 = vpack.c.b16 %v1761, %v1759
  %v2240 = vpack.c.b16 %v1762, %v1760
  %v2241 = vpack.c.b16 %v1765, %v1763
  %v2242 = vpack.c.b16 %v1766, %v1764
  %v2243 = vpack.c.b16 %v1769, %v1767
  %v2244 = vpack.c.b16 %v1770, %v1768
  %v2245 = vpack.c.b16 %v1773, %v1771
  %v2246 = vpack.c.b16 %v1774, %v1772
  %v2247 = vpack.c.b16 %v1777, %v1775
  %v2248 = vpack.c.b16 %v1778, %v1776
  %v2249 = vpack.c.b16 %v1781, %v1779
  %v2250 = vpack.c.b16 %v1782, %v1780
  %v2251 = vpack.c.b16 %v1785, %v1783
  %v2252 = vpack.c.b16 %v1786, %v1784
  %v2253 = vpack.c.b16 %v1789, %v1787
  %v2254 = vpack.c.b16 %v1790, %v1788
  %v2255 = vpack.c.b16 %v1793, %v1791
  %v2256 = vpack.c.b16 %v1794, %v1792
  %v2257 = vpack.c.b16 %v1797, %v1795
  %v2258 = vpack.c.b16 %v1798, %v1796
  %v2259 = vpack.c.b16 %v1801, %v1799
  %v2260 = vpack.c.b16 %v1802, %v1800
  %v2261 = vpack.c.b16 %v1805, %v1803
  %v2262 = vpack.c.b16 %v1806, %v1804
  %v2263 = vpack.c.b16 %v1809, %v1807
  %v2264 = vpack.c.b16 %v1810, %v1808
  %v2265 = vpack.c.b16 %v1813, %v1811
  %v2266 = vpack.c.b16 %v1814, %v1812
  %v2267 = vpack.c.b16 %v1817, %v1815
  %v2268 = vpack.c.b16 %v1818, %v1816
  %v2269 = vpack.c.b16 %v1821, %v1819
  %v2270 = vpack.c.b16 %v1822, %v1820
  %v2271 = vpack.c.b16 %v1825, %v1823
  %v2272 = vpack.c.b16 %v1826, %v1824
  %v2273 = vpack.c.b16 %v1829, %v1827
  %v2274 = vpack.c.b16 %v1830, %v1828
  %v2275 = vpack.c.b16 %v1833, %v1831
  %v2276 = vpack.c.b16 %v1834, %v1832
  %v2277 = vpack.c.b16 %v1837, %v1835
  %v2278 = vpack.c.b16 %v1838, %v1836
  %v2279 = vpack.c.b16 %v1841, %v1839
  %v2280 = vpack.c.b16 %v1842, %v1840
  %v2281 = vpack.c.b16 %v1845, %v1843
  %v2282 = vpack.c.b16 %v1846, %v1844
  %v2283 = vpack.c.b16 %v1849, %v1847
  %v2284 = vpack.c.b16 %v1850, %v1848
  %v2285 = vpack.c.b16 %v1853, %v1851
  %v2286 = vpack.c.b16 %v1854, %v1852
  %v2287 = vpack.c.b16 %v1857, %v1855
  %v2288 = vpack.c.b16 %v1858, %v1856
  %v2289 = vpack.c.b16 %v1861, %v1859
  %v2290 = vpack.c.b16 %v1862, %v1860
  %v2291 = vpack.c.b16 %v1865, %v1863
  %v2292 = vpack.c.b16 %v1866, %v1864
  %v2293 = vpack.c.b16 %v1869, %v1867
  %v2294 = vpack.c.b16 %v1870, %v1868
  %v2295 = vpack.c.b16 %v1873, %v1871
  %v2296 = vpack.c.b16 %v1874, %v1872
  %v2297 = vpack.c.b16 %v1877, %v1875
  %v2298 = vpack.c.b16 %v1878, %v1876
  %v2299 = vpack.c.b16 %v1881, %v1879
  %v2300 = vpack.c.b16 %v1882, %v1880
  %v2301 = vpack.c.b16 %v1885, %v1883
  %v2302 = vpack.c.b16 %v1886, %v1884
  %v2303 = vpack.c.b16 %v1889, %v1887
  %v2304 = vpack.c.b16 %v1890, %v1888
  %v2305 = vpack.c.b16 %v1893, %v1891
  %v2306 = vpack.c.b16 %v1894, %v1892
  %v2307 = vpack.c.b16 %v1897, %v1895
  %v2308 = vpack.c.b16 %v1898, %v1896
  %v2309 = vpack.c.b16 %v1901, %v1899
  %v2310 = vpack.c.b16 %v1902, %v1900
  %v2311 = vpack.c.b16 %v1905, %v1903
  %v2312 = vpack.c.b16 %v1906, %v1904
  %v2313 = vpack.c.b16 %v1909, %v1907
  %v2314 = vpack.c.b16 %v1910, %v1908
  %v2315 = vpack.c.b16 %v1913, %v1911
  %v2316 = vpack.c.b16 %v1914, %v1912
  %v2317 = vpack.c.b16 %v1917, %v1915
  %v2318 = vpack.c.b16 %v1918, %v1916
  %2719 = vmatprep.subr.bf16.mxu0 %v1920
  %2720 = vmatpush1.bf16.msra.mxu0 %v1919
  %2721 = vmatprep.subr.bf16.mxu0 %v1922
  %2722 = vmatpush1.bf16.msra.mxu0 %v1921
  %2723 = vmatprep.subr.bf16.mxu0 %v1924
  %2724 = vmatpush1.bf16.msra.mxu0 %v1923
  %2725 = vmatprep.subr.bf16.mxu0 %v1926
  %2726 = vmatpush1.bf16.msra.mxu0 %v1925
  %2727 = vmatprep.subr.bf16.mxu0 %v1928
  %2728 = vmatpush1.bf16.msra.mxu0 %v1927
  %2729 = vmatprep.subr.bf16.mxu0 %v1930
  %2730 = vmatpush1.bf16.msra.mxu0 %v1929
  %2731 = vmatprep.subr.bf16.mxu0 %v1932
  %2732 = vmatpush1.bf16.msra.mxu0 %v1931
  %2733 = vmatprep.subr.bf16.mxu0 %v1934
  %2734 = vmatpush1.bf16.msra.mxu0 %v1933
  %2735 = vmatprep.subr.bf16.mxu0 %v1936
  %2736 = vmatpush1.bf16.msra.mxu0 %v1935
  %2737 = vmatprep.subr.bf16.mxu0 %v1938
  %2738 = vmatpush1.bf16.msra.mxu0 %v1937
  %2739 = vmatprep.subr.bf16.mxu0 %v1940
  %2740 = vmatpush1.bf16.msra.mxu0 %v1939
  %2741 = vmatprep.subr.bf16.mxu0 %v1942
  %2742 = vmatpush1.bf16.msra.mxu0 %v1941
  %2743 = vmatprep.subr.bf16.mxu0 %v1944
  %2744 = vmatpush1.bf16.msra.mxu0 %v1943
  %2745 = vmatprep.subr.bf16.mxu0 %v1946
  %2746 = vmatpush1.bf16.msra.mxu0 %v1945
  %2747 = vmatprep.subr.bf16.mxu0 %v1948
  %2748 = vmatpush1.bf16.msra.mxu0 %v1947
  %2749 = vmatprep.subr.bf16.mxu0 %v1950
  %2750 = vmatpush1.bf16.msra.mxu0 %v1949
  %2751 = vmatprep.mubr.bf16.mxu0 %v620
  %2752 = vmatmul.mubr.bf16.gmra.mrb[0].mxu0 %v619
  %v2753 = vpop.f32.mrb[0].mxu0
  %v2754 = vadd.f32 0.0, %v2753
  %v2755 = vpop.f32.mrb[0].mxu0
  %v2756 = vadd.f32 0.0, %v2755
  %v2757 = vpop.f32.mrb[0].mxu0
  %v2758 = vadd.f32 0.0, %v2757
  %v2759 = vpop.f32.mrb[0].mxu0
  %v2760 = vadd.f32 0.0, %v2759
  %2761 = vmatprep.mubr.bf16.mxu0 %v645
  %2762 = vmatmul.mubr.bf16.gmra.mrb[0].mxu0 %v644
  %v2763 = vpop.f32.mrb[0].mxu0
  %v2764 = vadd.f32 0.0, %v2763
  %v2765 = vpop.f32.mrb[0].mxu0
  %v2766 = vadd.f32 0.0, %v2765
  %v2767 = vpop.f32.mrb[0].mxu0
  %v2768 = vadd.f32 0.0, %v2767
  %v2769 = vpop.f32.mrb[0].mxu0
  %v2770 = vadd.f32 0.0, %v2769
  %2771 = vdwg.mxu0
  %2772 = vmatprep.subr.bf16.mxu0 %v1952
  %2773 = vmatpush1.bf16.msra.mxu0 %v1951
  %2774 = vmatprep.subr.bf16.mxu0 %v1954
  %2775 = vmatpush1.bf16.msra.mxu0 %v1953
  %2776 = vmatprep.subr.bf16.mxu0 %v1956
  %2777 = vmatpush1.bf16.msra.mxu0 %v1955
  %2778 = vmatprep.subr.bf16.mxu0 %v1958
  %2779 = vmatpush1.bf16.msra.mxu0 %v1957
  %2780 = vmatprep.subr.bf16.mxu0 %v1960
  %2781 = vmatpush1.bf16.msra.mxu0 %v1959
  %2782 = vmatprep.subr.bf16.mxu0 %v1962
  %2783 = vmatpush1.bf16.msra.mxu0 %v1961
  %2784 = vmatprep.subr.bf16.mxu0 %v1964
  %2785 = vmatpush1.bf16.msra.mxu0 %v1963
  %2786 = vmatprep.subr.bf16.mxu0 %v1966
  %2787 = vmatpush1.bf16.msra.mxu0 %v1965
  %2788 = vmatprep.subr.bf16.mxu0 %v1968
  %2789 = vmatpush1.bf16.msra.mxu0 %v1967
  %2790 = vmatprep.subr.bf16.mxu0 %v1970
  %2791 = vmatpush1.bf16.msra.mxu0 %v1969
  %2792 = vmatprep.subr.bf16.mxu0 %v1972
  %2793 = vmatpush1.bf16.msra.mxu0 %v1971
  %2794 = vmatprep.subr.bf16.mxu0 %v1974
  %2795 = vmatpush1.bf16.msra.mxu0 %v1973
  %2796 = vmatprep.subr.bf16.mxu0 %v1976
  %2797 = vmatpush1.bf16.msra.mxu0 %v1975
  %2798 = vmatprep.subr.bf16.mxu0 %v1978
  %2799 = vmatpush1.bf16.msra.mxu0 %v1977
  %2800 = vmatprep.subr.bf16.mxu0 %v1980
  %2801 = vmatpush1.bf16.msra.mxu0 %v1979
  %2802 = vmatprep.subr.bf16.mxu0 %v1982
  %2803 = vmatpush1.bf16.msra.mxu0 %v1981
  %2804 = vmatprep.mubr.bf16.mxu0 %v622
  %2805 = vmatmul.mubr.bf16.gmra.mrb[0].mxu0 %v621
  %v2806 = vpop.f32.mrb[0].mxu0
  %v2807 = vadd.f32 %v2754, %v2806
  %v2808 = vpop.f32.mrb[0].mxu0
  %v2809 = vadd.f32 %v2756, %v2808
  %v2810 = vpop.f32.mrb[0].mxu0
  %v2811 = vadd.f32 %v2758, %v2810
  %v2812 = vpop.f32.mrb[0].mxu0
  %v2813 = vadd.f32 %v2760, %v2812
  %2814 = vmatprep.mubr.bf16.mxu0 %v647
  %2815 = vmatmul.mubr.bf16.gmra.mrb[0].mxu0 %v646
  %v2816 = vpop.f32.mrb[0].mxu0
  %v2817 = vadd.f32 %v2764, %v2816
  %v2818 = vpop.f32.mrb[0].mxu0
  %v2819 = vadd.f32 %v2766, %v2818
  %v2820 = vpop.f32.mrb[0].mxu0
  %v2821 = vadd.f32 %v2768, %v2820
  %v2822 = vpop.f32.mrb[0].mxu0
  %v2823 = vadd.f32 %v2770, %v2822
  %2824 = vdwg.mxu0
  %2825 = vmatprep.subr.bf16.mxu0 %v1984
  %2826 = vmatpush1.bf16.msra.mxu0 %v1983
  %2827 = vmatprep.subr.bf16.mxu0 %v1986
  %2828 = vmatpush1.bf16.msra.mxu0 %v1985
  %2829 = vmatprep.subr.bf16.mxu0 %v1988
  %2830 = vmatpush1.bf16.msra.mxu0 %v1987
  %2831 = vmatprep.subr.bf16.mxu0 %v1990
  %2832 = vmatpush1.bf16.msra.mxu0 %v1989
  %2833 = vmatprep.subr.bf16.mxu0 %v1992
  %2834 = vmatpush1.bf16.msra.mxu0 %v1991
  %2835 = vmatprep.subr.bf16.mxu0 %v1994
  %2836 = vmatpush1.bf16.msra.mxu0 %v1993
  %2837 = vmatprep.subr.bf16.mxu0 %v1996
  %2838 = vmatpush1.bf16.msra.mxu0 %v1995
  %2839 = vmatprep.subr.bf16.mxu0 %v1998
  %2840 = vmatpush1.bf16.msra.mxu0 %v1997
  %2841 = vmatprep.subr.bf16.mxu0 %v2000
  %2842 = vmatpush1.bf16.msra.mxu0 %v1999
  %2843 = vmatprep.subr.bf16.mxu0 %v2002
  %2844 = vmatpush1.bf16.msra.mxu0 %v2001
  %2845 = vmatprep.subr.bf16.mxu0 %v2004
  %2846 = vmatpush1.bf16.msra.mxu0 %v2003
  %2847 = vmatprep.subr.bf16.mxu0 %v2006
  %2848 = vmatpush1.bf16.msra.mxu0 %v2005
  %2849 = vmatprep.subr.bf16.mxu0 %v2008
  %2850 = vmatpush1.bf16.msra.mxu0 %v2007
  %2851 = vmatprep.subr.bf16.mxu0 %v2010
  %2852 = vmatpush1.bf16.msra.mxu0 %v2009
  %2853 = vmatprep.subr.bf16.mxu0 %v2012
  %2854 = vmatpush1.bf16.msra.mxu0 %v2011
  %2855 = vmatprep.subr.bf16.mxu0 %v2014
  %2856 = vmatpush1.bf16.msra.mxu0 %v2013
  %2857 = vmatprep.mubr.bf16.mxu0 %v624
  %2858 = vmatmul.mubr.bf16.gmra.mrb[0].mxu0 %v623
  %v2859 = vpop.f32.mrb[0].mxu0
  %v2860 = vadd.f32 %v2807, %v2859
  %v2861 = vpop.f32.mrb[0].mxu0
  %v2862 = vadd.f32 %v2809, %v2861
  %v2863 = vpop.f32.mrb[0].mxu0
  %v2864 = vadd.f32 %v2811, %v2863
  %v2865 = vpop.f32.mrb[0].mxu0
  %v2866 = vadd.f32 %v2813, %v2865
  %2867 = vmatprep.mubr.bf16.mxu0 %v649
  %2868 = vmatmul.mubr.bf16.gmra.mrb[0].mxu0 %v648
  %v2869 = vpop.f32.mrb[0].mxu0
  %v2870 = vadd.f32 %v2817, %v2869
  %v2871 = vpop.f32.mrb[0].mxu0
  %v2872 = vadd.f32 %v2819, %v2871
  %v2873 = vpop.f32.mrb[0].mxu0
  %v2874 = vadd.f32 %v2821, %v2873
  %v2875 = vpop.f32.mrb[0].mxu0
  %v2876 = vadd.f32 %v2823, %v2875
  %2877 = vdwg.mxu0
  %2878 = vmatprep.subr.bf16.mxu0 %v2016
  %2879 = vmatpush1.bf16.msra.mxu0 %v2015
  %2880 = vmatprep.subr.bf16.mxu0 %v2018
  %2881 = vmatpush1.bf16.msra.mxu0 %v2017
  %2882 = vmatprep.subr.bf16.mxu0 %v2020
  %2883 = vmatpush1.bf16.msra.mxu0 %v2019
  %2884 = vmatprep.subr.bf16.mxu0 %v2022
  %2885 = vmatpush1.bf16.msra.mxu0 %v2021
  %2886 = vmatprep.subr.bf16.mxu0 %v2024
  %2887 = vmatpush1.bf16.msra.mxu0 %v2023
  %2888 = vmatprep.subr.bf16.mxu0 %v2026
  %2889 = vmatpush1.bf16.msra.mxu0 %v2025
  %2890 = vmatprep.subr.bf16.mxu0 %v2028
  %2891 = vmatpush1.bf16.msra.mxu0 %v2027
  %2892 = vmatprep.subr.bf16.mxu0 %v2030
  %2893 = vmatpush1.bf16.msra.mxu0 %v2029
  %2894 = vmatprep.subr.bf16.mxu0 %v2032
  %2895 = vmatpush1.bf16.msra.mxu0 %v2031
  %2896 = vmatprep.subr.bf16.mxu0 %v2034
  %2897 = vmatpush1.bf16.msra.mxu0 %v2033
  %2898 = vmatprep.subr.bf16.mxu0 %v2036
  %2899 = vmatpush1.bf16.msra.mxu0 %v2035
  %2900 = vmatprep.subr.bf16.mxu0 %v2038
  %2901 = vmatpush1.bf16.msra.mxu0 %v2037
  %2902 = vmatprep.subr.bf16.mxu0 %v2040
  %2903 = vmatpush1.bf16.msra.mxu0 %v2039
  %2904 = vmatprep.subr.bf16.mxu0 %v2042
  %2905 = vmatpush1.bf16.msra.mxu0 %v2041
  %2906 = vmatprep.subr.bf16.mxu0 %v2044
  %2907 = vmatpush1.bf16.msra.mxu0 %v2043
  %2908 = vmatprep.subr.bf16.mxu0 %v2046
  %2909 = vmatpush1.bf16.msra.mxu0 %v2045
  %2910 = vmatprep.mubr.bf16.mxu0 %v626
  %2911 = vmatmul.mubr.bf16.gmra.mrb[0].mxu0 %v625
  %v2912 = vpop.f32.mrb[0].mxu0
  %v2913 = vadd.f32 %v2860, %v2912
  %v2914 = vpop.f32.mrb[0].mxu0
  %v2915 = vadd.f32 %v2862, %v2914
  %v2916 = vpop.f32.mrb[0].mxu0
  %v2917 = vadd.f32 %v2864, %v2916
  %v2918 = vpop.f32.mrb[0].mxu0
  %v2919 = vadd.f32 %v2866, %v2918
  %2920 = vmatprep.mubr.bf16.mxu0 %v651
  %2921 = vmatmul.mubr.bf16.gmra.mrb[0].mxu0 %v650
  %v2922 = vpop.f32.mrb[0].mxu0
  %v2923 = vadd.f32 %v2870, %v2922
  %v2924 = vpop.f32.mrb[0].mxu0
  %v2925 = vadd.f32 %v2872, %v2924
  %v2926 = vpop.f32.mrb[0].mxu0
  %v2927 = vadd.f32 %v2874, %v2926
  %v2928 = vpop.f32.mrb[0].mxu0
  %v2929 = vadd.f32 %v2876, %v2928
  %2930 = vdwg.mxu0
  %2931 = vmatprep.subr.bf16.mxu0 %v2048
  %2932 = vmatpush1.bf16.msra.mxu0 %v2047
  %2933 = vmatprep.subr.bf16.mxu0 %v2050
  %2934 = vmatpush1.bf16.msra.mxu0 %v2049
  %2935 = vmatprep.subr.bf16.mxu0 %v2052
  %2936 = vmatpush1.bf16.msra.mxu0 %v2051
  %2937 = vmatprep.subr.bf16.mxu0 %v2054
  %2938 = vmatpush1.bf16.msra.mxu0 %v2053
  %2939 = vmatprep.subr.bf16.mxu0 %v2056
  %2940 = vmatpush1.bf16.msra.mxu0 %v2055
  %2941 = vmatprep.subr.bf16.mxu0 %v2058
  %2942 = vmatpush1.bf16.msra.mxu0 %v2057
  %2943 = vmatprep.subr.bf16.mxu0 %v2060
  %2944 = vmatpush1.bf16.msra.mxu0 %v2059
  %2945 = vmatprep.subr.bf16.mxu0 %v2062
  %2946 = vmatpush1.bf16.msra.mxu0 %v2061
  %2947 = vmatprep.subr.bf16.mxu0 %v2064
  %2948 = vmatpush1.bf16.msra.mxu0 %v2063
  %2949 = vmatprep.subr.bf16.mxu0 %v2066
  %2950 = vmatpush1.bf16.msra.mxu0 %v2065
  %2951 = vmatprep.subr.bf16.mxu0 %v2068
  %2952 = vmatpush1.bf16.msra.mxu0 %v2067
  %2953 = vmatprep.subr.bf16.mxu0 %v2070
  %2954 = vmatpush1.bf16.msra.mxu0 %v2069
  %2955 = vmatprep.subr.bf16.mxu0 %v2072
  %2956 = vmatpush1.bf16.msra.mxu0 %v2071
  %2957 = vmatprep.subr.bf16.mxu0 %v2074
  %2958 = vmatpush1.bf16.msra.mxu0 %v2073
  %2959 = vmatprep.subr.bf16.mxu0 %v2076
  %2960 = vmatpush1.bf16.msra.mxu0 %v2075
  %2961 = vmatprep.subr.bf16.mxu0 %v2078
  %2962 = vmatpush1.bf16.msra.mxu0 %v2077
  %2963 = vmatprep.mubr.bf16.mxu0 %v628
  %2964 = vmatmul.mubr.bf16.gmra.mrb[0].mxu0 %v627
  %v2965 = vpop.f32.mrb[0].mxu0
  %v2966 = vadd.f32 %v2913, %v2965
  %v2967 = vpop.f32.mrb[0].mxu0
  %v2968 = vadd.f32 %v2915, %v2967
  %v2969 = vpop.f32.mrb[0].mxu0
  %v2970 = vadd.f32 %v2917, %v2969
  %v2971 = vpop.f32.mrb[0].mxu0
  %v2972 = vadd.f32 %v2919, %v2971
  %2973 = vmatprep.mubr.bf16.mxu0 %v653
  %2974 = vmatmul.mubr.bf16.gmra.mrb[0].mxu0 %v652
  %v2975 = vpop.f32.mrb[0].mxu0
  %v2976 = vadd.f32 %v2923, %v2975
  %v2977 = vpop.f32.mrb[0].mxu0
  %v2978 = vadd.f32 %v2925, %v2977
  %v2979 = vpop.f32.mrb[0].mxu0
  %v2980 = vadd.f32 %v2927, %v2979
  %v2981 = vpop.f32.mrb[0].mxu0
  %v2982 = vadd.f32 %v2929, %v2981
  %2983 = vdwg.mxu0
  %2984 = vmatprep.subr.bf16.mxu0 %v2080
  %2985 = vmatpush1.bf16.msra.mxu0 %v2079
  %2986 = vmatprep.subr.bf16.mxu0 %v2082
  %2987 = vmatpush1.bf16.msra.mxu0 %v2081
  %2988 = vmatprep.subr.bf16.mxu0 %v2084
  %2989 = vmatpush1.bf16.msra.mxu0 %v2083
  %2990 = vmatprep.subr.bf16.mxu0 %v2086
  %2991 = vmatpush1.bf16.msra.mxu0 %v2085
  %2992 = vmatprep.subr.bf16.mxu0 %v2088
  %2993 = vmatpush1.bf16.msra.mxu0 %v2087
  %2994 = vmatprep.subr.bf16.mxu0 %v2090
  %2995 = vmatpush1.bf16.msra.mxu0 %v2089
  %2996 = vmatprep.subr.bf16.mxu0 %v2092
  %2997 = vmatpush1.bf16.msra.mxu0 %v2091
  %2998 = vmatprep.subr.bf16.mxu0 %v2094
  %2999 = vmatpush1.bf16.msra.mxu0 %v2093
  %3000 = vmatprep.subr.bf16.mxu0 %v2096
  %3001 = vmatpush1.bf16.msra.mxu0 %v2095
  %3002 = vmatprep.subr.bf16.mxu0 %v2098
  %3003 = vmatpush1.bf16.msra.mxu0 %v2097
  %3004 = vmatprep.subr.bf16.mxu0 %v2100
  %3005 = vmatpush1.bf16.msra.mxu0 %v2099
  %3006 = vmatprep.subr.bf16.mxu0 %v2102
  %3007 = vmatpush1.bf16.msra.mxu0 %v2101
  %3008 = vmatprep.subr.bf16.mxu0 %v2104
  %3009 = vmatpush1.bf16.msra.mxu0 %v2103
  %3010 = vmatprep.subr.bf16.mxu0 %v2106
  %3011 = vmatpush1.bf16.msra.mxu0 %v2105
  %3012 = vmatprep.subr.bf16.mxu0 %v2108
  %3013 = vmatpush1.bf16.msra.mxu0 %v2107
  %3014 = vmatprep.subr.bf16.mxu0 %v2110
  %3015 = vmatpush1.bf16.msra.mxu0 %v2109
  %3016 = vmatprep.mubr.bf16.mxu0 %v630
  %3017 = vmatmul.mubr.bf16.gmra.mrb[0].mxu0 %v629
  %v3018 = vpop.f32.mrb[0].mxu0
  %v3019 = vadd.f32 %v2966, %v3018
  %v3020 = vpop.f32.mrb[0].mxu0
  %v3021 = vadd.f32 %v2968, %v3020
  %v3022 = vpop.f32.mrb[0].mxu0
  %v3023 = vadd.f32 %v2970, %v3022
  %v3024 = vpop.f32.mrb[0].mxu0
  %v3025 = vadd.f32 %v2972, %v3024
  %3026 = vmatprep.mubr.bf16.mxu0 %v655
  %3027 = vmatmul.mubr.bf16.gmra.mrb[0].mxu0 %v654
  %v3028 = vpop.f32.mrb[0].mxu0
  %v3029 = vadd.f32 %v2976, %v3028
  %v3030 = vpop.f32.mrb[0].mxu0
  %v3031 = vadd.f32 %v2978, %v3030
  %v3032 = vpop.f32.mrb[0].mxu0
  %v3033 = vadd.f32 %v2980, %v3032
  %v3034 = vpop.f32.mrb[0].mxu0
  %v3035 = vadd.f32 %v2982, %v3034
  %3036 = vdwg.mxu0
  %3037 = vmatprep.subr.bf16.mxu0 %v2112
  %3038 = vmatpush1.bf16.msra.mxu0 %v2111
  %3039 = vmatprep.subr.bf16.mxu0 %v2114
  %3040 = vmatpush1.bf16.msra.mxu0 %v2113
  %3041 = vmatprep.subr.bf16.mxu0 %v2116
  %3042 = vmatpush1.bf16.msra.mxu0 %v2115
  %3043 = vmatprep.subr.bf16.mxu0 %v2118
  %3044 = vmatpush1.bf16.msra.mxu0 %v2117
  %3045 = vmatprep.subr.bf16.mxu0 %v2120
  %3046 = vmatpush1.bf16.msra.mxu0 %v2119
  %3047 = vmatprep.subr.bf16.mxu0 %v2122
  %3048 = vmatpush1.bf16.msra.mxu0 %v2121
  %3049 = vmatprep.subr.bf16.mxu0 %v2124
  %3050 = vmatpush1.bf16.msra.mxu0 %v2123
  %3051 = vmatprep.subr.bf16.mxu0 %v2126
  %3052 = vmatpush1.bf16.msra.mxu0 %v2125
  %3053 = vmatprep.subr.bf16.mxu0 %v2128
  %3054 = vmatpush1.bf16.msra.mxu0 %v2127
  %3055 = vmatprep.subr.bf16.mxu0 %v2130
  %3056 = vmatpush1.bf16.msra.mxu0 %v2129
  %3057 = vmatprep.subr.bf16.mxu0 %v2132
  %3058 = vmatpush1.bf16.msra.mxu0 %v2131
  %3059 = vmatprep.subr.bf16.mxu0 %v2134
  %3060 = vmatpush1.bf16.msra.mxu0 %v2133
  %3061 = vmatprep.subr.bf16.mxu0 %v2136
  %3062 = vmatpush1.bf16.msra.mxu0 %v2135
  %3063 = vmatprep.subr.bf16.mxu0 %v2138
  %3064 = vmatpush1.bf16.msra.mxu0 %v2137
  %3065 = vmatprep.subr.bf16.mxu0 %v2140
  %3066 = vmatpush1.bf16.msra.mxu0 %v2139
  %3067 = vmatprep.subr.bf16.mxu0 %v2142
  %3068 = vmatpush1.bf16.msra.mxu0 %v2141
  %3069 = vmatprep.mubr.bf16.mxu0 %v632
  %3070 = vmatmul.mubr.bf16.gmra.mrb[0].mxu0 %v631
  %v3071 = vpop.f32.mrb[0].mxu0
  %v3072 = vadd.f32 %v3019, %v3071
  %v3073 = vpop.f32.mrb[0].mxu0
  %v3074 = vadd.f32 %v3021, %v3073
  %v3075 = vpop.f32.mrb[0].mxu0
  %v3076 = vadd.f32 %v3023, %v3075
  %v3077 = vpop.f32.mrb[0].mxu0
  %v3078 = vadd.f32 %v3025, %v3077
  %3079 = vmatprep.mubr.bf16.mxu0 %v657
  %3080 = vmatmul.mubr.bf16.gmra.mrb[0].mxu0 %v656
  %v3081 = vpop.f32.mrb[0].mxu0
  %v3082 = vadd.f32 %v3029, %v3081
  %v3083 = vpop.f32.mrb[0].mxu0
  %v3084 = vadd.f32 %v3031, %v3083
  %v3085 = vpop.f32.mrb[0].mxu0
  %v3086 = vadd.f32 %v3033, %v3085
  %v3087 = vpop.f32.mrb[0].mxu0
  %v3088 = vadd.f32 %v3035, %v3087
  %3089 = vdwg.mxu0
  %3090 = vmatprep.subr.bf16.mxu0 %v2144
  %3091 = vmatpush1.bf16.msra.mxu0 %v2143
  %3092 = vmatprep.subr.bf16.mxu0 %v2146
  %3093 = vmatpush1.bf16.msra.mxu0 %v2145
  %3094 = vmatprep.subr.bf16.mxu0 %v2148
  %3095 = vmatpush1.bf16.msra.mxu0 %v2147
  %3096 = vmatprep.subr.bf16.mxu0 %v2150
  %3097 = vmatpush1.bf16.msra.mxu0 %v2149
  %3098 = vmatprep.subr.bf16.mxu0 %v2152
  %3099 = vmatpush1.bf16.msra.mxu0 %v2151
  %3100 = vmatprep.subr.bf16.mxu0 %v2154
  %3101 = vmatpush1.bf16.msra.mxu0 %v2153
  %3102 = vmatprep.subr.bf16.mxu0 %v2156
  %3103 = vmatpush1.bf16.msra.mxu0 %v2155
  %3104 = vmatprep.subr.bf16.mxu0 %v2158
  %3105 = vmatpush1.bf16.msra.mxu0 %v2157
  %3106 = vmatprep.subr.bf16.mxu0 %v2160
  %3107 = vmatpush1.bf16.msra.mxu0 %v2159
  %3108 = vmatprep.subr.bf16.mxu0 %v2162
  %3109 = vmatpush1.bf16.msra.mxu0 %v2161
  %3110 = vmatprep.subr.bf16.mxu0 %v2164
  %3111 = vmatpush1.bf16.msra.mxu0 %v2163
  %3112 = vmatprep.subr.bf16.mxu0 %v2166
  %3113 = vmatpush1.bf16.msra.mxu0 %v2165
  %3114 = vmatprep.subr.bf16.mxu0 %v2168
  %3115 = vmatpush1.bf16.msra.mxu0 %v2167
  %3116 = vmatprep.subr.bf16.mxu0 %v2170
  %3117 = vmatpush1.bf16.msra.mxu0 %v2169
  %3118 = vmatprep.subr.bf16.mxu0 %v2172
  %3119 = vmatpush1.bf16.msra.mxu0 %v2171
  %3120 = vmatprep.subr.bf16.mxu0 %v2174
  %3121 = vmatpush1.bf16.msra.mxu0 %v2173
  %3122 = vmatprep.mubr.bf16.mxu0 %v634
  %3123 = vmatmul.mubr.bf16.gmra.mrb[0].mxu0 %v633
  %v3124 = vpop.f32.mrb[0].mxu0
  %v3125 = vadd.f32 %v3072, %v3124
  %v3126 = vpop.f32.mrb[0].mxu0
  %v3127 = vadd.f32 %v3074, %v3126
  %v3128 = vpop.f32.mrb[0].mxu0
  %v3129 = vadd.f32 %v3076, %v3128
  %v3130 = vpop.f32.mrb[0].mxu0
  %v3131 = vadd.f32 %v3078, %v3130
  %3132 = vmatprep.mubr.bf16.mxu0 %v659
  %3133 = vmatmul.mubr.bf16.gmra.mrb[0].mxu0 %v658
  %v3134 = vpop.f32.mrb[0].mxu0
  %v3135 = vadd.f32 %v3082, %v3134
  %v3136 = vpop.f32.mrb[0].mxu0
  %v3137 = vadd.f32 %v3084, %v3136
  %v3138 = vpop.f32.mrb[0].mxu0
  %v3139 = vadd.f32 %v3086, %v3138
  %v3140 = vpop.f32.mrb[0].mxu0
  %v3141 = vadd.f32 %v3088, %v3140
  %3142 = vdwg.mxu0
  %3143 = vmatprep.subr.bf16.mxu0 %v2176
  %3144 = vmatpush1.bf16.msra.mxu0 %v2175
  %3145 = vmatprep.subr.bf16.mxu0 %v2178
  %3146 = vmatpush1.bf16.msra.mxu0 %v2177
  %3147 = vmatprep.subr.bf16.mxu0 %v2180
  %3148 = vmatpush1.bf16.msra.mxu0 %v2179
  %3149 = vmatprep.subr.bf16.mxu0 %v2182
  %3150 = vmatpush1.bf16.msra.mxu0 %v2181
  %3151 = vmatprep.subr.bf16.mxu0 %v2184
  %3152 = vmatpush1.bf16.msra.mxu0 %v2183
  %3153 = vmatprep.subr.bf16.mxu0 %v2186
  %3154 = vmatpush1.bf16.msra.mxu0 %v2185
  %3155 = vmatprep.subr.bf16.mxu0 %v2188
  %3156 = vmatpush1.bf16.msra.mxu0 %v2187
  %3157 = vmatprep.subr.bf16.mxu0 %v2190
  %3158 = vmatpush1.bf16.msra.mxu0 %v2189
  %3159 = vmatprep.subr.bf16.mxu0 %v2192
  %3160 = vmatpush1.bf16.msra.mxu0 %v2191
  %3161 = vmatprep.subr.bf16.mxu0 %v2194
  %3162 = vmatpush1.bf16.msra.mxu0 %v2193
  %3163 = vmatprep.subr.bf16.mxu0 %v2196
  %3164 = vmatpush1.bf16.msra.mxu0 %v2195
  %3165 = vmatprep.subr.bf16.mxu0 %v2198
  %3166 = vmatpush1.bf16.msra.mxu0 %v2197
  %3167 = vmatprep.subr.bf16.mxu0 %v2200
  %3168 = vmatpush1.bf16.msra.mxu0 %v2199
  %3169 = vmatprep.subr.bf16.mxu0 %v2202
  %3170 = vmatpush1.bf16.msra.mxu0 %v2201
  %3171 = vmatprep.subr.bf16.mxu0 %v2204
  %3172 = vmatpush1.bf16.msra.mxu0 %v2203
  %3173 = vmatprep.subr.bf16.mxu0 %v2206
  %3174 = vmatpush1.bf16.msra.mxu0 %v2205
  %3175 = vmatprep.mubr.bf16.mxu0 %v636
  %3176 = vmatmul.mubr.bf16.gmra.mrb[0].mxu0 %v635
  %v3177 = vpop.f32.mrb[0].mxu0
  %v3178 = vadd.f32 %v3125, %v3177
  %v3179 = vpop.f32.mrb[0].mxu0
  %v3180 = vadd.f32 %v3127, %v3179
  %v3181 = vpop.f32.mrb[0].mxu0
  %v3182 = vadd.f32 %v3129, %v3181
  %v3183 = vpop.f32.mrb[0].mxu0
  %v3184 = vadd.f32 %v3131, %v3183
  %3185 = vmatprep.mubr.bf16.mxu0 %v661
  %3186 = vmatmul.mubr.bf16.gmra.mrb[0].mxu0 %v660
  %v3187 = vpop.f32.mrb[0].mxu0
  %v3188 = vadd.f32 %v3135, %v3187
  %v3189 = vpop.f32.mrb[0].mxu0
  %v3190 = vadd.f32 %v3137, %v3189
  %v3191 = vpop.f32.mrb[0].mxu0
  %v3192 = vadd.f32 %v3139, %v3191
  %v3193 = vpop.f32.mrb[0].mxu0
  %v3194 = vadd.f32 %v3141, %v3193
  %3195 = vdwg.mxu0
  %3196 = vmatprep.subr.bf16.mxu0 %v2208
  %3197 = vmatpush1.bf16.msra.mxu0 %v2207
  %3198 = vmatprep.subr.bf16.mxu0 %v2210
  %3199 = vmatpush1.bf16.msra.mxu0 %v2209
  %3200 = vmatprep.subr.bf16.mxu0 %v2212
  %3201 = vmatpush1.bf16.msra.mxu0 %v2211
  %3202 = vmatprep.subr.bf16.mxu0 %v2214
  %3203 = vmatpush1.bf16.msra.mxu0 %v2213
  %3204 = vmatprep.subr.bf16.mxu0 %v2216
  %3205 = vmatpush1.bf16.msra.mxu0 %v2215
  %3206 = vmatprep.subr.bf16.mxu0 %v2218
  %3207 = vmatpush1.bf16.msra.mxu0 %v2217
  %3208 = vmatprep.subr.bf16.mxu0 %v2220
  %3209 = vmatpush1.bf16.msra.mxu0 %v2219
  %3210 = vmatprep.subr.bf16.mxu0 %v2222
  %3211 = vmatpush1.bf16.msra.mxu0 %v2221
  %3212 = vmatprep.subr.bf16.mxu0 %v2224
  %3213 = vmatpush1.bf16.msra.mxu0 %v2223
  %3214 = vmatprep.subr.bf16.mxu0 %v2226
  %3215 = vmatpush1.bf16.msra.mxu0 %v2225
  %3216 = vmatprep.subr.bf16.mxu0 %v2228
  %3217 = vmatpush1.bf16.msra.mxu0 %v2227
  %3218 = vmatprep.subr.bf16.mxu0 %v2230
  %3219 = vmatpush1.bf16.msra.mxu0 %v2229
  %3220 = vmatprep.subr.bf16.mxu0 %v2232
  %3221 = vmatpush1.bf16.msra.mxu0 %v2231
  %3222 = vmatprep.subr.bf16.mxu0 %v2234
  %3223 = vmatpush1.bf16.msra.mxu0 %v2233
  %3224 = vmatprep.subr.bf16.mxu0 %v2236
  %3225 = vmatpush1.bf16.msra.mxu0 %v2235
  %3226 = vmatprep.subr.bf16.mxu0 %v2238
  %3227 = vmatpush1.bf16.msra.mxu0 %v2237
  %3228 = vmatprep.mubr.bf16.mxu0 %v638
  %3229 = vmatmul.mubr.bf16.gmra.mrb[0].mxu0 %v637
  %v3230 = vpop.f32.mrb[0].mxu0
  %v3231 = vadd.f32 %v3178, %v3230
  %v3232 = vpop.f32.mrb[0].mxu0
  %v3233 = vadd.f32 %v3180, %v3232
  %v3234 = vpop.f32.mrb[0].mxu0
  %v3235 = vadd.f32 %v3182, %v3234
  %v3236 = vpop.f32.mrb[0].mxu0
  %v3237 = vadd.f32 %v3184, %v3236
  %3238 = vmatprep.mubr.bf16.mxu0 %v663
  %3239 = vmatmul.mubr.bf16.gmra.mrb[0].mxu0 %v662
  %v3240 = vpop.f32.mrb[0].mxu0
  %v3241 = vadd.f32 %v3188, %v3240
  %v3242 = vpop.f32.mrb[0].mxu0
  %v3243 = vadd.f32 %v3190, %v3242
  %v3244 = vpop.f32.mrb[0].mxu0
  %v3245 = vadd.f32 %v3192, %v3244
  %v3246 = vpop.f32.mrb[0].mxu0
  %v3247 = vadd.f32 %v3194, %v3246
  %3248 = vdwg.mxu0
  %3249 = vmatprep.subr.bf16.mxu0 %v2240
  %3250 = vmatpush1.bf16.msra.mxu0 %v2239
  %3251 = vmatprep.subr.bf16.mxu0 %v2242
  %3252 = vmatpush1.bf16.msra.mxu0 %v2241
  %3253 = vmatprep.subr.bf16.mxu0 %v2244
  %3254 = vmatpush1.bf16.msra.mxu0 %v2243
  %3255 = vmatprep.subr.bf16.mxu0 %v2246
  %3256 = vmatpush1.bf16.msra.mxu0 %v2245
  %3257 = vmatprep.subr.bf16.mxu0 %v2248
  %3258 = vmatpush1.bf16.msra.mxu0 %v2247
  %3259 = vmatprep.subr.bf16.mxu0 %v2250
  %3260 = vmatpush1.bf16.msra.mxu0 %v2249
  %3261 = vmatprep.subr.bf16.mxu0 %v2252
  %3262 = vmatpush1.bf16.msra.mxu0 %v2251
  %3263 = vmatprep.subr.bf16.mxu0 %v2254
  %3264 = vmatpush1.bf16.msra.mxu0 %v2253
  %3265 = vmatprep.subr.bf16.mxu0 %v2256
  %3266 = vmatpush1.bf16.msra.mxu0 %v2255
  %3267 = vmatprep.subr.bf16.mxu0 %v2258
  %3268 = vmatpush1.bf16.msra.mxu0 %v2257
  %3269 = vmatprep.subr.bf16.mxu0 %v2260
  %3270 = vmatpush1.bf16.msra.mxu0 %v2259
  %3271 = vmatprep.subr.bf16.mxu0 %v2262
  %3272 = vmatpush1.bf16.msra.mxu0 %v2261
  %3273 = vmatprep.subr.bf16.mxu0 %v2264
  %3274 = vmatpush1.bf16.msra.mxu0 %v2263
  %3275 = vmatprep.subr.bf16.mxu0 %v2266
  %3276 = vmatpush1.bf16.msra.mxu0 %v2265
  %3277 = vmatprep.subr.bf16.mxu0 %v2268
  %3278 = vmatpush1.bf16.msra.mxu0 %v2267
  %3279 = vmatprep.subr.bf16.mxu0 %v2270
  %3280 = vmatpush1.bf16.msra.mxu0 %v2269
  %3281 = vmatprep.mubr.bf16.mxu0 %v640
  %3282 = vmatmul.mubr.bf16.gmra.mrb[0].mxu0 %v639
  %v3283 = vpop.f32.mrb[0].mxu0
  %v3284 = vadd.f32 %v3231, %v3283
  %v3285 = vpop.f32.mrb[0].mxu0
  %v3286 = vadd.f32 %v3233, %v3285
  %v3287 = vpop.f32.mrb[0].mxu0
  %v3288 = vadd.f32 %v3235, %v3287
  %v3289 = vpop.f32.mrb[0].mxu0
  %v3290 = vadd.f32 %v3237, %v3289
  %3291 = vmatprep.mubr.bf16.mxu0 %v665
  %3292 = vmatmul.mubr.bf16.gmra.mrb[0].mxu0 %v664
  %v3293 = vpop.f32.mrb[0].mxu0
  %v3294 = vadd.f32 %v3241, %v3293
  %v3295 = vpop.f32.mrb[0].mxu0
  %v3296 = vadd.f32 %v3243, %v3295
  %v3297 = vpop.f32.mrb[0].mxu0
  %v3298 = vadd.f32 %v3245, %v3297
  %v3299 = vpop.f32.mrb[0].mxu0
  %v3300 = vadd.f32 %v3247, %v3299
  %3301 = vdwg.mxu0
  %3302 = vmatprep.subr.bf16.mxu0 %v2272
  %3303 = vmatpush1.bf16.msra.mxu0 %v2271
  %3304 = vmatprep.subr.bf16.mxu0 %v2274
  %3305 = vmatpush1.bf16.msra.mxu0 %v2273
  %3306 = vmatprep.subr.bf16.mxu0 %v2276
  %3307 = vmatpush1.bf16.msra.mxu0 %v2275
  %3308 = vmatprep.subr.bf16.mxu0 %v2278
  %3309 = vmatpush1.bf16.msra.mxu0 %v2277
  %3310 = vmatprep.subr.bf16.mxu0 %v2280
  %3311 = vmatpush1.bf16.msra.mxu0 %v2279
  %3312 = vmatprep.subr.bf16.mxu0 %v2282
  %3313 = vmatpush1.bf16.msra.mxu0 %v2281
  %3314 = vmatprep.subr.bf16.mxu0 %v2284
  %3315 = vmatpush1.bf16.msra.mxu0 %v2283
  %3316 = vmatprep.subr.bf16.mxu0 %v2286
  %3317 = vmatpush1.bf16.msra.mxu0 %v2285
  %3318 = vmatprep.subr.bf16.mxu0 %v2288
  %3319 = vmatpush1.bf16.msra.mxu0 %v2287
  %3320 = vmatprep.subr.bf16.mxu0 %v2290
  %3321 = vmatpush1.bf16.msra.mxu0 %v2289
  %3322 = vmatprep.subr.bf16.mxu0 %v2292
  %3323 = vmatpush1.bf16.msra.mxu0 %v2291
  %3324 = vmatprep.subr.bf16.mxu0 %v2294
  %3325 = vmatpush1.bf16.msra.mxu0 %v2293
  %3326 = vmatprep.subr.bf16.mxu0 %v2296
  %3327 = vmatpush1.bf16.msra.mxu0 %v2295
  %3328 = vmatprep.subr.bf16.mxu0 %v2298
  %3329 = vmatpush1.bf16.msra.mxu0 %v2297
  %3330 = vmatprep.subr.bf16.mxu0 %v2300
  %3331 = vmatpush1.bf16.msra.mxu0 %v2299
  %3332 = vmatprep.subr.bf16.mxu0 %v2302
  %3333 = vmatpush1.bf16.msra.mxu0 %v2301
  %3334 = vmatprep.mubr.bf16.mxu0 %v642
  %3335 = vmatmul.mubr.bf16.gmra.mrb[0].mxu0 %v641
  %v3336 = vpop.f32.mrb[0].mxu0
  %v3337 = vadd.f32 %v3284, %v3336
  %v3338 = vpop.f32.mrb[0].mxu0
  %v3339 = vadd.f32 %v3286, %v3338
  %v3340 = vpop.f32.mrb[0].mxu0
  %v3341 = vadd.f32 %v3288, %v3340
  %v3342 = vpop.f32.mrb[0].mxu0
  %v3343 = vadd.f32 %v3290, %v3342
  %3344 = vmatprep.mubr.bf16.mxu0 %v667
  %3345 = vmatmul.mubr.bf16.gmra.mrb[0].mxu0 %v666
  %v3346 = vpop.f32.mrb[0].mxu0
  %v3347 = vadd.f32 %v3294, %v3346
  %v3348 = vpop.f32.mrb[0].mxu0
  %v3349 = vadd.f32 %v3296, %v3348
  %v3350 = vpop.f32.mrb[0].mxu0
  %v3351 = vadd.f32 %v3298, %v3350
  %v3352 = vpop.f32.mrb[0].mxu0
  %v3353 = vadd.f32 %v3300, %v3352
  %3354 = vdwg.mxu0
  %3355 = vmatprep.subr.bf16.mxu0 %v2304
  %3356 = vmatpush1.bf16.msra.mxu0 %v2303
  %3357 = vmatprep.subr.bf16.mxu0 %v2306
  %3358 = vmatpush1.bf16.msra.mxu0 %v2305
  %3359 = vmatprep.subr.bf16.mxu0 %v2308
  %3360 = vmatpush1.bf16.msra.mxu0 %v2307
  %3361 = vmatprep.subr.bf16.mxu0 %v2310
  %3362 = vmatpush1.bf16.msra.mxu0 %v2309
  %3363 = vmatprep.subr.bf16.mxu0 %v2312
  %3364 = vmatpush1.bf16.msra.mxu0 %v2311
  %3365 = vmatprep.subr.bf16.mxu0 %v2314
  %3366 = vmatpush1.bf16.msra.mxu0 %v2313
  %3367 = vmatprep.subr.bf16.mxu0 %v2316
  %3368 = vmatpush1.bf16.msra.mxu0 %v2315
  %3369 = vmatprep.subr.bf16.mxu0 %v2318
  %3370 = vmatpush1.bf16.msra.mxu0 %v2317
  %3371 = vmatprep.subr.bf16.mxu0 0
  %3372 = vmatpush1.bf16.msra.mxu0 0
  %3373 = vmatprep.subr.bf16.mxu0 0
  %3374 = vmatpush1.bf16.msra.mxu0 0
  %3375 = vmatprep.subr.bf16.mxu0 0
  %3376 = vmatpush1.bf16.msra.mxu0 0
  %3377 = vmatprep.subr.bf16.mxu0 0
  %3378 = vmatpush1.bf16.msra.mxu0 0
  %3379 = vmatprep.subr.bf16.mxu0 0
  %3380 = vmatpush1.bf16.msra.mxu0 0
  %3381 = vmatprep.subr.bf16.mxu0 0
  %3382 = vmatpush1.bf16.msra.mxu0 0
  %3383 = vmatprep.subr.bf16.mxu0 0
  %3384 = vmatpush1.bf16.msra.mxu0 0
  %3385 = vmatprep.subr.bf16.mxu0 0
  %3386 = vmatpush1.bf16.msra.mxu0 0
  %3387 = vmatprep.mubr.bf16.mxu0 0
  %3388 = vmatmul.mubr.bf16.gmra.mrb[0].mxu0 %v643
  %v3389 = vpop.f32.mrb[0].mxu0
  %v3390 = vadd.f32 %v3337, %v3389
  %v3391 = vpop.f32.mrb[0].mxu0
  %v3392 = vadd.f32 %v3339, %v3391
  %v3393 = vpop.f32.mrb[0].mxu0
  %v3394 = vadd.f32 %v3341, %v3393
  %v3395 = vpop.f32.mrb[0].mxu0
  %v3396 = vadd.f32 %v3343, %v3395
  %3397 = vmatprep.mubr.bf16.mxu0 0
  %3398 = vmatmul.mubr.bf16.gmra.mrb[0].mxu0 %v668
  %v3399 = vpop.f32.mrb[0].mxu0
  %v3400 = vadd.f32 %v3347, %v3399
  %v3401 = vpop.f32.mrb[0].mxu0
  %v3402 = vadd.f32 %v3349, %v3401
  %v3403 = vpop.f32.mrb[0].mxu0
  %v3404 = vadd.f32 %v3351, %v3403
  %v3405 = vpop.f32.mrb[0].mxu0
  %v3406 = vadd.f32 %v3353, %v3405
  %3407 = vdwg.mxu0
  %s3408 = scalar_lea.vmem %s0, 400
  %v3409 = vld [vmem:[%s3408] sm:$0xff]
  %v3410 = vld [vmem:[%s3408 + $0x8] sm:$0xff]
  %v3411 = vld [vmem:[%s3408 + $0x10] sm:$0xff]
  %v3412 = vld [vmem:[%s3408 + $0x18] sm:$0xff]
  %v3413 = vld [vmem:[%s3408 + $0x20] sm:$0xff]
  %v3414 = vld [vmem:[%s3408 + $0x28] sm:$0xff]
  %v3415 = vld [vmem:[%s3408 + $0x30] sm:$0xff]
  %v3416 = vld [vmem:[%s3408 + $0x38] sm:$0xff]
  %v3417 = vld [vmem:[%s3408 + $0x40] sm:$0xff]
  %v3418 = vld [vmem:[%s3408 + $0x48] sm:$0xff]
  %v3419 = vld [vmem:[%s3408 + $0x50] sm:$0xff]
  %v3420 = vld [vmem:[%s3408 + $0x58] sm:$0xff]
  %v3421 = vld [vmem:[%s3408 + $0x60] sm:$0xf]
  %v3422 = vld [vmem:[%s3408 + $0x64] sm:$0xff]
  %v3423 = vld [vmem:[%s3408 + $0x6c] sm:$0xff]
  %v3424 = vld [vmem:[%s3408 + $0x74] sm:$0xff]
  %v3425 = vld [vmem:[%s3408 + $0x7c] sm:$0xff]
  %v3426 = vld [vmem:[%s3408 + $0x84] sm:$0xff]
  %v3427 = vld [vmem:[%s3408 + $0x8c] sm:$0xff]
  %v3428 = vld [vmem:[%s3408 + $0x94] sm:$0xff]
  %v3429 = vld [vmem:[%s3408 + $0x9c] sm:$0xff]
  %v3430 = vld [vmem:[%s3408 + $0xa4] sm:$0xff]
  %v3431 = vld [vmem:[%s3408 + $0xac] sm:$0xff]
  %v3432 = vld [vmem:[%s3408 + $0xb4] sm:$0xff]
  %v3433 = vld [vmem:[%s3408 + $0xbc] sm:$0xff]
  %v3434 = vld [vmem:[%s3408 + $0xc4] sm:$0xf]
  %v3435 = vld [vmem:[%s3408 + $0xc8] sm:$0xff]
  %v3436 = vld [vmem:[%s3408 + $0xd0] sm:$0xff]
  %v3437 = vld [vmem:[%s3408 + $0xd8] sm:$0xff]
  %v3438 = vld [vmem:[%s3408 + $0xe0] sm:$0xff]
  %v3439 = vld [vmem:[%s3408 + $0xe8] sm:$0xff]
  %v3440 = vld [vmem:[%s3408 + $0xf0] sm:$0xff]
  %v3441 = vld [vmem:[%s3408 + $0xf8] sm:$0xff]
  %v3442 = vld [vmem:[%s3408 + $0x100] sm:$0xff]
  %v3443 = vld [vmem:[%s3408 + $0x108] sm:$0xff]
  %v3444 = vld [vmem:[%s3408 + $0x110] sm:$0xff]
  %v3445 = vld [vmem:[%s3408 + $0x118] sm:$0xff]
  %v3446 = vld [vmem:[%s3408 + $0x120] sm:$0xff]
  %v3447 = vld [vmem:[%s3408 + $0x128] sm:$0xf]
  %v3448 = vld [vmem:[%s3408 + $0x12c] sm:$0xff]
  %v3449 = vld [vmem:[%s3408 + $0x134] sm:$0xff]
  %v3450 = vld [vmem:[%s3408 + $0x13c] sm:$0xff]
  %v3451 = vld [vmem:[%s3408 + $0x144] sm:$0xff]
  %v3452 = vld [vmem:[%s3408 + $0x14c] sm:$0xff]
  %v3453 = vld [vmem:[%s3408 + $0x154] sm:$0xff]
  %v3454 = vld [vmem:[%s3408 + $0x15c] sm:$0xff]
  %v3455 = vld [vmem:[%s3408 + $0x164] sm:$0xff]
  %v3456 = vld [vmem:[%s3408 + $0x16c] sm:$0xff]
  %v3457 = vld [vmem:[%s3408 + $0x174] sm:$0xff]
  %v3458 = vld [vmem:[%s3408 + $0x17c] sm:$0xff]
  %v3459 = vld [vmem:[%s3408 + $0x184] sm:$0xff]
  %v3460 = vld [vmem:[%s3408 + $0x18c] sm:$0xf]
  %v3513 = vunpack.c.l.b16 %v3409
  %v3514 = vunpack.c.h.b16 %v3409
  %v3515 = vunpack.c.l.b16 %v3410
  %v3516 = vunpack.c.h.b16 %v3410
  %v3517 = vunpack.c.l.b16 %v3411
  %v3518 = vunpack.c.h.b16 %v3411
  %v3519 = vunpack.c.l.b16 %v3412
  %v3520 = vunpack.c.h.b16 %v3412
  %v3521 = vunpack.c.l.b16 %v3413
  %v3522 = vunpack.c.h.b16 %v3413
  %v3523 = vunpack.c.l.b16 %v3414
  %v3524 = vunpack.c.h.b16 %v3414
  %v3525 = vunpack.c.l.b16 %v3415
  %v3526 = vunpack.c.h.b16 %v3415
  %v3527 = vunpack.c.l.b16 %v3416
  %v3528 = vunpack.c.h.b16 %v3416
  %v3529 = vunpack.c.l.b16 %v3417
  %v3530 = vunpack.c.h.b16 %v3417
  %v3531 = vunpack.c.l.b16 %v3418
  %v3532 = vunpack.c.h.b16 %v3418
  %v3533 = vunpack.c.l.b16 %v3419
  %v3534 = vunpack.c.h.b16 %v3419
  %v3535 = vunpack.c.l.b16 %v3420
  %v3536 = vunpack.c.h.b16 %v3420
  %v3537 = vunpack.c.l.b16 %v3421
  %v3538 = vunpack.c.l.b16 %v3422
  %v3539 = vunpack.c.h.b16 %v3422
  %v3540 = vunpack.c.l.b16 %v3423
  %v3541 = vunpack.c.h.b16 %v3423
  %v3542 = vunpack.c.l.b16 %v3424
  %v3543 = vunpack.c.h.b16 %v3424
  %v3544 = vunpack.c.l.b16 %v3425
  %v3545 = vunpack.c.h.b16 %v3425
  %v3546 = vunpack.c.l.b16 %v3426
  %v3547 = vunpack.c.h.b16 %v3426
  %v3548 = vunpack.c.l.b16 %v3427
  %v3549 = vunpack.c.h.b16 %v3427
  %v3550 = vunpack.c.l.b16 %v3428
  %v3551 = vunpack.c.h.b16 %v3428
  %v3552 = vunpack.c.l.b16 %v3429
  %v3553 = vunpack.c.h.b16 %v3429
  %v3554 = vunpack.c.l.b16 %v3430
  %v3555 = vunpack.c.h.b16 %v3430
  %v3556 = vunpack.c.l.b16 %v3431
  %v3557 = vunpack.c.h.b16 %v3431
  %v3558 = vunpack.c.l.b16 %v3432
  %v3559 = vunpack.c.h.b16 %v3432
  %v3560 = vunpack.c.l.b16 %v3433
  %v3561 = vunpack.c.h.b16 %v3433
  %v3562 = vunpack.c.l.b16 %v3434
  %v3563 = vunpack.c.l.b16 %v3435
  %v3564 = vunpack.c.h.b16 %v3435
  %v3565 = vunpack.c.l.b16 %v3436
  %v3566 = vunpack.c.h.b16 %v3436
  %v3567 = vunpack.c.l.b16 %v3437
  %v3568 = vunpack.c.h.b16 %v3437
  %v3569 = vunpack.c.l.b16 %v3438
  %v3570 = vunpack.c.h.b16 %v3438
  %v3571 = vunpack.c.l.b16 %v3439
  %v3572 = vunpack.c.h.b16 %v3439
  %v3573 = vunpack.c.l.b16 %v3440
  %v3574 = vunpack.c.h.b16 %v3440
  %v3575 = vunpack.c.l.b16 %v3441
  %v3576 = vunpack.c.h.b16 %v3441
  %v3577 = vunpack.c.l.b16 %v3442
  %v3578 = vunpack.c.h.b16 %v3442
  %v3579 = vunpack.c.l.b16 %v3443
  %v3580 = vunpack.c.h.b16 %v3443
  %v3581 = vunpack.c.l.b16 %v3444
  %v3582 = vunpack.c.h.b16 %v3444
  %v3583 = vunpack.c.l.b16 %v3445
  %v3584 = vunpack.c.h.b16 %v3445
  %v3585 = vunpack.c.l.b16 %v3446
  %v3586 = vunpack.c.h.b16 %v3446
  %v3587 = vunpack.c.l.b16 %v3447
  %v3588 = vunpack.c.l.b16 %v3448
  %v3589 = vunpack.c.h.b16 %v3448
  %v3590 = vunpack.c.l.b16 %v3449
  %v3591 = vunpack.c.h.b16 %v3449
  %v3592 = vunpack.c.l.b16 %v3450
  %v3593 = vunpack.c.h.b16 %v3450
  %v3594 = vunpack.c.l.b16 %v3451
  %v3595 = vunpack.c.h.b16 %v3451
  %v3596 = vunpack.c.l.b16 %v3452
  %v3597 = vunpack.c.h.b16 %v3452
  %v3598 = vunpack.c.l.b16 %v3453
  %v3599 = vunpack.c.h.b16 %v3453
  %v3600 = vunpack.c.l.b16 %v3454
  %v3601 = vunpack.c.h.b16 %v3454
  %v3602 = vunpack.c.l.b16 %v3455
  %v3603 = vunpack.c.h.b16 %v3455
  %v3604 = vunpack.c.l.b16 %v3456
  %v3605 = vunpack.c.h.b16 %v3456
  %v3606 = vunpack.c.l.b16 %v3457
  %v3607 = vunpack.c.h.b16 %v3457
  %v3608 = vunpack.c.l.b16 %v3458
  %v3609 = vunpack.c.h.b16 %v3458
  %v3610 = vunpack.c.l.b16 %v3459
  %v3611 = vunpack.c.h.b16 %v3459
  %v3612 = vunpack.c.l.b16 %v3460
  %v3613 = vpack.c.b16 %v3538, %v3513
  %v3614 = vpack.c.b16 %v3539, %v3514
  %v3615 = vpack.c.b16 %v3540, %v3515
  %v3616 = vpack.c.b16 %v3541, %v3516
  %v3617 = vpack.c.b16 %v3542, %v3517
  %v3618 = vpack.c.b16 %v3543, %v3518
  %v3619 = vpack.c.b16 %v3544, %v3519
  %v3620 = vpack.c.b16 %v3545, %v3520
  %v3621 = vpack.c.b16 %v3546, %v3521
  %v3622 = vpack.c.b16 %v3547, %v3522
  %v3623 = vpack.c.b16 %v3548, %v3523
  %v3624 = vpack.c.b16 %v3549, %v3524
  %v3625 = vpack.c.b16 %v3550, %v3525
  %v3626 = vpack.c.b16 %v3551, %v3526
  %v3627 = vpack.c.b16 %v3552, %v3527
  %v3628 = vpack.c.b16 %v3553, %v3528
  %v3629 = vpack.c.b16 %v3554, %v3529
  %v3630 = vpack.c.b16 %v3555, %v3530
  %v3631 = vpack.c.b16 %v3556, %v3531
  %v3632 = vpack.c.b16 %v3557, %v3532
  %v3633 = vpack.c.b16 %v3558, %v3533
  %v3634 = vpack.c.b16 %v3559, %v3534
  %v3635 = vpack.c.b16 %v3560, %v3535
  %v3636 = vpack.c.b16 %v3561, %v3536
  %v3637 = vpack.c.b16 %v3562, %v3537
  %v3638 = vpack.c.b16 %v3588, %v3563
  %v3639 = vpack.c.b16 %v3589, %v3564
  %v3640 = vpack.c.b16 %v3590, %v3565
  %v3641 = vpack.c.b16 %v3591, %v3566
  %v3642 = vpack.c.b16 %v3592, %v3567
  %v3643 = vpack.c.b16 %v3593, %v3568
  %v3644 = vpack.c.b16 %v3594, %v3569
  %v3645 = vpack.c.b16 %v3595, %v3570
  %v3646 = vpack.c.b16 %v3596, %v3571
  %v3647 = vpack.c.b16 %v3597, %v3572
  %v3648 = vpack.c.b16 %v3598, %v3573
  %v3649 = vpack.c.b16 %v3599, %v3574
  %v3650 = vpack.c.b16 %v3600, %v3575
  %v3651 = vpack.c.b16 %v3601, %v3576
  %v3652 = vpack.c.b16 %v3602, %v3577
  %v3653 = vpack.c.b16 %v3603, %v3578
  %v3654 = vpack.c.b16 %v3604, %v3579
  %v3655 = vpack.c.b16 %v3605, %v3580
  %v3656 = vpack.c.b16 %v3606, %v3581
  %v3657 = vpack.c.b16 %v3607, %v3582
  %v3658 = vpack.c.b16 %v3608, %v3583
  %v3659 = vpack.c.b16 %v3609, %v3584
  %v3660 = vpack.c.b16 %v3610, %v3585
  %v3661 = vpack.c.b16 %v3611, %v3586
  %v3662 = vpack.c.b16 %v3612, %v3587
  %3713 = vmatprep.subr.bf16.mxu0 %v1920
  %3714 = vmatpush1.bf16.msra.mxu0 %v1919
  %3715 = vmatprep.subr.bf16.mxu0 %v1922
  %3716 = vmatpush1.bf16.msra.mxu0 %v1921
  %3717 = vmatprep.subr.bf16.mxu0 %v1924
  %3718 = vmatpush1.bf16.msra.mxu0 %v1923
  %3719 = vmatprep.subr.bf16.mxu0 %v1926
  %3720 = vmatpush1.bf16.msra.mxu0 %v1925
  %3721 = vmatprep.subr.bf16.mxu0 %v1928
  %3722 = vmatpush1.bf16.msra.mxu0 %v1927
  %3723 = vmatprep.subr.bf16.mxu0 %v1930
  %3724 = vmatpush1.bf16.msra.mxu0 %v1929
  %3725 = vmatprep.subr.bf16.mxu0 %v1932
  %3726 = vmatpush1.bf16.msra.mxu0 %v1931
  %3727 = vmatprep.subr.bf16.mxu0 %v1934
  %3728 = vmatpush1.bf16.msra.mxu0 %v1933
  %3729 = vmatprep.subr.bf16.mxu0 %v1936
  %3730 = vmatpush1.bf16.msra.mxu0 %v1935
  %3731 = vmatprep.subr.bf16.mxu0 %v1938
  %3732 = vmatpush1.bf16.msra.mxu0 %v1937
  %3733 = vmatprep.subr.bf16.mxu0 %v1940
  %3734 = vmatpush1.bf16.msra.mxu0 %v1939
  %3735 = vmatprep.subr.bf16.mxu0 %v1942
  %3736 = vmatpush1.bf16.msra.mxu0 %v1941
  %3737 = vmatprep.subr.bf16.mxu0 %v1944
  %3738 = vmatpush1.bf16.msra.mxu0 %v1943
  %3739 = vmatprep.subr.bf16.mxu0 %v1946
  %3740 = vmatpush1.bf16.msra.mxu0 %v1945
  %3741 = vmatprep.subr.bf16.mxu0 %v1948
  %3742 = vmatpush1.bf16.msra.mxu0 %v1947
  %3743 = vmatprep.subr.bf16.mxu0 %v1950
  %3744 = vmatpush1.bf16.msra.mxu0 %v1949
  %3745 = vmatprep.mubr.bf16.mxu0 %v3614
  %3746 = vmatmul.mubr.bf16.gmra.mrb[0].mxu0 %v3613
  %v3747 = vpop.f32.mrb[0].mxu0
  %v3748 = vadd.f32 0.0, %v3747
  %v3749 = vpop.f32.mrb[0].mxu0
  %v3750 = vadd.f32 0.0, %v3749
  %v3751 = vpop.f32.mrb[0].mxu0
  %v3752 = vadd.f32 0.0, %v3751
  %v3753 = vpop.f32.mrb[0].mxu0
  %v3754 = vadd.f32 0.0, %v3753
  %3755 = vmatprep.mubr.bf16.mxu0 %v3639
  %3756 = vmatmul.mubr.bf16.gmra.mrb[0].mxu0 %v3638
  %v3757 = vpop.f32.mrb[0].mxu0
  %v3758 = vadd.f32 0.0, %v3757
  %v3759 = vpop.f32.mrb[0].mxu0
  %v3760 = vadd.f32 0.0, %v3759
  %v3761 = vpop.f32.mrb[0].mxu0
  %v3762 = vadd.f32 0.0, %v3761
  %v3763 = vpop.f32.mrb[0].mxu0
  %v3764 = vadd.f32 0.0, %v3763
  %3765 = vdwg.mxu0
  %3766 = vmatprep.subr.bf16.mxu0 %v1952
  %3767 = vmatpush1.bf16.msra.mxu0 %v1951
  %3768 = vmatprep.subr.bf16.mxu0 %v1954
  %3769 = vmatpush1.bf16.msra.mxu0 %v1953
  %3770 = vmatprep.subr.bf16.mxu0 %v1956
  %3771 = vmatpush1.bf16.msra.mxu0 %v1955
  %3772 = vmatprep.subr.bf16.mxu0 %v1958
  %3773 = vmatpush1.bf16.msra.mxu0 %v1957
  %3774 = vmatprep.subr.bf16.mxu0 %v1960
  %3775 = vmatpush1.bf16.msra.mxu0 %v1959
  %3776 = vmatprep.subr.bf16.mxu0 %v1962
  %3777 = vmatpush1.bf16.msra.mxu0 %v1961
  %3778 = vmatprep.subr.bf16.mxu0 %v1964
  %3779 = vmatpush1.bf16.msra.mxu0 %v1963
  %3780 = vmatprep.subr.bf16.mxu0 %v1966
  %3781 = vmatpush1.bf16.msra.mxu0 %v1965
  %3782 = vmatprep.subr.bf16.mxu0 %v1968
  %3783 = vmatpush1.bf16.msra.mxu0 %v1967
  %3784 = vmatprep.subr.bf16.mxu0 %v1970
  %3785 = vmatpush1.bf16.msra.mxu0 %v1969
  %3786 = vmatprep.subr.bf16.mxu0 %v1972
  %3787 = vmatpush1.bf16.msra.mxu0 %v1971
  %3788 = vmatprep.subr.bf16.mxu0 %v1974
  %3789 = vmatpush1.bf16.msra.mxu0 %v1973
  %3790 = vmatprep.subr.bf16.mxu0 %v1976
  %3791 = vmatpush1.bf16.msra.mxu0 %v1975
  %3792 = vmatprep.subr.bf16.mxu0 %v1978
  %3793 = vmatpush1.bf16.msra.mxu0 %v1977
  %3794 = vmatprep.subr.bf16.mxu0 %v1980
  %3795 = vmatpush1.bf16.msra.mxu0 %v1979
  %3796 = vmatprep.subr.bf16.mxu0 %v1982
  %3797 = vmatpush1.bf16.msra.mxu0 %v1981
  %3798 = vmatprep.mubr.bf16.mxu0 %v3616
  %3799 = vmatmul.mubr.bf16.gmra.mrb[0].mxu0 %v3615
  %v3800 = vpop.f32.mrb[0].mxu0
  %v3801 = vadd.f32 %v3748, %v3800
  %v3802 = vpop.f32.mrb[0].mxu0
  %v3803 = vadd.f32 %v3750, %v3802
  %v3804 = vpop.f32.mrb[0].mxu0
  %v3805 = vadd.f32 %v3752, %v3804
  %v3806 = vpop.f32.mrb[0].mxu0
  %v3807 = vadd.f32 %v3754, %v3806
  %3808 = vmatprep.mubr.bf16.mxu0 %v3641
  %3809 = vmatmul.mubr.bf16.gmra.mrb[0].mxu0 %v3640
  %v3810 = vpop.f32.mrb[0].mxu0
  %v3811 = vadd.f32 %v3758, %v3810
  %v3812 = vpop.f32.mrb[0].mxu0
  %v3813 = vadd.f32 %v3760, %v3812
  %v3814 = vpop.f32.mrb[0].mxu0
  %v3815 = vadd.f32 %v3762, %v3814
  %v3816 = vpop.f32.mrb[0].mxu0
  %v3817 = vadd.f32 %v3764, %v3816
  %3818 = vdwg.mxu0
  %3819 = vmatprep.subr.bf16.mxu0 %v1984
  %3820 = vmatpush1.bf16.msra.mxu0 %v1983
  %3821 = vmatprep.subr.bf16.mxu0 %v1986
  %3822 = vmatpush1.bf16.msra.mxu0 %v1985
  %3823 = vmatprep.subr.bf16.mxu0 %v1988
  %3824 = vmatpush1.bf16.msra.mxu0 %v1987
  %3825 = vmatprep.subr.bf16.mxu0 %v1990
  %3826 = vmatpush1.bf16.msra.mxu0 %v1989
  %3827 = vmatprep.subr.bf16.mxu0 %v1992
  %3828 = vmatpush1.bf16.msra.mxu0 %v1991
  %3829 = vmatprep.subr.bf16.mxu0 %v1994
  %3830 = vmatpush1.bf16.msra.mxu0 %v1993
  %3831 = vmatprep.subr.bf16.mxu0 %v1996
  %3832 = vmatpush1.bf16.msra.mxu0 %v1995
  %3833 = vmatprep.subr.bf16.mxu0 %v1998
  %3834 = vmatpush1.bf16.msra.mxu0 %v1997
  %3835 = vmatprep.subr.bf16.mxu0 %v2000
  %3836 = vmatpush1.bf16.msra.mxu0 %v1999
  %3837 = vmatprep.subr.bf16.mxu0 %v2002
  %3838 = vmatpush1.bf16.msra.mxu0 %v2001
  %3839 = vmatprep.subr.bf16.mxu0 %v2004
  %3840 = vmatpush1.bf16.msra.mxu0 %v2003
  %3841 = vmatprep.subr.bf16.mxu0 %v2006
  %3842 = vmatpush1.bf16.msra.mxu0 %v2005
  %3843 = vmatprep.subr.bf16.mxu0 %v2008
  %3844 = vmatpush1.bf16.msra.mxu0 %v2007
  %3845 = vmatprep.subr.bf16.mxu0 %v2010
  %3846 = vmatpush1.bf16.msra.mxu0 %v2009
  %3847 = vmatprep.subr.bf16.mxu0 %v2012
  %3848 = vmatpush1.bf16.msra.mxu0 %v2011
  %3849 = vmatprep.subr.bf16.mxu0 %v2014
  %3850 = vmatpush1.bf16.msra.mxu0 %v2013
  %3851 = vmatprep.mubr.bf16.mxu0 %v3618
  %3852 = vmatmul.mubr.bf16.gmra.mrb[0].mxu0 %v3617
  %v3853 = vpop.f32.mrb[0].mxu0
  %v3854 = vadd.f32 %v3801, %v3853
  %v3855 = vpop.f32.mrb[0].mxu0
  %v3856 = vadd.f32 %v3803, %v3855
  %v3857 = vpop.f32.mrb[0].mxu0
  %v3858 = vadd.f32 %v3805, %v3857
  %v3859 = vpop.f32.mrb[0].mxu0
  %v3860 = vadd.f32 %v3807, %v3859
  %3861 = vmatprep.mubr.bf16.mxu0 %v3643
  %3862 = vmatmul.mubr.bf16.gmra.mrb[0].mxu0 %v3642
  %v3863 = vpop.f32.mrb[0].mxu0
  %v3864 = vadd.f32 %v3811, %v3863
  %v3865 = vpop.f32.mrb[0].mxu0
  %v3866 = vadd.f32 %v3813, %v3865
  %v3867 = vpop.f32.mrb[0].mxu0
  %v3868 = vadd.f32 %v3815, %v3867
  %v3869 = vpop.f32.mrb[0].mxu0
  %v3870 = vadd.f32 %v3817, %v3869
  %3871 = vdwg.mxu0
  %3872 = vmatprep.subr.bf16.mxu0 %v2016
  %3873 = vmatpush1.bf16.msra.mxu0 %v2015
  %3874 = vmatprep.subr.bf16.mxu0 %v2018
  %3875 = vmatpush1.bf16.msra.mxu0 %v2017
  %3876 = vmatprep.subr.bf16.mxu0 %v2020
  %3877 = vmatpush1.bf16.msra.mxu0 %v2019
  %3878 = vmatprep.subr.bf16.mxu0 %v2022
  %3879 = vmatpush1.bf16.msra.mxu0 %v2021
  %3880 = vmatprep.subr.bf16.mxu0 %v2024
  %3881 = vmatpush1.bf16.msra.mxu0 %v2023
  %3882 = vmatprep.subr.bf16.mxu0 %v2026
  %3883 = vmatpush1.bf16.msra.mxu0 %v2025
  %3884 = vmatprep.subr.bf16.mxu0 %v2028
  %3885 = vmatpush1.bf16.msra.mxu0 %v2027
  %3886 = vmatprep.subr.bf16.mxu0 %v2030
  %3887 = vmatpush1.bf16.msra.mxu0 %v2029
  %3888 = vmatprep.subr.bf16.mxu0 %v2032
  %3889 = vmatpush1.bf16.msra.mxu0 %v2031
  %3890 = vmatprep.subr.bf16.mxu0 %v2034
  %3891 = vmatpush1.bf16.msra.mxu0 %v2033
  %3892 = vmatprep.subr.bf16.mxu0 %v2036
  %3893 = vmatpush1.bf16.msra.mxu0 %v2035
  %3894 = vmatprep.subr.bf16.mxu0 %v2038
  %3895 = vmatpush1.bf16.msra.mxu0 %v2037
  %3896 = vmatprep.subr.bf16.mxu0 %v2040
  %3897 = vmatpush1.bf16.msra.mxu0 %v2039
  %3898 = vmatprep.subr.bf16.mxu0 %v2042
  %3899 = vmatpush1.bf16.msra.mxu0 %v2041
  %3900 = vmatprep.subr.bf16.mxu0 %v2044
  %3901 = vmatpush1.bf16.msra.mxu0 %v2043
  %3902 = vmatprep.subr.bf16.mxu0 %v2046
  %3903 = vmatpush1.bf16.msra.mxu0 %v2045
  %3904 = vmatprep.mubr.bf16.mxu0 %v3620
  %3905 = vmatmul.mubr.bf16.gmra.mrb[0].mxu0 %v3619
  %v3906 = vpop.f32.mrb[0].mxu0
  %v3907 = vadd.f32 %v3854, %v3906
  %v3908 = vpop.f32.mrb[0].mxu0
  %v3909 = vadd.f32 %v3856, %v3908
  %v3910 = vpop.f32.mrb[0].mxu0
  %v3911 = vadd.f32 %v3858, %v3910
  %v3912 = vpop.f32.mrb[0].mxu0
  %v3913 = vadd.f32 %v3860, %v3912
  %3914 = vmatprep.mubr.bf16.mxu0 %v3645
  %3915 = vmatmul.mubr.bf16.gmra.mrb[0].mxu0 %v3644
  %v3916 = vpop.f32.mrb[0].mxu0
  %v3917 = vadd.f32 %v3864, %v3916
  %v3918 = vpop.f32.mrb[0].mxu0
  %v3919 = vadd.f32 %v3866, %v3918
  %v3920 = vpop.f32.mrb[0].mxu0
  %v3921 = vadd.f32 %v3868, %v3920
  %v3922 = vpop.f32.mrb[0].mxu0
  %v3923 = vadd.f32 %v3870, %v3922
  %3924 = vdwg.mxu0
  %3925 = vmatprep.subr.bf16.mxu0 %v2048
  %3926 = vmatpush1.bf16.msra.mxu0 %v2047
  %3927 = vmatprep.subr.bf16.mxu0 %v2050
  %3928 = vmatpush1.bf16.msra.mxu0 %v2049
  %3929 = vmatprep.subr.bf16.mxu0 %v2052
  %3930 = vmatpush1.bf16.msra.mxu0 %v2051
  %3931 = vmatprep.subr.bf16.mxu0 %v2054
  %3932 = vmatpush1.bf16.msra.mxu0 %v2053
  %3933 = vmatprep.subr.bf16.mxu0 %v2056
  %3934 = vmatpush1.bf16.msra.mxu0 %v2055
  %3935 = vmatprep.subr.bf16.mxu0 %v2058
  %3936 = vmatpush1.bf16.msra.mxu0 %v2057
  %3937 = vmatprep.subr.bf16.mxu0 %v2060
  %3938 = vmatpush1.bf16.msra.mxu0 %v2059
  %3939 = vmatprep.subr.bf16.mxu0 %v2062
  %3940 = vmatpush1.bf16.msra.mxu0 %v2061
  %3941 = vmatprep.subr.bf16.mxu0 %v2064
  %3942 = vmatpush1.bf16.msra.mxu0 %v2063
  %3943 = vmatprep.subr.bf16.mxu0 %v2066
  %3944 = vmatpush1.bf16.msra.mxu0 %v2065
  %3945 = vmatprep.subr.bf16.mxu0 %v2068
  %3946 = vmatpush1.bf16.msra.mxu0 %v2067
  %3947 = vmatprep.subr.bf16.mxu0 %v2070
  %3948 = vmatpush1.bf16.msra.mxu0 %v2069
  %3949 = vmatprep.subr.bf16.mxu0 %v2072
  %3950 = vmatpush1.bf16.msra.mxu0 %v2071
  %3951 = vmatprep.subr.bf16.mxu0 %v2074
  %3952 = vmatpush1.bf16.msra.mxu0 %v2073
  %3953 = vmatprep.subr.bf16.mxu0 %v2076
  %3954 = vmatpush1.bf16.msra.mxu0 %v2075
  %3955 = vmatprep.subr.bf16.mxu0 %v2078
  %3956 = vmatpush1.bf16.msra.mxu0 %v2077
  %3957 = vmatprep.mubr.bf16.mxu0 %v3622
  %3958 = vmatmul.mubr.bf16.gmra.mrb[0].mxu0 %v3621
  %v3959 = vpop.f32.mrb[0].mxu0
  %v3960 = vadd.f32 %v3907, %v3959
  %v3961 = vpop.f32.mrb[0].mxu0
  %v3962 = vadd.f32 %v3909, %v3961
  %v3963 = vpop.f32.mrb[0].mxu0
  %v3964 = vadd.f32 %v3911, %v3963
  %v3965 = vpop.f32.mrb[0].mxu0
  %v3966 = vadd.f32 %v3913, %v3965
  %3967 = vmatprep.mubr.bf16.mxu0 %v3647
  %3968 = vmatmul.mubr.bf16.gmra.mrb[0].mxu0 %v3646
  %v3969 = vpop.f32.mrb[0].mxu0
  %v3970 = vadd.f32 %v3917, %v3969
  %v3971 = vpop.f32.mrb[0].mxu0
  %v3972 = vadd.f32 %v3919, %v3971
  %v3973 = vpop.f32.mrb[0].mxu0
  %v3974 = vadd.f32 %v3921, %v3973
  %v3975 = vpop.f32.mrb[0].mxu0
  %v3976 = vadd.f32 %v3923, %v3975
  %3977 = vdwg.mxu0
  %3978 = vmatprep.subr.bf16.mxu0 %v2080
  %3979 = vmatpush1.bf16.msra.mxu0 %v2079
  %3980 = vmatprep.subr.bf16.mxu0 %v2082
  %3981 = vmatpush1.bf16.msra.mxu0 %v2081
  %3982 = vmatprep.subr.bf16.mxu0 %v2084
  %3983 = vmatpush1.bf16.msra.mxu0 %v2083
  %3984 = vmatprep.subr.bf16.mxu0 %v2086
  %3985 = vmatpush1.bf16.msra.mxu0 %v2085
  %3986 = vmatprep.subr.bf16.mxu0 %v2088
  %3987 = vmatpush1.bf16.msra.mxu0 %v2087
  %3988 = vmatprep.subr.bf16.mxu0 %v2090
  %3989 = vmatpush1.bf16.msra.mxu0 %v2089
  %3990 = vmatprep.subr.bf16.mxu0 %v2092
  %3991 = vmatpush1.bf16.msra.mxu0 %v2091
  %3992 = vmatprep.subr.bf16.mxu0 %v2094
  %3993 = vmatpush1.bf16.msra.mxu0 %v2093
  %3994 = vmatprep.subr.bf16.mxu0 %v2096
  %3995 = vmatpush1.bf16.msra.mxu0 %v2095
  %3996 = vmatprep.subr.bf16.mxu0 %v2098
  %3997 = vmatpush1.bf16.msra.mxu0 %v2097
  %3998 = vmatprep.subr.bf16.mxu0 %v2100
  %3999 = vmatpush1.bf16.msra.mxu0 %v2099
  %4000 = vmatprep.subr.bf16.mxu0 %v2102
  %4001 = vmatpush1.bf16.msra.mxu0 %v2101
  %4002 = vmatprep.subr.bf16.mxu0 %v2104
  %4003 = vmatpush1.bf16.msra.mxu0 %v2103
  %4004 = vmatprep.subr.bf16.mxu0 %v2106
  %4005 = vmatpush1.bf16.msra.mxu0 %v2105
  %4006 = vmatprep.subr.bf16.mxu0 %v2108
  %4007 = vmatpush1.bf16.msra.mxu0 %v2107
  %4008 = vmatprep.subr.bf16.mxu0 %v2110
  %4009 = vmatpush1.bf16.msra.mxu0 %v2109
  %4010 = vmatprep.mubr.bf16.mxu0 %v3624
  %4011 = vmatmul.mubr.bf16.gmra.mrb[0].mxu0 %v3623
  %v4012 = vpop.f32.mrb[0].mxu0
  %v4013 = vadd.f32 %v3960, %v4012
  %v4014 = vpop.f32.mrb[0].mxu0
  %v4015 = vadd.f32 %v3962, %v4014
  %v4016 = vpop.f32.mrb[0].mxu0
  %v4017 = vadd.f32 %v3964, %v4016
  %v4018 = vpop.f32.mrb[0].mxu0
  %v4019 = vadd.f32 %v3966, %v4018
  %4020 = vmatprep.mubr.bf16.mxu0 %v3649
  %4021 = vmatmul.mubr.bf16.gmra.mrb[0].mxu0 %v3648
  %v4022 = vpop.f32.mrb[0].mxu0
  %v4023 = vadd.f32 %v3970, %v4022
  %v4024 = vpop.f32.mrb[0].mxu0
  %v4025 = vadd.f32 %v3972, %v4024
  %v4026 = vpop.f32.mrb[0].mxu0
  %v4027 = vadd.f32 %v3974, %v4026
  %v4028 = vpop.f32.mrb[0].mxu0
  %v4029 = vadd.f32 %v3976, %v4028
  %4030 = vdwg.mxu0
  %4031 = vmatprep.subr.bf16.mxu0 %v2112
  %4032 = vmatpush1.bf16.msra.mxu0 %v2111
  %4033 = vmatprep.subr.bf16.mxu0 %v2114
  %4034 = vmatpush1.bf16.msra.mxu0 %v2113
  %4035 = vmatprep.subr.bf16.mxu0 %v2116
  %4036 = vmatpush1.bf16.msra.mxu0 %v2115
  %4037 = vmatprep.subr.bf16.mxu0 %v2118
  %4038 = vmatpush1.bf16.msra.mxu0 %v2117
  %4039 = vmatprep.subr.bf16.mxu0 %v2120
  %4040 = vmatpush1.bf16.msra.mxu0 %v2119
  %4041 = vmatprep.subr.bf16.mxu0 %v2122
  %4042 = vmatpush1.bf16.msra.mxu0 %v2121
  %4043 = vmatprep.subr.bf16.mxu0 %v2124
  %4044 = vmatpush1.bf16.msra.mxu0 %v2123
  %4045 = vmatprep.subr.bf16.mxu0 %v2126
  %4046 = vmatpush1.bf16.msra.mxu0 %v2125
  %4047 = vmatprep.subr.bf16.mxu0 %v2128
  %4048 = vmatpush1.bf16.msra.mxu0 %v2127
  %4049 = vmatprep.subr.bf16.mxu0 %v2130
  %4050 = vmatpush1.bf16.msra.mxu0 %v2129
  %4051 = vmatprep.subr.bf16.mxu0 %v2132
  %4052 = vmatpush1.bf16.msra.mxu0 %v2131
  %4053 = vmatprep.subr.bf16.mxu0 %v2134
  %4054 = vmatpush1.bf16.msra.mxu0 %v2133
  %4055 = vmatprep.subr.bf16.mxu0 %v2136
  %4056 = vmatpush1.bf16.msra.mxu0 %v2135
  %4057 = vmatprep.subr.bf16.mxu0 %v2138
  %4058 = vmatpush1.bf16.msra.mxu0 %v2137
  %4059 = vmatprep.subr.bf16.mxu0 %v2140
  %4060 = vmatpush1.bf16.msra.mxu0 %v2139
  %4061 = vmatprep.subr.bf16.mxu0 %v2142
  %4062 = vmatpush1.bf16.msra.mxu0 %v2141
  %4063 = vmatprep.mubr.bf16.mxu0 %v3626
  %4064 = vmatmul.mubr.bf16.gmra.mrb[0].mxu0 %v3625
  %v4065 = vpop.f32.mrb[0].mxu0
  %v4066 = vadd.f32 %v4013, %v4065
  %v4067 = vpop.f32.mrb[0].mxu0
  %v4068 = vadd.f32 %v4015, %v4067
  %v4069 = vpop.f32.mrb[0].mxu0
  %v4070 = vadd.f32 %v4017, %v4069
  %v4071 = vpop.f32.mrb[0].mxu0
  %v4072 = vadd.f32 %v4019, %v4071
  %4073 = vmatprep.mubr.bf16.mxu0 %v3651
  %4074 = vmatmul.mubr.bf16.gmra.mrb[0].mxu0 %v3650
  %v4075 = vpop.f32.mrb[0].mxu0
  %v4076 = vadd.f32 %v4023, %v4075
  %v4077 = vpop.f32.mrb[0].mxu0
  %v4078 = vadd.f32 %v4025, %v4077
  %v4079 = vpop.f32.mrb[0].mxu0
  %v4080 = vadd.f32 %v4027, %v4079
  %v4081 = vpop.f32.mrb[0].mxu0
  %v4082 = vadd.f32 %v4029, %v4081
  %4083 = vdwg.mxu0
  %4084 = vmatprep.subr.bf16.mxu0 %v2144
  %4085 = vmatpush1.bf16.msra.mxu0 %v2143
  %4086 = vmatprep.subr.bf16.mxu0 %v2146
  %4087 = vmatpush1.bf16.msra.mxu0 %v2145
  %4088 = vmatprep.subr.bf16.mxu0 %v2148
  %4089 = vmatpush1.bf16.msra.mxu0 %v2147
  %4090 = vmatprep.subr.bf16.mxu0 %v2150
  %4091 = vmatpush1.bf16.msra.mxu0 %v2149
  %4092 = vmatprep.subr.bf16.mxu0 %v2152
  %4093 = vmatpush1.bf16.msra.mxu0 %v2151
  %4094 = vmatprep.subr.bf16.mxu0 %v2154
  %4095 = vmatpush1.bf16.msra.mxu0 %v2153
  %4096 = vmatprep.subr.bf16.mxu0 %v2156
  %4097 = vmatpush1.bf16.msra.mxu0 %v2155
  %4098 = vmatprep.subr.bf16.mxu0 %v2158
  %4099 = vmatpush1.bf16.msra.mxu0 %v2157
  %4100 = vmatprep.subr.bf16.mxu0 %v2160
  %4101 = vmatpush1.bf16.msra.mxu0 %v2159
  %4102 = vmatprep.subr.bf16.mxu0 %v2162
  %4103 = vmatpush1.bf16.msra.mxu0 %v2161
  %4104 = vmatprep.subr.bf16.mxu0 %v2164
  %4105 = vmatpush1.bf16.msra.mxu0 %v2163
  %4106 = vmatprep.subr.bf16.mxu0 %v2166
  %4107 = vmatpush1.bf16.msra.mxu0 %v2165
  %4108 = vmatprep.subr.bf16.mxu0 %v2168
  %4109 = vmatpush1.bf16.msra.mxu0 %v2167
  %4110 = vmatprep.subr.bf16.mxu0 %v2170
  %4111 = vmatpush1.bf16.msra.mxu0 %v2169
  %4112 = vmatprep.subr.bf16.mxu0 %v2172
  %4113 = vmatpush1.bf16.msra.mxu0 %v2171
  %4114 = vmatprep.subr.bf16.mxu0 %v2174
  %4115 = vmatpush1.bf16.msra.mxu0 %v2173
  %4116 = vmatprep.mubr.bf16.mxu0 %v3628
  %4117 = vmatmul.mubr.bf16.gmra.mrb[0].mxu0 %v3627
  %v4118 = vpop.f32.mrb[0].mxu0
  %v4119 = vadd.f32 %v4066, %v4118
  %v4120 = vpop.f32.mrb[0].mxu0
  %v4121 = vadd.f32 %v4068, %v4120
  %v4122 = vpop.f32.mrb[0].mxu0
  %v4123 = vadd.f32 %v4070, %v4122
  %v4124 = vpop.f32.mrb[0].mxu0
  %v4125 = vadd.f32 %v4072, %v4124
  %4126 = vmatprep.mubr.bf16.mxu0 %v3653
  %4127 = vmatmul.mubr.bf16.gmra.mrb[0].mxu0 %v3652
  %v4128 = vpop.f32.mrb[0].mxu0
  %v4129 = vadd.f32 %v4076, %v4128
  %v4130 = vpop.f32.mrb[0].mxu0
  %v4131 = vadd.f32 %v4078, %v4130
  %v4132 = vpop.f32.mrb[0].mxu0
  %v4133 = vadd.f32 %v4080, %v4132
  %v4134 = vpop.f32.mrb[0].mxu0
  %v4135 = vadd.f32 %v4082, %v4134
  %4136 = vdwg.mxu0
  %4137 = vmatprep.subr.bf16.mxu0 %v2176
  %4138 = vmatpush1.bf16.msra.mxu0 %v2175
  %4139 = vmatprep.subr.bf16.mxu0 %v2178
  %4140 = vmatpush1.bf16.msra.mxu0 %v2177
  %4141 = vmatprep.subr.bf16.mxu0 %v2180
  %4142 = vmatpush1.bf16.msra.mxu0 %v2179
  %4143 = vmatprep.subr.bf16.mxu0 %v2182
  %4144 = vmatpush1.bf16.msra.mxu0 %v2181
  %4145 = vmatprep.subr.bf16.mxu0 %v2184
  %4146 = vmatpush1.bf16.msra.mxu0 %v2183
  %4147 = vmatprep.subr.bf16.mxu0 %v2186
  %4148 = vmatpush1.bf16.msra.mxu0 %v2185
  %4149 = vmatprep.subr.bf16.mxu0 %v2188
  %4150 = vmatpush1.bf16.msra.mxu0 %v2187
  %4151 = vmatprep.subr.bf16.mxu0 %v2190
  %4152 = vmatpush1.bf16.msra.mxu0 %v2189
  %4153 = vmatprep.subr.bf16.mxu0 %v2192
  %4154 = vmatpush1.bf16.msra.mxu0 %v2191
  %4155 = vmatprep.subr.bf16.mxu0 %v2194
  %4156 = vmatpush1.bf16.msra.mxu0 %v2193
  %4157 = vmatprep.subr.bf16.mxu0 %v2196
  %4158 = vmatpush1.bf16.msra.mxu0 %v2195
  %4159 = vmatprep.subr.bf16.mxu0 %v2198
  %4160 = vmatpush1.bf16.msra.mxu0 %v2197
  %4161 = vmatprep.subr.bf16.mxu0 %v2200
  %4162 = vmatpush1.bf16.msra.mxu0 %v2199
  %4163 = vmatprep.subr.bf16.mxu0 %v2202
  %4164 = vmatpush1.bf16.msra.mxu0 %v2201
  %4165 = vmatprep.subr.bf16.mxu0 %v2204
  %4166 = vmatpush1.bf16.msra.mxu0 %v2203
  %4167 = vmatprep.subr.bf16.mxu0 %v2206
  %4168 = vmatpush1.bf16.msra.mxu0 %v2205
  %4169 = vmatprep.mubr.bf16.mxu0 %v3630
  %4170 = vmatmul.mubr.bf16.gmra.mrb[0].mxu0 %v3629
  %v4171 = vpop.f32.mrb[0].mxu0
  %v4172 = vadd.f32 %v4119, %v4171
  %v4173 = vpop.f32.mrb[0].mxu0
  %v4174 = vadd.f32 %v4121, %v4173
  %v4175 = vpop.f32.mrb[0].mxu0
  %v4176 = vadd.f32 %v4123, %v4175
  %v4177 = vpop.f32.mrb[0].mxu0
  %v4178 = vadd.f32 %v4125, %v4177
  %4179 = vmatprep.mubr.bf16.mxu0 %v3655
  %4180 = vmatmul.mubr.bf16.gmra.mrb[0].mxu0 %v3654
  %v4181 = vpop.f32.mrb[0].mxu0
  %v4182 = vadd.f32 %v4129, %v4181
  %v4183 = vpop.f32.mrb[0].mxu0
  %v4184 = vadd.f32 %v4131, %v4183
  %v4185 = vpop.f32.mrb[0].mxu0
  %v4186 = vadd.f32 %v4133, %v4185
  %v4187 = vpop.f32.mrb[0].mxu0
  %v4188 = vadd.f32 %v4135, %v4187
  %4189 = vdwg.mxu0
  %4190 = vmatprep.subr.bf16.mxu0 %v2208
  %4191 = vmatpush1.bf16.msra.mxu0 %v2207
  %4192 = vmatprep.subr.bf16.mxu0 %v2210
  %4193 = vmatpush1.bf16.msra.mxu0 %v2209
  %4194 = vmatprep.subr.bf16.mxu0 %v2212
  %4195 = vmatpush1.bf16.msra.mxu0 %v2211
  %4196 = vmatprep.subr.bf16.mxu0 %v2214
  %4197 = vmatpush1.bf16.msra.mxu0 %v2213
  %4198 = vmatprep.subr.bf16.mxu0 %v2216
  %4199 = vmatpush1.bf16.msra.mxu0 %v2215
  %4200 = vmatprep.subr.bf16.mxu0 %v2218
  %4201 = vmatpush1.bf16.msra.mxu0 %v2217
  %4202 = vmatprep.subr.bf16.mxu0 %v2220
  %4203 = vmatpush1.bf16.msra.mxu0 %v2219
  %4204 = vmatprep.subr.bf16.mxu0 %v2222
  %4205 = vmatpush1.bf16.msra.mxu0 %v2221
  %4206 = vmatprep.subr.bf16.mxu0 %v2224
  %4207 = vmatpush1.bf16.msra.mxu0 %v2223
  %4208 = vmatprep.subr.bf16.mxu0 %v2226
  %4209 = vmatpush1.bf16.msra.mxu0 %v2225
  %4210 = vmatprep.subr.bf16.mxu0 %v2228
  %4211 = vmatpush1.bf16.msra.mxu0 %v2227
  %4212 = vmatprep.subr.bf16.mxu0 %v2230
  %4213 = vmatpush1.bf16.msra.mxu0 %v2229
  %4214 = vmatprep.subr.bf16.mxu0 %v2232
  %4215 = vmatpush1.bf16.msra.mxu0 %v2231
  %4216 = vmatprep.subr.bf16.mxu0 %v2234
  %4217 = vmatpush1.bf16.msra.mxu0 %v2233
  %4218 = vmatprep.subr.bf16.mxu0 %v2236
  %4219 = vmatpush1.bf16.msra.mxu0 %v2235
  %4220 = vmatprep.subr.bf16.mxu0 %v2238
  %4221 = vmatpush1.bf16.msra.mxu0 %v2237
  %4222 = vmatprep.mubr.bf16.mxu0 %v3632
  %4223 = vmatmul.mubr.bf16.gmra.mrb[0].mxu0 %v3631
  %v4224 = vpop.f32.mrb[0].mxu0
  %v4225 = vadd.f32 %v4172, %v4224
  %v4226 = vpop.f32.mrb[0].mxu0
  %v4227 = vadd.f32 %v4174, %v4226
  %v4228 = vpop.f32.mrb[0].mxu0
  %v4229 = vadd.f32 %v4176, %v4228
  %v4230 = vpop.f32.mrb[0].mxu0
  %v4231 = vadd.f32 %v4178, %v4230
  %4232 = vmatprep.mubr.bf16.mxu0 %v3657
  %4233 = vmatmul.mubr.bf16.gmra.mrb[0].mxu0 %v3656
  %v4234 = vpop.f32.mrb[0].mxu0
  %v4235 = vadd.f32 %v4182, %v4234
  %v4236 = vpop.f32.mrb[0].mxu0
  %v4237 = vadd.f32 %v4184, %v4236
  %v4238 = vpop.f32.mrb[0].mxu0
  %v4239 = vadd.f32 %v4186, %v4238
  %v4240 = vpop.f32.mrb[0].mxu0
  %v4241 = vadd.f32 %v4188, %v4240
  %4242 = vdwg.mxu0
  %4243 = vmatprep.subr.bf16.mxu0 %v2240
  %4244 = vmatpush1.bf16.msra.mxu0 %v2239
  %4245 = vmatprep.subr.bf16.mxu0 %v2242
  %4246 = vmatpush1.bf16.msra.mxu0 %v2241
  %4247 = vmatprep.subr.bf16.mxu0 %v2244
  %4248 = vmatpush1.bf16.msra.mxu0 %v2243
  %4249 = vmatprep.subr.bf16.mxu0 %v2246
  %4250 = vmatpush1.bf16.msra.mxu0 %v2245
  %4251 = vmatprep.subr.bf16.mxu0 %v2248
  %4252 = vmatpush1.bf16.msra.mxu0 %v2247
  %4253 = vmatprep.subr.bf16.mxu0 %v2250
  %4254 = vmatpush1.bf16.msra.mxu0 %v2249
  %4255 = vmatprep.subr.bf16.mxu0 %v2252
  %4256 = vmatpush1.bf16.msra.mxu0 %v2251
  %4257 = vmatprep.subr.bf16.mxu0 %v2254
  %4258 = vmatpush1.bf16.msra.mxu0 %v2253
  %4259 = vmatprep.subr.bf16.mxu0 %v2256
  %4260 = vmatpush1.bf16.msra.mxu0 %v2255
  %4261 = vmatprep.subr.bf16.mxu0 %v2258
  %4262 = vmatpush1.bf16.msra.mxu0 %v2257
  %4263 = vmatprep.subr.bf16.mxu0 %v2260
  %4264 = vmatpush1.bf16.msra.mxu0 %v2259
  %4265 = vmatprep.subr.bf16.mxu0 %v2262
  %4266 = vmatpush1.bf16.msra.mxu0 %v2261
  %4267 = vmatprep.subr.bf16.mxu0 %v2264
  %4268 = vmatpush1.bf16.msra.mxu0 %v2263
  %4269 = vmatprep.subr.bf16.mxu0 %v2266
  %4270 = vmatpush1.bf16.msra.mxu0 %v2265
  %4271 = vmatprep.subr.bf16.mxu0 %v2268
  %4272 = vmatpush1.bf16.msra.mxu0 %v2267
  %4273 = vmatprep.subr.bf16.mxu0 %v2270
  %4274 = vmatpush1.bf16.msra.mxu0 %v2269
  %4275 = vmatprep.mubr.bf16.mxu0 %v3634
  %4276 = vmatmul.mubr.bf16.gmra.mrb[0].mxu0 %v3633
  %v4277 = vpop.f32.mrb[0].mxu0
  %v4278 = vadd.f32 %v4225, %v4277
  %v4279 = vpop.f32.mrb[0].mxu0
  %v4280 = vadd.f32 %v4227, %v4279
  %v4281 = vpop.f32.mrb[0].mxu0
  %v4282 = vadd.f32 %v4229, %v4281
  %v4283 = vpop.f32.mrb[0].mxu0
  %v4284 = vadd.f32 %v4231, %v4283
  %4285 = vmatprep.mubr.bf16.mxu0 %v3659
  %4286 = vmatmul.mubr.bf16.gmra.mrb[0].mxu0 %v3658
  %v4287 = vpop.f32.mrb[0].mxu0
  %v4288 = vadd.f32 %v4235, %v4287
  %v4289 = vpop.f32.mrb[0].mxu0
  %v4290 = vadd.f32 %v4237, %v4289
  %v4291 = vpop.f32.mrb[0].mxu0
  %v4292 = vadd.f32 %v4239, %v4291
  %v4293 = vpop.f32.mrb[0].mxu0
  %v4294 = vadd.f32 %v4241, %v4293
  %4295 = vdwg.mxu0
  %4296 = vmatprep.subr.bf16.mxu0 %v2272
  %4297 = vmatpush1.bf16.msra.mxu0 %v2271
  %4298 = vmatprep.subr.bf16.mxu0 %v2274
  %4299 = vmatpush1.bf16.msra.mxu0 %v2273
  %4300 = vmatprep.subr.bf16.mxu0 %v2276
  %4301 = vmatpush1.bf16.msra.mxu0 %v2275
  %4302 = vmatprep.subr.bf16.mxu0 %v2278
  %4303 = vmatpush1.bf16.msra.mxu0 %v2277
  %4304 = vmatprep.subr.bf16.mxu0 %v2280
  %4305 = vmatpush1.bf16.msra.mxu0 %v2279
  %4306 = vmatprep.subr.bf16.mxu0 %v2282
  %4307 = vmatpush1.bf16.msra.mxu0 %v2281
  %4308 = vmatprep.subr.bf16.mxu0 %v2284
  %4309 = vmatpush1.bf16.msra.mxu0 %v2283
  %4310 = vmatprep.subr.bf16.mxu0 %v2286
  %4311 = vmatpush1.bf16.msra.mxu0 %v2285
  %4312 = vmatprep.subr.bf16.mxu0 %v2288
  %4313 = vmatpush1.bf16.msra.mxu0 %v2287
  %4314 = vmatprep.subr.bf16.mxu0 %v2290
  %4315 = vmatpush1.bf16.msra.mxu0 %v2289
  %4316 = vmatprep.subr.bf16.mxu0 %v2292
  %4317 = vmatpush1.bf16.msra.mxu0 %v2291
  %4318 = vmatprep.subr.bf16.mxu0 %v2294
  %4319 = vmatpush1.bf16.msra.mxu0 %v2293
  %4320 = vmatprep.subr.bf16.mxu0 %v2296
  %4321 = vmatpush1.bf16.msra.mxu0 %v2295
  %4322 = vmatprep.subr.bf16.mxu0 %v2298
  %4323 = vmatpush1.bf16.msra.mxu0 %v2297
  %4324 = vmatprep.subr.bf16.mxu0 %v2300
  %4325 = vmatpush1.bf16.msra.mxu0 %v2299
  %4326 = vmatprep.subr.bf16.mxu0 %v2302
  %4327 = vmatpush1.bf16.msra.mxu0 %v2301
  %4328 = vmatprep.mubr.bf16.mxu0 %v3636
  %4329 = vmatmul.mubr.bf16.gmra.mrb[0].mxu0 %v3635
  %v4330 = vpop.f32.mrb[0].mxu0
  %v4331 = vadd.f32 %v4278, %v4330
  %v4332 = vpop.f32.mrb[0].mxu0
  %v4333 = vadd.f32 %v4280, %v4332
  %v4334 = vpop.f32.mrb[0].mxu0
  %v4335 = vadd.f32 %v4282, %v4334
  %v4336 = vpop.f32.mrb[0].mxu0
  %v4337 = vadd.f32 %v4284, %v4336
  %4338 = vmatprep.mubr.bf16.mxu0 %v3661
  %4339 = vmatmul.mubr.bf16.gmra.mrb[0].mxu0 %v3660
  %v4340 = vpop.f32.mrb[0].mxu0
  %v4341 = vadd.f32 %v4288, %v4340
  %v4342 = vpop.f32.mrb[0].mxu0
  %v4343 = vadd.f32 %v4290, %v4342
  %v4344 = vpop.f32.mrb[0].mxu0
  %v4345 = vadd.f32 %v4292, %v4344
  %v4346 = vpop.f32.mrb[0].mxu0
  %v4347 = vadd.f32 %v4294, %v4346
  %4348 = vdwg.mxu0
  %4349 = vmatprep.subr.bf16.mxu0 %v2304
  %4350 = vmatpush1.bf16.msra.mxu0 %v2303
  %4351 = vmatprep.subr.bf16.mxu0 %v2306
  %4352 = vmatpush1.bf16.msra.mxu0 %v2305
  %4353 = vmatprep.subr.bf16.mxu0 %v2308
  %4354 = vmatpush1.bf16.msra.mxu0 %v2307
  %4355 = vmatprep.subr.bf16.mxu0 %v2310
  %4356 = vmatpush1.bf16.msra.mxu0 %v2309
  %4357 = vmatprep.subr.bf16.mxu0 %v2312
  %4358 = vmatpush1.bf16.msra.mxu0 %v2311
  %4359 = vmatprep.subr.bf16.mxu0 %v2314
  %4360 = vmatpush1.bf16.msra.mxu0 %v2313
  %4361 = vmatprep.subr.bf16.mxu0 %v2316
  %4362 = vmatpush1.bf16.msra.mxu0 %v2315
  %4363 = vmatprep.subr.bf16.mxu0 %v2318
  %4364 = vmatpush1.bf16.msra.mxu0 %v2317
  %4365 = vmatprep.subr.bf16.mxu0 0
  %4366 = vmatpush1.bf16.msra.mxu0 0
  %4367 = vmatprep.subr.bf16.mxu0 0
  %4368 = vmatpush1.bf16.msra.mxu0 0
  %4369 = vmatprep.subr.bf16.mxu0 0
  %4370 = vmatpush1.bf16.msra.mxu0 0
  %4371 = vmatprep.subr.bf16.mxu0 0
  %4372 = vmatpush1.bf16.msra.mxu0 0
  %4373 = vmatprep.subr.bf16.mxu0 0
  %4374 = vmatpush1.bf16.msra.mxu0 0
  %4375 = vmatprep.subr.bf16.mxu0 0
  %4376 = vmatpush1.bf16.msra.mxu0 0
  %4377 = vmatprep.subr.bf16.mxu0 0
  %4378 = vmatpush1.bf16.msra.mxu0 0
  %4379 = vmatprep.subr.bf16.mxu0 0
  %4380 = vmatpush1.bf16.msra.mxu0 0
  %4381 = vmatprep.mubr.bf16.mxu0 0
  %4382 = vmatmul.mubr.bf16.gmra.mrb[0].mxu0 %v3637
  %v4383 = vpop.f32.mrb[0].mxu0
  %v4384 = vadd.f32 %v4331, %v4383
  %v4385 = vpop.f32.mrb[0].mxu0
  %v4386 = vadd.f32 %v4333, %v4385
  %v4387 = vpop.f32.mrb[0].mxu0
  %v4388 = vadd.f32 %v4335, %v4387
  %v4389 = vpop.f32.mrb[0].mxu0
  %v4390 = vadd.f32 %v4337, %v4389
  %4391 = vmatprep.mubr.bf16.mxu0 0
  %4392 = vmatmul.mubr.bf16.gmra.mrb[0].mxu0 %v3662
  %v4393 = vpop.f32.mrb[0].mxu0
  %v4394 = vadd.f32 %v4341, %v4393
  %v4395 = vpop.f32.mrb[0].mxu0
  %v4396 = vadd.f32 %v4343, %v4395
  %v4397 = vpop.f32.mrb[0].mxu0
  %v4398 = vadd.f32 %v4345, %v4397
  %v4399 = vpop.f32.mrb[0].mxu0
  %v4400 = vadd.f32 %v4347, %v4399
  %4401 = vdwg.mxu0
  %v4402 = vmax.f32 %v3390, %v4384
  %v4403 = vmax.f32 %v3392, %v4386
  %v4404 = vmax.f32 %v3394, %v4388
  %v4405 = vmax.f32 %v3396, %v4390
  %v4406 = vmax.f32 %v3400, %v4394
  %v4407 = vmax.f32 %v3402, %v4396
  %v4408 = vmax.f32 %v3404, %v4398
  %v4409 = vmax.f32 %v3406, %v4400
  %s4410 = scalar_lea.vmem %s0, 800
  %v4411 = vld [vmem:[%s4410] sm:$0xff]
  %v4412 = vld [vmem:[%s4410 + $0x8] sm:$0xff]
  %v4413 = vld [vmem:[%s4410 + $0x10] sm:$0xff]
  %v4414 = vld [vmem:[%s4410 + $0x18] sm:$0xff]
  %v4415 = vld [vmem:[%s4410 + $0x20] sm:$0xff]
  %v4416 = vld [vmem:[%s4410 + $0x28] sm:$0xff]
  %v4417 = vld [vmem:[%s4410 + $0x30] sm:$0xff]
  %v4418 = vld [vmem:[%s4410 + $0x38] sm:$0xff]
  %v4419 = vld [vmem:[%s4410 + $0x40] sm:$0xff]
  %v4420 = vld [vmem:[%s4410 + $0x48] sm:$0xff]
  %v4421 = vld [vmem:[%s4410 + $0x50] sm:$0xff]
  %v4422 = vld [vmem:[%s4410 + $0x58] sm:$0xff]
  %v4423 = vld [vmem:[%s4410 + $0x60] sm:$0xf]
  %v4424 = vld [vmem:[%s4410 + $0x64] sm:$0xff]
  %v4425 = vld [vmem:[%s4410 + $0x6c] sm:$0xff]
  %v4426 = vld [vmem:[%s4410 + $0x74] sm:$0xff]
  %v4427 = vld [vmem:[%s4410 + $0x7c] sm:$0xff]
  %v4428 = vld [vmem:[%s4410 + $0x84] sm:$0xff]
  %v4429 = vld [vmem:[%s4410 + $0x8c] sm:$0xff]
  %v4430 = vld [vmem:[%s4410 + $0x94] sm:$0xff]
  %v4431 = vld [vmem:[%s4410 + $0x9c] sm:$0xff]
  %v4432 = vld [vmem:[%s4410 + $0xa4] sm:$0xff]
  %v4433 = vld [vmem:[%s4410 + $0xac] sm:$0xff]
  %v4434 = vld [vmem:[%s4410 + $0xb4] sm:$0xff]
  %v4435 = vld [vmem:[%s4410 + $0xbc] sm:$0xff]
  %v4436 = vld [vmem:[%s4410 + $0xc4] sm:$0xf]
  %v4437 = vld [vmem:[%s4410 + $0xc8] sm:$0xff]
  %v4438 = vld [vmem:[%s4410 + $0xd0] sm:$0xff]
  %v4439 = vld [vmem:[%s4410 + $0xd8] sm:$0xff]
  %v4440 = vld [vmem:[%s4410 + $0xe0] sm:$0xff]
  %v4441 = vld [vmem:[%s4410 + $0xe8] sm:$0xff]
  %v4442 = vld [vmem:[%s4410 + $0xf0] sm:$0xff]
  %v4443 = vld [vmem:[%s4410 + $0xf8] sm:$0xff]
  %v4444 = vld [vmem:[%s4410 + $0x100] sm:$0xff]
  %v4445 = vld [vmem:[%s4410 + $0x108] sm:$0xff]
  %v4446 = vld [vmem:[%s4410 + $0x110] sm:$0xff]
  %v4447 = vld [vmem:[%s4410 + $0x118] sm:$0xff]
  %v4448 = vld [vmem:[%s4410 + $0x120] sm:$0xff]
  %v4449 = vld [vmem:[%s4410 + $0x128] sm:$0xf]
  %v4450 = vld [vmem:[%s4410 + $0x12c] sm:$0xff]
  %v4451 = vld [vmem:[%s4410 + $0x134] sm:$0xff]
  %v4452 = vld [vmem:[%s4410 + $0x13c] sm:$0xff]
  %v4453 = vld [vmem:[%s4410 + $0x144] sm:$0xff]
  %v4454 = vld [vmem:[%s4410 + $0x14c] sm:$0xff]
  %v4455 = vld [vmem:[%s4410 + $0x154] sm:$0xff]
  %v4456 = vld [vmem:[%s4410 + $0x15c] sm:$0xff]
  %v4457 = vld [vmem:[%s4410 + $0x164] sm:$0xff]
  %v4458 = vld [vmem:[%s4410 + $0x16c] sm:$0xff]
  %v4459 = vld [vmem:[%s4410 + $0x174] sm:$0xff]
  %v4460 = vld [vmem:[%s4410 + $0x17c] sm:$0xff]
  %v4461 = vld [vmem:[%s4410 + $0x184] sm:$0xff]
  %v4462 = vld [vmem:[%s4410 + $0x18c] sm:$0xf]
  %v4515 = vunpack.c.l.b16 %v4411
  %v4516 = vunpack.c.h.b16 %v4411
  %v4517 = vunpack.c.l.b16 %v4412
  %v4518 = vunpack.c.h.b16 %v4412
  %v4519 = vunpack.c.l.b16 %v4413
  %v4520 = vunpack.c.h.b16 %v4413
  %v4521 = vunpack.c.l.b16 %v4414
  %v4522 = vunpack.c.h.b16 %v4414
  %v4523 = vunpack.c.l.b16 %v4415
  %v4524 = vunpack.c.h.b16 %v4415
  %v4525 = vunpack.c.l.b16 %v4416
  %v4526 = vunpack.c.h.b16 %v4416
  %v4527 = vunpack.c.l.b16 %v4417
  %v4528 = vunpack.c.h.b16 %v4417
  %v4529 = vunpack.c.l.b16 %v4418
  %v4530 = vunpack.c.h.b16 %v4418
  %v4531 = vunpack.c.l.b16 %v4419
  %v4532 = vunpack.c.h.b16 %v4419
  %v4533 = vunpack.c.l.b16 %v4420
  %v4534 = vunpack.c.h.b16 %v4420
  %v4535 = vunpack.c.l.b16 %v4421
  %v4536 = vunpack.c.h.b16 %v4421
  %v4537 = vunpack.c.l.b16 %v4422
  %v4538 = vunpack.c.h.b16 %v4422
  %v4539 = vunpack.c.l.b16 %v4423
  %v4540 = vunpack.c.l.b16 %v4424
  %v4541 = vunpack.c.h.b16 %v4424
  %v4542 = vunpack.c.l.b16 %v4425
  %v4543 = vunpack.c.h.b16 %v4425
  %v4544 = vunpack.c.l.b16 %v4426
  %v4545 = vunpack.c.h.b16 %v4426
  %v4546 = vunpack.c.l.b16 %v4427
  %v4547 = vunpack.c.h.b16 %v4427
  %v4548 = vunpack.c.l.b16 %v4428
  %v4549 = vunpack.c.h.b16 %v4428
  %v4550 = vunpack.c.l.b16 %v4429
  %v4551 = vunpack.c.h.b16 %v4429
  %v4552 = vunpack.c.l.b16 %v4430
  %v4553 = vunpack.c.h.b16 %v4430
  %v4554 = vunpack.c.l.b16 %v4431
  %v4555 = vunpack.c.h.b16 %v4431
  %v4556 = vunpack.c.l.b16 %v4432
  %v4557 = vunpack.c.h.b16 %v4432
  %v4558 = vunpack.c.l.b16 %v4433
  %v4559 = vunpack.c.h.b16 %v4433
  %v4560 = vunpack.c.l.b16 %v4434
  %v4561 = vunpack.c.h.b16 %v4434
  %v4562 = vunpack.c.l.b16 %v4435
  %v4563 = vunpack.c.h.b16 %v4435
  %v4564 = vunpack.c.l.b16 %v4436
  %v4565 = vunpack.c.l.b16 %v4437
  %v4566 = vunpack.c.h.b16 %v4437
  %v4567 = vunpack.c.l.b16 %v4438
  %v4568 = vunpack.c.h.b16 %v4438
  %v4569 = vunpack.c.l.b16 %v4439
  %v4570 = vunpack.c.h.b16 %v4439
  %v4571 = vunpack.c.l.b16 %v4440
  %v4572 = vunpack.c.h.b16 %v4440
  %v4573 = vunpack.c.l.b16 %v4441
  %v4574 = vunpack.c.h.b16 %v4441
  %v4575 = vunpack.c.l.b16 %v4442
  %v4576 = vunpack.c.h.b16 %v4442
  %v4577 = vunpack.c.l.b16 %v4443
  %v4578 = vunpack.c.h.b16 %v4443
  %v4579 = vunpack.c.l.b16 %v4444
  %v4580 = vunpack.c.h.b16 %v4444
  %v4581 = vunpack.c.l.b16 %v4445
  %v4582 = vunpack.c.h.b16 %v4445
  %v4583 = vunpack.c.l.b16 %v4446
  %v4584 = vunpack.c.h.b16 %v4446
  %v4585 = vunpack.c.l.b16 %v4447
  %v4586 = vunpack.c.h.b16 %v4447
  %v4587 = vunpack.c.l.b16 %v4448
  %v4588 = vunpack.c.h.b16 %v4448
  %v4589 = vunpack.c.l.b16 %v4449
  %v4590 = vunpack.c.l.b16 %v4450
  %v4591 = vunpack.c.h.b16 %v4450
  %v4592 = vunpack.c.l.b16 %v4451
  %v4593 = vunpack.c.h.b16 %v4451
  %v4594 = vunpack.c.l.b16 %v4452
  %v4595 = vunpack.c.h.b16 %v4452
  %v4596 = vunpack.c.l.b16 %v4453
  %v4597 = vunpack.c.h.b16 %v4453
  %v4598 = vunpack.c.l.b16 %v4454
  %v4599 = vunpack.c.h.b16 %v4454
  %v4600 = vunpack.c.l.b16 %v4455
  %v4601 = vunpack.c.h.b16 %v4455
  %v4602 = vunpack.c.l.b16 %v4456
  %v4603 = vunpack.c.h.b16 %v4456
  %v4604 = vunpack.c.l.b16 %v4457
  %v4605 = vunpack.c.h.b16 %v4457
  %v4606 = vunpack.c.l.b16 %v4458
  %v4607 = vunpack.c.h.b16 %v4458
  %v4608 = vunpack.c.l.b16 %v4459
  %v4609 = vunpack.c.h.b16 %v4459
  %v4610 = vunpack.c.l.b16 %v4460
  %v4611 = vunpack.c.h.b16 %v4460
  %v4612 = vunpack.c.l.b16 %v4461
  %v4613 = vunpack.c.h.b16 %v4461
  %v4614 = vunpack.c.l.b16 %v4462
  %v4615 = vpack.c.b16 %v4540, %v4515
  %v4616 = vpack.c.b16 %v4541, %v4516
  %v4617 = vpack.c.b16 %v4542, %v4517
  %v4618 = vpack.c.b16 %v4543, %v4518
  %v4619 = vpack.c.b16 %v4544, %v4519
  %v4620 = vpack.c.b16 %v4545, %v4520
  %v4621 = vpack.c.b16 %v4546, %v4521
  %v4622 = vpack.c.b16 %v4547, %v4522
  %v4623 = vpack.c.b16 %v4548, %v4523
  %v4624 = vpack.c.b16 %v4549, %v4524
  %v4625 = vpack.c.b16 %v4550, %v4525
  %v4626 = vpack.c.b16 %v4551, %v4526
  %v4627 = vpack.c.b16 %v4552, %v4527
  %v4628 = vpack.c.b16 %v4553, %v4528
  %v4629 = vpack.c.b16 %v4554, %v4529
  %v4630 = vpack.c.b16 %v4555, %v4530
  %v4631 = vpack.c.b16 %v4556, %v4531
  %v4632 = vpack.c.b16 %v4557, %v4532
  %v4633 = vpack.c.b16 %v4558, %v4533
  %v4634 = vpack.c.b16 %v4559, %v4534
  %v4635 = vpack.c.b16 %v4560, %v4535
  %v4636 = vpack.c.b16 %v4561, %v4536
  %v4637 = vpack.c.b16 %v4562, %v4537
  %v4638 = vpack.c.b16 %v4563, %v4538
  %v4639 = vpack.c.b16 %v4564, %v4539
  %v4640 = vpack.c.b16 %v4590, %v4565
  %v4641 = vpack.c.b16 %v4591, %v4566
  %v4642 = vpack.c.b16 %v4592, %v4567
  %v4643 = vpack.c.b16 %v4593, %v4568
  %v4644 = vpack.c.b16 %v4594, %v4569
  %v4645 = vpack.c.b16 %v4595, %v4570
  %v4646 = vpack.c.b16 %v4596, %v4571
  %v4647 = vpack.c.b16 %v4597, %v4572
  %v4648 = vpack.c.b16 %v4598, %v4573
  %v4649 = vpack.c.b16 %v4599, %v4574
  %v4650 = vpack.c.b16 %v4600, %v4575
  %v4651 = vpack.c.b16 %v4601, %v4576
  %v4652 = vpack.c.b16 %v4602, %v4577
  %v4653 = vpack.c.b16 %v4603, %v4578
  %v4654 = vpack.c.b16 %v4604, %v4579
  %v4655 = vpack.c.b16 %v4605, %v4580
  %v4656 = vpack.c.b16 %v4606, %v4581
  %v4657 = vpack.c.b16 %v4607, %v4582
  %v4658 = vpack.c.b16 %v4608, %v4583
  %v4659 = vpack.c.b16 %v4609, %v4584
  %v4660 = vpack.c.b16 %v4610, %v4585
  %v4661 = vpack.c.b16 %v4611, %v4586
  %v4662 = vpack.c.b16 %v4612, %v4587
  %v4663 = vpack.c.b16 %v4613, %v4588
  %v4664 = vpack.c.b16 %v4614, %v4589
  %4715 = vmatprep.subr.bf16.mxu0 %v1920
  %4716 = vmatpush1.bf16.msra.mxu0 %v1919
  %4717 = vmatprep.subr.bf16.mxu0 %v1922
  %4718 = vmatpush1.bf16.msra.mxu0 %v1921
  %4719 = vmatprep.subr.bf16.mxu0 %v1924
  %4720 = vmatpush1.bf16.msra.mxu0 %v1923
  %4721 = vmatprep.subr.bf16.mxu0 %v1926
  %4722 = vmatpush1.bf16.msra.mxu0 %v1925
  %4723 = vmatprep.subr.bf16.mxu0 %v1928
  %4724 = vmatpush1.bf16.msra.mxu0 %v1927
  %4725 = vmatprep.subr.bf16.mxu0 %v1930
  %4726 = vmatpush1.bf16.msra.mxu0 %v1929
  %4727 = vmatprep.subr.bf16.mxu0 %v1932
  %4728 = vmatpush1.bf16.msra.mxu0 %v1931
  %4729 = vmatprep.subr.bf16.mxu0 %v1934
  %4730 = vmatpush1.bf16.msra.mxu0 %v1933
  %4731 = vmatprep.subr.bf16.mxu0 %v1936
  %4732 = vmatpush1.bf16.msra.mxu0 %v1935
  %4733 = vmatprep.subr.bf16.mxu0 %v1938
  %4734 = vmatpush1.bf16.msra.mxu0 %v1937
  %4735 = vmatprep.subr.bf16.mxu0 %v1940
  %4736 = vmatpush1.bf16.msra.mxu0 %v1939
  %4737 = vmatprep.subr.bf16.mxu0 %v1942
  %4738 = vmatpush1.bf16.msra.mxu0 %v1941
  %4739 = vmatprep.subr.bf16.mxu0 %v1944
  %4740 = vmatpush1.bf16.msra.mxu0 %v1943
  %4741 = vmatprep.subr.bf16.mxu0 %v1946
  %4742 = vmatpush1.bf16.msra.mxu0 %v1945
  %4743 = vmatprep.subr.bf16.mxu0 %v1948
  %4744 = vmatpush1.bf16.msra.mxu0 %v1947
  %4745 = vmatprep.subr.bf16.mxu0 %v1950
  %4746 = vmatpush1.bf16.msra.mxu0 %v1949
  %4747 = vmatprep.mubr.bf16.mxu0 %v4616
  %4748 = vmatmul.mubr.bf16.gmra.mrb[0].mxu0 %v4615
  %v4749 = vpop.f32.mrb[0].mxu0
  %v4750 = vadd.f32 0.0, %v4749
  %v4751 = vpop.f32.mrb[0].mxu0
  %v4752 = vadd.f32 0.0, %v4751
  %v4753 = vpop.f32.mrb[0].mxu0
  %v4754 = vadd.f32 0.0, %v4753
  %v4755 = vpop.f32.mrb[0].mxu0
  %v4756 = vadd.f32 0.0, %v4755
  %4757 = vmatprep.mubr.bf16.mxu0 %v4641
  %4758 = vmatmul.mubr.bf16.gmra.mrb[0].mxu0 %v4640
  %v4759 = vpop.f32.mrb[0].mxu0
  %v4760 = vadd.f32 0.0, %v4759
  %v4761 = vpop.f32.mrb[0].mxu0
  %v4762 = vadd.f32 0.0, %v4761
  %v4763 = vpop.f32.mrb[0].mxu0
  %v4764 = vadd.f32 0.0, %v4763
  %v4765 = vpop.f32.mrb[0].mxu0
  %v4766 = vadd.f32 0.0, %v4765
  %4767 = vdwg.mxu0
  %4768 = vmatprep.subr.bf16.mxu0 %v1952
  %4769 = vmatpush1.bf16.msra.mxu0 %v1951
  %4770 = vmatprep.subr.bf16.mxu0 %v1954
  %4771 = vmatpush1.bf16.msra.mxu0 %v1953
  %4772 = vmatprep.subr.bf16.mxu0 %v1956
  %4773 = vmatpush1.bf16.msra.mxu0 %v1955
  %4774 = vmatprep.subr.bf16.mxu0 %v1958
  %4775 = vmatpush1.bf16.msra.mxu0 %v1957
  %4776 = vmatprep.subr.bf16.mxu0 %v1960
  %4777 = vmatpush1.bf16.msra.mxu0 %v1959
  %4778 = vmatprep.subr.bf16.mxu0 %v1962
  %4779 = vmatpush1.bf16.msra.mxu0 %v1961
  %4780 = vmatprep.subr.bf16.mxu0 %v1964
  %4781 = vmatpush1.bf16.msra.mxu0 %v1963
  %4782 = vmatprep.subr.bf16.mxu0 %v1966
  %4783 = vmatpush1.bf16.msra.mxu0 %v1965
  %4784 = vmatprep.subr.bf16.mxu0 %v1968
  %4785 = vmatpush1.bf16.msra.mxu0 %v1967
  %4786 = vmatprep.subr.bf16.mxu0 %v1970
  %4787 = vmatpush1.bf16.msra.mxu0 %v1969
  %4788 = vmatprep.subr.bf16.mxu0 %v1972
  %4789 = vmatpush1.bf16.msra.mxu0 %v1971
  %4790 = vmatprep.subr.bf16.mxu0 %v1974
  %4791 = vmatpush1.bf16.msra.mxu0 %v1973
  %4792 = vmatprep.subr.bf16.mxu0 %v1976
  %4793 = vmatpush1.bf16.msra.mxu0 %v1975
  %4794 = vmatprep.subr.bf16.mxu0 %v1978
  %4795 = vmatpush1.bf16.msra.mxu0 %v1977
  %4796 = vmatprep.subr.bf16.mxu0 %v1980
  %4797 = vmatpush1.bf16.msra.mxu0 %v1979
  %4798 = vmatprep.subr.bf16.mxu0 %v1982
  %4799 = vmatpush1.bf16.msra.mxu0 %v1981
  %4800 = vmatprep.mubr.bf16.mxu0 %v4618
  %4801 = vmatmul.mubr.bf16.gmra.mrb[0].mxu0 %v4617
  %v4802 = vpop.f32.mrb[0].mxu0
  %v4803 = vadd.f32 %v4750, %v4802
  %v4804 = vpop.f32.mrb[0].mxu0
  %v4805 = vadd.f32 %v4752, %v4804
  %v4806 = vpop.f32.mrb[0].mxu0
  %v4807 = vadd.f32 %v4754, %v4806
  %v4808 = vpop.f32.mrb[0].mxu0
  %v4809 = vadd.f32 %v4756, %v4808
  %4810 = vmatprep.mubr.bf16.mxu0 %v4643
  %4811 = vmatmul.mubr.bf16.gmra.mrb[0].mxu0 %v4642
  %v4812 = vpop.f32.mrb[0].mxu0
  %v4813 = vadd.f32 %v4760, %v4812
  %v4814 = vpop.f32.mrb[0].mxu0
  %v4815 = vadd.f32 %v4762, %v4814
  %v4816 = vpop.f32.mrb[0].mxu0
  %v4817 = vadd.f32 %v4764, %v4816
  %v4818 = vpop.f32.mrb[0].mxu0
  %v4819 = vadd.f32 %v4766, %v4818
  %4820 = vdwg.mxu0
  %4821 = vmatprep.subr.bf16.mxu0 %v1984
  %4822 = vmatpush1.bf16.msra.mxu0 %v1983
  %4823 = vmatprep.subr.bf16.mxu0 %v1986
  %4824 = vmatpush1.bf16.msra.mxu0 %v1985
  %4825 = vmatprep.subr.bf16.mxu0 %v1988
  %4826 = vmatpush1.bf16.msra.mxu0 %v1987
  %4827 = vmatprep.subr.bf16.mxu0 %v1990
  %4828 = vmatpush1.bf16.msra.mxu0 %v1989
  %4829 = vmatprep.subr.bf16.mxu0 %v1992
  %4830 = vmatpush1.bf16.msra.mxu0 %v1991
  %4831 = vmatprep.subr.bf16.mxu0 %v1994
  %4832 = vmatpush1.bf16.msra.mxu0 %v1993
  %4833 = vmatprep.subr.bf16.mxu0 %v1996
  %4834 = vmatpush1.bf16.msra.mxu0 %v1995
  %4835 = vmatprep.subr.bf16.mxu0 %v1998
  %4836 = vmatpush1.bf16.msra.mxu0 %v1997
  %4837 = vmatprep.subr.bf16.mxu0 %v2000
  %4838 = vmatpush1.bf16.msra.mxu0 %v1999
  %4839 = vmatprep.subr.bf16.mxu0 %v2002
  %4840 = vmatpush1.bf16.msra.mxu0 %v2001
  %4841 = vmatprep.subr.bf16.mxu0 %v2004
  %4842 = vmatpush1.bf16.msra.mxu0 %v2003
  %4843 = vmatprep.subr.bf16.mxu0 %v2006
  %4844 = vmatpush1.bf16.msra.mxu0 %v2005
  %4845 = vmatprep.subr.bf16.mxu0 %v2008
  %4846 = vmatpush1.bf16.msra.mxu0 %v2007
  %4847 = vmatprep.subr.bf16.mxu0 %v2010
  %4848 = vmatpush1.bf16.msra.mxu0 %v2009
  %4849 = vmatprep.subr.bf16.mxu0 %v2012
  %4850 = vmatpush1.bf16.msra.mxu0 %v2011
  %4851 = vmatprep.subr.bf16.mxu0 %v2014
  %4852 = vmatpush1.bf16.msra.mxu0 %v2013
  %4853 = vmatprep.mubr.bf16.mxu0 %v4620
  %4854 = vmatmul.mubr.bf16.gmra.mrb[0].mxu0 %v4619
  %v4855 = vpop.f32.mrb[0].mxu0
  %v4856 = vadd.f32 %v4803, %v4855
  %v4857 = vpop.f32.mrb[0].mxu0
  %v4858 = vadd.f32 %v4805, %v4857
  %v4859 = vpop.f32.mrb[0].mxu0
  %v4860 = vadd.f32 %v4807, %v4859
  %v4861 = vpop.f32.mrb[0].mxu0
  %v4862 = vadd.f32 %v4809, %v4861
  %4863 = vmatprep.mubr.bf16.mxu0 %v4645
  %4864 = vmatmul.mubr.bf16.gmra.mrb[0].mxu0 %v4644
  %v4865 = vpop.f32.mrb[0].mxu0
  %v4866 = vadd.f32 %v4813, %v4865
  %v4867 = vpop.f32.mrb[0].mxu0
  %v4868 = vadd.f32 %v4815, %v4867
  %v4869 = vpop.f32.mrb[0].mxu0
  %v4870 = vadd.f32 %v4817, %v4869
  %v4871 = vpop.f32.mrb[0].mxu0
  %v4872 = vadd.f32 %v4819, %v4871
  %4873 = vdwg.mxu0
  %4874 = vmatprep.subr.bf16.mxu0 %v2016
  %4875 = vmatpush1.bf16.msra.mxu0 %v2015
  %4876 = vmatprep.subr.bf16.mxu0 %v2018
  %4877 = vmatpush1.bf16.msra.mxu0 %v2017
  %4878 = vmatprep.subr.bf16.mxu0 %v2020
  %4879 = vmatpush1.bf16.msra.mxu0 %v2019
  %4880 = vmatprep.subr.bf16.mxu0 %v2022
  %4881 = vmatpush1.bf16.msra.mxu0 %v2021
  %4882 = vmatprep.subr.bf16.mxu0 %v2024
  %4883 = vmatpush1.bf16.msra.mxu0 %v2023
  %4884 = vmatprep.subr.bf16.mxu0 %v2026
  %4885 = vmatpush1.bf16.msra.mxu0 %v2025
  %4886 = vmatprep.subr.bf16.mxu0 %v2028
  %4887 = vmatpush1.bf16.msra.mxu0 %v2027
  %4888 = vmatprep.subr.bf16.mxu0 %v2030
  %4889 = vmatpush1.bf16.msra.mxu0 %v2029
  %4890 = vmatprep.subr.bf16.mxu0 %v2032
  %4891 = vmatpush1.bf16.msra.mxu0 %v2031
  %4892 = vmatprep.subr.bf16.mxu0 %v2034
  %4893 = vmatpush1.bf16.msra.mxu0 %v2033
  %4894 = vmatprep.subr.bf16.mxu0 %v2036
  %4895 = vmatpush1.bf16.msra.mxu0 %v2035
  %4896 = vmatprep.subr.bf16.mxu0 %v2038
  %4897 = vmatpush1.bf16.msra.mxu0 %v2037
  %4898 = vmatprep.subr.bf16.mxu0 %v2040
  %4899 = vmatpush1.bf16.msra.mxu0 %v2039
  %4900 = vmatprep.subr.bf16.mxu0 %v2042
  %4901 = vmatpush1.bf16.msra.mxu0 %v2041
  %4902 = vmatprep.subr.bf16.mxu0 %v2044
  %4903 = vmatpush1.bf16.msra.mxu0 %v2043
  %4904 = vmatprep.subr.bf16.mxu0 %v2046
  %4905 = vmatpush1.bf16.msra.mxu0 %v2045
  %4906 = vmatprep.mubr.bf16.mxu0 %v4622
  %4907 = vmatmul.mubr.bf16.gmra.mrb[0].mxu0 %v4621
  %v4908 = vpop.f32.mrb[0].mxu0
  %v4909 = vadd.f32 %v4856, %v4908
  %v4910 = vpop.f32.mrb[0].mxu0
  %v4911 = vadd.f32 %v4858, %v4910
  %v4912 = vpop.f32.mrb[0].mxu0
  %v4913 = vadd.f32 %v4860, %v4912
  %v4914 = vpop.f32.mrb[0].mxu0
  %v4915 = vadd.f32 %v4862, %v4914
  %4916 = vmatprep.mubr.bf16.mxu0 %v4647
  %4917 = vmatmul.mubr.bf16.gmra.mrb[0].mxu0 %v4646
  %v4918 = vpop.f32.mrb[0].mxu0
  %v4919 = vadd.f32 %v4866, %v4918
  %v4920 = vpop.f32.mrb[0].mxu0
  %v4921 = vadd.f32 %v4868, %v4920
  %v4922 = vpop.f32.mrb[0].mxu0
  %v4923 = vadd.f32 %v4870, %v4922
  %v4924 = vpop.f32.mrb[0].mxu0
  %v4925 = vadd.f32 %v4872, %v4924
  %4926 = vdwg.mxu0
  %4927 = vmatprep.subr.bf16.mxu0 %v2048
  %4928 = vmatpush1.bf16.msra.mxu0 %v2047
  %4929 = vmatprep.subr.bf16.mxu0 %v2050
  %4930 = vmatpush1.bf16.msra.mxu0 %v2049
  %4931 = vmatprep.subr.bf16.mxu0 %v2052
  %4932 = vmatpush1.bf16.msra.mxu0 %v2051
  %4933 = vmatprep.subr.bf16.mxu0 %v2054
  %4934 = vmatpush1.bf16.msra.mxu0 %v2053
  %4935 = vmatprep.subr.bf16.mxu0 %v2056
  %4936 = vmatpush1.bf16.msra.mxu0 %v2055
  %4937 = vmatprep.subr.bf16.mxu0 %v2058
  %4938 = vmatpush1.bf16.msra.mxu0 %v2057
  %4939 = vmatprep.subr.bf16.mxu0 %v2060
  %4940 = vmatpush1.bf16.msra.mxu0 %v2059
  %4941 = vmatprep.subr.bf16.mxu0 %v2062
  %4942 = vmatpush1.bf16.msra.mxu0 %v2061
  %4943 = vmatprep.subr.bf16.mxu0 %v2064
  %4944 = vmatpush1.bf16.msra.mxu0 %v2063
  %4945 = vmatprep.subr.bf16.mxu0 %v2066
  %4946 = vmatpush1.bf16.msra.mxu0 %v2065
  %4947 = vmatprep.subr.bf16.mxu0 %v2068
  %4948 = vmatpush1.bf16.msra.mxu0 %v2067
  %4949 = vmatprep.subr.bf16.mxu0 %v2070
  %4950 = vmatpush1.bf16.msra.mxu0 %v2069
  %4951 = vmatprep.subr.bf16.mxu0 %v2072
  %4952 = vmatpush1.bf16.msra.mxu0 %v2071
  %4953 = vmatprep.subr.bf16.mxu0 %v2074
  %4954 = vmatpush1.bf16.msra.mxu0 %v2073
  %4955 = vmatprep.subr.bf16.mxu0 %v2076
  %4956 = vmatpush1.bf16.msra.mxu0 %v2075
  %4957 = vmatprep.subr.bf16.mxu0 %v2078
  %4958 = vmatpush1.bf16.msra.mxu0 %v2077
  %4959 = vmatprep.mubr.bf16.mxu0 %v4624
  %4960 = vmatmul.mubr.bf16.gmra.mrb[0].mxu0 %v4623
  %v4961 = vpop.f32.mrb[0].mxu0
  %v4962 = vadd.f32 %v4909, %v4961
  %v4963 = vpop.f32.mrb[0].mxu0
  %v4964 = vadd.f32 %v4911, %v4963
  %v4965 = vpop.f32.mrb[0].mxu0
  %v4966 = vadd.f32 %v4913, %v4965
  %v4967 = vpop.f32.mrb[0].mxu0
  %v4968 = vadd.f32 %v4915, %v4967
  %4969 = vmatprep.mubr.bf16.mxu0 %v4649
  %4970 = vmatmul.mubr.bf16.gmra.mrb[0].mxu0 %v4648
  %v4971 = vpop.f32.mrb[0].mxu0
  %v4972 = vadd.f32 %v4919, %v4971
  %v4973 = vpop.f32.mrb[0].mxu0
  %v4974 = vadd.f32 %v4921, %v4973
  %v4975 = vpop.f32.mrb[0].mxu0
  %v4976 = vadd.f32 %v4923, %v4975
  %v4977 = vpop.f32.mrb[0].mxu0
  %v4978 = vadd.f32 %v4925, %v4977
  %4979 = vdwg.mxu0
  %4980 = vmatprep.subr.bf16.mxu0 %v2080
  %4981 = vmatpush1.bf16.msra.mxu0 %v2079
  %4982 = vmatprep.subr.bf16.mxu0 %v2082
  %4983 = vmatpush1.bf16.msra.mxu0 %v2081
  %4984 = vmatprep.subr.bf16.mxu0 %v2084
  %4985 = vmatpush1.bf16.msra.mxu0 %v2083
  %4986 = vmatprep.subr.bf16.mxu0 %v2086
  %4987 = vmatpush1.bf16.msra.mxu0 %v2085
  %4988 = vmatprep.subr.bf16.mxu0 %v2088
  %4989 = vmatpush1.bf16.msra.mxu0 %v2087
  %4990 = vmatprep.subr.bf16.mxu0 %v2090
  %4991 = vmatpush1.bf16.msra.mxu0 %v2089
  %4992 = vmatprep.subr.bf16.mxu0 %v2092
  %4993 = vmatpush1.bf16.msra.mxu0 %v2091
  %4994 = vmatprep.subr.bf16.mxu0 %v2094
  %4995 = vmatpush1.bf16.msra.mxu0 %v2093
  %4996 = vmatprep.subr.bf16.mxu0 %v2096
  %4997 = vmatpush1.bf16.msra.mxu0 %v2095
  %4998 = vmatprep.subr.bf16.mxu0 %v2098
  %4999 = vmatpush1.bf16.msra.mxu0 %v2097
  %5000 = vmatprep.subr.bf16.mxu0 %v2100
  %5001 = vmatpush1.bf16.msra.mxu0 %v2099
  %5002 = vmatprep.subr.bf16.mxu0 %v2102
  %5003 = vmatpush1.bf16.msra.mxu0 %v2101
  %5004 = vmatprep.subr.bf16.mxu0 %v2104
  %5005 = vmatpush1.bf16.msra.mxu0 %v2103
  %5006 = vmatprep.subr.bf16.mxu0 %v2106
  %5007 = vmatpush1.bf16.msra.mxu0 %v2105
  %5008 = vmatprep.subr.bf16.mxu0 %v2108
  %5009 = vmatpush1.bf16.msra.mxu0 %v2107
  %5010 = vmatprep.subr.bf16.mxu0 %v2110
  %5011 = vmatpush1.bf16.msra.mxu0 %v2109
  %5012 = vmatprep.mubr.bf16.mxu0 %v4626
  %5013 = vmatmul.mubr.bf16.gmra.mrb[0].mxu0 %v4625
  %v5014 = vpop.f32.mrb[0].mxu0
  %v5015 = vadd.f32 %v4962, %v5014
  %v5016 = vpop.f32.mrb[0].mxu0
  %v5017 = vadd.f32 %v4964, %v5016
  %v5018 = vpop.f32.mrb[0].mxu0
  %v5019 = vadd.f32 %v4966, %v5018
  %v5020 = vpop.f32.mrb[0].mxu0
  %v5021 = vadd.f32 %v4968, %v5020
  %5022 = vmatprep.mubr.bf16.mxu0 %v4651
  %5023 = vmatmul.mubr.bf16.gmra.mrb[0].mxu0 %v4650
  %v5024 = vpop.f32.mrb[0].mxu0
  %v5025 = vadd.f32 %v4972, %v5024
  %v5026 = vpop.f32.mrb[0].mxu0
  %v5027 = vadd.f32 %v4974, %v5026
  %v5028 = vpop.f32.mrb[0].mxu0
  %v5029 = vadd.f32 %v4976, %v5028
  %v5030 = vpop.f32.mrb[0].mxu0
  %v5031 = vadd.f32 %v4978, %v5030
  %5032 = vdwg.mxu0
  %5033 = vmatprep.subr.bf16.mxu0 %v2112
  %5034 = vmatpush1.bf16.msra.mxu0 %v2111
  %5035 = vmatprep.subr.bf16.mxu0 %v2114
  %5036 = vmatpush1.bf16.msra.mxu0 %v2113
  %5037 = vmatprep.subr.bf16.mxu0 %v2116
  %5038 = vmatpush1.bf16.msra.mxu0 %v2115
  %5039 = vmatprep.subr.bf16.mxu0 %v2118
  %5040 = vmatpush1.bf16.msra.mxu0 %v2117
  %5041 = vmatprep.subr.bf16.mxu0 %v2120
  %5042 = vmatpush1.bf16.msra.mxu0 %v2119
  %5043 = vmatprep.subr.bf16.mxu0 %v2122
  %5044 = vmatpush1.bf16.msra.mxu0 %v2121
  %5045 = vmatprep.subr.bf16.mxu0 %v2124
  %5046 = vmatpush1.bf16.msra.mxu0 %v2123
  %5047 = vmatprep.subr.bf16.mxu0 %v2126
  %5048 = vmatpush1.bf16.msra.mxu0 %v2125
  %5049 = vmatprep.subr.bf16.mxu0 %v2128
  %5050 = vmatpush1.bf16.msra.mxu0 %v2127
  %5051 = vmatprep.subr.bf16.mxu0 %v2130
  %5052 = vmatpush1.bf16.msra.mxu0 %v2129
  %5053 = vmatprep.subr.bf16.mxu0 %v2132
  %5054 = vmatpush1.bf16.msra.mxu0 %v2131
  %5055 = vmatprep.subr.bf16.mxu0 %v2134
  %5056 = vmatpush1.bf16.msra.mxu0 %v2133
  %5057 = vmatprep.subr.bf16.mxu0 %v2136
  %5058 = vmatpush1.bf16.msra.mxu0 %v2135
  %5059 = vmatprep.subr.bf16.mxu0 %v2138
  %5060 = vmatpush1.bf16.msra.mxu0 %v2137
  %5061 = vmatprep.subr.bf16.mxu0 %v2140
  %5062 = vmatpush1.bf16.msra.mxu0 %v2139
  %5063 = vmatprep.subr.bf16.mxu0 %v2142
  %5064 = vmatpush1.bf16.msra.mxu0 %v2141
  %5065 = vmatprep.mubr.bf16.mxu0 %v4628
  %5066 = vmatmul.mubr.bf16.gmra.mrb[0].mxu0 %v4627
  %v5067 = vpop.f32.mrb[0].mxu0
  %v5068 = vadd.f32 %v5015, %v5067
  %v5069 = vpop.f32.mrb[0].mxu0
  %v5070 = vadd.f32 %v5017, %v5069
  %v5071 = vpop.f32.mrb[0].mxu0
  %v5072 = vadd.f32 %v5019, %v5071
  %v5073 = vpop.f32.mrb[0].mxu0
  %v5074 = vadd.f32 %v5021, %v5073
  %5075 = vmatprep.mubr.bf16.mxu0 %v4653
  %5076 = vmatmul.mubr.bf16.gmra.mrb[0].mxu0 %v4652
  %v5077 = vpop.f32.mrb[0].mxu0
  %v5078 = vadd.f32 %v5025, %v5077
  %v5079 = vpop.f32.mrb[0].mxu0
  %v5080 = vadd.f32 %v5027, %v5079
  %v5081 = vpop.f32.mrb[0].mxu0
  %v5082 = vadd.f32 %v5029, %v5081
  %v5083 = vpop.f32.mrb[0].mxu0
  %v5084 = vadd.f32 %v5031, %v5083
  %5085 = vdwg.mxu0
  %5086 = vmatprep.subr.bf16.mxu0 %v2144
  %5087 = vmatpush1.bf16.msra.mxu0 %v2143
  %5088 = vmatprep.subr.bf16.mxu0 %v2146
  %5089 = vmatpush1.bf16.msra.mxu0 %v2145
  %5090 = vmatprep.subr.bf16.mxu0 %v2148
  %5091 = vmatpush1.bf16.msra.mxu0 %v2147
  %5092 = vmatprep.subr.bf16.mxu0 %v2150
  %5093 = vmatpush1.bf16.msra.mxu0 %v2149
  %5094 = vmatprep.subr.bf16.mxu0 %v2152
  %5095 = vmatpush1.bf16.msra.mxu0 %v2151
  %5096 = vmatprep.subr.bf16.mxu0 %v2154
  %5097 = vmatpush1.bf16.msra.mxu0 %v2153
  %5098 = vmatprep.subr.bf16.mxu0 %v2156
  %5099 = vmatpush1.bf16.msra.mxu0 %v2155
  %5100 = vmatprep.subr.bf16.mxu0 %v2158
  %5101 = vmatpush1.bf16.msra.mxu0 %v2157
  %5102 = vmatprep.subr.bf16.mxu0 %v2160
  %5103 = vmatpush1.bf16.msra.mxu0 %v2159
  %5104 = vmatprep.subr.bf16.mxu0 %v2162
  %5105 = vmatpush1.bf16.msra.mxu0 %v2161
  %5106 = vmatprep.subr.bf16.mxu0 %v2164
  %5107 = vmatpush1.bf16.msra.mxu0 %v2163
  %5108 = vmatprep.subr.bf16.mxu0 %v2166
  %5109 = vmatpush1.bf16.msra.mxu0 %v2165
  %5110 = vmatprep.subr.bf16.mxu0 %v2168
  %5111 = vmatpush1.bf16.msra.mxu0 %v2167
  %5112 = vmatprep.subr.bf16.mxu0 %v2170
  %5113 = vmatpush1.bf16.msra.mxu0 %v2169
  %5114 = vmatprep.subr.bf16.mxu0 %v2172
  %5115 = vmatpush1.bf16.msra.mxu0 %v2171
  %5116 = vmatprep.subr.bf16.mxu0 %v2174
  %5117 = vmatpush1.bf16.msra.mxu0 %v2173
  %5118 = vmatprep.mubr.bf16.mxu0 %v4630
  %5119 = vmatmul.mubr.bf16.gmra.mrb[0].mxu0 %v4629
  %v5120 = vpop.f32.mrb[0].mxu0
  %v5121 = vadd.f32 %v5068, %v5120
  %v5122 = vpop.f32.mrb[0].mxu0
  %v5123 = vadd.f32 %v5070, %v5122
  %v5124 = vpop.f32.mrb[0].mxu0
  %v5125 = vadd.f32 %v5072, %v5124
  %v5126 = vpop.f32.mrb[0].mxu0
  %v5127 = vadd.f32 %v5074, %v5126
  %5128 = vmatprep.mubr.bf16.mxu0 %v4655
  %5129 = vmatmul.mubr.bf16.gmra.mrb[0].mxu0 %v4654
  %v5130 = vpop.f32.mrb[0].mxu0
  %v5131 = vadd.f32 %v5078, %v5130
  %v5132 = vpop.f32.mrb[0].mxu0
  %v5133 = vadd.f32 %v5080, %v5132
  %v5134 = vpop.f32.mrb[0].mxu0
  %v5135 = vadd.f32 %v5082, %v5134
  %v5136 = vpop.f32.mrb[0].mxu0
  %v5137 = vadd.f32 %v5084, %v5136
  %5138 = vdwg.mxu0
  %5139 = vmatprep.subr.bf16.mxu0 %v2176
  %5140 = vmatpush1.bf16.msra.mxu0 %v2175
  %5141 = vmatprep.subr.bf16.mxu0 %v2178
  %5142 = vmatpush1.bf16.msra.mxu0 %v2177
  %5143 = vmatprep.subr.bf16.mxu0 %v2180
  %5144 = vmatpush1.bf16.msra.mxu0 %v2179
  %5145 = vmatprep.subr.bf16.mxu0 %v2182
  %5146 = vmatpush1.bf16.msra.mxu0 %v2181
  %5147 = vmatprep.subr.bf16.mxu0 %v2184
  %5148 = vmatpush1.bf16.msra.mxu0 %v2183
  %5149 = vmatprep.subr.bf16.mxu0 %v2186
  %5150 = vmatpush1.bf16.msra.mxu0 %v2185
  %5151 = vmatprep.subr.bf16.mxu0 %v2188
  %5152 = vmatpush1.bf16.msra.mxu0 %v2187
  %5153 = vmatprep.subr.bf16.mxu0 %v2190
  %5154 = vmatpush1.bf16.msra.mxu0 %v2189
  %5155 = vmatprep.subr.bf16.mxu0 %v2192
  %5156 = vmatpush1.bf16.msra.mxu0 %v2191
  %5157 = vmatprep.subr.bf16.mxu0 %v2194
  %5158 = vmatpush1.bf16.msra.mxu0 %v2193
  %5159 = vmatprep.subr.bf16.mxu0 %v2196
  %5160 = vmatpush1.bf16.msra.mxu0 %v2195
  %5161 = vmatprep.subr.bf16.mxu0 %v2198
  %5162 = vmatpush1.bf16.msra.mxu0 %v2197
  %5163 = vmatprep.subr.bf16.mxu0 %v2200
  %5164 = vmatpush1.bf16.msra.mxu0 %v2199
  %5165 = vmatprep.subr.bf16.mxu0 %v2202
  %5166 = vmatpush1.bf16.msra.mxu0 %v2201
  %5167 = vmatprep.subr.bf16.mxu0 %v2204
  %5168 = vmatpush1.bf16.msra.mxu0 %v2203
  %5169 = vmatprep.subr.bf16.mxu0 %v2206
  %5170 = vmatpush1.bf16.msra.mxu0 %v2205
  %5171 = vmatprep.mubr.bf16.mxu0 %v4632
  %5172 = vmatmul.mubr.bf16.gmra.mrb[0].mxu0 %v4631
  %v5173 = vpop.f32.mrb[0].mxu0
  %v5174 = vadd.f32 %v5121, %v5173
  %v5175 = vpop.f32.mrb[0].mxu0
  %v5176 = vadd.f32 %v5123, %v5175
  %v5177 = vpop.f32.mrb[0].mxu0
  %v5178 = vadd.f32 %v5125, %v5177
  %v5179 = vpop.f32.mrb[0].mxu0
  %v5180 = vadd.f32 %v5127, %v5179
  %5181 = vmatprep.mubr.bf16.mxu0 %v4657
  %5182 = vmatmul.mubr.bf16.gmra.mrb[0].mxu0 %v4656
  %v5183 = vpop.f32.mrb[0].mxu0
  %v5184 = vadd.f32 %v5131, %v5183
  %v5185 = vpop.f32.mrb[0].mxu0
  %v5186 = vadd.f32 %v5133, %v5185
  %v5187 = vpop.f32.mrb[0].mxu0
  %v5188 = vadd.f32 %v5135, %v5187
  %v5189 = vpop.f32.mrb[0].mxu0
  %v5190 = vadd.f32 %v5137, %v5189
  %5191 = vdwg.mxu0
  %5192 = vmatprep.subr.bf16.mxu0 %v2208
  %5193 = vmatpush1.bf16.msra.mxu0 %v2207
  %5194 = vmatprep.subr.bf16.mxu0 %v2210
  %5195 = vmatpush1.bf16.msra.mxu0 %v2209
  %5196 = vmatprep.subr.bf16.mxu0 %v2212
  %5197 = vmatpush1.bf16.msra.mxu0 %v2211
  %5198 = vmatprep.subr.bf16.mxu0 %v2214
  %5199 = vmatpush1.bf16.msra.mxu0 %v2213
  %5200 = vmatprep.subr.bf16.mxu0 %v2216
  %5201 = vmatpush1.bf16.msra.mxu0 %v2215
  %5202 = vmatprep.subr.bf16.mxu0 %v2218
  %5203 = vmatpush1.bf16.msra.mxu0 %v2217
  %5204 = vmatprep.subr.bf16.mxu0 %v2220
  %5205 = vmatpush1.bf16.msra.mxu0 %v2219
  %5206 = vmatprep.subr.bf16.mxu0 %v2222
  %5207 = vmatpush1.bf16.msra.mxu0 %v2221
  %5208 = vmatprep.subr.bf16.mxu0 %v2224
  %5209 = vmatpush1.bf16.msra.mxu0 %v2223
  %5210 = vmatprep.subr.bf16.mxu0 %v2226
  %5211 = vmatpush1.bf16.msra.mxu0 %v2225
  %5212 = vmatprep.subr.bf16.mxu0 %v2228
  %5213 = vmatpush1.bf16.msra.mxu0 %v2227
  %5214 = vmatprep.subr.bf16.mxu0 %v2230
  %5215 = vmatpush1.bf16.msra.mxu0 %v2229
  %5216 = vmatprep.subr.bf16.mxu0 %v2232
  %5217 = vmatpush1.bf16.msra.mxu0 %v2231
  %5218 = vmatprep.subr.bf16.mxu0 %v2234
  %5219 = vmatpush1.bf16.msra.mxu0 %v2233
  %5220 = vmatprep.subr.bf16.mxu0 %v2236
  %5221 = vmatpush1.bf16.msra.mxu0 %v2235
  %5222 = vmatprep.subr.bf16.mxu0 %v2238
  %5223 = vmatpush1.bf16.msra.mxu0 %v2237
  %5224 = vmatprep.mubr.bf16.mxu0 %v4634
  %5225 = vmatmul.mubr.bf16.gmra.mrb[0].mxu0 %v4633
  %v5226 = vpop.f32.mrb[0].mxu0
  %v5227 = vadd.f32 %v5174, %v5226
  %v5228 = vpop.f32.mrb[0].mxu0
  %v5229 = vadd.f32 %v5176, %v5228
  %v5230 = vpop.f32.mrb[0].mxu0
  %v5231 = vadd.f32 %v5178, %v5230
  %v5232 = vpop.f32.mrb[0].mxu0
  %v5233 = vadd.f32 %v5180, %v5232
  %5234 = vmatprep.mubr.bf16.mxu0 %v4659
  %5235 = vmatmul.mubr.bf16.gmra.mrb[0].mxu0 %v4658
  %v5236 = vpop.f32.mrb[0].mxu0
  %v5237 = vadd.f32 %v5184, %v5236
  %v5238 = vpop.f32.mrb[0].mxu0
  %v5239 = vadd.f32 %v5186, %v5238
  %v5240 = vpop.f32.mrb[0].mxu0
  %v5241 = vadd.f32 %v5188, %v5240
  %v5242 = vpop.f32.mrb[0].mxu0
  %v5243 = vadd.f32 %v5190, %v5242
  %5244 = vdwg.mxu0
  %5245 = vmatprep.subr.bf16.mxu0 %v2240
  %5246 = vmatpush1.bf16.msra.mxu0 %v2239
  %5247 = vmatprep.subr.bf16.mxu0 %v2242
  %5248 = vmatpush1.bf16.msra.mxu0 %v2241
  %5249 = vmatprep.subr.bf16.mxu0 %v2244
  %5250 = vmatpush1.bf16.msra.mxu0 %v2243
  %5251 = vmatprep.subr.bf16.mxu0 %v2246
  %5252 = vmatpush1.bf16.msra.mxu0 %v2245
  %5253 = vmatprep.subr.bf16.mxu0 %v2248
  %5254 = vmatpush1.bf16.msra.mxu0 %v2247
  %5255 = vmatprep.subr.bf16.mxu0 %v2250
  %5256 = vmatpush1.bf16.msra.mxu0 %v2249
  %5257 = vmatprep.subr.bf16.mxu0 %v2252
  %5258 = vmatpush1.bf16.msra.mxu0 %v2251
  %5259 = vmatprep.subr.bf16.mxu0 %v2254
  %5260 = vmatpush1.bf16.msra.mxu0 %v2253
  %5261 = vmatprep.subr.bf16.mxu0 %v2256
  %5262 = vmatpush1.bf16.msra.mxu0 %v2255
  %5263 = vmatprep.subr.bf16.mxu0 %v2258
  %5264 = vmatpush1.bf16.msra.mxu0 %v2257
  %5265 = vmatprep.subr.bf16.mxu0 %v2260
  %5266 = vmatpush1.bf16.msra.mxu0 %v2259
  %5267 = vmatprep.subr.bf16.mxu0 %v2262
  %5268 = vmatpush1.bf16.msra.mxu0 %v2261
  %5269 = vmatprep.subr.bf16.mxu0 %v2264
  %5270 = vmatpush1.bf16.msra.mxu0 %v2263
  %5271 = vmatprep.subr.bf16.mxu0 %v2266
  %5272 = vmatpush1.bf16.msra.mxu0 %v2265
  %5273 = vmatprep.subr.bf16.mxu0 %v2268
  %5274 = vmatpush1.bf16.msra.mxu0 %v2267
  %5275 = vmatprep.subr.bf16.mxu0 %v2270
  %5276 = vmatpush1.bf16.msra.mxu0 %v2269
  %5277 = vmatprep.mubr.bf16.mxu0 %v4636
  %5278 = vmatmul.mubr.bf16.gmra.mrb[0].mxu0 %v4635
  %v5279 = vpop.f32.mrb[0].mxu0
  %v5280 = vadd.f32 %v5227, %v5279
  %v5281 = vpop.f32.mrb[0].mxu0
  %v5282 = vadd.f32 %v5229, %v5281
  %v5283 = vpop.f32.mrb[0].mxu0
  %v5284 = vadd.f32 %v5231, %v5283
  %v5285 = vpop.f32.mrb[0].mxu0
  %v5286 = vadd.f32 %v5233, %v5285
  %5287 = vmatprep.mubr.bf16.mxu0 %v4661
  %5288 = vmatmul.mubr.bf16.gmra.mrb[0].mxu0 %v4660
  %v5289 = vpop.f32.mrb[0].mxu0
  %v5290 = vadd.f32 %v5237, %v5289
  %v5291 = vpop.f32.mrb[0].mxu0
  %v5292 = vadd.f32 %v5239, %v5291
  %v5293 = vpop.f32.mrb[0].mxu0
  %v5294 = vadd.f32 %v5241, %v5293
  %v5295 = vpop.f32.mrb[0].mxu0
  %v5296 = vadd.f32 %v5243, %v5295
  %5297 = vdwg.mxu0
  %5298 = vmatprep.subr.bf16.mxu0 %v2272
  %5299 = vmatpush1.bf16.msra.mxu0 %v2271
  %5300 = vmatprep.subr.bf16.mxu0 %v2274
  %5301 = vmatpush1.bf16.msra.mxu0 %v2273
  %5302 = vmatprep.subr.bf16.mxu0 %v2276
  %5303 = vmatpush1.bf16.msra.mxu0 %v2275
  %5304 = vmatprep.subr.bf16.mxu0 %v2278
  %5305 = vmatpush1.bf16.msra.mxu0 %v2277
  %5306 = vmatprep.subr.bf16.mxu0 %v2280
  %5307 = vmatpush1.bf16.msra.mxu0 %v2279
  %5308 = vmatprep.subr.bf16.mxu0 %v2282
  %5309 = vmatpush1.bf16.msra.mxu0 %v2281
  %5310 = vmatprep.subr.bf16.mxu0 %v2284
  %5311 = vmatpush1.bf16.msra.mxu0 %v2283
  %5312 = vmatprep.subr.bf16.mxu0 %v2286
  %5313 = vmatpush1.bf16.msra.mxu0 %v2285
  %5314 = vmatprep.subr.bf16.mxu0 %v2288
  %5315 = vmatpush1.bf16.msra.mxu0 %v2287
  %5316 = vmatprep.subr.bf16.mxu0 %v2290
  %5317 = vmatpush1.bf16.msra.mxu0 %v2289
  %5318 = vmatprep.subr.bf16.mxu0 %v2292
  %5319 = vmatpush1.bf16.msra.mxu0 %v2291
  %5320 = vmatprep.subr.bf16.mxu0 %v2294
  %5321 = vmatpush1.bf16.msra.mxu0 %v2293
  %5322 = vmatprep.subr.bf16.mxu0 %v2296
  %5323 = vmatpush1.bf16.msra.mxu0 %v2295
  %5324 = vmatprep.subr.bf16.mxu0 %v2298
  %5325 = vmatpush1.bf16.msra.mxu0 %v2297
  %5326 = vmatprep.subr.bf16.mxu0 %v2300
  %5327 = vmatpush1.bf16.msra.mxu0 %v2299
  %5328 = vmatprep.subr.bf16.mxu0 %v2302
  %5329 = vmatpush1.bf16.msra.mxu0 %v2301
  %5330 = vmatprep.mubr.bf16.mxu0 %v4638
  %5331 = vmatmul.mubr.bf16.gmra.mrb[0].mxu0 %v4637
  %v5332 = vpop.f32.mrb[0].mxu0
  %v5333 = vadd.f32 %v5280, %v5332
  %v5334 = vpop.f32.mrb[0].mxu0
  %v5335 = vadd.f32 %v5282, %v5334
  %v5336 = vpop.f32.mrb[0].mxu0
  %v5337 = vadd.f32 %v5284, %v5336
  %v5338 = vpop.f32.mrb[0].mxu0
  %v5339 = vadd.f32 %v5286, %v5338
  %5340 = vmatprep.mubr.bf16.mxu0 %v4663
  %5341 = vmatmul.mubr.bf16.gmra.mrb[0].mxu0 %v4662
  %v5342 = vpop.f32.mrb[0].mxu0
  %v5343 = vadd.f32 %v5290, %v5342
  %v5344 = vpop.f32.mrb[0].mxu0
  %v5345 = vadd.f32 %v5292, %v5344
  %v5346 = vpop.f32.mrb[0].mxu0
  %v5347 = vadd.f32 %v5294, %v5346
  %v5348 = vpop.f32.mrb[0].mxu0
  %v5349 = vadd.f32 %v5296, %v5348
  %5350 = vdwg.mxu0
  %5351 = vmatprep.subr.bf16.mxu0 %v2304
  %5352 = vmatpush1.bf16.msra.mxu0 %v2303
  %5353 = vmatprep.subr.bf16.mxu0 %v2306
  %5354 = vmatpush1.bf16.msra.mxu0 %v2305
  %5355 = vmatprep.subr.bf16.mxu0 %v2308
  %5356 = vmatpush1.bf16.msra.mxu0 %v2307
  %5357 = vmatprep.subr.bf16.mxu0 %v2310
  %5358 = vmatpush1.bf16.msra.mxu0 %v2309
  %5359 = vmatprep.subr.bf16.mxu0 %v2312
  %5360 = vmatpush1.bf16.msra.mxu0 %v2311
  %5361 = vmatprep.subr.bf16.mxu0 %v2314
  %5362 = vmatpush1.bf16.msra.mxu0 %v2313
  %5363 = vmatprep.subr.bf16.mxu0 %v2316
  %5364 = vmatpush1.bf16.msra.mxu0 %v2315
  %5365 = vmatprep.subr.bf16.mxu0 %v2318
  %5366 = vmatpush1.bf16.msra.mxu0 %v2317
  %5367 = vmatprep.subr.bf16.mxu0 0
  %5368 = vmatpush1.bf16.msra.mxu0 0
  %5369 = vmatprep.subr.bf16.mxu0 0
  %5370 = vmatpush1.bf16.msra.mxu0 0
  %5371 = vmatprep.subr.bf16.mxu0 0
  %5372 = vmatpush1.bf16.msra.mxu0 0
  %5373 = vmatprep.subr.bf16.mxu0 0
  %5374 = vmatpush1.bf16.msra.mxu0 0
  %5375 = vmatprep.subr.bf16.mxu0 0
  %5376 = vmatpush1.bf16.msra.mxu0 0
  %5377 = vmatprep.subr.bf16.mxu0 0
  %5378 = vmatpush1.bf16.msra.mxu0 0
  %5379 = vmatprep.subr.bf16.mxu0 0
  %5380 = vmatpush1.bf16.msra.mxu0 0
  %5381 = vmatprep.subr.bf16.mxu0 0
  %5382 = vmatpush1.bf16.msra.mxu0 0
  %5383 = vmatprep.mubr.bf16.mxu0 0
  %5384 = vmatmul.mubr.bf16.gmra.mrb[0].mxu0 %v4639
  %v5385 = vpop.f32.mrb[0].mxu0
  %v5386 = vadd.f32 %v5333, %v5385
  %v5387 = vpop.f32.mrb[0].mxu0
  %v5388 = vadd.f32 %v5335, %v5387
  %v5389 = vpop.f32.mrb[0].mxu0
  %v5390 = vadd.f32 %v5337, %v5389
  %v5391 = vpop.f32.mrb[0].mxu0
  %v5392 = vadd.f32 %v5339, %v5391
  %5393 = vmatprep.mubr.bf16.mxu0 0
  %5394 = vmatmul.mubr.bf16.gmra.mrb[0].mxu0 %v4664
  %v5395 = vpop.f32.mrb[0].mxu0
  %v5396 = vadd.f32 %v5343, %v5395
  %v5397 = vpop.f32.mrb[0].mxu0
  %v5398 = vadd.f32 %v5345, %v5397
  %v5399 = vpop.f32.mrb[0].mxu0
  %v5400 = vadd.f32 %v5347, %v5399
  %v5401 = vpop.f32.mrb[0].mxu0
  %v5402 = vadd.f32 %v5349, %v5401
  %5403 = vdwg.mxu0
  %v5404 = vmax.f32 %v4402, %v5386
  %v5405 = vmax.f32 %v4403, %v5388
  %v5406 = vmax.f32 %v4404, %v5390
  %v5407 = vmax.f32 %v4405, %v5392
  %v5408 = vmax.f32 %v4406, %v5396
  %v5409 = vmax.f32 %v4407, %v5398
  %v5410 = vmax.f32 %v4408, %v5400
  %v5411 = vmax.f32 %v4409, %v5402
  %s5412 = scalar_lea.vmem %s0, 1200
  %v5413 = vld [vmem:[%s5412] sm:$0xff]
  %v5414 = vld [vmem:[%s5412 + $0x8] sm:$0xff]
  %v5415 = vld [vmem:[%s5412 + $0x10] sm:$0xff]
  %v5416 = vld [vmem:[%s5412 + $0x18] sm:$0xff]
  %v5417 = vld [vmem:[%s5412 + $0x20] sm:$0xff]
  %v5418 = vld [vmem:[%s5412 + $0x28] sm:$0xff]
  %v5419 = vld [vmem:[%s5412 + $0x30] sm:$0xff]
  %v5420 = vld [vmem:[%s5412 + $0x38] sm:$0xff]
  %v5421 = vld [vmem:[%s5412 + $0x40] sm:$0xff]
  %v5422 = vld [vmem:[%s5412 + $0x48] sm:$0xff]
  %v5423 = vld [vmem:[%s5412 + $0x50] sm:$0xff]
  %v5424 = vld [vmem:[%s5412 + $0x58] sm:$0xff]
  %v5425 = vld [vmem:[%s5412 + $0x60] sm:$0xf]
  %v5426 = vld [vmem:[%s5412 + $0x64] sm:$0xff]
  %v5427 = vld [vmem:[%s5412 + $0x6c] sm:$0xff]
  %v5428 = vld [vmem:[%s5412 + $0x74] sm:$0xff]
  %v5429 = vld [vmem:[%s5412 + $0x7c] sm:$0xff]
  %v5430 = vld [vmem:[%s5412 + $0x84] sm:$0xff]
  %v5431 = vld [vmem:[%s5412 + $0x8c] sm:$0xff]
  %v5432 = vld [vmem:[%s5412 + $0x94] sm:$0xff]
  %v5433 = vld [vmem:[%s5412 + $0x9c] sm:$0xff]
  %v5434 = vld [vmem:[%s5412 + $0xa4] sm:$0xff]
  %v5435 = vld [vmem:[%s5412 + $0xac] sm:$0xff]
  %v5436 = vld [vmem:[%s5412 + $0xb4] sm:$0xff]
  %v5437 = vld [vmem:[%s5412 + $0xbc] sm:$0xff]
  %v5438 = vld [vmem:[%s5412 + $0xc4] sm:$0xf]
  %v5439 = vld [vmem:[%s5412 + $0xc8] sm:$0xff]
  %v5440 = vld [vmem:[%s5412 + $0xd0] sm:$0xff]
  %v5441 = vld [vmem:[%s5412 + $0xd8] sm:$0xff]
  %v5442 = vld [vmem:[%s5412 + $0xe0] sm:$0xff]
  %v5443 = vld [vmem:[%s5412 + $0xe8] sm:$0xff]
  %v5444 = vld [vmem:[%s5412 + $0xf0] sm:$0xff]
  %v5445 = vld [vmem:[%s5412 + $0xf8] sm:$0xff]
  %v5446 = vld [vmem:[%s5412 + $0x100] sm:$0xff]
  %v5447 = vld [vmem:[%s5412 + $0x108] sm:$0xff]
  %v5448 = vld [vmem:[%s5412 + $0x110] sm:$0xff]
  %v5449 = vld [vmem:[%s5412 + $0x118] sm:$0xff]
  %v5450 = vld [vmem:[%s5412 + $0x120] sm:$0xff]
  %v5451 = vld [vmem:[%s5412 + $0x128] sm:$0xf]
  %v5452 = vld [vmem:[%s5412 + $0x12c] sm:$0xff]
  %v5453 = vld [vmem:[%s5412 + $0x134] sm:$0xff]
  %v5454 = vld [vmem:[%s5412 + $0x13c] sm:$0xff]
  %v5455 = vld [vmem:[%s5412 + $0x144] sm:$0xff]
  %v5456 = vld [vmem:[%s5412 + $0x14c] sm:$0xff]
  %v5457 = vld [vmem:[%s5412 + $0x154] sm:$0xff]
  %v5458 = vld [vmem:[%s5412 + $0x15c] sm:$0xff]
  %v5459 = vld [vmem:[%s5412 + $0x164] sm:$0xff]
  %v5460 = vld [vmem:[%s5412 + $0x16c] sm:$0xff]
  %v5461 = vld [vmem:[%s5412 + $0x174] sm:$0xff]
  %v5462 = vld [vmem:[%s5412 + $0x17c] sm:$0xff]
  %v5463 = vld [vmem:[%s5412 + $0x184] sm:$0xff]
  %v5464 = vld [vmem:[%s5412 + $0x18c] sm:$0xf]
  %v5517 = vunpack.c.l.b16 %v5413
  %v5518 = vunpack.c.h.b16 %v5413
  %v5519 = vunpack.c.l.b16 %v5414
  %v5520 = vunpack.c.h.b16 %v5414
  %v5521 = vunpack.c.l.b16 %v5415
  %v5522 = vunpack.c.h.b16 %v5415
  %v5523 = vunpack.c.l.b16 %v5416
  %v5524 = vunpack.c.h.b16 %v5416
  %v5525 = vunpack.c.l.b16 %v5417
  %v5526 = vunpack.c.h.b16 %v5417
  %v5527 = vunpack.c.l.b16 %v5418
  %v5528 = vunpack.c.h.b16 %v5418
  %v5529 = vunpack.c.l.b16 %v5419
  %v5530 = vunpack.c.h.b16 %v5419
  %v5531 = vunpack.c.l.b16 %v5420
  %v5532 = vunpack.c.h.b16 %v5420
  %v5533 = vunpack.c.l.b16 %v5421
  %v5534 = vunpack.c.h.b16 %v5421
  %v5535 = vunpack.c.l.b16 %v5422
  %v5536 = vunpack.c.h.b16 %v5422
  %v5537 = vunpack.c.l.b16 %v5423
  %v5538 = vunpack.c.h.b16 %v5423
  %v5539 = vunpack.c.l.b16 %v5424
  %v5540 = vunpack.c.h.b16 %v5424
  %v5541 = vunpack.c.l.b16 %v5425
  %v5542 = vunpack.c.l.b16 %v5426
  %v5543 = vunpack.c.h.b16 %v5426
  %v5544 = vunpack.c.l.b16 %v5427
  %v5545 = vunpack.c.h.b16 %v5427
  %v5546 = vunpack.c.l.b16 %v5428
  %v5547 = vunpack.c.h.b16 %v5428
  %v5548 = vunpack.c.l.b16 %v5429
  %v5549 = vunpack.c.h.b16 %v5429
  %v5550 = vunpack.c.l.b16 %v5430
  %v5551 = vunpack.c.h.b16 %v5430
  %v5552 = vunpack.c.l.b16 %v5431
  %v5553 = vunpack.c.h.b16 %v5431
  %v5554 = vunpack.c.l.b16 %v5432
  %v5555 = vunpack.c.h.b16 %v5432
  %v5556 = vunpack.c.l.b16 %v5433
  %v5557 = vunpack.c.h.b16 %v5433
  %v5558 = vunpack.c.l.b16 %v5434
  %v5559 = vunpack.c.h.b16 %v5434
  %v5560 = vunpack.c.l.b16 %v5435
  %v5561 = vunpack.c.h.b16 %v5435
  %v5562 = vunpack.c.l.b16 %v5436
  %v5563 = vunpack.c.h.b16 %v5436
  %v5564 = vunpack.c.l.b16 %v5437
  %v5565 = vunpack.c.h.b16 %v5437
  %v5566 = vunpack.c.l.b16 %v5438
  %v5567 = vunpack.c.l.b16 %v5439
  %v5568 = vunpack.c.h.b16 %v5439
  %v5569 = vunpack.c.l.b16 %v5440
  %v5570 = vunpack.c.h.b16 %v5440
  %v5571 = vunpack.c.l.b16 %v5441
  %v5572 = vunpack.c.h.b16 %v5441
  %v5573 = vunpack.c.l.b16 %v5442
  %v5574 = vunpack.c.h.b16 %v5442
  %v5575 = vunpack.c.l.b16 %v5443
  %v5576 = vunpack.c.h.b16 %v5443
  %v5577 = vunpack.c.l.b16 %v5444
  %v5578 = vunpack.c.h.b16 %v5444
  %v5579 = vunpack.c.l.b16 %v5445
  %v5580 = vunpack.c.h.b16 %v5445
  %v5581 = vunpack.c.l.b16 %v5446
  %v5582 = vunpack.c.h.b16 %v5446
  %v5583 = vunpack.c.l.b16 %v5447
  %v5584 = vunpack.c.h.b16 %v5447
  %v5585 = vunpack.c.l.b16 %v5448
  %v5586 = vunpack.c.h.b16 %v5448
  %v5587 = vunpack.c.l.b16 %v5449
  %v5588 = vunpack.c.h.b16 %v5449
  %v5589 = vunpack.c.l.b16 %v5450
  %v5590 = vunpack.c.h.b16 %v5450
  %v5591 = vunpack.c.l.b16 %v5451
  %v5592 = vunpack.c.l.b16 %v5452
  %v5593 = vunpack.c.h.b16 %v5452
  %v5594 = vunpack.c.l.b16 %v5453
  %v5595 = vunpack.c.h.b16 %v5453
  %v5596 = vunpack.c.l.b16 %v5454
  %v5597 = vunpack.c.h.b16 %v5454
  %v5598 = vunpack.c.l.b16 %v5455
  %v5599 = vunpack.c.h.b16 %v5455
  %v5600 = vunpack.c.l.b16 %v5456
  %v5601 = vunpack.c.h.b16 %v5456
  %v5602 = vunpack.c.l.b16 %v5457
  %v5603 = vunpack.c.h.b16 %v5457
  %v5604 = vunpack.c.l.b16 %v5458
  %v5605 = vunpack.c.h.b16 %v5458
  %v5606 = vunpack.c.l.b16 %v5459
  %v5607 = vunpack.c.h.b16 %v5459
  %v5608 = vunpack.c.l.b16 %v5460
  %v5609 = vunpack.c.h.b16 %v5460
  %v5610 = vunpack.c.l.b16 %v5461
  %v5611 = vunpack.c.h.b16 %v5461
  %v5612 = vunpack.c.l.b16 %v5462
  %v5613 = vunpack.c.h.b16 %v5462
  %v5614 = vunpack.c.l.b16 %v5463
  %v5615 = vunpack.c.h.b16 %v5463
  %v5616 = vunpack.c.l.b16 %v5464
  %v5617 = vpack.c.b16 %v5542, %v5517
  %v5618 = vpack.c.b16 %v5543, %v5518
  %v5619 = vpack.c.b16 %v5544, %v5519
  %v5620 = vpack.c.b16 %v5545, %v5520
  %v5621 = vpack.c.b16 %v5546, %v5521
  %v5622 = vpack.c.b16 %v5547, %v5522
  %v5623 = vpack.c.b16 %v5548, %v5523
  %v5624 = vpack.c.b16 %v5549, %v5524
  %v5625 = vpack.c.b16 %v5550, %v5525
  %v5626 = vpack.c.b16 %v5551, %v5526
  %v5627 = vpack.c.b16 %v5552, %v5527
  %v5628 = vpack.c.b16 %v5553, %v5528
  %v5629 = vpack.c.b16 %v5554, %v5529
  %v5630 = vpack.c.b16 %v5555, %v5530
  %v5631 = vpack.c.b16 %v5556, %v5531
  %v5632 = vpack.c.b16 %v5557, %v5532
  %v5633 = vpack.c.b16 %v5558, %v5533
  %v5634 = vpack.c.b16 %v5559, %v5534
  %v5635 = vpack.c.b16 %v5560, %v5535
  %v5636 = vpack.c.b16 %v5561, %v5536
  %v5637 = vpack.c.b16 %v5562, %v5537
  %v5638 = vpack.c.b16 %v5563, %v5538
  %v5639 = vpack.c.b16 %v5564, %v5539
  %v5640 = vpack.c.b16 %v5565, %v5540
  %v5641 = vpack.c.b16 %v5566, %v5541
  %v5642 = vpack.c.b16 %v5592, %v5567
  %v5643 = vpack.c.b16 %v5593, %v5568
  %v5644 = vpack.c.b16 %v5594, %v5569
  %v5645 = vpack.c.b16 %v5595, %v5570
  %v5646 = vpack.c.b16 %v5596, %v5571
  %v5647 = vpack.c.b16 %v5597, %v5572
  %v5648 = vpack.c.b16 %v5598, %v5573
  %v5649 = vpack.c.b16 %v5599, %v5574
  %v5650 = vpack.c.b16 %v5600, %v5575
  %v5651 = vpack.c.b16 %v5601, %v5576
  %v5652 = vpack.c.b16 %v5602, %v5577
  %v5653 = vpack.c.b16 %v5603, %v5578
  %v5654 = vpack.c.b16 %v5604, %v5579
  %v5655 = vpack.c.b16 %v5605, %v5580
  %v5656 = vpack.c.b16 %v5606, %v5581
  %v5657 = vpack.c.b16 %v5607, %v5582
  %v5658 = vpack.c.b16 %v5608, %v5583
  %v5659 = vpack.c.b16 %v5609, %v5584
  %v5660 = vpack.c.b16 %v5610, %v5585
  %v5661 = vpack.c.b16 %v5611, %v5586
  %v5662 = vpack.c.b16 %v5612, %v5587
  %v5663 = vpack.c.b16 %v5613, %v5588
  %v5664 = vpack.c.b16 %v5614, %v5589
  %v5665 = vpack.c.b16 %v5615, %v5590
  %v5666 = vpack.c.b16 %v5616, %v5591
  %5717 = vmatprep.subr.bf16.mxu0 %v1920
  %5718 = vmatpush1.bf16.msra.mxu0 %v1919
  %5719 = vmatprep.subr.bf16.mxu0 %v1922
  %5720 = vmatpush1.bf16.msra.mxu0 %v1921
  %5721 = vmatprep.subr.bf16.mxu0 %v1924
  %5722 = vmatpush1.bf16.msra.mxu0 %v1923
  %5723 = vmatprep.subr.bf16.mxu0 %v1926
  %5724 = vmatpush1.bf16.msra.mxu0 %v1925
  %5725 = vmatprep.subr.bf16.mxu0 %v1928
  %5726 = vmatpush1.bf16.msra.mxu0 %v1927
  %5727 = vmatprep.subr.bf16.mxu0 %v1930
  %5728 = vmatpush1.bf16.msra.mxu0 %v1929
  %5729 = vmatprep.subr.bf16.mxu0 %v1932
  %5730 = vmatpush1.bf16.msra.mxu0 %v1931
  %5731 = vmatprep.subr.bf16.mxu0 %v1934
  %5732 = vmatpush1.bf16.msra.mxu0 %v1933
  %5733 = vmatprep.subr.bf16.mxu0 %v1936
  %5734 = vmatpush1.bf16.msra.mxu0 %v1935
  %5735 = vmatprep.subr.bf16.mxu0 %v1938
  %5736 = vmatpush1.bf16.msra.mxu0 %v1937
  %5737 = vmatprep.subr.bf16.mxu0 %v1940
  %5738 = vmatpush1.bf16.msra.mxu0 %v1939
  %5739 = vmatprep.subr.bf16.mxu0 %v1942
  %5740 = vmatpush1.bf16.msra.mxu0 %v1941
  %5741 = vmatprep.subr.bf16.mxu0 %v1944
  %5742 = vmatpush1.bf16.msra.mxu0 %v1943
  %5743 = vmatprep.subr.bf16.mxu0 %v1946
  %5744 = vmatpush1.bf16.msra.mxu0 %v1945
  %5745 = vmatprep.subr.bf16.mxu0 %v1948
  %5746 = vmatpush1.bf16.msra.mxu0 %v1947
  %5747 = vmatprep.subr.bf16.mxu0 %v1950
  %5748 = vmatpush1.bf16.msra.mxu0 %v1949
  %5749 = vmatprep.mubr.bf16.mxu0 %v5618
  %5750 = vmatmul.mubr.bf16.gmra.mrb[0].mxu0 %v5617
  %v5751 = vpop.f32.mrb[0].mxu0
  %v5752 = vadd.f32 0.0, %v5751
  %v5753 = vpop.f32.mrb[0].mxu0
  %v5754 = vadd.f32 0.0, %v5753
  %v5755 = vpop.f32.mrb[0].mxu0
  %v5756 = vadd.f32 0.0, %v5755
  %v5757 = vpop.f32.mrb[0].mxu0
  %v5758 = vadd.f32 0.0, %v5757
  %5759 = vmatprep.mubr.bf16.mxu0 %v5643
  %5760 = vmatmul.mubr.bf16.gmra.mrb[0].mxu0 %v5642
  %v5761 = vpop.f32.mrb[0].mxu0
  %v5762 = vadd.f32 0.0, %v5761
  %v5763 = vpop.f32.mrb[0].mxu0
  %v5764 = vadd.f32 0.0, %v5763
  %v5765 = vpop.f32.mrb[0].mxu0
  %v5766 = vadd.f32 0.0, %v5765
  %v5767 = vpop.f32.mrb[0].mxu0
  %v5768 = vadd.f32 0.0, %v5767
  %5769 = vdwg.mxu0
  %5770 = vmatprep.subr.bf16.mxu0 %v1952
  %5771 = vmatpush1.bf16.msra.mxu0 %v1951
  %5772 = vmatprep.subr.bf16.mxu0 %v1954
  %5773 = vmatpush1.bf16.msra.mxu0 %v1953
  %5774 = vmatprep.subr.bf16.mxu0 %v1956
  %5775 = vmatpush1.bf16.msra.mxu0 %v1955
  %5776 = vmatprep.subr.bf16.mxu0 %v1958
  %5777 = vmatpush1.bf16.msra.mxu0 %v1957
  %5778 = vmatprep.subr.bf16.mxu0 %v1960
  %5779 = vmatpush1.bf16.msra.mxu0 %v1959
  %5780 = vmatprep.subr.bf16.mxu0 %v1962
  %5781 = vmatpush1.bf16.msra.mxu0 %v1961
  %5782 = vmatprep.subr.bf16.mxu0 %v1964
  %5783 = vmatpush1.bf16.msra.mxu0 %v1963
  %5784 = vmatprep.subr.bf16.mxu0 %v1966
  %5785 = vmatpush1.bf16.msra.mxu0 %v1965
  %5786 = vmatprep.subr.bf16.mxu0 %v1968
  %5787 = vmatpush1.bf16.msra.mxu0 %v1967
  %5788 = vmatprep.subr.bf16.mxu0 %v1970
  %5789 = vmatpush1.bf16.msra.mxu0 %v1969
  %5790 = vmatprep.subr.bf16.mxu0 %v1972
  %5791 = vmatpush1.bf16.msra.mxu0 %v1971
  %5792 = vmatprep.subr.bf16.mxu0 %v1974
  %5793 = vmatpush1.bf16.msra.mxu0 %v1973
  %5794 = vmatprep.subr.bf16.mxu0 %v1976
  %5795 = vmatpush1.bf16.msra.mxu0 %v1975
  %5796 = vmatprep.subr.bf16.mxu0 %v1978
  %5797 = vmatpush1.bf16.msra.mxu0 %v1977
  %5798 = vmatprep.subr.bf16.mxu0 %v1980
  %5799 = vmatpush1.bf16.msra.mxu0 %v1979
  %5800 = vmatprep.subr.bf16.mxu0 %v1982
  %5801 = vmatpush1.bf16.msra.mxu0 %v1981
  %5802 = vmatprep.mubr.bf16.mxu0 %v5620
  %5803 = vmatmul.mubr.bf16.gmra.mrb[0].mxu0 %v5619
  %v5804 = vpop.f32.mrb[0].mxu0
  %v5805 = vadd.f32 %v5752, %v5804
  %v5806 = vpop.f32.mrb[0].mxu0
  %v5807 = vadd.f32 %v5754, %v5806
  %v5808 = vpop.f32.mrb[0].mxu0
  %v5809 = vadd.f32 %v5756, %v5808
  %v5810 = vpop.f32.mrb[0].mxu0
  %v5811 = vadd.f32 %v5758, %v5810
  %5812 = vmatprep.mubr.bf16.mxu0 %v5645
  %5813 = vmatmul.mubr.bf16.gmra.mrb[0].mxu0 %v5644
  %v5814 = vpop.f32.mrb[0].mxu0
  %v5815 = vadd.f32 %v5762, %v5814
  %v5816 = vpop.f32.mrb[0].mxu0
  %v5817 = vadd.f32 %v5764, %v5816
  %v5818 = vpop.f32.mrb[0].mxu0
  %v5819 = vadd.f32 %v5766, %v5818
  %v5820 = vpop.f32.mrb[0].mxu0
  %v5821 = vadd.f32 %v5768, %v5820
  %5822 = vdwg.mxu0
  %5823 = vmatprep.subr.bf16.mxu0 %v1984
  %5824 = vmatpush1.bf16.msra.mxu0 %v1983
  %5825 = vmatprep.subr.bf16.mxu0 %v1986
  %5826 = vmatpush1.bf16.msra.mxu0 %v1985
  %5827 = vmatprep.subr.bf16.mxu0 %v1988
  %5828 = vmatpush1.bf16.msra.mxu0 %v1987
  %5829 = vmatprep.subr.bf16.mxu0 %v1990
  %5830 = vmatpush1.bf16.msra.mxu0 %v1989
  %5831 = vmatprep.subr.bf16.mxu0 %v1992
  %5832 = vmatpush1.bf16.msra.mxu0 %v1991
  %5833 = vmatprep.subr.bf16.mxu0 %v1994
  %5834 = vmatpush1.bf16.msra.mxu0 %v1993
  %5835 = vmatprep.subr.bf16.mxu0 %v1996
  %5836 = vmatpush1.bf16.msra.mxu0 %v1995
  %5837 = vmatprep.subr.bf16.mxu0 %v1998
  %5838 = vmatpush1.bf16.msra.mxu0 %v1997
  %5839 = vmatprep.subr.bf16.mxu0 %v2000
  %5840 = vmatpush1.bf16.msra.mxu0 %v1999
  %5841 = vmatprep.subr.bf16.mxu0 %v2002
  %5842 = vmatpush1.bf16.msra.mxu0 %v2001
  %5843 = vmatprep.subr.bf16.mxu0 %v2004
  %5844 = vmatpush1.bf16.msra.mxu0 %v2003
  %5845 = vmatprep.subr.bf16.mxu0 %v2006
  %5846 = vmatpush1.bf16.msra.mxu0 %v2005
  %5847 = vmatprep.subr.bf16.mxu0 %v2008
  %5848 = vmatpush1.bf16.msra.mxu0 %v2007
  %5849 = vmatprep.subr.bf16.mxu0 %v2010
  %5850 = vmatpush1.bf16.msra.mxu0 %v2009
  %5851 = vmatprep.subr.bf16.mxu0 %v2012
  %5852 = vmatpush1.bf16.msra.mxu0 %v2011
  %5853 = vmatprep.subr.bf16.mxu0 %v2014
  %5854 = vmatpush1.bf16.msra.mxu0 %v2013
  %5855 = vmatprep.mubr.bf16.mxu0 %v5622
  %5856 = vmatmul.mubr.bf16.gmra.mrb[0].mxu0 %v5621
  %v5857 = vpop.f32.mrb[0].mxu0
  %v5858 = vadd.f32 %v5805, %v5857
  %v5859 = vpop.f32.mrb[0].mxu0
  %v5860 = vadd.f32 %v5807, %v5859
  %v5861 = vpop.f32.mrb[0].mxu0
  %v5862 = vadd.f32 %v5809, %v5861
  %v5863 = vpop.f32.mrb[0].mxu0
  %v5864 = vadd.f32 %v5811, %v5863
  %5865 = vmatprep.mubr.bf16.mxu0 %v5647
  %5866 = vmatmul.mubr.bf16.gmra.mrb[0].mxu0 %v5646
  %v5867 = vpop.f32.mrb[0].mxu0
  %v5868 = vadd.f32 %v5815, %v5867
  %v5869 = vpop.f32.mrb[0].mxu0
  %v5870 = vadd.f32 %v5817, %v5869
  %v5871 = vpop.f32.mrb[0].mxu0
  %v5872 = vadd.f32 %v5819, %v5871
  %v5873 = vpop.f32.mrb[0].mxu0
  %v5874 = vadd.f32 %v5821, %v5873
  %5875 = vdwg.mxu0
  %5876 = vmatprep.subr.bf16.mxu0 %v2016
  %5877 = vmatpush1.bf16.msra.mxu0 %v2015
  %5878 = vmatprep.subr.bf16.mxu0 %v2018
  %5879 = vmatpush1.bf16.msra.mxu0 %v2017
  %5880 = vmatprep.subr.bf16.mxu0 %v2020
  %5881 = vmatpush1.bf16.msra.mxu0 %v2019
  %5882 = vmatprep.subr.bf16.mxu0 %v2022
  %5883 = vmatpush1.bf16.msra.mxu0 %v2021
  %5884 = vmatprep.subr.bf16.mxu0 %v2024
  %5885 = vmatpush1.bf16.msra.mxu0 %v2023
  %5886 = vmatprep.subr.bf16.mxu0 %v2026
  %5887 = vmatpush1.bf16.msra.mxu0 %v2025
  %5888 = vmatprep.subr.bf16.mxu0 %v2028
  %5889 = vmatpush1.bf16.msra.mxu0 %v2027
  %5890 = vmatprep.subr.bf16.mxu0 %v2030
  %5891 = vmatpush1.bf16.msra.mxu0 %v2029
  %5892 = vmatprep.subr.bf16.mxu0 %v2032
  %5893 = vmatpush1.bf16.msra.mxu0 %v2031
  %5894 = vmatprep.subr.bf16.mxu0 %v2034
  %5895 = vmatpush1.bf16.msra.mxu0 %v2033
  %5896 = vmatprep.subr.bf16.mxu0 %v2036
  %5897 = vmatpush1.bf16.msra.mxu0 %v2035
  %5898 = vmatprep.subr.bf16.mxu0 %v2038
  %5899 = vmatpush1.bf16.msra.mxu0 %v2037
  %5900 = vmatprep.subr.bf16.mxu0 %v2040
  %5901 = vmatpush1.bf16.msra.mxu0 %v2039
  %5902 = vmatprep.subr.bf16.mxu0 %v2042
  %5903 = vmatpush1.bf16.msra.mxu0 %v2041
  %5904 = vmatprep.subr.bf16.mxu0 %v2044
  %5905 = vmatpush1.bf16.msra.mxu0 %v2043
  %5906 = vmatprep.subr.bf16.mxu0 %v2046
  %5907 = vmatpush1.bf16.msra.mxu0 %v2045
  %5908 = vmatprep.mubr.bf16.mxu0 %v5624
  %5909 = vmatmul.mubr.bf16.gmra.mrb[0].mxu0 %v5623
  %v5910 = vpop.f32.mrb[0].mxu0
  %v5911 = vadd.f32 %v5858, %v5910
  %v5912 = vpop.f32.mrb[0].mxu0
  %v5913 = vadd.f32 %v5860, %v5912
  %v5914 = vpop.f32.mrb[0].mxu0
  %v5915 = vadd.f32 %v5862, %v5914
  %v5916 = vpop.f32.mrb[0].mxu0
  %v5917 = vadd.f32 %v5864, %v5916
  %5918 = vmatprep.mubr.bf16.mxu0 %v5649
  %5919 = vmatmul.mubr.bf16.gmra.mrb[0].mxu0 %v5648
  %v5920 = vpop.f32.mrb[0].mxu0
  %v5921 = vadd.f32 %v5868, %v5920
  %v5922 = vpop.f32.mrb[0].mxu0
  %v5923 = vadd.f32 %v5870, %v5922
  %v5924 = vpop.f32.mrb[0].mxu0
  %v5925 = vadd.f32 %v5872, %v5924
  %v5926 = vpop.f32.mrb[0].mxu0
  %v5927 = vadd.f32 %v5874, %v5926
  %5928 = vdwg.mxu0
  %5929 = vmatprep.subr.bf16.mxu0 %v2048
  %5930 = vmatpush1.bf16.msra.mxu0 %v2047
  %5931 = vmatprep.subr.bf16.mxu0 %v2050
  %5932 = vmatpush1.bf16.msra.mxu0 %v2049
  %5933 = vmatprep.subr.bf16.mxu0 %v2052
  %5934 = vmatpush1.bf16.msra.mxu0 %v2051
  %5935 = vmatprep.subr.bf16.mxu0 %v2054
  %5936 = vmatpush1.bf16.msra.mxu0 %v2053
  %5937 = vmatprep.subr.bf16.mxu0 %v2056
  %5938 = vmatpush1.bf16.msra.mxu0 %v2055
  %5939 = vmatprep.subr.bf16.mxu0 %v2058
  %5940 = vmatpush1.bf16.msra.mxu0 %v2057
  %5941 = vmatprep.subr.bf16.mxu0 %v2060
  %5942 = vmatpush1.bf16.msra.mxu0 %v2059
  %5943 = vmatprep.subr.bf16.mxu0 %v2062
  %5944 = vmatpush1.bf16.msra.mxu0 %v2061
  %5945 = vmatprep.subr.bf16.mxu0 %v2064
  %5946 = vmatpush1.bf16.msra.mxu0 %v2063
  %5947 = vmatprep.subr.bf16.mxu0 %v2066
  %5948 = vmatpush1.bf16.msra.mxu0 %v2065
  %5949 = vmatprep.subr.bf16.mxu0 %v2068
  %5950 = vmatpush1.bf16.msra.mxu0 %v2067
  %5951 = vmatprep.subr.bf16.mxu0 %v2070
  %5952 = vmatpush1.bf16.msra.mxu0 %v2069
  %5953 = vmatprep.subr.bf16.mxu0 %v2072
  %5954 = vmatpush1.bf16.msra.mxu0 %v2071
  %5955 = vmatprep.subr.bf16.mxu0 %v2074
  %5956 = vmatpush1.bf16.msra.mxu0 %v2073
  %5957 = vmatprep.subr.bf16.mxu0 %v2076
  %5958 = vmatpush1.bf16.msra.mxu0 %v2075
  %5959 = vmatprep.subr.bf16.mxu0 %v2078
  %5960 = vmatpush1.bf16.msra.mxu0 %v2077
  %5961 = vmatprep.mubr.bf16.mxu0 %v5626
  %5962 = vmatmul.mubr.bf16.gmra.mrb[0].mxu0 %v5625
  %v5963 = vpop.f32.mrb[0].mxu0
  %v5964 = vadd.f32 %v5911, %v5963
  %v5965 = vpop.f32.mrb[0].mxu0
  %v5966 = vadd.f32 %v5913, %v5965
  %v5967 = vpop.f32.mrb[0].mxu0
  %v5968 = vadd.f32 %v5915, %v5967
  %v5969 = vpop.f32.mrb[0].mxu0
  %v5970 = vadd.f32 %v5917, %v5969
  %5971 = vmatprep.mubr.bf16.mxu0 %v5651
  %5972 = vmatmul.mubr.bf16.gmra.mrb[0].mxu0 %v5650
  %v5973 = vpop.f32.mrb[0].mxu0
  %v5974 = vadd.f32 %v5921, %v5973
  %v5975 = vpop.f32.mrb[0].mxu0
  %v5976 = vadd.f32 %v5923, %v5975
  %v5977 = vpop.f32.mrb[0].mxu0
  %v5978 = vadd.f32 %v5925, %v5977
  %v5979 = vpop.f32.mrb[0].mxu0
  %v5980 = vadd.f32 %v5927, %v5979
  %5981 = vdwg.mxu0
  %5982 = vmatprep.subr.bf16.mxu0 %v2080
  %5983 = vmatpush1.bf16.msra.mxu0 %v2079
  %5984 = vmatprep.subr.bf16.mxu0 %v2082
  %5985 = vmatpush1.bf16.msra.mxu0 %v2081
  %5986 = vmatprep.subr.bf16.mxu0 %v2084
  %5987 = vmatpush1.bf16.msra.mxu0 %v2083
  %5988 = vmatprep.subr.bf16.mxu0 %v2086
  %5989 = vmatpush1.bf16.msra.mxu0 %v2085
  %5990 = vmatprep.subr.bf16.mxu0 %v2088
  %5991 = vmatpush1.bf16.msra.mxu0 %v2087
  %5992 = vmatprep.subr.bf16.mxu0 %v2090
  %5993 = vmatpush1.bf16.msra.mxu0 %v2089
  %5994 = vmatprep.subr.bf16.mxu0 %v2092
  %5995 = vmatpush1.bf16.msra.mxu0 %v2091
  %5996 = vmatprep.subr.bf16.mxu0 %v2094
  %5997 = vmatpush1.bf16.msra.mxu0 %v2093
  %5998 = vmatprep.subr.bf16.mxu0 %v2096
  %5999 = vmatpush1.bf16.msra.mxu0 %v2095
  %6000 = vmatprep.subr.bf16.mxu0 %v2098
  %6001 = vmatpush1.bf16.msra.mxu0 %v2097
  %6002 = vmatprep.subr.bf16.mxu0 %v2100
  %6003 = vmatpush1.bf16.msra.mxu0 %v2099
  %6004 = vmatprep.subr.bf16.mxu0 %v2102
  %6005 = vmatpush1.bf16.msra.mxu0 %v2101
  %6006 = vmatprep.subr.bf16.mxu0 %v2104
  %6007 = vmatpush1.bf16.msra.mxu0 %v2103
  %6008 = vmatprep.subr.bf16.mxu0 %v2106
  %6009 = vmatpush1.bf16.msra.mxu0 %v2105
  %6010 = vmatprep.subr.bf16.mxu0 %v2108
  %6011 = vmatpush1.bf16.msra.mxu0 %v2107
  %6012 = vmatprep.subr.bf16.mxu0 %v2110
  %6013 = vmatpush1.bf16.msra.mxu0 %v2109
  %6014 = vmatprep.mubr.bf16.mxu0 %v5628
  %6015 = vmatmul.mubr.bf16.gmra.mrb[0].mxu0 %v5627
  %v6016 = vpop.f32.mrb[0].mxu0
  %v6017 = vadd.f32 %v5964, %v6016
  %v6018 = vpop.f32.mrb[0].mxu0
  %v6019 = vadd.f32 %v5966, %v6018
  %v6020 = vpop.f32.mrb[0].mxu0
  %v6021 = vadd.f32 %v5968, %v6020
  %v6022 = vpop.f32.mrb[0].mxu0
  %v6023 = vadd.f32 %v5970, %v6022
  %6024 = vmatprep.mubr.bf16.mxu0 %v5653
  %6025 = vmatmul.mubr.bf16.gmra.mrb[0].mxu0 %v5652
  %v6026 = vpop.f32.mrb[0].mxu0
  %v6027 = vadd.f32 %v5974, %v6026
  %v6028 = vpop.f32.mrb[0].mxu0
  %v6029 = vadd.f32 %v5976, %v6028
  %v6030 = vpop.f32.mrb[0].mxu0
  %v6031 = vadd.f32 %v5978, %v6030
  %v6032 = vpop.f32.mrb[0].mxu0
  %v6033 = vadd.f32 %v5980, %v6032
  %6034 = vdwg.mxu0
  %6035 = vmatprep.subr.bf16.mxu0 %v2112
  %6036 = vmatpush1.bf16.msra.mxu0 %v2111
  %6037 = vmatprep.subr.bf16.mxu0 %v2114
  %6038 = vmatpush1.bf16.msra.mxu0 %v2113
  %6039 = vmatprep.subr.bf16.mxu0 %v2116
  %6040 = vmatpush1.bf16.msra.mxu0 %v2115
  %6041 = vmatprep.subr.bf16.mxu0 %v2118
  %6042 = vmatpush1.bf16.msra.mxu0 %v2117
  %6043 = vmatprep.subr.bf16.mxu0 %v2120
  %6044 = vmatpush1.bf16.msra.mxu0 %v2119
  %6045 = vmatprep.subr.bf16.mxu0 %v2122
  %6046 = vmatpush1.bf16.msra.mxu0 %v2121
  %6047 = vmatprep.subr.bf16.mxu0 %v2124
  %6048 = vmatpush1.bf16.msra.mxu0 %v2123
  %6049 = vmatprep.subr.bf16.mxu0 %v2126
  %6050 = vmatpush1.bf16.msra.mxu0 %v2125
  %6051 = vmatprep.subr.bf16.mxu0 %v2128
  %6052 = vmatpush1.bf16.msra.mxu0 %v2127
  %6053 = vmatprep.subr.bf16.mxu0 %v2130
  %6054 = vmatpush1.bf16.msra.mxu0 %v2129
  %6055 = vmatprep.subr.bf16.mxu0 %v2132
  %6056 = vmatpush1.bf16.msra.mxu0 %v2131
  %6057 = vmatprep.subr.bf16.mxu0 %v2134
  %6058 = vmatpush1.bf16.msra.mxu0 %v2133
  %6059 = vmatprep.subr.bf16.mxu0 %v2136
  %6060 = vmatpush1.bf16.msra.mxu0 %v2135
  %6061 = vmatprep.subr.bf16.mxu0 %v2138
  %6062 = vmatpush1.bf16.msra.mxu0 %v2137
  %6063 = vmatprep.subr.bf16.mxu0 %v2140
  %6064 = vmatpush1.bf16.msra.mxu0 %v2139
  %6065 = vmatprep.subr.bf16.mxu0 %v2142
  %6066 = vmatpush1.bf16.msra.mxu0 %v2141
  %6067 = vmatprep.mubr.bf16.mxu0 %v5630
  %6068 = vmatmul.mubr.bf16.gmra.mrb[0].mxu0 %v5629
  %v6069 = vpop.f32.mrb[0].mxu0
  %v6070 = vadd.f32 %v6017, %v6069
  %v6071 = vpop.f32.mrb[0].mxu0
  %v6072 = vadd.f32 %v6019, %v6071
  %v6073 = vpop.f32.mrb[0].mxu0
  %v6074 = vadd.f32 %v6021, %v6073
  %v6075 = vpop.f32.mrb[0].mxu0
  %v6076 = vadd.f32 %v6023, %v6075
  %6077 = vmatprep.mubr.bf16.mxu0 %v5655
  %6078 = vmatmul.mubr.bf16.gmra.mrb[0].mxu0 %v5654
  %v6079 = vpop.f32.mrb[0].mxu0
  %v6080 = vadd.f32 %v6027, %v6079
  %v6081 = vpop.f32.mrb[0].mxu0
  %v6082 = vadd.f32 %v6029, %v6081
  %v6083 = vpop.f32.mrb[0].mxu0
  %v6084 = vadd.f32 %v6031, %v6083
  %v6085 = vpop.f32.mrb[0].mxu0
  %v6086 = vadd.f32 %v6033, %v6085
  %6087 = vdwg.mxu0
  %6088 = vmatprep.subr.bf16.mxu0 %v2144
  %6089 = vmatpush1.bf16.msra.mxu0 %v2143
  %6090 = vmatprep.subr.bf16.mxu0 %v2146
  %6091 = vmatpush1.bf16.msra.mxu0 %v2145
  %6092 = vmatprep.subr.bf16.mxu0 %v2148
  %6093 = vmatpush1.bf16.msra.mxu0 %v2147
  %6094 = vmatprep.subr.bf16.mxu0 %v2150
  %6095 = vmatpush1.bf16.msra.mxu0 %v2149
  %6096 = vmatprep.subr.bf16.mxu0 %v2152
  %6097 = vmatpush1.bf16.msra.mxu0 %v2151
  %6098 = vmatprep.subr.bf16.mxu0 %v2154
  %6099 = vmatpush1.bf16.msra.mxu0 %v2153
  %6100 = vmatprep.subr.bf16.mxu0 %v2156
  %6101 = vmatpush1.bf16.msra.mxu0 %v2155
  %6102 = vmatprep.subr.bf16.mxu0 %v2158
  %6103 = vmatpush1.bf16.msra.mxu0 %v2157
  %6104 = vmatprep.subr.bf16.mxu0 %v2160
  %6105 = vmatpush1.bf16.msra.mxu0 %v2159
  %6106 = vmatprep.subr.bf16.mxu0 %v2162
  %6107 = vmatpush1.bf16.msra.mxu0 %v2161
  %6108 = vmatprep.subr.bf16.mxu0 %v2164
  %6109 = vmatpush1.bf16.msra.mxu0 %v2163
  %6110 = vmatprep.subr.bf16.mxu0 %v2166
  %6111 = vmatpush1.bf16.msra.mxu0 %v2165
  %6112 = vmatprep.subr.bf16.mxu0 %v2168
  %6113 = vmatpush1.bf16.msra.mxu0 %v2167
  %6114 = vmatprep.subr.bf16.mxu0 %v2170
  %6115 = vmatpush1.bf16.msra.mxu0 %v2169
  %6116 = vmatprep.subr.bf16.mxu0 %v2172
  %6117 = vmatpush1.bf16.msra.mxu0 %v2171
  %6118 = vmatprep.subr.bf16.mxu0 %v2174
  %6119 = vmatpush1.bf16.msra.mxu0 %v2173
  %6120 = vmatprep.mubr.bf16.mxu0 %v5632
  %6121 = vmatmul.mubr.bf16.gmra.mrb[0].mxu0 %v5631
  %v6122 = vpop.f32.mrb[0].mxu0
  %v6123 = vadd.f32 %v6070, %v6122
  %v6124 = vpop.f32.mrb[0].mxu0
  %v6125 = vadd.f32 %v6072, %v6124
  %v6126 = vpop.f32.mrb[0].mxu0
  %v6127 = vadd.f32 %v6074, %v6126
  %v6128 = vpop.f32.mrb[0].mxu0
  %v6129 = vadd.f32 %v6076, %v6128
  %6130 = vmatprep.mubr.bf16.mxu0 %v5657
  %6131 = vmatmul.mubr.bf16.gmra.mrb[0].mxu0 %v5656
  %v6132 = vpop.f32.mrb[0].mxu0
  %v6133 = vadd.f32 %v6080, %v6132
  %v6134 = vpop.f32.mrb[0].mxu0
  %v6135 = vadd.f32 %v6082, %v6134
  %v6136 = vpop.f32.mrb[0].mxu0
  %v6137 = vadd.f32 %v6084, %v6136
  %v6138 = vpop.f32.mrb[0].mxu0
  %v6139 = vadd.f32 %v6086, %v6138
  %6140 = vdwg.mxu0
  %6141 = vmatprep.subr.bf16.mxu0 %v2176
  %6142 = vmatpush1.bf16.msra.mxu0 %v2175
  %6143 = vmatprep.subr.bf16.mxu0 %v2178
  %6144 = vmatpush1.bf16.msra.mxu0 %v2177
  %6145 = vmatprep.subr.bf16.mxu0 %v2180
  %6146 = vmatpush1.bf16.msra.mxu0 %v2179
  %6147 = vmatprep.subr.bf16.mxu0 %v2182
  %6148 = vmatpush1.bf16.msra.mxu0 %v2181
  %6149 = vmatprep.subr.bf16.mxu0 %v2184
  %6150 = vmatpush1.bf16.msra.mxu0 %v2183
  %6151 = vmatprep.subr.bf16.mxu0 %v2186
  %6152 = vmatpush1.bf16.msra.mxu0 %v2185
  %6153 = vmatprep.subr.bf16.mxu0 %v2188
  %6154 = vmatpush1.bf16.msra.mxu0 %v2187
  %6155 = vmatprep.subr.bf16.mxu0 %v2190
  %6156 = vmatpush1.bf16.msra.mxu0 %v2189
  %6157 = vmatprep.subr.bf16.mxu0 %v2192
  %6158 = vmatpush1.bf16.msra.mxu0 %v2191
  %6159 = vmatprep.subr.bf16.mxu0 %v2194
  %6160 = vmatpush1.bf16.msra.mxu0 %v2193
  %6161 = vmatprep.subr.bf16.mxu0 %v2196
  %6162 = vmatpush1.bf16.msra.mxu0 %v2195
  %6163 = vmatprep.subr.bf16.mxu0 %v2198
  %6164 = vmatpush1.bf16.msra.mxu0 %v2197
  %6165 = vmatprep.subr.bf16.mxu0 %v2200
  %6166 = vmatpush1.bf16.msra.mxu0 %v2199
  %6167 = vmatprep.subr.bf16.mxu0 %v2202
  %6168 = vmatpush1.bf16.msra.mxu0 %v2201
  %6169 = vmatprep.subr.bf16.mxu0 %v2204
  %6170 = vmatpush1.bf16.msra.mxu0 %v2203
  %6171 = vmatprep.subr.bf16.mxu0 %v2206
  %6172 = vmatpush1.bf16.msra.mxu0 %v2205
  %6173 = vmatprep.mubr.bf16.mxu0 %v5634
  %6174 = vmatmul.mubr.bf16.gmra.mrb[0].mxu0 %v5633
  %v6175 = vpop.f32.mrb[0].mxu0
  %v6176 = vadd.f32 %v6123, %v6175
  %v6177 = vpop.f32.mrb[0].mxu0
  %v6178 = vadd.f32 %v6125, %v6177
  %v6179 = vpop.f32.mrb[0].mxu0
  %v6180 = vadd.f32 %v6127, %v6179
  %v6181 = vpop.f32.mrb[0].mxu0
  %v6182 = vadd.f32 %v6129, %v6181
  %6183 = vmatprep.mubr.bf16.mxu0 %v5659
  %6184 = vmatmul.mubr.bf16.gmra.mrb[0].mxu0 %v5658
  %v6185 = vpop.f32.mrb[0].mxu0
  %v6186 = vadd.f32 %v6133, %v6185
  %v6187 = vpop.f32.mrb[0].mxu0
  %v6188 = vadd.f32 %v6135, %v6187
  %v6189 = vpop.f32.mrb[0].mxu0
  %v6190 = vadd.f32 %v6137, %v6189
  %v6191 = vpop.f32.mrb[0].mxu0
  %v6192 = vadd.f32 %v6139, %v6191
  %6193 = vdwg.mxu0
  %6194 = vmatprep.subr.bf16.mxu0 %v2208
  %6195 = vmatpush1.bf16.msra.mxu0 %v2207
  %6196 = vmatprep.subr.bf16.mxu0 %v2210
  %6197 = vmatpush1.bf16.msra.mxu0 %v2209
  %6198 = vmatprep.subr.bf16.mxu0 %v2212
  %6199 = vmatpush1.bf16.msra.mxu0 %v2211
  %6200 = vmatprep.subr.bf16.mxu0 %v2214
  %6201 = vmatpush1.bf16.msra.mxu0 %v2213
  %6202 = vmatprep.subr.bf16.mxu0 %v2216
  %6203 = vmatpush1.bf16.msra.mxu0 %v2215
  %6204 = vmatprep.subr.bf16.mxu0 %v2218
  %6205 = vmatpush1.bf16.msra.mxu0 %v2217
  %6206 = vmatprep.subr.bf16.mxu0 %v2220
  %6207 = vmatpush1.bf16.msra.mxu0 %v2219
  %6208 = vmatprep.subr.bf16.mxu0 %v2222
  %6209 = vmatpush1.bf16.msra.mxu0 %v2221
  %6210 = vmatprep.subr.bf16.mxu0 %v2224
  %6211 = vmatpush1.bf16.msra.mxu0 %v2223
  %6212 = vmatprep.subr.bf16.mxu0 %v2226
  %6213 = vmatpush1.bf16.msra.mxu0 %v2225
  %6214 = vmatprep.subr.bf16.mxu0 %v2228
  %6215 = vmatpush1.bf16.msra.mxu0 %v2227
  %6216 = vmatprep.subr.bf16.mxu0 %v2230
  %6217 = vmatpush1.bf16.msra.mxu0 %v2229
  %6218 = vmatprep.subr.bf16.mxu0 %v2232
  %6219 = vmatpush1.bf16.msra.mxu0 %v2231
  %6220 = vmatprep.subr.bf16.mxu0 %v2234
  %6221 = vmatpush1.bf16.msra.mxu0 %v2233
  %6222 = vmatprep.subr.bf16.mxu0 %v2236
  %6223 = vmatpush1.bf16.msra.mxu0 %v2235
  %6224 = vmatprep.subr.bf16.mxu0 %v2238
  %6225 = vmatpush1.bf16.msra.mxu0 %v2237
  %6226 = vmatprep.mubr.bf16.mxu0 %v5636
  %6227 = vmatmul.mubr.bf16.gmra.mrb[0].mxu0 %v5635
  %v6228 = vpop.f32.mrb[0].mxu0
  %v6229 = vadd.f32 %v6176, %v6228
  %v6230 = vpop.f32.mrb[0].mxu0
  %v6231 = vadd.f32 %v6178, %v6230
  %v6232 = vpop.f32.mrb[0].mxu0
  %v6233 = vadd.f32 %v6180, %v6232
  %v6234 = vpop.f32.mrb[0].mxu0
  %v6235 = vadd.f32 %v6182, %v6234
  %6236 = vmatprep.mubr.bf16.mxu0 %v5661
  %6237 = vmatmul.mubr.bf16.gmra.mrb[0].mxu0 %v5660
  %v6238 = vpop.f32.mrb[0].mxu0
  %v6239 = vadd.f32 %v6186, %v6238
  %v6240 = vpop.f32.mrb[0].mxu0
  %v6241 = vadd.f32 %v6188, %v6240
  %v6242 = vpop.f32.mrb[0].mxu0
  %v6243 = vadd.f32 %v6190, %v6242
  %v6244 = vpop.f32.mrb[0].mxu0
  %v6245 = vadd.f32 %v6192, %v6244
  %6246 = vdwg.mxu0
  %6247 = vmatprep.subr.bf16.mxu0 %v2240
  %6248 = vmatpush1.bf16.msra.mxu0 %v2239
  %6249 = vmatprep.subr.bf16.mxu0 %v2242
  %6250 = vmatpush1.bf16.msra.mxu0 %v2241
  %6251 = vmatprep.subr.bf16.mxu0 %v2244
  %6252 = vmatpush1.bf16.msra.mxu0 %v2243
  %6253 = vmatprep.subr.bf16.mxu0 %v2246
  %6254 = vmatpush1.bf16.msra.mxu0 %v2245
  %6255 = vmatprep.subr.bf16.mxu0 %v2248
  %6256 = vmatpush1.bf16.msra.mxu0 %v2247
  %6257 = vmatprep.subr.bf16.mxu0 %v2250
  %6258 = vmatpush1.bf16.msra.mxu0 %v2249
  %6259 = vmatprep.subr.bf16.mxu0 %v2252
  %6260 = vmatpush1.bf16.msra.mxu0 %v2251
  %6261 = vmatprep.subr.bf16.mxu0 %v2254
  %6262 = vmatpush1.bf16.msra.mxu0 %v2253
  %6263 = vmatprep.subr.bf16.mxu0 %v2256
  %6264 = vmatpush1.bf16.msra.mxu0 %v2255
  %6265 = vmatprep.subr.bf16.mxu0 %v2258
  %6266 = vmatpush1.bf16.msra.mxu0 %v2257
  %6267 = vmatprep.subr.bf16.mxu0 %v2260
  %6268 = vmatpush1.bf16.msra.mxu0 %v2259
  %6269 = vmatprep.subr.bf16.mxu0 %v2262
  %6270 = vmatpush1.bf16.msra.mxu0 %v2261
  %6271 = vmatprep.subr.bf16.mxu0 %v2264
  %6272 = vmatpush1.bf16.msra.mxu0 %v2263
  %6273 = vmatprep.subr.bf16.mxu0 %v2266
  %6274 = vmatpush1.bf16.msra.mxu0 %v2265
  %6275 = vmatprep.subr.bf16.mxu0 %v2268
  %6276 = vmatpush1.bf16.msra.mxu0 %v2267
  %6277 = vmatprep.subr.bf16.mxu0 %v2270
  %6278 = vmatpush1.bf16.msra.mxu0 %v2269
  %6279 = vmatprep.mubr.bf16.mxu0 %v5638
  %6280 = vmatmul.mubr.bf16.gmra.mrb[0].mxu0 %v5637
  %v6281 = vpop.f32.mrb[0].mxu0
  %v6282 = vadd.f32 %v6229, %v6281
  %v6283 = vpop.f32.mrb[0].mxu0
  %v6284 = vadd.f32 %v6231, %v6283
  %v6285 = vpop.f32.mrb[0].mxu0
  %v6286 = vadd.f32 %v6233, %v6285
  %v6287 = vpop.f32.mrb[0].mxu0
  %v6288 = vadd.f32 %v6235, %v6287
  %6289 = vmatprep.mubr.bf16.mxu0 %v5663
  %6290 = vmatmul.mubr.bf16.gmra.mrb[0].mxu0 %v5662
  %v6291 = vpop.f32.mrb[0].mxu0
  %v6292 = vadd.f32 %v6239, %v6291
  %v6293 = vpop.f32.mrb[0].mxu0
  %v6294 = vadd.f32 %v6241, %v6293
  %v6295 = vpop.f32.mrb[0].mxu0
  %v6296 = vadd.f32 %v6243, %v6295
  %v6297 = vpop.f32.mrb[0].mxu0
  %v6298 = vadd.f32 %v6245, %v6297
  %6299 = vdwg.mxu0
  %6300 = vmatprep.subr.bf16.mxu0 %v2272
  %6301 = vmatpush1.bf16.msra.mxu0 %v2271
  %6302 = vmatprep.subr.bf16.mxu0 %v2274
  %6303 = vmatpush1.bf16.msra.mxu0 %v2273
  %6304 = vmatprep.subr.bf16.mxu0 %v2276
  %6305 = vmatpush1.bf16.msra.mxu0 %v2275
  %6306 = vmatprep.subr.bf16.mxu0 %v2278
  %6307 = vmatpush1.bf16.msra.mxu0 %v2277
  %6308 = vmatprep.subr.bf16.mxu0 %v2280
  %6309 = vmatpush1.bf16.msra.mxu0 %v2279
  %6310 = vmatprep.subr.bf16.mxu0 %v2282
  %6311 = vmatpush1.bf16.msra.mxu0 %v2281
  %6312 = vmatprep.subr.bf16.mxu0 %v2284
  %6313 = vmatpush1.bf16.msra.mxu0 %v2283
  %6314 = vmatprep.subr.bf16.mxu0 %v2286
  %6315 = vmatpush1.bf16.msra.mxu0 %v2285
  %6316 = vmatprep.subr.bf16.mxu0 %v2288
  %6317 = vmatpush1.bf16.msra.mxu0 %v2287
  %6318 = vmatprep.subr.bf16.mxu0 %v2290
  %6319 = vmatpush1.bf16.msra.mxu0 %v2289
  %6320 = vmatprep.subr.bf16.mxu0 %v2292
  %6321 = vmatpush1.bf16.msra.mxu0 %v2291
  %6322 = vmatprep.subr.bf16.mxu0 %v2294
  %6323 = vmatpush1.bf16.msra.mxu0 %v2293
  %6324 = vmatprep.subr.bf16.mxu0 %v2296
  %6325 = vmatpush1.bf16.msra.mxu0 %v2295
  %6326 = vmatprep.subr.bf16.mxu0 %v2298
  %6327 = vmatpush1.bf16.msra.mxu0 %v2297
  %6328 = vmatprep.subr.bf16.mxu0 %v2300
  %6329 = vmatpush1.bf16.msra.mxu0 %v2299
  %6330 = vmatprep.subr.bf16.mxu0 %v2302
  %6331 = vmatpush1.bf16.msra.mxu0 %v2301
  %6332 = vmatprep.mubr.bf16.mxu0 %v5640
  %6333 = vmatmul.mubr.bf16.gmra.mrb[0].mxu0 %v5639
  %v6334 = vpop.f32.mrb[0].mxu0
  %v6335 = vadd.f32 %v6282, %v6334
  %v6336 = vpop.f32.mrb[0].mxu0
  %v6337 = vadd.f32 %v6284, %v6336
  %v6338 = vpop.f32.mrb[0].mxu0
  %v6339 = vadd.f32 %v6286, %v6338
  %v6340 = vpop.f32.mrb[0].mxu0
  %v6341 = vadd.f32 %v6288, %v6340
  %6342 = vmatprep.mubr.bf16.mxu0 %v5665
  %6343 = vmatmul.mubr.bf16.gmra.mrb[0].mxu0 %v5664
  %v6344 = vpop.f32.mrb[0].mxu0
  %v6345 = vadd.f32 %v6292, %v6344
  %v6346 = vpop.f32.mrb[0].mxu0
  %v6347 = vadd.f32 %v6294, %v6346
  %v6348 = vpop.f32.mrb[0].mxu0
  %v6349 = vadd.f32 %v6296, %v6348
  %v6350 = vpop.f32.mrb[0].mxu0
  %v6351 = vadd.f32 %v6298, %v6350
  %6352 = vdwg.mxu0
  %6353 = vmatprep.subr.bf16.mxu0 %v2304
  %6354 = vmatpush1.bf16.msra.mxu0 %v2303
  %6355 = vmatprep.subr.bf16.mxu0 %v2306
  %6356 = vmatpush1.bf16.msra.mxu0 %v2305
  %6357 = vmatprep.subr.bf16.mxu0 %v2308
  %6358 = vmatpush1.bf16.msra.mxu0 %v2307
  %6359 = vmatprep.subr.bf16.mxu0 %v2310
  %6360 = vmatpush1.bf16.msra.mxu0 %v2309
  %6361 = vmatprep.subr.bf16.mxu0 %v2312
  %6362 = vmatpush1.bf16.msra.mxu0 %v2311
  %6363 = vmatprep.subr.bf16.mxu0 %v2314
  %6364 = vmatpush1.bf16.msra.mxu0 %v2313
  %6365 = vmatprep.subr.bf16.mxu0 %v2316
  %6366 = vmatpush1.bf16.msra.mxu0 %v2315
  %6367 = vmatprep.subr.bf16.mxu0 %v2318
  %6368 = vmatpush1.bf16.msra.mxu0 %v2317
  %6369 = vmatprep.subr.bf16.mxu0 0
  %6370 = vmatpush1.bf16.msra.mxu0 0
  %6371 = vmatprep.subr.bf16.mxu0 0
  %6372 = vmatpush1.bf16.msra.mxu0 0
  %6373 = vmatprep.subr.bf16.mxu0 0
  %6374 = vmatpush1.bf16.msra.mxu0 0
  %6375 = vmatprep.subr.bf16.mxu0 0
  %6376 = vmatpush1.bf16.msra.mxu0 0
  %6377 = vmatprep.subr.bf16.mxu0 0
  %6378 = vmatpush1.bf16.msra.mxu0 0
  %6379 = vmatprep.subr.bf16.mxu0 0
  %6380 = vmatpush1.bf16.msra.mxu0 0
  %6381 = vmatprep.subr.bf16.mxu0 0
  %6382 = vmatpush1.bf16.msra.mxu0 0
  %6383 = vmatprep.subr.bf16.mxu0 0
  %6384 = vmatpush1.bf16.msra.mxu0 0
  %6385 = vmatprep.mubr.bf16.mxu0 0
  %6386 = vmatmul.mubr.bf16.gmra.mrb[0].mxu0 %v5641
  %v6387 = vpop.f32.mrb[0].mxu0
  %v6388 = vadd.f32 %v6335, %v6387
  %v6389 = vpop.f32.mrb[0].mxu0
  %v6390 = vadd.f32 %v6337, %v6389
  %v6391 = vpop.f32.mrb[0].mxu0
  %v6392 = vadd.f32 %v6339, %v6391
  %v6393 = vpop.f32.mrb[0].mxu0
  %v6394 = vadd.f32 %v6341, %v6393
  %6395 = vmatprep.mubr.bf16.mxu0 0
  %6396 = vmatmul.mubr.bf16.gmra.mrb[0].mxu0 %v5666
  %v6397 = vpop.f32.mrb[0].mxu0
  %v6398 = vadd.f32 %v6345, %v6397
  %v6399 = vpop.f32.mrb[0].mxu0
  %v6400 = vadd.f32 %v6347, %v6399
  %v6401 = vpop.f32.mrb[0].mxu0
  %v6402 = vadd.f32 %v6349, %v6401
  %v6403 = vpop.f32.mrb[0].mxu0
  %v6404 = vadd.f32 %v6351, %v6403
  %6405 = vdwg.mxu0
  %v6406 = vmax.f32 %v5404, %v6388
  %v6407 = vmax.f32 %v5405, %v6390
  %v6408 = vmax.f32 %v5406, %v6392
  %v6409 = vmax.f32 %v5407, %v6394
  %v6410 = vmax.f32 %v5408, %v6398
  %v6411 = vmax.f32 %v5409, %v6400
  %v6412 = vmax.f32 %v5410, %v6402
  %v6413 = vmax.f32 %v5411, %v6404
  %v6414 = vld [vmem:[%s2] sm:$0x3]
  %v6416 = vlaneseq
  %v6417 = vshrl.u32 %v6416, 7
  %v6418 = vsub.s32 0, %v6417
  %v6419 = vrot.slane %v6414, %v6418
  %v6420 = vlaneseq
  %v6421 = vshrl.u32 %v6420, 7
  %v6422 = vsub.s32 1, %v6421
  %v6423 = vrot.slane %v6414, %v6422
  %v6426 = vadd.f32 %v6406, %v6419
  %v6427 = vadd.f32 %v6407, %v6423
  %v6428 = vadd.f32 %v6408, %v6419
  %v6429 = vadd.f32 %v6409, %v6423
  %v6430 = vadd.f32 %v6410, %v6419
  %v6431 = vadd.f32 %v6411, %v6423
  %v6432 = vadd.f32 %v6412, %v6419
  %v6433 = vadd.f32 %v6413, %v6423
  %v6434 = vmax.f32 %v6426, 0.0
  %v6435 = vmax.f32 %v6427, 0.0
  %v6436 = vmax.f32 %v6428, 0.0
  %v6437 = vmax.f32 %v6429, 0.0
  %v6438 = vmax.f32 %v6430, 0.0
  %v6439 = vmax.f32 %v6431, 0.0
  %v6440 = vmax.f32 %v6432, 0.0
  %v6441 = vmax.f32 %v6433, 0.0
  %v6442 = vpack.c.bf16 %v6436, %v6434
  %v6443 = vpack.c.bf16 %v6437, %v6435
  %v6444 = vpack.c.bf16 %v6440, %v6438
  %v6445 = vpack.c.bf16 %v6441, %v6439
  %v6450 = vunpack.c.l.b16 %v6442
  %v6451 = vunpack.c.l.b16 %v6443
  %v6452 = vunpack.c.h.b16 %v6442
  %v6453 = vunpack.c.h.b16 %v6443
  %v6454 = vunpack.c.l.b16 %v6444
  %v6455 = vunpack.c.l.b16 %v6445
  %v6456 = vunpack.c.h.b16 %v6444
  %v6457 = vunpack.c.h.b16 %v6445
  %v6458 = vpack.c.b16 %v6451, %v6450
  %v6459 = vpack.c.b16 %v6453, %v6452
  %v6460 = vpack.c.b16 %v6455, %v6454
  %v6461 = vpack.c.b16 %v6457, %v6456
  %6466 = vst [vmem:[%s3] sm:$0xff] %v6458
  %6467 = vst [vmem:[%s3 + $0x8] sm:$0xff] %v6459
  %6468 = vst [vmem:[%s3 + $0x10] sm:$0xff] %v6460
  %6469 = vst [vmem:[%s3 + $0x18] sm:$0xff] %v6461
  // Predicated region
  $region14: #{encoder_forward.5} parent=0 // pred_check
    _
  $region15: #{encoder_forward.5} parent=0 // pred_check_branch
    %6471 = sbr.rel (0) target = $region17
  $region16: #{encoder_forward.5} parent=0 // pred_region
    _
  $region17: #{encoder_forward.5} parent=0 // pred_fallthru
    _
  // Predicated region
  $region18: #{encoder_forward.5} parent=0 // pred_check
    _
  $region19: #{encoder_forward.5} parent=0 // pred_check_branch
    %6473 = sbr.rel (0) target = $region21
  $region20: #{encoder_forward.5} parent=0 // pred_region
    _
  $region21: #{encoder_forward.5} parent=0 // pred_fallthru
    _

// kernel: encoder_forward.6
$region0: #{encoder_forward.6}
  #allocation0 [shape = 'u32[]', space=smem, size = 0x4, offset = 0x4, fixed_abs, tag = 'smem constant byte address 0x4 - core index']
  #allocation1 [shape = 'u32[144,128]{1,0:T(1,128)}', space=vmem, size = 0x12000, scoped, tag = 'internal scratch']
  %s0 = inlined_call_operand.vmem [shape: bf16[1,32,2304], index: 0, kind: input, shape index: {}]
  %s1 = inlined_call_operand.vmem [shape: bf16[2304,256], index: 1, kind: input, shape index: {}]
  %s2 = inlined_call_operand.vmem [shape: f32[1,256], index: 2, kind: input, shape index: {}]
  %s3 = inlined_call_operand.vmem [shape: bf16[32,256], index: 3, kind: output, shape index: {}]
  %s4 = sld [smem:[#allocation0]]
  $region22: #{encoder_forward.6} parent=0
    _
  %s6 = ssub.s32 1, %s4
  %s7 = scalar_select 0, %s6, %s4
  // Predicated region
  $region2: #{encoder_forward.6} parent=0 // pred_check
    _
  $region3: #{encoder_forward.6} parent=0 // pred_check_branch
    %9 = sbr.rel (0) target = $region5
  $region4: #{encoder_forward.6} parent=0 // pred_region
    _
  $region5: #{encoder_forward.6} parent=0 // pred_fallthru
    _
  // Predicated region
  $region6: #{encoder_forward.6} parent=0 // pred_check
    _
  $region7: #{encoder_forward.6} parent=0 // pred_check_branch
    %11 = sbr.rel (0) target = $region9
  $region8: #{encoder_forward.6} parent=0 // pred_region
    _
  $region9: #{encoder_forward.6} parent=0 // pred_fallthru
    _
  // Predicated region
  $region10: #{encoder_forward.6} parent=0 // pred_check
    _
  $region11: #{encoder_forward.6} parent=0 // pred_check_branch
    %13 = sbr.rel (0) target = $region13
  $region12: #{encoder_forward.6} parent=0 // pred_region
    _
  $region13: #{encoder_forward.6} parent=0 // pred_fallthru
    _
  %v14 = vld [vmem:[%s1] sm:$0xff]
  %v15 = vld [vmem:[%s1 + $0x8] sm:$0xff]
  %v16 = vld [vmem:[%s1 + $0x10] sm:$0xff]
  %v17 = vld [vmem:[%s1 + $0x18] sm:$0xff]
  %v18 = vld [vmem:[%s1 + $0x20] sm:$0xff]
  %v19 = vld [vmem:[%s1 + $0x28] sm:$0xff]
  %v20 = vld [vmem:[%s1 + $0x30] sm:$0xff]
  %v21 = vld [vmem:[%s1 + $0x38] sm:$0xff]
  %v22 = vld [vmem:[%s1 + $0x40] sm:$0xff]
  %v23 = vld [vmem:[%s1 + $0x48] sm:$0xff]
  %v24 = vld [vmem:[%s1 + $0x50] sm:$0xff]
  %v25 = vld [vmem:[%s1 + $0x58] sm:$0xff]
  %v26 = vld [vmem:[%s1 + $0x60] sm:$0xff]
  %v27 = vld [vmem:[%s1 + $0x68] sm:$0xff]
  %v28 = vld [vmem:[%s1 + $0x70] sm:$0xff]
  %v29 = vld [vmem:[%s1 + $0x78] sm:$0xff]
  %v30 = vld [vmem:[%s1 + $0x80] sm:$0xff]
  %v31 = vld [vmem:[%s1 + $0x88] sm:$0xff]
  %v32 = vld [vmem:[%s1 + $0x90] sm:$0xff]
  %v33 = vld [vmem:[%s1 + $0x98] sm:$0xff]
  %v34 = vld [vmem:[%s1 + $0xa0] sm:$0xff]
  %v35 = vld [vmem:[%s1 + $0xa8] sm:$0xff]
  %v36 = vld [vmem:[%s1 + $0xb0] sm:$0xff]
  %v37 = vld [vmem:[%s1 + $0xb8] sm:$0xff]
  %v38 = vld [vmem:[%s1 + $0xc0] sm:$0xff]
  %v39 = vld [vmem:[%s1 + $0xc8] sm:$0xff]
  %v40 = vld [vmem:[%s1 + $0xd0] sm:$0xff]
  %v41 = vld [vmem:[%s1 + $0xd8] sm:$0xff]
  %v42 = vld [vmem:[%s1 + $0xe0] sm:$0xff]
  %v43 = vld [vmem:[%s1 + $0xe8] sm:$0xff]
  %v44 = vld [vmem:[%s1 + $0xf0] sm:$0xff]
  %v45 = vld [vmem:[%s1 + $0xf8] sm:$0xff]
  %v46 = vld [vmem:[%s1 + $0x100] sm:$0xff]
  %v47 = vld [vmem:[%s1 + $0x108] sm:$0xff]
  %v48 = vld [vmem:[%s1 + $0x110] sm:$0xff]
  %v49 = vld [vmem:[%s1 + $0x118] sm:$0xff]
  %v50 = vld [vmem:[%s1 + $0x120] sm:$0xff]
  %v51 = vld [vmem:[%s1 + $0x128] sm:$0xff]
  %v52 = vld [vmem:[%s1 + $0x130] sm:$0xff]
  %v53 = vld [vmem:[%s1 + $0x138] sm:$0xff]
  %v54 = vld [vmem:[%s1 + $0x140] sm:$0xff]
  %v55 = vld [vmem:[%s1 + $0x148] sm:$0xff]
  %v56 = vld [vmem:[%s1 + $0x150] sm:$0xff]
  %v57 = vld [vmem:[%s1 + $0x158] sm:$0xff]
  %v58 = vld [vmem:[%s1 + $0x160] sm:$0xff]
  %v59 = vld [vmem:[%s1 + $0x168] sm:$0xff]
  %v60 = vld [vmem:[%s1 + $0x170] sm:$0xff]
  %v61 = vld [vmem:[%s1 + $0x178] sm:$0xff]
  %v62 = vld [vmem:[%s1 + $0x180] sm:$0xff]
  %v63 = vld [vmem:[%s1 + $0x188] sm:$0xff]
  %v64 = vld [vmem:[%s1 + $0x190] sm:$0xff]
  %v65 = vld [vmem:[%s1 + $0x198] sm:$0xff]
  %v66 = vld [vmem:[%s1 + $0x1a0] sm:$0xff]
  %v67 = vld [vmem:[%s1 + $0x1a8] sm:$0xff]
  %v68 = vld [vmem:[%s1 + $0x1b0] sm:$0xff]
  %v69 = vld [vmem:[%s1 + $0x1b8] sm:$0xff]
  %v70 = vld [vmem:[%s1 + $0x1c0] sm:$0xff]
  %v71 = vld [vmem:[%s1 + $0x1c8] sm:$0xff]
  %v72 = vld [vmem:[%s1 + $0x1d0] sm:$0xff]
  %v73 = vld [vmem:[%s1 + $0x1d8] sm:$0xff]
  %v74 = vld [vmem:[%s1 + $0x1e0] sm:$0xff]
  %v75 = vld [vmem:[%s1 + $0x1e8] sm:$0xff]
  %v76 = vld [vmem:[%s1 + $0x1f0] sm:$0xff]
  %v77 = vld [vmem:[%s1 + $0x1f8] sm:$0xff]
  %v78 = vld [vmem:[%s1 + $0x200] sm:$0xff]
  %v79 = vld [vmem:[%s1 + $0x208] sm:$0xff]
  %v80 = vld [vmem:[%s1 + $0x210] sm:$0xff]
  %v81 = vld [vmem:[%s1 + $0x218] sm:$0xff]
  %v82 = vld [vmem:[%s1 + $0x220] sm:$0xff]
  %v83 = vld [vmem:[%s1 + $0x228] sm:$0xff]
  %v84 = vld [vmem:[%s1 + $0x230] sm:$0xff]
  %v85 = vld [vmem:[%s1 + $0x238] sm:$0xff]
  %v86 = vld [vmem:[%s1 + $0x240] sm:$0xff]
  %v87 = vld [vmem:[%s1 + $0x248] sm:$0xff]
  %v88 = vld [vmem:[%s1 + $0x250] sm:$0xff]
  %v89 = vld [vmem:[%s1 + $0x258] sm:$0xff]
  %v90 = vld [vmem:[%s1 + $0x260] sm:$0xff]
  %v91 = vld [vmem:[%s1 + $0x268] sm:$0xff]
  %v92 = vld [vmem:[%s1 + $0x270] sm:$0xff]
  %v93 = vld [vmem:[%s1 + $0x278] sm:$0xff]
  %v94 = vld [vmem:[%s1 + $0x280] sm:$0xff]
  %v95 = vld [vmem:[%s1 + $0x288] sm:$0xff]
  %v96 = vld [vmem:[%s1 + $0x290] sm:$0xff]
  %v97 = vld [vmem:[%s1 + $0x298] sm:$0xff]
  %v98 = vld [vmem:[%s1 + $0x2a0] sm:$0xff]
  %v99 = vld [vmem:[%s1 + $0x2a8] sm:$0xff]
  %v100 = vld [vmem:[%s1 + $0x2b0] sm:$0xff]
  %v101 = vld [vmem:[%s1 + $0x2b8] sm:$0xff]
  %v102 = vld [vmem:[%s1 + $0x2c0] sm:$0xff]
  %v103 = vld [vmem:[%s1 + $0x2c8] sm:$0xff]
  %v104 = vld [vmem:[%s1 + $0x2d0] sm:$0xff]
  %v105 = vld [vmem:[%s1 + $0x2d8] sm:$0xff]
  %v106 = vld [vmem:[%s1 + $0x2e0] sm:$0xff]
  %v107 = vld [vmem:[%s1 + $0x2e8] sm:$0xff]
  %v108 = vld [vmem:[%s1 + $0x2f0] sm:$0xff]
  %v109 = vld [vmem:[%s1 + $0x2f8] sm:$0xff]
  %v110 = vld [vmem:[%s1 + $0x300] sm:$0xff]
  %v111 = vld [vmem:[%s1 + $0x308] sm:$0xff]
  %v112 = vld [vmem:[%s1 + $0x310] sm:$0xff]
  %v113 = vld [vmem:[%s1 + $0x318] sm:$0xff]
  %v114 = vld [vmem:[%s1 + $0x320] sm:$0xff]
  %v115 = vld [vmem:[%s1 + $0x328] sm:$0xff]
  %v116 = vld [vmem:[%s1 + $0x330] sm:$0xff]
  %v117 = vld [vmem:[%s1 + $0x338] sm:$0xff]
  %v118 = vld [vmem:[%s1 + $0x340] sm:$0xff]
  %v119 = vld [vmem:[%s1 + $0x348] sm:$0xff]
  %v120 = vld [vmem:[%s1 + $0x350] sm:$0xff]
  %v121 = vld [vmem:[%s1 + $0x358] sm:$0xff]
  %v122 = vld [vmem:[%s1 + $0x360] sm:$0xff]
  %v123 = vld [vmem:[%s1 + $0x368] sm:$0xff]
  %v124 = vld [vmem:[%s1 + $0x370] sm:$0xff]
  %v125 = vld [vmem:[%s1 + $0x378] sm:$0xff]
  %v126 = vld [vmem:[%s1 + $0x380] sm:$0xff]
  %v127 = vld [vmem:[%s1 + $0x388] sm:$0xff]
  %v128 = vld [vmem:[%s1 + $0x390] sm:$0xff]
  %v129 = vld [vmem:[%s1 + $0x398] sm:$0xff]
  %v130 = vld [vmem:[%s1 + $0x3a0] sm:$0xff]
  %v131 = vld [vmem:[%s1 + $0x3a8] sm:$0xff]
  %v132 = vld [vmem:[%s1 + $0x3b0] sm:$0xff]
  %v133 = vld [vmem:[%s1 + $0x3b8] sm:$0xff]
  %v134 = vld [vmem:[%s1 + $0x3c0] sm:$0xff]
  %v135 = vld [vmem:[%s1 + $0x3c8] sm:$0xff]
  %v136 = vld [vmem:[%s1 + $0x3d0] sm:$0xff]
  %v137 = vld [vmem:[%s1 + $0x3d8] sm:$0xff]
  %v138 = vld [vmem:[%s1 + $0x3e0] sm:$0xff]
  %v139 = vld [vmem:[%s1 + $0x3e8] sm:$0xff]
  %v140 = vld [vmem:[%s1 + $0x3f0] sm:$0xff]
  %v141 = vld [vmem:[%s1 + $0x3f8] sm:$0xff]
  %v142 = vld [vmem:[%s1 + $0x400] sm:$0xff]
  %v143 = vld [vmem:[%s1 + $0x408] sm:$0xff]
  %v144 = vld [vmem:[%s1 + $0x410] sm:$0xff]
  %v145 = vld [vmem:[%s1 + $0x418] sm:$0xff]
  %v146 = vld [vmem:[%s1 + $0x420] sm:$0xff]
  %v147 = vld [vmem:[%s1 + $0x428] sm:$0xff]
  %v148 = vld [vmem:[%s1 + $0x430] sm:$0xff]
  %v149 = vld [vmem:[%s1 + $0x438] sm:$0xff]
  %v150 = vld [vmem:[%s1 + $0x440] sm:$0xff]
  %v151 = vld [vmem:[%s1 + $0x448] sm:$0xff]
  %v152 = vld [vmem:[%s1 + $0x450] sm:$0xff]
  %v153 = vld [vmem:[%s1 + $0x458] sm:$0xff]
  %v154 = vld [vmem:[%s1 + $0x460] sm:$0xff]
  %v155 = vld [vmem:[%s1 + $0x468] sm:$0xff]
  %v156 = vld [vmem:[%s1 + $0x470] sm:$0xff]
  %v157 = vld [vmem:[%s1 + $0x478] sm:$0xff]
  %v158 = vld [vmem:[%s1 + $0x480] sm:$0xff]
  %v159 = vld [vmem:[%s1 + $0x488] sm:$0xff]
  %v160 = vld [vmem:[%s1 + $0x490] sm:$0xff]
  %v161 = vld [vmem:[%s1 + $0x498] sm:$0xff]
  %v162 = vld [vmem:[%s1 + $0x4a0] sm:$0xff]
  %v163 = vld [vmem:[%s1 + $0x4a8] sm:$0xff]
  %v164 = vld [vmem:[%s1 + $0x4b0] sm:$0xff]
  %v165 = vld [vmem:[%s1 + $0x4b8] sm:$0xff]
  %v166 = vld [vmem:[%s1 + $0x4c0] sm:$0xff]
  %v167 = vld [vmem:[%s1 + $0x4c8] sm:$0xff]
  %v168 = vld [vmem:[%s1 + $0x4d0] sm:$0xff]
  %v169 = vld [vmem:[%s1 + $0x4d8] sm:$0xff]
  %v170 = vld [vmem:[%s1 + $0x4e0] sm:$0xff]
  %v171 = vld [vmem:[%s1 + $0x4e8] sm:$0xff]
  %v172 = vld [vmem:[%s1 + $0x4f0] sm:$0xff]
  %v173 = vld [vmem:[%s1 + $0x4f8] sm:$0xff]
  %v174 = vld [vmem:[%s1 + $0x500] sm:$0xff]
  %v175 = vld [vmem:[%s1 + $0x508] sm:$0xff]
  %v176 = vld [vmem:[%s1 + $0x510] sm:$0xff]
  %v177 = vld [vmem:[%s1 + $0x518] sm:$0xff]
  %v178 = vld [vmem:[%s1 + $0x520] sm:$0xff]
  %v179 = vld [vmem:[%s1 + $0x528] sm:$0xff]
  %v180 = vld [vmem:[%s1 + $0x530] sm:$0xff]
  %v181 = vld [vmem:[%s1 + $0x538] sm:$0xff]
  %v182 = vld [vmem:[%s1 + $0x540] sm:$0xff]
  %v183 = vld [vmem:[%s1 + $0x548] sm:$0xff]
  %v184 = vld [vmem:[%s1 + $0x550] sm:$0xff]
  %v185 = vld [vmem:[%s1 + $0x558] sm:$0xff]
  %v186 = vld [vmem:[%s1 + $0x560] sm:$0xff]
  %v187 = vld [vmem:[%s1 + $0x568] sm:$0xff]
  %v188 = vld [vmem:[%s1 + $0x570] sm:$0xff]
  %v189 = vld [vmem:[%s1 + $0x578] sm:$0xff]
  %v190 = vld [vmem:[%s1 + $0x580] sm:$0xff]
  %v191 = vld [vmem:[%s1 + $0x588] sm:$0xff]
  %v192 = vld [vmem:[%s1 + $0x590] sm:$0xff]
  %v193 = vld [vmem:[%s1 + $0x598] sm:$0xff]
  %v194 = vld [vmem:[%s1 + $0x5a0] sm:$0xff]
  %v195 = vld [vmem:[%s1 + $0x5a8] sm:$0xff]
  %v196 = vld [vmem:[%s1 + $0x5b0] sm:$0xff]
  %v197 = vld [vmem:[%s1 + $0x5b8] sm:$0xff]
  %v198 = vld [vmem:[%s1 + $0x5c0] sm:$0xff]
  %v199 = vld [vmem:[%s1 + $0x5c8] sm:$0xff]
  %v200 = vld [vmem:[%s1 + $0x5d0] sm:$0xff]
  %v201 = vld [vmem:[%s1 + $0x5d8] sm:$0xff]
  %v202 = vld [vmem:[%s1 + $0x5e0] sm:$0xff]
  %v203 = vld [vmem:[%s1 + $0x5e8] sm:$0xff]
  %v204 = vld [vmem:[%s1 + $0x5f0] sm:$0xff]
  %v205 = vld [vmem:[%s1 + $0x5f8] sm:$0xff]
  %v206 = vld [vmem:[%s1 + $0x600] sm:$0xff]
  %v207 = vld [vmem:[%s1 + $0x608] sm:$0xff]
  %v208 = vld [vmem:[%s1 + $0x610] sm:$0xff]
  %v209 = vld [vmem:[%s1 + $0x618] sm:$0xff]
  %v210 = vld [vmem:[%s1 + $0x620] sm:$0xff]
  %v211 = vld [vmem:[%s1 + $0x628] sm:$0xff]
  %v212 = vld [vmem:[%s1 + $0x630] sm:$0xff]
  %v213 = vld [vmem:[%s1 + $0x638] sm:$0xff]
  %v214 = vld [vmem:[%s1 + $0x640] sm:$0xff]
  %v215 = vld [vmem:[%s1 + $0x648] sm:$0xff]
  %v216 = vld [vmem:[%s1 + $0x650] sm:$0xff]
  %v217 = vld [vmem:[%s1 + $0x658] sm:$0xff]
  %v218 = vld [vmem:[%s1 + $0x660] sm:$0xff]
  %v219 = vld [vmem:[%s1 + $0x668] sm:$0xff]
  %v220 = vld [vmem:[%s1 + $0x670] sm:$0xff]
  %v221 = vld [vmem:[%s1 + $0x678] sm:$0xff]
  %v222 = vld [vmem:[%s1 + $0x680] sm:$0xff]
  %v223 = vld [vmem:[%s1 + $0x688] sm:$0xff]
  %v224 = vld [vmem:[%s1 + $0x690] sm:$0xff]
  %v225 = vld [vmem:[%s1 + $0x698] sm:$0xff]
  %v226 = vld [vmem:[%s1 + $0x6a0] sm:$0xff]
  %v227 = vld [vmem:[%s1 + $0x6a8] sm:$0xff]
  %v228 = vld [vmem:[%s1 + $0x6b0] sm:$0xff]
  %v229 = vld [vmem:[%s1 + $0x6b8] sm:$0xff]
  %v230 = vld [vmem:[%s1 + $0x6c0] sm:$0xff]
  %v231 = vld [vmem:[%s1 + $0x6c8] sm:$0xff]
  %v232 = vld [vmem:[%s1 + $0x6d0] sm:$0xff]
  %v233 = vld [vmem:[%s1 + $0x6d8] sm:$0xff]
  %v234 = vld [vmem:[%s1 + $0x6e0] sm:$0xff]
  %v235 = vld [vmem:[%s1 + $0x6e8] sm:$0xff]
  %v236 = vld [vmem:[%s1 + $0x6f0] sm:$0xff]
  %v237 = vld [vmem:[%s1 + $0x6f8] sm:$0xff]
  %v238 = vld [vmem:[%s1 + $0x700] sm:$0xff]
  %v239 = vld [vmem:[%s1 + $0x708] sm:$0xff]
  %v240 = vld [vmem:[%s1 + $0x710] sm:$0xff]
  %v241 = vld [vmem:[%s1 + $0x718] sm:$0xff]
  %v242 = vld [vmem:[%s1 + $0x720] sm:$0xff]
  %v243 = vld [vmem:[%s1 + $0x728] sm:$0xff]
  %v244 = vld [vmem:[%s1 + $0x730] sm:$0xff]
  %v245 = vld [vmem:[%s1 + $0x738] sm:$0xff]
  %v246 = vld [vmem:[%s1 + $0x740] sm:$0xff]
  %v247 = vld [vmem:[%s1 + $0x748] sm:$0xff]
  %v248 = vld [vmem:[%s1 + $0x750] sm:$0xff]
  %v249 = vld [vmem:[%s1 + $0x758] sm:$0xff]
  %v250 = vld [vmem:[%s1 + $0x760] sm:$0xff]
  %v251 = vld [vmem:[%s1 + $0x768] sm:$0xff]
  %v252 = vld [vmem:[%s1 + $0x770] sm:$0xff]
  %v253 = vld [vmem:[%s1 + $0x778] sm:$0xff]
  %v254 = vld [vmem:[%s1 + $0x780] sm:$0xff]
  %v255 = vld [vmem:[%s1 + $0x788] sm:$0xff]
  %v256 = vld [vmem:[%s1 + $0x790] sm:$0xff]
  %v257 = vld [vmem:[%s1 + $0x798] sm:$0xff]
  %v258 = vld [vmem:[%s1 + $0x7a0] sm:$0xff]
  %v259 = vld [vmem:[%s1 + $0x7a8] sm:$0xff]
  %v260 = vld [vmem:[%s1 + $0x7b0] sm:$0xff]
  %v261 = vld [vmem:[%s1 + $0x7b8] sm:$0xff]
  %v262 = vld [vmem:[%s1 + $0x7c0] sm:$0xff]
  %v263 = vld [vmem:[%s1 + $0x7c8] sm:$0xff]
  %v264 = vld [vmem:[%s1 + $0x7d0] sm:$0xff]
  %v265 = vld [vmem:[%s1 + $0x7d8] sm:$0xff]
  %v266 = vld [vmem:[%s1 + $0x7e0] sm:$0xff]
  %v267 = vld [vmem:[%s1 + $0x7e8] sm:$0xff]
  %v268 = vld [vmem:[%s1 + $0x7f0] sm:$0xff]
  %v269 = vld [vmem:[%s1 + $0x7f8] sm:$0xff]
  %v270 = vld [vmem:[%s1 + $0x800] sm:$0xff]
  %v271 = vld [vmem:[%s1 + $0x808] sm:$0xff]
  %v272 = vld [vmem:[%s1 + $0x810] sm:$0xff]
  %v273 = vld [vmem:[%s1 + $0x818] sm:$0xff]
  %v274 = vld [vmem:[%s1 + $0x820] sm:$0xff]
  %v275 = vld [vmem:[%s1 + $0x828] sm:$0xff]
  %v276 = vld [vmem:[%s1 + $0x830] sm:$0xff]
  %v277 = vld [vmem:[%s1 + $0x838] sm:$0xff]
  %v278 = vld [vmem:[%s1 + $0x840] sm:$0xff]
  %v279 = vld [vmem:[%s1 + $0x848] sm:$0xff]
  %v280 = vld [vmem:[%s1 + $0x850] sm:$0xff]
  %v281 = vld [vmem:[%s1 + $0x858] sm:$0xff]
  %v282 = vld [vmem:[%s1 + $0x860] sm:$0xff]
  %v283 = vld [vmem:[%s1 + $0x868] sm:$0xff]
  %v284 = vld [vmem:[%s1 + $0x870] sm:$0xff]
  %v285 = vld [vmem:[%s1 + $0x878] sm:$0xff]
  %v286 = vld [vmem:[%s1 + $0x880] sm:$0xff]
  %v287 = vld [vmem:[%s1 + $0x888] sm:$0xff]
  %v288 = vld [vmem:[%s1 + $0x890] sm:$0xff]
  %v289 = vld [vmem:[%s1 + $0x898] sm:$0xff]
  %v290 = vld [vmem:[%s1 + $0x8a0] sm:$0xff]
  %v291 = vld [vmem:[%s1 + $0x8a8] sm:$0xff]
  %v292 = vld [vmem:[%s1 + $0x8b0] sm:$0xff]
  %v293 = vld [vmem:[%s1 + $0x8b8] sm:$0xff]
  %v294 = vld [vmem:[%s1 + $0x8c0] sm:$0xff]
  %v295 = vld [vmem:[%s1 + $0x8c8] sm:$0xff]
  %v296 = vld [vmem:[%s1 + $0x8d0] sm:$0xff]
  %v297 = vld [vmem:[%s1 + $0x8d8] sm:$0xff]
  %v298 = vld [vmem:[%s1 + $0x8e0] sm:$0xff]
  %v299 = vld [vmem:[%s1 + $0x8e8] sm:$0xff]
  %v300 = vld [vmem:[%s1 + $0x8f0] sm:$0xff]
  %v301 = vld [vmem:[%s1 + $0x8f8] sm:$0xff]
  %v302 = vld [vmem:[%s0] sm:$0xff]
  %v303 = vld [vmem:[%s0 + $0x8] sm:$0xff]
  %v304 = vld [vmem:[%s0 + $0x10] sm:$0xff]
  %v305 = vld [vmem:[%s0 + $0x18] sm:$0xff]
  %v306 = vld [vmem:[%s0 + $0x20] sm:$0xff]
  %v307 = vld [vmem:[%s0 + $0x28] sm:$0xff]
  %v308 = vld [vmem:[%s0 + $0x30] sm:$0xff]
  %v309 = vld [vmem:[%s0 + $0x38] sm:$0xff]
  %v310 = vld [vmem:[%s0 + $0x40] sm:$0xff]
  %v311 = vld [vmem:[%s0 + $0x48] sm:$0xff]
  %v312 = vld [vmem:[%s0 + $0x50] sm:$0xff]
  %v313 = vld [vmem:[%s0 + $0x58] sm:$0xff]
  %v314 = vld [vmem:[%s0 + $0x60] sm:$0xff]
  %v315 = vld [vmem:[%s0 + $0x68] sm:$0xff]
  %v316 = vld [vmem:[%s0 + $0x70] sm:$0xff]
  %v317 = vld [vmem:[%s0 + $0x78] sm:$0xff]
  %v318 = vld [vmem:[%s0 + $0x80] sm:$0xff]
  %v319 = vld [vmem:[%s0 + $0x88] sm:$0xff]
  %v320 = vld [vmem:[%s0 + $0x90] sm:$0xff]
  %v321 = vld [vmem:[%s0 + $0x98] sm:$0xff]
  %v322 = vld [vmem:[%s0 + $0xa0] sm:$0xff]
  %v323 = vld [vmem:[%s0 + $0xa8] sm:$0xff]
  %v324 = vld [vmem:[%s0 + $0xb0] sm:$0xff]
  %v325 = vld [vmem:[%s0 + $0xb8] sm:$0xff]
  %v326 = vld [vmem:[%s0 + $0xc0] sm:$0xff]
  %v327 = vld [vmem:[%s0 + $0xc8] sm:$0xff]
  %v328 = vld [vmem:[%s0 + $0xd0] sm:$0xff]
  %v329 = vld [vmem:[%s0 + $0xd8] sm:$0xff]
  %v330 = vld [vmem:[%s0 + $0xe0] sm:$0xff]
  %v331 = vld [vmem:[%s0 + $0xe8] sm:$0xff]
  %v332 = vld [vmem:[%s0 + $0xf0] sm:$0xff]
  %v333 = vld [vmem:[%s0 + $0xf8] sm:$0xff]
  %v334 = vld [vmem:[%s0 + $0x100] sm:$0xff]
  %v335 = vld [vmem:[%s0 + $0x108] sm:$0xff]
  %v336 = vld [vmem:[%s0 + $0x110] sm:$0xff]
  %v337 = vld [vmem:[%s0 + $0x118] sm:$0xff]
  %v338 = vld [vmem:[%s2] sm:$0x3]
  %v340 = vlaneseq
  %v341 = vshrl.u32 %v340, 7
  %v342 = vsub.s32 0, %v341
  %v343 = vrot.slane %v338, %v342
  %v344 = vlaneseq
  %v345 = vshrl.u32 %v344, 7
  %v346 = vsub.s32 1, %v345
  %v347 = vrot.slane %v338, %v346
  %v386 = vunpack.c.l.b16 %v302
  %v387 = vunpack.c.h.b16 %v302
  %v388 = vunpack.c.l.b16 %v303
  %v389 = vunpack.c.h.b16 %v303
  %v390 = vunpack.c.l.b16 %v304
  %v391 = vunpack.c.h.b16 %v304
  %v392 = vunpack.c.l.b16 %v305
  %v393 = vunpack.c.h.b16 %v305
  %v394 = vunpack.c.l.b16 %v306
  %v395 = vunpack.c.h.b16 %v306
  %v396 = vunpack.c.l.b16 %v307
  %v397 = vunpack.c.h.b16 %v307
  %v398 = vunpack.c.l.b16 %v308
  %v399 = vunpack.c.h.b16 %v308
  %v400 = vunpack.c.l.b16 %v309
  %v401 = vunpack.c.h.b16 %v309
  %v402 = vunpack.c.l.b16 %v310
  %v403 = vunpack.c.h.b16 %v310
  %v404 = vunpack.c.l.b16 %v311
  %v405 = vunpack.c.h.b16 %v311
  %v406 = vunpack.c.l.b16 %v312
  %v407 = vunpack.c.h.b16 %v312
  %v408 = vunpack.c.l.b16 %v313
  %v409 = vunpack.c.h.b16 %v313
  %v410 = vunpack.c.l.b16 %v314
  %v411 = vunpack.c.h.b16 %v314
  %v412 = vunpack.c.l.b16 %v315
  %v413 = vunpack.c.h.b16 %v315
  %v414 = vunpack.c.l.b16 %v316
  %v415 = vunpack.c.h.b16 %v316
  %v416 = vunpack.c.l.b16 %v317
  %v417 = vunpack.c.h.b16 %v317
  %v418 = vunpack.c.l.b16 %v318
  %v419 = vunpack.c.h.b16 %v318
  %v420 = vunpack.c.l.b16 %v319
  %v421 = vunpack.c.h.b16 %v319
  %v422 = vunpack.c.l.b16 %v320
  %v423 = vunpack.c.h.b16 %v320
  %v424 = vunpack.c.l.b16 %v321
  %v425 = vunpack.c.h.b16 %v321
  %v426 = vunpack.c.l.b16 %v322
  %v427 = vunpack.c.h.b16 %v322
  %v428 = vunpack.c.l.b16 %v323
  %v429 = vunpack.c.h.b16 %v323
  %v430 = vunpack.c.l.b16 %v324
  %v431 = vunpack.c.h.b16 %v324
  %v432 = vunpack.c.l.b16 %v325
  %v433 = vunpack.c.h.b16 %v325
  %v434 = vunpack.c.l.b16 %v326
  %v435 = vunpack.c.h.b16 %v326
  %v436 = vunpack.c.l.b16 %v327
  %v437 = vunpack.c.h.b16 %v327
  %v438 = vunpack.c.l.b16 %v328
  %v439 = vunpack.c.h.b16 %v328
  %v440 = vunpack.c.l.b16 %v329
  %v441 = vunpack.c.h.b16 %v329
  %v442 = vunpack.c.l.b16 %v330
  %v443 = vunpack.c.h.b16 %v330
  %v444 = vunpack.c.l.b16 %v331
  %v445 = vunpack.c.h.b16 %v331
  %v446 = vunpack.c.l.b16 %v332
  %v447 = vunpack.c.h.b16 %v332
  %v448 = vunpack.c.l.b16 %v333
  %v449 = vunpack.c.h.b16 %v333
  %v450 = vunpack.c.l.b16 %v334
  %v451 = vunpack.c.h.b16 %v334
  %v452 = vunpack.c.l.b16 %v335
  %v453 = vunpack.c.h.b16 %v335
  %v454 = vunpack.c.l.b16 %v336
  %v455 = vunpack.c.h.b16 %v336
  %v456 = vunpack.c.l.b16 %v337
  %v457 = vunpack.c.h.b16 %v337
  %v458 = vpack.c.b16 %v404, %v386
  %v459 = vpack.c.b16 %v405, %v387
  %v460 = vpack.c.b16 %v406, %v388
  %v461 = vpack.c.b16 %v407, %v389
  %v462 = vpack.c.b16 %v408, %v390
  %v463 = vpack.c.b16 %v409, %v391
  %v464 = vpack.c.b16 %v410, %v392
  %v465 = vpack.c.b16 %v411, %v393
  %v466 = vpack.c.b16 %v412, %v394
  %v467 = vpack.c.b16 %v413, %v395
  %v468 = vpack.c.b16 %v414, %v396
  %v469 = vpack.c.b16 %v415, %v397
  %v470 = vpack.c.b16 %v416, %v398
  %v471 = vpack.c.b16 %v417, %v399
  %v472 = vpack.c.b16 %v418, %v400
  %v473 = vpack.c.b16 %v419, %v401
  %v474 = vpack.c.b16 %v420, %v402
  %v475 = vpack.c.b16 %v421, %v403
  %v476 = vpack.c.b16 %v440, %v422
  %v477 = vpack.c.b16 %v441, %v423
  %v478 = vpack.c.b16 %v442, %v424
  %v479 = vpack.c.b16 %v443, %v425
  %v480 = vpack.c.b16 %v444, %v426
  %v481 = vpack.c.b16 %v445, %v427
  %v482 = vpack.c.b16 %v446, %v428
  %v483 = vpack.c.b16 %v447, %v429
  %v484 = vpack.c.b16 %v448, %v430
  %v485 = vpack.c.b16 %v449, %v431
  %v486 = vpack.c.b16 %v450, %v432
  %v487 = vpack.c.b16 %v451, %v433
  %v488 = vpack.c.b16 %v452, %v434
  %v489 = vpack.c.b16 %v453, %v435
  %v490 = vpack.c.b16 %v454, %v436
  %v491 = vpack.c.b16 %v455, %v437
  %v492 = vpack.c.b16 %v456, %v438
  %v493 = vpack.c.b16 %v457, %v439
  %v818 = vunpack.c.l.b16 %v14
  %v819 = vunpack.c.h.b16 %v14
  %v820 = vunpack.c.l.b16 %v15
  %v821 = vunpack.c.h.b16 %v15
  %v822 = vunpack.c.l.b16 %v16
  %v823 = vunpack.c.h.b16 %v16
  %v824 = vunpack.c.l.b16 %v17
  %v825 = vunpack.c.h.b16 %v17
  %v826 = vunpack.c.l.b16 %v18
  %v827 = vunpack.c.h.b16 %v18
  %v828 = vunpack.c.l.b16 %v19
  %v829 = vunpack.c.h.b16 %v19
  %v830 = vunpack.c.l.b16 %v20
  %v831 = vunpack.c.h.b16 %v20
  %v832 = vunpack.c.l.b16 %v21
  %v833 = vunpack.c.h.b16 %v21
  %v834 = vunpack.c.l.b16 %v22
  %v835 = vunpack.c.h.b16 %v22
  %v836 = vunpack.c.l.b16 %v23
  %v837 = vunpack.c.h.b16 %v23
  %v838 = vunpack.c.l.b16 %v24
  %v839 = vunpack.c.h.b16 %v24
  %v840 = vunpack.c.l.b16 %v25
  %v841 = vunpack.c.h.b16 %v25
  %v842 = vunpack.c.l.b16 %v26
  %v843 = vunpack.c.h.b16 %v26
  %v844 = vunpack.c.l.b16 %v27
  %v845 = vunpack.c.h.b16 %v27
  %v846 = vunpack.c.l.b16 %v28
  %v847 = vunpack.c.h.b16 %v28
  %v848 = vunpack.c.l.b16 %v29
  %v849 = vunpack.c.h.b16 %v29
  %v850 = vunpack.c.l.b16 %v30
  %v851 = vunpack.c.h.b16 %v30
  %v852 = vunpack.c.l.b16 %v31
  %v853 = vunpack.c.h.b16 %v31
  %v854 = vunpack.c.l.b16 %v32
  %v855 = vunpack.c.h.b16 %v32
  %v856 = vunpack.c.l.b16 %v33
  %v857 = vunpack.c.h.b16 %v33
  %v858 = vunpack.c.l.b16 %v34
  %v859 = vunpack.c.h.b16 %v34
  %v860 = vunpack.c.l.b16 %v35
  %v861 = vunpack.c.h.b16 %v35
  %v862 = vunpack.c.l.b16 %v36
  %v863 = vunpack.c.h.b16 %v36
  %v864 = vunpack.c.l.b16 %v37
  %v865 = vunpack.c.h.b16 %v37
  %v866 = vunpack.c.l.b16 %v38
  %v867 = vunpack.c.h.b16 %v38
  %v868 = vunpack.c.l.b16 %v39
  %v869 = vunpack.c.h.b16 %v39
  %v870 = vunpack.c.l.b16 %v40
  %v871 = vunpack.c.h.b16 %v40
  %v872 = vunpack.c.l.b16 %v41
  %v873 = vunpack.c.h.b16 %v41
  %v874 = vunpack.c.l.b16 %v42
  %v875 = vunpack.c.h.b16 %v42
  %v876 = vunpack.c.l.b16 %v43
  %v877 = vunpack.c.h.b16 %v43
  %v878 = vunpack.c.l.b16 %v44
  %v879 = vunpack.c.h.b16 %v44
  %v880 = vunpack.c.l.b16 %v45
  %v881 = vunpack.c.h.b16 %v45
  %v882 = vunpack.c.l.b16 %v46
  %v883 = vunpack.c.h.b16 %v46
  %v884 = vunpack.c.l.b16 %v47
  %v885 = vunpack.c.h.b16 %v47
  %v886 = vunpack.c.l.b16 %v48
  %v887 = vunpack.c.h.b16 %v48
  %v888 = vunpack.c.l.b16 %v49
  %v889 = vunpack.c.h.b16 %v49
  %v890 = vunpack.c.l.b16 %v50
  %v891 = vunpack.c.h.b16 %v50
  %v892 = vunpack.c.l.b16 %v51
  %v893 = vunpack.c.h.b16 %v51
  %v894 = vunpack.c.l.b16 %v52
  %v895 = vunpack.c.h.b16 %v52
  %v896 = vunpack.c.l.b16 %v53
  %v897 = vunpack.c.h.b16 %v53
  %v898 = vunpack.c.l.b16 %v54
  %v899 = vunpack.c.h.b16 %v54
  %v900 = vunpack.c.l.b16 %v55
  %v901 = vunpack.c.h.b16 %v55
  %v902 = vunpack.c.l.b16 %v56
  %v903 = vunpack.c.h.b16 %v56
  %v904 = vunpack.c.l.b16 %v57
  %v905 = vunpack.c.h.b16 %v57
  %v906 = vunpack.c.l.b16 %v58
  %v907 = vunpack.c.h.b16 %v58
  %v908 = vunpack.c.l.b16 %v59
  %v909 = vunpack.c.h.b16 %v59
  %v910 = vunpack.c.l.b16 %v60
  %v911 = vunpack.c.h.b16 %v60
  %v912 = vunpack.c.l.b16 %v61
  %v913 = vunpack.c.h.b16 %v61
  %v914 = vunpack.c.l.b16 %v62
  %v915 = vunpack.c.h.b16 %v62
  %v916 = vunpack.c.l.b16 %v63
  %v917 = vunpack.c.h.b16 %v63
  %v918 = vunpack.c.l.b16 %v64
  %v919 = vunpack.c.h.b16 %v64
  %v920 = vunpack.c.l.b16 %v65
  %v921 = vunpack.c.h.b16 %v65
  %v922 = vunpack.c.l.b16 %v66
  %v923 = vunpack.c.h.b16 %v66
  %v924 = vunpack.c.l.b16 %v67
  %v925 = vunpack.c.h.b16 %v67
  %v926 = vunpack.c.l.b16 %v68
  %v927 = vunpack.c.h.b16 %v68
  %v928 = vunpack.c.l.b16 %v69
  %v929 = vunpack.c.h.b16 %v69
  %v930 = vunpack.c.l.b16 %v70
  %v931 = vunpack.c.h.b16 %v70
  %v932 = vunpack.c.l.b16 %v71
  %v933 = vunpack.c.h.b16 %v71
  %v934 = vunpack.c.l.b16 %v72
  %v935 = vunpack.c.h.b16 %v72
  %v936 = vunpack.c.l.b16 %v73
  %v937 = vunpack.c.h.b16 %v73
  %v938 = vunpack.c.l.b16 %v74
  %v939 = vunpack.c.h.b16 %v74
  %v940 = vunpack.c.l.b16 %v75
  %v941 = vunpack.c.h.b16 %v75
  %v942 = vunpack.c.l.b16 %v76
  %v943 = vunpack.c.h.b16 %v76
  %v944 = vunpack.c.l.b16 %v77
  %v945 = vunpack.c.h.b16 %v77
  %v946 = vunpack.c.l.b16 %v78
  %v947 = vunpack.c.h.b16 %v78
  %v948 = vunpack.c.l.b16 %v79
  %v949 = vunpack.c.h.b16 %v79
  %v950 = vunpack.c.l.b16 %v80
  %v951 = vunpack.c.h.b16 %v80
  %v952 = vunpack.c.l.b16 %v81
  %v953 = vunpack.c.h.b16 %v81
  %v954 = vunpack.c.l.b16 %v82
  %v955 = vunpack.c.h.b16 %v82
  %v956 = vunpack.c.l.b16 %v83
  %v957 = vunpack.c.h.b16 %v83
  %v958 = vunpack.c.l.b16 %v84
  %v959 = vunpack.c.h.b16 %v84
  %v960 = vunpack.c.l.b16 %v85
  %v961 = vunpack.c.h.b16 %v85
  %v962 = vunpack.c.l.b16 %v86
  %v963 = vunpack.c.h.b16 %v86
  %v964 = vunpack.c.l.b16 %v87
  %v965 = vunpack.c.h.b16 %v87
  %v966 = vunpack.c.l.b16 %v88
  %v967 = vunpack.c.h.b16 %v88
  %v968 = vunpack.c.l.b16 %v89
  %v969 = vunpack.c.h.b16 %v89
  %v970 = vunpack.c.l.b16 %v90
  %v971 = vunpack.c.h.b16 %v90
  %v972 = vunpack.c.l.b16 %v91
  %v973 = vunpack.c.h.b16 %v91
  %v974 = vunpack.c.l.b16 %v92
  %v975 = vunpack.c.h.b16 %v92
  %v976 = vunpack.c.l.b16 %v93
  %v977 = vunpack.c.h.b16 %v93
  %v978 = vunpack.c.l.b16 %v94
  %v979 = vunpack.c.h.b16 %v94
  %v980 = vunpack.c.l.b16 %v95
  %v981 = vunpack.c.h.b16 %v95
  %v982 = vunpack.c.l.b16 %v96
  %v983 = vunpack.c.h.b16 %v96
  %v984 = vunpack.c.l.b16 %v97
  %v985 = vunpack.c.h.b16 %v97
  %v986 = vunpack.c.l.b16 %v98
  %v987 = vunpack.c.h.b16 %v98
  %v988 = vunpack.c.l.b16 %v99
  %v989 = vunpack.c.h.b16 %v99
  %v990 = vunpack.c.l.b16 %v100
  %v991 = vunpack.c.h.b16 %v100
  %v992 = vunpack.c.l.b16 %v101
  %v993 = vunpack.c.h.b16 %v101
  %v994 = vunpack.c.l.b16 %v102
  %v995 = vunpack.c.h.b16 %v102
  %v996 = vunpack.c.l.b16 %v103
  %v997 = vunpack.c.h.b16 %v103
  %v998 = vunpack.c.l.b16 %v104
  %v999 = vunpack.c.h.b16 %v104
  %v1000 = vunpack.c.l.b16 %v105
  %v1001 = vunpack.c.h.b16 %v105
  %v1002 = vunpack.c.l.b16 %v106
  %v1003 = vunpack.c.h.b16 %v106
  %v1004 = vunpack.c.l.b16 %v107
  %v1005 = vunpack.c.h.b16 %v107
  %v1006 = vunpack.c.l.b16 %v108
  %v1007 = vunpack.c.h.b16 %v108
  %v1008 = vunpack.c.l.b16 %v109
  %v1009 = vunpack.c.h.b16 %v109
  %v1010 = vunpack.c.l.b16 %v110
  %v1011 = vunpack.c.h.b16 %v110
  %v1012 = vunpack.c.l.b16 %v111
  %v1013 = vunpack.c.h.b16 %v111
  %v1014 = vunpack.c.l.b16 %v112
  %v1015 = vunpack.c.h.b16 %v112
  %v1016 = vunpack.c.l.b16 %v113
  %v1017 = vunpack.c.h.b16 %v113
  %v1018 = vunpack.c.l.b16 %v114
  %v1019 = vunpack.c.h.b16 %v114
  %v1020 = vunpack.c.l.b16 %v115
  %v1021 = vunpack.c.h.b16 %v115
  %v1022 = vunpack.c.l.b16 %v116
  %v1023 = vunpack.c.h.b16 %v116
  %v1024 = vunpack.c.l.b16 %v117
  %v1025 = vunpack.c.h.b16 %v117
  %v1026 = vunpack.c.l.b16 %v118
  %v1027 = vunpack.c.h.b16 %v118
  %v1028 = vunpack.c.l.b16 %v119
  %v1029 = vunpack.c.h.b16 %v119
  %v1030 = vunpack.c.l.b16 %v120
  %v1031 = vunpack.c.h.b16 %v120
  %v1032 = vunpack.c.l.b16 %v121
  %v1033 = vunpack.c.h.b16 %v121
  %v1034 = vunpack.c.l.b16 %v122
  %v1035 = vunpack.c.h.b16 %v122
  %v1036 = vunpack.c.l.b16 %v123
  %v1037 = vunpack.c.h.b16 %v123
  %v1038 = vunpack.c.l.b16 %v124
  %v1039 = vunpack.c.h.b16 %v124
  %v1040 = vunpack.c.l.b16 %v125
  %v1041 = vunpack.c.h.b16 %v125
  %v1042 = vunpack.c.l.b16 %v126
  %v1043 = vunpack.c.h.b16 %v126
  %v1044 = vunpack.c.l.b16 %v127
  %v1045 = vunpack.c.h.b16 %v127
  %v1046 = vunpack.c.l.b16 %v128
  %v1047 = vunpack.c.h.b16 %v128
  %v1048 = vunpack.c.l.b16 %v129
  %v1049 = vunpack.c.h.b16 %v129
  %v1050 = vunpack.c.l.b16 %v130
  %v1051 = vunpack.c.h.b16 %v130
  %v1052 = vunpack.c.l.b16 %v131
  %v1053 = vunpack.c.h.b16 %v131
  %v1054 = vunpack.c.l.b16 %v132
  %v1055 = vunpack.c.h.b16 %v132
  %v1056 = vunpack.c.l.b16 %v133
  %v1057 = vunpack.c.h.b16 %v133
  %v1058 = vunpack.c.l.b16 %v134
  %v1059 = vunpack.c.h.b16 %v134
  %v1060 = vunpack.c.l.b16 %v135
  %v1061 = vunpack.c.h.b16 %v135
  %v1062 = vunpack.c.l.b16 %v136
  %v1063 = vunpack.c.h.b16 %v136
  %v1064 = vunpack.c.l.b16 %v137
  %v1065 = vunpack.c.h.b16 %v137
  %v1066 = vunpack.c.l.b16 %v138
  %v1067 = vunpack.c.h.b16 %v138
  %v1068 = vunpack.c.l.b16 %v139
  %v1069 = vunpack.c.h.b16 %v139
  %v1070 = vunpack.c.l.b16 %v140
  %v1071 = vunpack.c.h.b16 %v140
  %v1072 = vunpack.c.l.b16 %v141
  %v1073 = vunpack.c.h.b16 %v141
  %v1074 = vunpack.c.l.b16 %v142
  %v1075 = vunpack.c.h.b16 %v142
  %v1076 = vunpack.c.l.b16 %v143
  %v1077 = vunpack.c.h.b16 %v143
  %v1078 = vunpack.c.l.b16 %v144
  %v1079 = vunpack.c.h.b16 %v144
  %v1080 = vunpack.c.l.b16 %v145
  %v1081 = vunpack.c.h.b16 %v145
  %v1082 = vunpack.c.l.b16 %v146
  %v1083 = vunpack.c.h.b16 %v146
  %v1084 = vunpack.c.l.b16 %v147
  %v1085 = vunpack.c.h.b16 %v147
  %v1086 = vunpack.c.l.b16 %v148
  %v1087 = vunpack.c.h.b16 %v148
  %v1088 = vunpack.c.l.b16 %v149
  %v1089 = vunpack.c.h.b16 %v149
  %v1090 = vunpack.c.l.b16 %v150
  %v1091 = vunpack.c.h.b16 %v150
  %v1092 = vunpack.c.l.b16 %v151
  %v1093 = vunpack.c.h.b16 %v151
  %v1094 = vunpack.c.l.b16 %v152
  %v1095 = vunpack.c.h.b16 %v152
  %v1096 = vunpack.c.l.b16 %v153
  %v1097 = vunpack.c.h.b16 %v153
  %v1098 = vunpack.c.l.b16 %v154
  %v1099 = vunpack.c.h.b16 %v154
  %v1100 = vunpack.c.l.b16 %v155
  %v1101 = vunpack.c.h.b16 %v155
  %v1102 = vunpack.c.l.b16 %v156
  %v1103 = vunpack.c.h.b16 %v156
  %v1104 = vunpack.c.l.b16 %v157
  %v1105 = vunpack.c.h.b16 %v157
  %v1106 = vunpack.c.l.b16 %v158
  %v1107 = vunpack.c.h.b16 %v158
  %v1108 = vunpack.c.l.b16 %v159
  %v1109 = vunpack.c.h.b16 %v159
  %v1110 = vunpack.c.l.b16 %v160
  %v1111 = vunpack.c.h.b16 %v160
  %v1112 = vunpack.c.l.b16 %v161
  %v1113 = vunpack.c.h.b16 %v161
  %v1114 = vunpack.c.l.b16 %v162
  %v1115 = vunpack.c.h.b16 %v162
  %v1116 = vunpack.c.l.b16 %v163
  %v1117 = vunpack.c.h.b16 %v163
  %v1118 = vunpack.c.l.b16 %v164
  %v1119 = vunpack.c.h.b16 %v164
  %v1120 = vunpack.c.l.b16 %v165
  %v1121 = vunpack.c.h.b16 %v165
  %v1122 = vunpack.c.l.b16 %v166
  %v1123 = vunpack.c.h.b16 %v166
  %v1124 = vunpack.c.l.b16 %v167
  %v1125 = vunpack.c.h.b16 %v167
  %v1126 = vunpack.c.l.b16 %v168
  %v1127 = vunpack.c.h.b16 %v168
  %v1128 = vunpack.c.l.b16 %v169
  %v1129 = vunpack.c.h.b16 %v169
  %v1130 = vunpack.c.l.b16 %v170
  %v1131 = vunpack.c.h.b16 %v170
  %v1132 = vunpack.c.l.b16 %v171
  %v1133 = vunpack.c.h.b16 %v171
  %v1134 = vunpack.c.l.b16 %v172
  %v1135 = vunpack.c.h.b16 %v172
  %v1136 = vunpack.c.l.b16 %v173
  %v1137 = vunpack.c.h.b16 %v173
  %v1138 = vunpack.c.l.b16 %v174
  %v1139 = vunpack.c.h.b16 %v174
  %v1140 = vunpack.c.l.b16 %v175
  %v1141 = vunpack.c.h.b16 %v175
  %v1142 = vunpack.c.l.b16 %v176
  %v1143 = vunpack.c.h.b16 %v176
  %v1144 = vunpack.c.l.b16 %v177
  %v1145 = vunpack.c.h.b16 %v177
  %v1146 = vunpack.c.l.b16 %v178
  %v1147 = vunpack.c.h.b16 %v178
  %v1148 = vunpack.c.l.b16 %v179
  %v1149 = vunpack.c.h.b16 %v179
  %v1150 = vunpack.c.l.b16 %v180
  %v1151 = vunpack.c.h.b16 %v180
  %v1152 = vunpack.c.l.b16 %v181
  %v1153 = vunpack.c.h.b16 %v181
  %v1154 = vunpack.c.l.b16 %v182
  %v1155 = vunpack.c.h.b16 %v182
  %v1156 = vunpack.c.l.b16 %v183
  %v1157 = vunpack.c.h.b16 %v183
  %v1158 = vunpack.c.l.b16 %v184
  %v1159 = vunpack.c.h.b16 %v184
  %v1160 = vunpack.c.l.b16 %v185
  %v1161 = vunpack.c.h.b16 %v185
  %v1162 = vunpack.c.l.b16 %v186
  %v1163 = vunpack.c.h.b16 %v186
  %v1164 = vunpack.c.l.b16 %v187
  %v1165 = vunpack.c.h.b16 %v187
  %v1166 = vunpack.c.l.b16 %v188
  %v1167 = vunpack.c.h.b16 %v188
  %v1168 = vunpack.c.l.b16 %v189
  %v1169 = vunpack.c.h.b16 %v189
  %v1170 = vunpack.c.l.b16 %v190
  %v1171 = vunpack.c.h.b16 %v190
  %v1172 = vunpack.c.l.b16 %v191
  %v1173 = vunpack.c.h.b16 %v191
  %v1174 = vunpack.c.l.b16 %v192
  %v1175 = vunpack.c.h.b16 %v192
  %v1176 = vunpack.c.l.b16 %v193
  %v1177 = vunpack.c.h.b16 %v193
  %v1178 = vunpack.c.l.b16 %v194
  %v1179 = vunpack.c.h.b16 %v194
  %v1180 = vunpack.c.l.b16 %v195
  %v1181 = vunpack.c.h.b16 %v195
  %v1182 = vunpack.c.l.b16 %v196
  %v1183 = vunpack.c.h.b16 %v196
  %v1184 = vunpack.c.l.b16 %v197
  %v1185 = vunpack.c.h.b16 %v197
  %v1186 = vunpack.c.l.b16 %v198
  %v1187 = vunpack.c.h.b16 %v198
  %v1188 = vunpack.c.l.b16 %v199
  %v1189 = vunpack.c.h.b16 %v199
  %v1190 = vunpack.c.l.b16 %v200
  %v1191 = vunpack.c.h.b16 %v200
  %v1192 = vunpack.c.l.b16 %v201
  %v1193 = vunpack.c.h.b16 %v201
  %v1194 = vunpack.c.l.b16 %v202
  %v1195 = vunpack.c.h.b16 %v202
  %v1196 = vunpack.c.l.b16 %v203
  %v1197 = vunpack.c.h.b16 %v203
  %v1198 = vunpack.c.l.b16 %v204
  %v1199 = vunpack.c.h.b16 %v204
  %v1200 = vunpack.c.l.b16 %v205
  %v1201 = vunpack.c.h.b16 %v205
  %v1202 = vunpack.c.l.b16 %v206
  %v1203 = vunpack.c.h.b16 %v206
  %v1204 = vunpack.c.l.b16 %v207
  %v1205 = vunpack.c.h.b16 %v207
  %v1206 = vunpack.c.l.b16 %v208
  %v1207 = vunpack.c.h.b16 %v208
  %v1208 = vunpack.c.l.b16 %v209
  %v1209 = vunpack.c.h.b16 %v209
  %v1210 = vunpack.c.l.b16 %v210
  %v1211 = vunpack.c.h.b16 %v210
  %v1212 = vunpack.c.l.b16 %v211
  %v1213 = vunpack.c.h.b16 %v211
  %v1214 = vunpack.c.l.b16 %v212
  %v1215 = vunpack.c.h.b16 %v212
  %v1216 = vunpack.c.l.b16 %v213
  %v1217 = vunpack.c.h.b16 %v213
  %v1218 = vunpack.c.l.b16 %v214
  %v1219 = vunpack.c.h.b16 %v214
  %v1220 = vunpack.c.l.b16 %v215
  %v1221 = vunpack.c.h.b16 %v215
  %v1222 = vunpack.c.l.b16 %v216
  %v1223 = vunpack.c.h.b16 %v216
  %v1224 = vunpack.c.l.b16 %v217
  %v1225 = vunpack.c.h.b16 %v217
  %v1226 = vunpack.c.l.b16 %v218
  %v1227 = vunpack.c.h.b16 %v218
  %v1228 = vunpack.c.l.b16 %v219
  %v1229 = vunpack.c.h.b16 %v219
  %v1230 = vunpack.c.l.b16 %v220
  %v1231 = vunpack.c.h.b16 %v220
  %v1232 = vunpack.c.l.b16 %v221
  %v1233 = vunpack.c.h.b16 %v221
  %v1234 = vunpack.c.l.b16 %v222
  %v1235 = vunpack.c.h.b16 %v222
  %v1236 = vunpack.c.l.b16 %v223
  %v1237 = vunpack.c.h.b16 %v223
  %v1238 = vunpack.c.l.b16 %v224
  %v1239 = vunpack.c.h.b16 %v224
  %v1240 = vunpack.c.l.b16 %v225
  %v1241 = vunpack.c.h.b16 %v225
  %v1242 = vunpack.c.l.b16 %v226
  %v1243 = vunpack.c.h.b16 %v226
  %v1244 = vunpack.c.l.b16 %v227
  %v1245 = vunpack.c.h.b16 %v227
  %v1246 = vunpack.c.l.b16 %v228
  %v1247 = vunpack.c.h.b16 %v228
  %v1248 = vunpack.c.l.b16 %v229
  %v1249 = vunpack.c.h.b16 %v229
  %v1250 = vunpack.c.l.b16 %v230
  %v1251 = vunpack.c.h.b16 %v230
  %v1252 = vunpack.c.l.b16 %v231
  %v1253 = vunpack.c.h.b16 %v231
  %v1254 = vunpack.c.l.b16 %v232
  %v1255 = vunpack.c.h.b16 %v232
  %v1256 = vunpack.c.l.b16 %v233
  %v1257 = vunpack.c.h.b16 %v233
  %v1258 = vunpack.c.l.b16 %v234
  %v1259 = vunpack.c.h.b16 %v234
  %v1260 = vunpack.c.l.b16 %v235
  %v1261 = vunpack.c.h.b16 %v235
  %v1262 = vunpack.c.l.b16 %v236
  %v1263 = vunpack.c.h.b16 %v236
  %v1264 = vunpack.c.l.b16 %v237
  %v1265 = vunpack.c.h.b16 %v237
  %v1266 = vunpack.c.l.b16 %v238
  %v1267 = vunpack.c.h.b16 %v238
  %v1268 = vunpack.c.l.b16 %v239
  %v1269 = vunpack.c.h.b16 %v239
  %v1270 = vunpack.c.l.b16 %v240
  %v1271 = vunpack.c.h.b16 %v240
  %v1272 = vunpack.c.l.b16 %v241
  %v1273 = vunpack.c.h.b16 %v241
  %v1274 = vunpack.c.l.b16 %v242
  %v1275 = vunpack.c.h.b16 %v242
  %v1276 = vunpack.c.l.b16 %v243
  %v1277 = vunpack.c.h.b16 %v243
  %v1278 = vunpack.c.l.b16 %v244
  %v1279 = vunpack.c.h.b16 %v244
  %v1280 = vunpack.c.l.b16 %v245
  %v1281 = vunpack.c.h.b16 %v245
  %v1282 = vunpack.c.l.b16 %v246
  %v1283 = vunpack.c.h.b16 %v246
  %v1284 = vunpack.c.l.b16 %v247
  %v1285 = vunpack.c.h.b16 %v247
  %v1286 = vunpack.c.l.b16 %v248
  %v1287 = vunpack.c.h.b16 %v248
  %v1288 = vunpack.c.l.b16 %v249
  %v1289 = vunpack.c.h.b16 %v249
  %v1290 = vunpack.c.l.b16 %v250
  %v1291 = vunpack.c.h.b16 %v250
  %v1292 = vunpack.c.l.b16 %v251
  %v1293 = vunpack.c.h.b16 %v251
  %v1294 = vunpack.c.l.b16 %v252
  %v1295 = vunpack.c.h.b16 %v252
  %v1296 = vunpack.c.l.b16 %v253
  %v1297 = vunpack.c.h.b16 %v253
  %v1298 = vunpack.c.l.b16 %v254
  %v1299 = vunpack.c.h.b16 %v254
  %v1300 = vunpack.c.l.b16 %v255
  %v1301 = vunpack.c.h.b16 %v255
  %v1302 = vunpack.c.l.b16 %v256
  %v1303 = vunpack.c.h.b16 %v256
  %v1304 = vunpack.c.l.b16 %v257
  %v1305 = vunpack.c.h.b16 %v257
  %v1306 = vunpack.c.l.b16 %v258
  %v1307 = vunpack.c.h.b16 %v258
  %v1308 = vunpack.c.l.b16 %v259
  %v1309 = vunpack.c.h.b16 %v259
  %v1310 = vunpack.c.l.b16 %v260
  %v1311 = vunpack.c.h.b16 %v260
  %v1312 = vunpack.c.l.b16 %v261
  %v1313 = vunpack.c.h.b16 %v261
  %v1314 = vunpack.c.l.b16 %v262
  %v1315 = vunpack.c.h.b16 %v262
  %v1316 = vunpack.c.l.b16 %v263
  %v1317 = vunpack.c.h.b16 %v263
  %v1318 = vunpack.c.l.b16 %v264
  %v1319 = vunpack.c.h.b16 %v264
  %v1320 = vunpack.c.l.b16 %v265
  %v1321 = vunpack.c.h.b16 %v265
  %v1322 = vunpack.c.l.b16 %v266
  %v1323 = vunpack.c.h.b16 %v266
  %v1324 = vunpack.c.l.b16 %v267
  %v1325 = vunpack.c.h.b16 %v267
  %v1326 = vunpack.c.l.b16 %v268
  %v1327 = vunpack.c.h.b16 %v268
  %v1328 = vunpack.c.l.b16 %v269
  %v1329 = vunpack.c.h.b16 %v269
  %v1330 = vunpack.c.l.b16 %v270
  %v1331 = vunpack.c.h.b16 %v270
  %v1332 = vunpack.c.l.b16 %v271
  %v1333 = vunpack.c.h.b16 %v271
  %v1334 = vunpack.c.l.b16 %v272
  %v1335 = vunpack.c.h.b16 %v272
  %v1336 = vunpack.c.l.b16 %v273
  %v1337 = vunpack.c.h.b16 %v273
  %v1338 = vunpack.c.l.b16 %v274
  %v1339 = vunpack.c.h.b16 %v274
  %v1340 = vunpack.c.l.b16 %v275
  %v1341 = vunpack.c.h.b16 %v275
  %v1342 = vunpack.c.l.b16 %v276
  %v1343 = vunpack.c.h.b16 %v276
  %v1344 = vunpack.c.l.b16 %v277
  %v1345 = vunpack.c.h.b16 %v277
  %v1346 = vunpack.c.l.b16 %v278
  %v1347 = vunpack.c.h.b16 %v278
  %v1348 = vunpack.c.l.b16 %v279
  %v1349 = vunpack.c.h.b16 %v279
  %v1350 = vunpack.c.l.b16 %v280
  %v1351 = vunpack.c.h.b16 %v280
  %v1352 = vunpack.c.l.b16 %v281
  %v1353 = vunpack.c.h.b16 %v281
  %v1354 = vunpack.c.l.b16 %v282
  %v1355 = vunpack.c.h.b16 %v282
  %v1356 = vunpack.c.l.b16 %v283
  %v1357 = vunpack.c.h.b16 %v283
  %v1358 = vunpack.c.l.b16 %v284
  %v1359 = vunpack.c.h.b16 %v284
  %v1360 = vunpack.c.l.b16 %v285
  %v1361 = vunpack.c.h.b16 %v285
  %v1362 = vunpack.c.l.b16 %v286
  %v1363 = vunpack.c.h.b16 %v286
  %v1364 = vunpack.c.l.b16 %v287
  %v1365 = vunpack.c.h.b16 %v287
  %v1366 = vunpack.c.l.b16 %v288
  %v1367 = vunpack.c.h.b16 %v288
  %v1368 = vunpack.c.l.b16 %v289
  %v1369 = vunpack.c.h.b16 %v289
  %v1370 = vunpack.c.l.b16 %v290
  %v1371 = vunpack.c.h.b16 %v290
  %v1372 = vunpack.c.l.b16 %v291
  %v1373 = vunpack.c.h.b16 %v291
  %v1374 = vunpack.c.l.b16 %v292
  %v1375 = vunpack.c.h.b16 %v292
  %v1376 = vunpack.c.l.b16 %v293
  %v1377 = vunpack.c.h.b16 %v293
  %v1378 = vunpack.c.l.b16 %v294
  %v1379 = vunpack.c.h.b16 %v294
  %v1380 = vunpack.c.l.b16 %v295
  %v1381 = vunpack.c.h.b16 %v295
  %v1382 = vunpack.c.l.b16 %v296
  %v1383 = vunpack.c.h.b16 %v296
  %v1384 = vunpack.c.l.b16 %v297
  %v1385 = vunpack.c.h.b16 %v297
  %v1386 = vunpack.c.l.b16 %v298
  %v1387 = vunpack.c.h.b16 %v298
  %v1388 = vunpack.c.l.b16 %v299
  %v1389 = vunpack.c.h.b16 %v299
  %v1390 = vunpack.c.l.b16 %v300
  %v1391 = vunpack.c.h.b16 %v300
  %v1392 = vunpack.c.l.b16 %v301
  %v1393 = vunpack.c.h.b16 %v301
  %v1394 = vpack.c.b16 %v820, %v818
  %v1395 = vpack.c.b16 %v821, %v819
  %v1396 = vpack.c.b16 %v824, %v822
  %v1397 = vpack.c.b16 %v825, %v823
  %v1398 = vpack.c.b16 %v828, %v826
  %v1399 = vpack.c.b16 %v829, %v827
  %v1400 = vpack.c.b16 %v832, %v830
  %v1401 = vpack.c.b16 %v833, %v831
  %v1402 = vpack.c.b16 %v836, %v834
  %v1403 = vpack.c.b16 %v837, %v835
  %v1404 = vpack.c.b16 %v840, %v838
  %v1405 = vpack.c.b16 %v841, %v839
  %v1406 = vpack.c.b16 %v844, %v842
  %v1407 = vpack.c.b16 %v845, %v843
  %v1408 = vpack.c.b16 %v848, %v846
  %v1409 = vpack.c.b16 %v849, %v847
  %v1410 = vpack.c.b16 %v852, %v850
  %v1411 = vpack.c.b16 %v853, %v851
  %v1412 = vpack.c.b16 %v856, %v854
  %v1413 = vpack.c.b16 %v857, %v855
  %v1414 = vpack.c.b16 %v860, %v858
  %v1415 = vpack.c.b16 %v861, %v859
  %v1416 = vpack.c.b16 %v864, %v862
  %v1417 = vpack.c.b16 %v865, %v863
  %v1418 = vpack.c.b16 %v868, %v866
  %v1419 = vpack.c.b16 %v869, %v867
  %v1420 = vpack.c.b16 %v872, %v870
  %v1421 = vpack.c.b16 %v873, %v871
  %v1422 = vpack.c.b16 %v876, %v874
  %v1423 = vpack.c.b16 %v877, %v875
  %v1424 = vpack.c.b16 %v880, %v878
  %v1425 = vpack.c.b16 %v881, %v879
  %v1426 = vpack.c.b16 %v884, %v882
  %v1427 = vpack.c.b16 %v885, %v883
  %v1428 = vpack.c.b16 %v888, %v886
  %v1429 = vpack.c.b16 %v889, %v887
  %v1430 = vpack.c.b16 %v892, %v890
  %v1431 = vpack.c.b16 %v893, %v891
  %v1432 = vpack.c.b16 %v896, %v894
  %v1433 = vpack.c.b16 %v897, %v895
  %v1434 = vpack.c.b16 %v900, %v898
  %v1435 = vpack.c.b16 %v901, %v899
  %v1436 = vpack.c.b16 %v904, %v902
  %v1437 = vpack.c.b16 %v905, %v903
  %v1438 = vpack.c.b16 %v908, %v906
  %v1439 = vpack.c.b16 %v909, %v907
  %v1440 = vpack.c.b16 %v912, %v910
  %v1441 = vpack.c.b16 %v913, %v911
  %v1442 = vpack.c.b16 %v916, %v914
  %v1443 = vpack.c.b16 %v917, %v915
  %v1444 = vpack.c.b16 %v920, %v918
  %v1445 = vpack.c.b16 %v921, %v919
  %v1446 = vpack.c.b16 %v924, %v922
  %v1447 = vpack.c.b16 %v925, %v923
  %v1448 = vpack.c.b16 %v928, %v926
  %v1449 = vpack.c.b16 %v929, %v927
  %v1450 = vpack.c.b16 %v932, %v930
  %v1451 = vpack.c.b16 %v933, %v931
  %v1452 = vpack.c.b16 %v936, %v934
  %v1453 = vpack.c.b16 %v937, %v935
  %v1454 = vpack.c.b16 %v940, %v938
  %v1455 = vpack.c.b16 %v941, %v939
  %v1456 = vpack.c.b16 %v944, %v942
  %v1457 = vpack.c.b16 %v945, %v943
  %v1458 = vpack.c.b16 %v948, %v946
  %v1459 = vpack.c.b16 %v949, %v947
  %v1460 = vpack.c.b16 %v952, %v950
  %v1461 = vpack.c.b16 %v953, %v951
  %v1462 = vpack.c.b16 %v956, %v954
  %v1463 = vpack.c.b16 %v957, %v955
  %v1464 = vpack.c.b16 %v960, %v958
  %v1465 = vpack.c.b16 %v961, %v959
  %v1466 = vpack.c.b16 %v964, %v962
  %v1467 = vpack.c.b16 %v965, %v963
  %v1468 = vpack.c.b16 %v968, %v966
  %v1469 = vpack.c.b16 %v969, %v967
  %v1470 = vpack.c.b16 %v972, %v970
  %v1471 = vpack.c.b16 %v973, %v971
  %v1472 = vpack.c.b16 %v976, %v974
  %v1473 = vpack.c.b16 %v977, %v975
  %v1474 = vpack.c.b16 %v980, %v978
  %v1475 = vpack.c.b16 %v981, %v979
  %v1476 = vpack.c.b16 %v984, %v982
  %v1477 = vpack.c.b16 %v985, %v983
  %v1478 = vpack.c.b16 %v988, %v986
  %v1479 = vpack.c.b16 %v989, %v987
  %v1480 = vpack.c.b16 %v992, %v990
  %v1481 = vpack.c.b16 %v993, %v991
  %v1482 = vpack.c.b16 %v996, %v994
  %v1483 = vpack.c.b16 %v997, %v995
  %v1484 = vpack.c.b16 %v1000, %v998
  %v1485 = vpack.c.b16 %v1001, %v999
  %v1486 = vpack.c.b16 %v1004, %v1002
  %v1487 = vpack.c.b16 %v1005, %v1003
  %v1488 = vpack.c.b16 %v1008, %v1006
  %v1489 = vpack.c.b16 %v1009, %v1007
  %v1490 = vpack.c.b16 %v1012, %v1010
  %v1491 = vpack.c.b16 %v1013, %v1011
  %v1492 = vpack.c.b16 %v1016, %v1014
  %v1493 = vpack.c.b16 %v1017, %v1015
  %v1494 = vpack.c.b16 %v1020, %v1018
  %v1495 = vpack.c.b16 %v1021, %v1019
  %v1496 = vpack.c.b16 %v1024, %v1022
  %v1497 = vpack.c.b16 %v1025, %v1023
  %v1498 = vpack.c.b16 %v1028, %v1026
  %v1499 = vpack.c.b16 %v1029, %v1027
  %v1500 = vpack.c.b16 %v1032, %v1030
  %v1501 = vpack.c.b16 %v1033, %v1031
  %v1502 = vpack.c.b16 %v1036, %v1034
  %v1503 = vpack.c.b16 %v1037, %v1035
  %v1504 = vpack.c.b16 %v1040, %v1038
  %v1505 = vpack.c.b16 %v1041, %v1039
  %v1506 = vpack.c.b16 %v1044, %v1042
  %v1507 = vpack.c.b16 %v1045, %v1043
  %v1508 = vpack.c.b16 %v1048, %v1046
  %v1509 = vpack.c.b16 %v1049, %v1047
  %v1510 = vpack.c.b16 %v1052, %v1050
  %v1511 = vpack.c.b16 %v1053, %v1051
  %v1512 = vpack.c.b16 %v1056, %v1054
  %v1513 = vpack.c.b16 %v1057, %v1055
  %v1514 = vpack.c.b16 %v1060, %v1058
  %v1515 = vpack.c.b16 %v1061, %v1059
  %v1516 = vpack.c.b16 %v1064, %v1062
  %v1517 = vpack.c.b16 %v1065, %v1063
  %v1518 = vpack.c.b16 %v1068, %v1066
  %v1519 = vpack.c.b16 %v1069, %v1067
  %v1520 = vpack.c.b16 %v1072, %v1070
  %v1521 = vpack.c.b16 %v1073, %v1071
  %v1522 = vpack.c.b16 %v1076, %v1074
  %v1523 = vpack.c.b16 %v1077, %v1075
  %v1524 = vpack.c.b16 %v1080, %v1078
  %v1525 = vpack.c.b16 %v1081, %v1079
  %v1526 = vpack.c.b16 %v1084, %v1082
  %v1527 = vpack.c.b16 %v1085, %v1083
  %v1528 = vpack.c.b16 %v1088, %v1086
  %v1529 = vpack.c.b16 %v1089, %v1087
  %v1530 = vpack.c.b16 %v1092, %v1090
  %v1531 = vpack.c.b16 %v1093, %v1091
  %v1532 = vpack.c.b16 %v1096, %v1094
  %v1533 = vpack.c.b16 %v1097, %v1095
  %v1534 = vpack.c.b16 %v1100, %v1098
  %v1535 = vpack.c.b16 %v1101, %v1099
  %v1536 = vpack.c.b16 %v1104, %v1102
  %v1537 = vpack.c.b16 %v1105, %v1103
  %v1538 = vpack.c.b16 %v1108, %v1106
  %v1539 = vpack.c.b16 %v1109, %v1107
  %v1540 = vpack.c.b16 %v1112, %v1110
  %v1541 = vpack.c.b16 %v1113, %v1111
  %v1542 = vpack.c.b16 %v1116, %v1114
  %v1543 = vpack.c.b16 %v1117, %v1115
  %v1544 = vpack.c.b16 %v1120, %v1118
  %v1545 = vpack.c.b16 %v1121, %v1119
  %v1546 = vpack.c.b16 %v1124, %v1122
  %v1547 = vpack.c.b16 %v1125, %v1123
  %v1548 = vpack.c.b16 %v1128, %v1126
  %v1549 = vpack.c.b16 %v1129, %v1127
  %v1550 = vpack.c.b16 %v1132, %v1130
  %v1551 = vpack.c.b16 %v1133, %v1131
  %v1552 = vpack.c.b16 %v1136, %v1134
  %v1553 = vpack.c.b16 %v1137, %v1135
  %v1554 = vpack.c.b16 %v1140, %v1138
  %v1555 = vpack.c.b16 %v1141, %v1139
  %v1556 = vpack.c.b16 %v1144, %v1142
  %v1557 = vpack.c.b16 %v1145, %v1143
  %v1558 = vpack.c.b16 %v1148, %v1146
  %v1559 = vpack.c.b16 %v1149, %v1147
  %v1560 = vpack.c.b16 %v1152, %v1150
  %v1561 = vpack.c.b16 %v1153, %v1151
  %v1562 = vpack.c.b16 %v1156, %v1154
  %v1563 = vpack.c.b16 %v1157, %v1155
  %v1564 = vpack.c.b16 %v1160, %v1158
  %v1565 = vpack.c.b16 %v1161, %v1159
  %v1566 = vpack.c.b16 %v1164, %v1162
  %v1567 = vpack.c.b16 %v1165, %v1163
  %v1568 = vpack.c.b16 %v1168, %v1166
  %v1569 = vpack.c.b16 %v1169, %v1167
  %v1570 = vpack.c.b16 %v1172, %v1170
  %v1571 = vpack.c.b16 %v1173, %v1171
  %v1572 = vpack.c.b16 %v1176, %v1174
  %v1573 = vpack.c.b16 %v1177, %v1175
  %v1574 = vpack.c.b16 %v1180, %v1178
  %v1575 = vpack.c.b16 %v1181, %v1179
  %v1576 = vpack.c.b16 %v1184, %v1182
  %v1577 = vpack.c.b16 %v1185, %v1183
  %v1578 = vpack.c.b16 %v1188, %v1186
  %v1579 = vpack.c.b16 %v1189, %v1187
  %v1580 = vpack.c.b16 %v1192, %v1190
  %v1581 = vpack.c.b16 %v1193, %v1191
  %v1582 = vpack.c.b16 %v1196, %v1194
  %v1583 = vpack.c.b16 %v1197, %v1195
  %v1584 = vpack.c.b16 %v1200, %v1198
  %v1585 = vpack.c.b16 %v1201, %v1199
  %v1586 = vpack.c.b16 %v1204, %v1202
  %v1587 = vpack.c.b16 %v1205, %v1203
  %v1588 = vpack.c.b16 %v1208, %v1206
  %v1589 = vpack.c.b16 %v1209, %v1207
  %v1590 = vpack.c.b16 %v1212, %v1210
  %v1591 = vpack.c.b16 %v1213, %v1211
  %v1592 = vpack.c.b16 %v1216, %v1214
  %v1593 = vpack.c.b16 %v1217, %v1215
  %v1594 = vpack.c.b16 %v1220, %v1218
  %v1595 = vpack.c.b16 %v1221, %v1219
  %v1596 = vpack.c.b16 %v1224, %v1222
  %v1597 = vpack.c.b16 %v1225, %v1223
  %v1598 = vpack.c.b16 %v1228, %v1226
  %v1599 = vpack.c.b16 %v1229, %v1227
  %v1600 = vpack.c.b16 %v1232, %v1230
  %v1601 = vpack.c.b16 %v1233, %v1231
  %v1602 = vpack.c.b16 %v1236, %v1234
  %v1603 = vpack.c.b16 %v1237, %v1235
  %v1604 = vpack.c.b16 %v1240, %v1238
  %v1605 = vpack.c.b16 %v1241, %v1239
  %v1606 = vpack.c.b16 %v1244, %v1242
  %v1607 = vpack.c.b16 %v1245, %v1243
  %v1608 = vpack.c.b16 %v1248, %v1246
  %v1609 = vpack.c.b16 %v1249, %v1247
  %v1610 = vpack.c.b16 %v1252, %v1250
  %v1611 = vpack.c.b16 %v1253, %v1251
  %v1612 = vpack.c.b16 %v1256, %v1254
  %v1613 = vpack.c.b16 %v1257, %v1255
  %v1614 = vpack.c.b16 %v1260, %v1258
  %v1615 = vpack.c.b16 %v1261, %v1259
  %v1616 = vpack.c.b16 %v1264, %v1262
  %v1617 = vpack.c.b16 %v1265, %v1263
  %v1618 = vpack.c.b16 %v1268, %v1266
  %v1619 = vpack.c.b16 %v1269, %v1267
  %v1620 = vpack.c.b16 %v1272, %v1270
  %v1621 = vpack.c.b16 %v1273, %v1271
  %v1622 = vpack.c.b16 %v1276, %v1274
  %v1623 = vpack.c.b16 %v1277, %v1275
  %v1624 = vpack.c.b16 %v1280, %v1278
  %v1625 = vpack.c.b16 %v1281, %v1279
  %v1626 = vpack.c.b16 %v1284, %v1282
  %v1627 = vpack.c.b16 %v1285, %v1283
  %v1628 = vpack.c.b16 %v1288, %v1286
  %v1629 = vpack.c.b16 %v1289, %v1287
  %v1630 = vpack.c.b16 %v1292, %v1290
  %v1631 = vpack.c.b16 %v1293, %v1291
  %v1632 = vpack.c.b16 %v1296, %v1294
  %v1633 = vpack.c.b16 %v1297, %v1295
  %v1634 = vpack.c.b16 %v1300, %v1298
  %v1635 = vpack.c.b16 %v1301, %v1299
  %v1636 = vpack.c.b16 %v1304, %v1302
  %v1637 = vpack.c.b16 %v1305, %v1303
  %v1638 = vpack.c.b16 %v1308, %v1306
  %v1639 = vpack.c.b16 %v1309, %v1307
  %v1640 = vpack.c.b16 %v1312, %v1310
  %v1641 = vpack.c.b16 %v1313, %v1311
  %v1642 = vpack.c.b16 %v1316, %v1314
  %v1643 = vpack.c.b16 %v1317, %v1315
  %v1644 = vpack.c.b16 %v1320, %v1318
  %v1645 = vpack.c.b16 %v1321, %v1319
  %v1646 = vpack.c.b16 %v1324, %v1322
  %v1647 = vpack.c.b16 %v1325, %v1323
  %v1648 = vpack.c.b16 %v1328, %v1326
  %v1649 = vpack.c.b16 %v1329, %v1327
  %v1650 = vpack.c.b16 %v1332, %v1330
  %v1651 = vpack.c.b16 %v1333, %v1331
  %v1652 = vpack.c.b16 %v1336, %v1334
  %v1653 = vpack.c.b16 %v1337, %v1335
  %v1654 = vpack.c.b16 %v1340, %v1338
  %v1655 = vpack.c.b16 %v1341, %v1339
  %v1656 = vpack.c.b16 %v1344, %v1342
  %v1657 = vpack.c.b16 %v1345, %v1343
  %v1658 = vpack.c.b16 %v1348, %v1346
  %v1659 = vpack.c.b16 %v1349, %v1347
  %v1660 = vpack.c.b16 %v1352, %v1350
  %v1661 = vpack.c.b16 %v1353, %v1351
  %v1662 = vpack.c.b16 %v1356, %v1354
  %v1663 = vpack.c.b16 %v1357, %v1355
  %v1664 = vpack.c.b16 %v1360, %v1358
  %v1665 = vpack.c.b16 %v1361, %v1359
  %v1666 = vpack.c.b16 %v1364, %v1362
  %v1667 = vpack.c.b16 %v1365, %v1363
  %v1668 = vpack.c.b16 %v1368, %v1366
  %v1669 = vpack.c.b16 %v1369, %v1367
  %v1670 = vpack.c.b16 %v1372, %v1370
  %v1671 = vpack.c.b16 %v1373, %v1371
  %v1672 = vpack.c.b16 %v1376, %v1374
  %v1673 = vpack.c.b16 %v1377, %v1375
  %v1674 = vpack.c.b16 %v1380, %v1378
  %v1675 = vpack.c.b16 %v1381, %v1379
  %v1676 = vpack.c.b16 %v1384, %v1382
  %v1677 = vpack.c.b16 %v1385, %v1383
  %v1678 = vpack.c.b16 %v1388, %v1386
  %v1679 = vpack.c.b16 %v1389, %v1387
  %v1680 = vpack.c.b16 %v1392, %v1390
  %v1681 = vpack.c.b16 %v1393, %v1391
  %1970 = vmatprep.subr.bf16.mxu0 %v1395
  %1971 = vmatpush1.bf16.msra.mxu0 %v1394
  %1972 = vmatprep.subr.bf16.mxu0 %v1397
  %1973 = vmatpush1.bf16.msra.mxu0 %v1396
  %1974 = vmatprep.subr.bf16.mxu0 %v1399
  %1975 = vmatpush1.bf16.msra.mxu0 %v1398
  %1976 = vmatprep.subr.bf16.mxu0 %v1401
  %1977 = vmatpush1.bf16.msra.mxu0 %v1400
  %1978 = vmatprep.subr.bf16.mxu0 %v1403
  %1979 = vmatpush1.bf16.msra.mxu0 %v1402
  %1980 = vmatprep.subr.bf16.mxu0 %v1405
  %1981 = vmatpush1.bf16.msra.mxu0 %v1404
  %1982 = vmatprep.subr.bf16.mxu0 %v1407
  %1983 = vmatpush1.bf16.msra.mxu0 %v1406
  %1984 = vmatprep.subr.bf16.mxu0 %v1409
  %1985 = vmatpush1.bf16.msra.mxu0 %v1408
  %1986 = vmatprep.subr.bf16.mxu0 %v1411
  %1987 = vmatpush1.bf16.msra.mxu0 %v1410
  %1988 = vmatprep.subr.bf16.mxu0 %v1413
  %1989 = vmatpush1.bf16.msra.mxu0 %v1412
  %1990 = vmatprep.subr.bf16.mxu0 %v1415
  %1991 = vmatpush1.bf16.msra.mxu0 %v1414
  %1992 = vmatprep.subr.bf16.mxu0 %v1417
  %1993 = vmatpush1.bf16.msra.mxu0 %v1416
  %1994 = vmatprep.subr.bf16.mxu0 %v1419
  %1995 = vmatpush1.bf16.msra.mxu0 %v1418
  %1996 = vmatprep.subr.bf16.mxu0 %v1421
  %1997 = vmatpush1.bf16.msra.mxu0 %v1420
  %1998 = vmatprep.subr.bf16.mxu0 %v1423
  %1999 = vmatpush1.bf16.msra.mxu0 %v1422
  %2000 = vmatprep.subr.bf16.mxu0 %v1425
  %2001 = vmatpush1.bf16.msra.mxu0 %v1424
  %2002 = vmatprep.mubr.bf16.mxu0 %v459
  %2003 = vmatmul.mubr.bf16.gmra.mrb[0].mxu0 %v458
  %v2004 = vpop.f32.mrb[0].mxu0
  %v2005 = vadd.f32 %v343, %v2004
  %v2006 = vpop.f32.mrb[0].mxu0
  %v2007 = vadd.f32 %v347, %v2006
  %v2008 = vpop.f32.mrb[0].mxu0
  %v2009 = vadd.f32 %v343, %v2008
  %v2010 = vpop.f32.mrb[0].mxu0
  %v2011 = vadd.f32 %v347, %v2010
  %2012 = vmatprep.mubr.bf16.mxu0 %v477
  %2013 = vmatmul.mubr.bf16.gmra.mrb[0].mxu0 %v476
  %v2014 = vpop.f32.mrb[0].mxu0
  %v2015 = vadd.f32 %v343, %v2014
  %v2016 = vpop.f32.mrb[0].mxu0
  %v2017 = vadd.f32 %v347, %v2016
  %v2018 = vpop.f32.mrb[0].mxu0
  %v2019 = vadd.f32 %v343, %v2018
  %v2020 = vpop.f32.mrb[0].mxu0
  %v2021 = vadd.f32 %v347, %v2020
  %2022 = vdwg.mxu0
  %2023 = vmatprep.subr.bf16.mxu0 %v1427
  %2024 = vmatpush1.bf16.msra.mxu0 %v1426
  %2025 = vmatprep.subr.bf16.mxu0 %v1429
  %2026 = vmatpush1.bf16.msra.mxu0 %v1428
  %2027 = vmatprep.subr.bf16.mxu0 %v1431
  %2028 = vmatpush1.bf16.msra.mxu0 %v1430
  %2029 = vmatprep.subr.bf16.mxu0 %v1433
  %2030 = vmatpush1.bf16.msra.mxu0 %v1432
  %2031 = vmatprep.subr.bf16.mxu0 %v1435
  %2032 = vmatpush1.bf16.msra.mxu0 %v1434
  %2033 = vmatprep.subr.bf16.mxu0 %v1437
  %2034 = vmatpush1.bf16.msra.mxu0 %v1436
  %2035 = vmatprep.subr.bf16.mxu0 %v1439
  %2036 = vmatpush1.bf16.msra.mxu0 %v1438
  %2037 = vmatprep.subr.bf16.mxu0 %v1441
  %2038 = vmatpush1.bf16.msra.mxu0 %v1440
  %2039 = vmatprep.subr.bf16.mxu0 %v1443
  %2040 = vmatpush1.bf16.msra.mxu0 %v1442
  %2041 = vmatprep.subr.bf16.mxu0 %v1445
  %2042 = vmatpush1.bf16.msra.mxu0 %v1444
  %2043 = vmatprep.subr.bf16.mxu0 %v1447
  %2044 = vmatpush1.bf16.msra.mxu0 %v1446
  %2045 = vmatprep.subr.bf16.mxu0 %v1449
  %2046 = vmatpush1.bf16.msra.mxu0 %v1448
  %2047 = vmatprep.subr.bf16.mxu0 %v1451
  %2048 = vmatpush1.bf16.msra.mxu0 %v1450
  %2049 = vmatprep.subr.bf16.mxu0 %v1453
  %2050 = vmatpush1.bf16.msra.mxu0 %v1452
  %2051 = vmatprep.subr.bf16.mxu0 %v1455
  %2052 = vmatpush1.bf16.msra.mxu0 %v1454
  %2053 = vmatprep.subr.bf16.mxu0 %v1457
  %2054 = vmatpush1.bf16.msra.mxu0 %v1456
  %2055 = vmatprep.mubr.bf16.mxu0 %v461
  %2056 = vmatmul.mubr.bf16.gmra.mrb[0].mxu0 %v460
  %v2057 = vpop.f32.mrb[0].mxu0
  %v2058 = vadd.f32 %v2005, %v2057
  %v2059 = vpop.f32.mrb[0].mxu0
  %v2060 = vadd.f32 %v2007, %v2059
  %v2061 = vpop.f32.mrb[0].mxu0
  %v2062 = vadd.f32 %v2009, %v2061
  %v2063 = vpop.f32.mrb[0].mxu0
  %v2064 = vadd.f32 %v2011, %v2063
  %2065 = vmatprep.mubr.bf16.mxu0 %v479
  %2066 = vmatmul.mubr.bf16.gmra.mrb[0].mxu0 %v478
  %v2067 = vpop.f32.mrb[0].mxu0
  %v2068 = vadd.f32 %v2015, %v2067
  %v2069 = vpop.f32.mrb[0].mxu0
  %v2070 = vadd.f32 %v2017, %v2069
  %v2071 = vpop.f32.mrb[0].mxu0
  %v2072 = vadd.f32 %v2019, %v2071
  %v2073 = vpop.f32.mrb[0].mxu0
  %v2074 = vadd.f32 %v2021, %v2073
  %2075 = vdwg.mxu0
  %2076 = vmatprep.subr.bf16.mxu0 %v1459
  %2077 = vmatpush1.bf16.msra.mxu0 %v1458
  %2078 = vmatprep.subr.bf16.mxu0 %v1461
  %2079 = vmatpush1.bf16.msra.mxu0 %v1460
  %2080 = vmatprep.subr.bf16.mxu0 %v1463
  %2081 = vmatpush1.bf16.msra.mxu0 %v1462
  %2082 = vmatprep.subr.bf16.mxu0 %v1465
  %2083 = vmatpush1.bf16.msra.mxu0 %v1464
  %2084 = vmatprep.subr.bf16.mxu0 %v1467
  %2085 = vmatpush1.bf16.msra.mxu0 %v1466
  %2086 = vmatprep.subr.bf16.mxu0 %v1469
  %2087 = vmatpush1.bf16.msra.mxu0 %v1468
  %2088 = vmatprep.subr.bf16.mxu0 %v1471
  %2089 = vmatpush1.bf16.msra.mxu0 %v1470
  %2090 = vmatprep.subr.bf16.mxu0 %v1473
  %2091 = vmatpush1.bf16.msra.mxu0 %v1472
  %2092 = vmatprep.subr.bf16.mxu0 %v1475
  %2093 = vmatpush1.bf16.msra.mxu0 %v1474
  %2094 = vmatprep.subr.bf16.mxu0 %v1477
  %2095 = vmatpush1.bf16.msra.mxu0 %v1476
  %2096 = vmatprep.subr.bf16.mxu0 %v1479
  %2097 = vmatpush1.bf16.msra.mxu0 %v1478
  %2098 = vmatprep.subr.bf16.mxu0 %v1481
  %2099 = vmatpush1.bf16.msra.mxu0 %v1480
  %2100 = vmatprep.subr.bf16.mxu0 %v1483
  %2101 = vmatpush1.bf16.msra.mxu0 %v1482
  %2102 = vmatprep.subr.bf16.mxu0 %v1485
  %2103 = vmatpush1.bf16.msra.mxu0 %v1484
  %2104 = vmatprep.subr.bf16.mxu0 %v1487
  %2105 = vmatpush1.bf16.msra.mxu0 %v1486
  %2106 = vmatprep.subr.bf16.mxu0 %v1489
  %2107 = vmatpush1.bf16.msra.mxu0 %v1488
  %2108 = vmatprep.mubr.bf16.mxu0 %v463
  %2109 = vmatmul.mubr.bf16.gmra.mrb[0].mxu0 %v462
  %v2110 = vpop.f32.mrb[0].mxu0
  %v2111 = vadd.f32 %v2058, %v2110
  %v2112 = vpop.f32.mrb[0].mxu0
  %v2113 = vadd.f32 %v2060, %v2112
  %v2114 = vpop.f32.mrb[0].mxu0
  %v2115 = vadd.f32 %v2062, %v2114
  %v2116 = vpop.f32.mrb[0].mxu0
  %v2117 = vadd.f32 %v2064, %v2116
  %2118 = vmatprep.mubr.bf16.mxu0 %v481
  %2119 = vmatmul.mubr.bf16.gmra.mrb[0].mxu0 %v480
  %v2120 = vpop.f32.mrb[0].mxu0
  %v2121 = vadd.f32 %v2068, %v2120
  %v2122 = vpop.f32.mrb[0].mxu0
  %v2123 = vadd.f32 %v2070, %v2122
  %v2124 = vpop.f32.mrb[0].mxu0
  %v2125 = vadd.f32 %v2072, %v2124
  %v2126 = vpop.f32.mrb[0].mxu0
  %v2127 = vadd.f32 %v2074, %v2126
  %2128 = vdwg.mxu0
  %2129 = vmatprep.subr.bf16.mxu0 %v1491
  %2130 = vmatpush1.bf16.msra.mxu0 %v1490
  %2131 = vmatprep.subr.bf16.mxu0 %v1493
  %2132 = vmatpush1.bf16.msra.mxu0 %v1492
  %2133 = vmatprep.subr.bf16.mxu0 %v1495
  %2134 = vmatpush1.bf16.msra.mxu0 %v1494
  %2135 = vmatprep.subr.bf16.mxu0 %v1497
  %2136 = vmatpush1.bf16.msra.mxu0 %v1496
  %2137 = vmatprep.subr.bf16.mxu0 %v1499
  %2138 = vmatpush1.bf16.msra.mxu0 %v1498
  %2139 = vmatprep.subr.bf16.mxu0 %v1501
  %2140 = vmatpush1.bf16.msra.mxu0 %v1500
  %2141 = vmatprep.subr.bf16.mxu0 %v1503
  %2142 = vmatpush1.bf16.msra.mxu0 %v1502
  %2143 = vmatprep.subr.bf16.mxu0 %v1505
  %2144 = vmatpush1.bf16.msra.mxu0 %v1504
  %2145 = vmatprep.subr.bf16.mxu0 %v1507
  %2146 = vmatpush1.bf16.msra.mxu0 %v1506
  %2147 = vmatprep.subr.bf16.mxu0 %v1509
  %2148 = vmatpush1.bf16.msra.mxu0 %v1508
  %2149 = vmatprep.subr.bf16.mxu0 %v1511
  %2150 = vmatpush1.bf16.msra.mxu0 %v1510
  %2151 = vmatprep.subr.bf16.mxu0 %v1513
  %2152 = vmatpush1.bf16.msra.mxu0 %v1512
  %2153 = vmatprep.subr.bf16.mxu0 %v1515
  %2154 = vmatpush1.bf16.msra.mxu0 %v1514
  %2155 = vmatprep.subr.bf16.mxu0 %v1517
  %2156 = vmatpush1.bf16.msra.mxu0 %v1516
  %2157 = vmatprep.subr.bf16.mxu0 %v1519
  %2158 = vmatpush1.bf16.msra.mxu0 %v1518
  %2159 = vmatprep.subr.bf16.mxu0 %v1521
  %2160 = vmatpush1.bf16.msra.mxu0 %v1520
  %2161 = vmatprep.mubr.bf16.mxu0 %v465
  %2162 = vmatmul.mubr.bf16.gmra.mrb[0].mxu0 %v464
  %v2163 = vpop.f32.mrb[0].mxu0
  %v2164 = vadd.f32 %v2111, %v2163
  %v2165 = vpop.f32.mrb[0].mxu0
  %v2166 = vadd.f32 %v2113, %v2165
  %v2167 = vpop.f32.mrb[0].mxu0
  %v2168 = vadd.f32 %v2115, %v2167
  %v2169 = vpop.f32.mrb[0].mxu0
  %v2170 = vadd.f32 %v2117, %v2169
  %2171 = vmatprep.mubr.bf16.mxu0 %v483
  %2172 = vmatmul.mubr.bf16.gmra.mrb[0].mxu0 %v482
  %v2173 = vpop.f32.mrb[0].mxu0
  %v2174 = vadd.f32 %v2121, %v2173
  %v2175 = vpop.f32.mrb[0].mxu0
  %v2176 = vadd.f32 %v2123, %v2175
  %v2177 = vpop.f32.mrb[0].mxu0
  %v2178 = vadd.f32 %v2125, %v2177
  %v2179 = vpop.f32.mrb[0].mxu0
  %v2180 = vadd.f32 %v2127, %v2179
  %2181 = vdwg.mxu0
  %2182 = vmatprep.subr.bf16.mxu0 %v1523
  %2183 = vmatpush1.bf16.msra.mxu0 %v1522
  %2184 = vmatprep.subr.bf16.mxu0 %v1525
  %2185 = vmatpush1.bf16.msra.mxu0 %v1524
  %2186 = vmatprep.subr.bf16.mxu0 %v1527
  %2187 = vmatpush1.bf16.msra.mxu0 %v1526
  %2188 = vmatprep.subr.bf16.mxu0 %v1529
  %2189 = vmatpush1.bf16.msra.mxu0 %v1528
  %2190 = vmatprep.subr.bf16.mxu0 %v1531
  %2191 = vmatpush1.bf16.msra.mxu0 %v1530
  %2192 = vmatprep.subr.bf16.mxu0 %v1533
  %2193 = vmatpush1.bf16.msra.mxu0 %v1532
  %2194 = vmatprep.subr.bf16.mxu0 %v1535
  %2195 = vmatpush1.bf16.msra.mxu0 %v1534
  %2196 = vmatprep.subr.bf16.mxu0 %v1537
  %2197 = vmatpush1.bf16.msra.mxu0 %v1536
  %2198 = vmatprep.subr.bf16.mxu0 %v1539
  %2199 = vmatpush1.bf16.msra.mxu0 %v1538
  %2200 = vmatprep.subr.bf16.mxu0 %v1541
  %2201 = vmatpush1.bf16.msra.mxu0 %v1540
  %2202 = vmatprep.subr.bf16.mxu0 %v1543
  %2203 = vmatpush1.bf16.msra.mxu0 %v1542
  %2204 = vmatprep.subr.bf16.mxu0 %v1545
  %2205 = vmatpush1.bf16.msra.mxu0 %v1544
  %2206 = vmatprep.subr.bf16.mxu0 %v1547
  %2207 = vmatpush1.bf16.msra.mxu0 %v1546
  %2208 = vmatprep.subr.bf16.mxu0 %v1549
  %2209 = vmatpush1.bf16.msra.mxu0 %v1548
  %2210 = vmatprep.subr.bf16.mxu0 %v1551
  %2211 = vmatpush1.bf16.msra.mxu0 %v1550
  %2212 = vmatprep.subr.bf16.mxu0 %v1553
  %2213 = vmatpush1.bf16.msra.mxu0 %v1552
  %2214 = vmatprep.mubr.bf16.mxu0 %v467
  %2215 = vmatmul.mubr.bf16.gmra.mrb[0].mxu0 %v466
  %v2216 = vpop.f32.mrb[0].mxu0
  %v2217 = vadd.f32 %v2164, %v2216
  %v2218 = vpop.f32.mrb[0].mxu0
  %v2219 = vadd.f32 %v2166, %v2218
  %v2220 = vpop.f32.mrb[0].mxu0
  %v2221 = vadd.f32 %v2168, %v2220
  %v2222 = vpop.f32.mrb[0].mxu0
  %v2223 = vadd.f32 %v2170, %v2222
  %2224 = vmatprep.mubr.bf16.mxu0 %v485
  %2225 = vmatmul.mubr.bf16.gmra.mrb[0].mxu0 %v484
  %v2226 = vpop.f32.mrb[0].mxu0
  %v2227 = vadd.f32 %v2174, %v2226
  %v2228 = vpop.f32.mrb[0].mxu0
  %v2229 = vadd.f32 %v2176, %v2228
  %v2230 = vpop.f32.mrb[0].mxu0
  %v2231 = vadd.f32 %v2178, %v2230
  %v2232 = vpop.f32.mrb[0].mxu0
  %v2233 = vadd.f32 %v2180, %v2232
  %2234 = vdwg.mxu0
  %2235 = vmatprep.subr.bf16.mxu0 %v1555
  %2236 = vmatpush1.bf16.msra.mxu0 %v1554
  %2237 = vmatprep.subr.bf16.mxu0 %v1557
  %2238 = vmatpush1.bf16.msra.mxu0 %v1556
  %2239 = vmatprep.subr.bf16.mxu0 %v1559
  %2240 = vmatpush1.bf16.msra.mxu0 %v1558
  %2241 = vmatprep.subr.bf16.mxu0 %v1561
  %2242 = vmatpush1.bf16.msra.mxu0 %v1560
  %2243 = vmatprep.subr.bf16.mxu0 %v1563
  %2244 = vmatpush1.bf16.msra.mxu0 %v1562
  %2245 = vmatprep.subr.bf16.mxu0 %v1565
  %2246 = vmatpush1.bf16.msra.mxu0 %v1564
  %2247 = vmatprep.subr.bf16.mxu0 %v1567
  %2248 = vmatpush1.bf16.msra.mxu0 %v1566
  %2249 = vmatprep.subr.bf16.mxu0 %v1569
  %2250 = vmatpush1.bf16.msra.mxu0 %v1568
  %2251 = vmatprep.subr.bf16.mxu0 %v1571
  %2252 = vmatpush1.bf16.msra.mxu0 %v1570
  %2253 = vmatprep.subr.bf16.mxu0 %v1573
  %2254 = vmatpush1.bf16.msra.mxu0 %v1572
  %2255 = vmatprep.subr.bf16.mxu0 %v1575
  %2256 = vmatpush1.bf16.msra.mxu0 %v1574
  %2257 = vmatprep.subr.bf16.mxu0 %v1577
  %2258 = vmatpush1.bf16.msra.mxu0 %v1576
  %2259 = vmatprep.subr.bf16.mxu0 %v1579
  %2260 = vmatpush1.bf16.msra.mxu0 %v1578
  %2261 = vmatprep.subr.bf16.mxu0 %v1581
  %2262 = vmatpush1.bf16.msra.mxu0 %v1580
  %2263 = vmatprep.subr.bf16.mxu0 %v1583
  %2264 = vmatpush1.bf16.msra.mxu0 %v1582
  %2265 = vmatprep.subr.bf16.mxu0 %v1585
  %2266 = vmatpush1.bf16.msra.mxu0 %v1584
  %2267 = vmatprep.mubr.bf16.mxu0 %v469
  %2268 = vmatmul.mubr.bf16.gmra.mrb[0].mxu0 %v468
  %v2269 = vpop.f32.mrb[0].mxu0
  %v2270 = vadd.f32 %v2217, %v2269
  %v2271 = vpop.f32.mrb[0].mxu0
  %v2272 = vadd.f32 %v2219, %v2271
  %v2273 = vpop.f32.mrb[0].mxu0
  %v2274 = vadd.f32 %v2221, %v2273
  %v2275 = vpop.f32.mrb[0].mxu0
  %v2276 = vadd.f32 %v2223, %v2275
  %2277 = vmatprep.mubr.bf16.mxu0 %v487
  %2278 = vmatmul.mubr.bf16.gmra.mrb[0].mxu0 %v486
  %v2279 = vpop.f32.mrb[0].mxu0
  %v2280 = vadd.f32 %v2227, %v2279
  %v2281 = vpop.f32.mrb[0].mxu0
  %v2282 = vadd.f32 %v2229, %v2281
  %v2283 = vpop.f32.mrb[0].mxu0
  %v2284 = vadd.f32 %v2231, %v2283
  %v2285 = vpop.f32.mrb[0].mxu0
  %v2286 = vadd.f32 %v2233, %v2285
  %2287 = vdwg.mxu0
  %2288 = vmatprep.subr.bf16.mxu0 %v1587
  %2289 = vmatpush1.bf16.msra.mxu0 %v1586
  %2290 = vmatprep.subr.bf16.mxu0 %v1589
  %2291 = vmatpush1.bf16.msra.mxu0 %v1588
  %2292 = vmatprep.subr.bf16.mxu0 %v1591
  %2293 = vmatpush1.bf16.msra.mxu0 %v1590
  %2294 = vmatprep.subr.bf16.mxu0 %v1593
  %2295 = vmatpush1.bf16.msra.mxu0 %v1592
  %2296 = vmatprep.subr.bf16.mxu0 %v1595
  %2297 = vmatpush1.bf16.msra.mxu0 %v1594
  %2298 = vmatprep.subr.bf16.mxu0 %v1597
  %2299 = vmatpush1.bf16.msra.mxu0 %v1596
  %2300 = vmatprep.subr.bf16.mxu0 %v1599
  %2301 = vmatpush1.bf16.msra.mxu0 %v1598
  %2302 = vmatprep.subr.bf16.mxu0 %v1601
  %2303 = vmatpush1.bf16.msra.mxu0 %v1600
  %2304 = vmatprep.subr.bf16.mxu0 %v1603
  %2305 = vmatpush1.bf16.msra.mxu0 %v1602
  %2306 = vmatprep.subr.bf16.mxu0 %v1605
  %2307 = vmatpush1.bf16.msra.mxu0 %v1604
  %2308 = vmatprep.subr.bf16.mxu0 %v1607
  %2309 = vmatpush1.bf16.msra.mxu0 %v1606
  %2310 = vmatprep.subr.bf16.mxu0 %v1609
  %2311 = vmatpush1.bf16.msra.mxu0 %v1608
  %2312 = vmatprep.subr.bf16.mxu0 %v1611
  %2313 = vmatpush1.bf16.msra.mxu0 %v1610
  %2314 = vmatprep.subr.bf16.mxu0 %v1613
  %2315 = vmatpush1.bf16.msra.mxu0 %v1612
  %2316 = vmatprep.subr.bf16.mxu0 %v1615
  %2317 = vmatpush1.bf16.msra.mxu0 %v1614
  %2318 = vmatprep.subr.bf16.mxu0 %v1617
  %2319 = vmatpush1.bf16.msra.mxu0 %v1616
  %2320 = vmatprep.mubr.bf16.mxu0 %v471
  %2321 = vmatmul.mubr.bf16.gmra.mrb[0].mxu0 %v470
  %v2322 = vpop.f32.mrb[0].mxu0
  %v2323 = vadd.f32 %v2270, %v2322
  %v2324 = vpop.f32.mrb[0].mxu0
  %v2325 = vadd.f32 %v2272, %v2324
  %v2326 = vpop.f32.mrb[0].mxu0
  %v2327 = vadd.f32 %v2274, %v2326
  %v2328 = vpop.f32.mrb[0].mxu0
  %v2329 = vadd.f32 %v2276, %v2328
  %2330 = vmatprep.mubr.bf16.mxu0 %v489
  %2331 = vmatmul.mubr.bf16.gmra.mrb[0].mxu0 %v488
  %v2332 = vpop.f32.mrb[0].mxu0
  %v2333 = vadd.f32 %v2280, %v2332
  %v2334 = vpop.f32.mrb[0].mxu0
  %v2335 = vadd.f32 %v2282, %v2334
  %v2336 = vpop.f32.mrb[0].mxu0
  %v2337 = vadd.f32 %v2284, %v2336
  %v2338 = vpop.f32.mrb[0].mxu0
  %v2339 = vadd.f32 %v2286, %v2338
  %2340 = vdwg.mxu0
  %2341 = vmatprep.subr.bf16.mxu0 %v1619
  %2342 = vmatpush1.bf16.msra.mxu0 %v1618
  %2343 = vmatprep.subr.bf16.mxu0 %v1621
  %2344 = vmatpush1.bf16.msra.mxu0 %v1620
  %2345 = vmatprep.subr.bf16.mxu0 %v1623
  %2346 = vmatpush1.bf16.msra.mxu0 %v1622
  %2347 = vmatprep.subr.bf16.mxu0 %v1625
  %2348 = vmatpush1.bf16.msra.mxu0 %v1624
  %2349 = vmatprep.subr.bf16.mxu0 %v1627
  %2350 = vmatpush1.bf16.msra.mxu0 %v1626
  %2351 = vmatprep.subr.bf16.mxu0 %v1629
  %2352 = vmatpush1.bf16.msra.mxu0 %v1628
  %2353 = vmatprep.subr.bf16.mxu0 %v1631
  %2354 = vmatpush1.bf16.msra.mxu0 %v1630
  %2355 = vmatprep.subr.bf16.mxu0 %v1633
  %2356 = vmatpush1.bf16.msra.mxu0 %v1632
  %2357 = vmatprep.subr.bf16.mxu0 %v1635
  %2358 = vmatpush1.bf16.msra.mxu0 %v1634
  %2359 = vmatprep.subr.bf16.mxu0 %v1637
  %2360 = vmatpush1.bf16.msra.mxu0 %v1636
  %2361 = vmatprep.subr.bf16.mxu0 %v1639
  %2362 = vmatpush1.bf16.msra.mxu0 %v1638
  %2363 = vmatprep.subr.bf16.mxu0 %v1641
  %2364 = vmatpush1.bf16.msra.mxu0 %v1640
  %2365 = vmatprep.subr.bf16.mxu0 %v1643
  %2366 = vmatpush1.bf16.msra.mxu0 %v1642
  %2367 = vmatprep.subr.bf16.mxu0 %v1645
  %2368 = vmatpush1.bf16.msra.mxu0 %v1644
  %2369 = vmatprep.subr.bf16.mxu0 %v1647
  %2370 = vmatpush1.bf16.msra.mxu0 %v1646
  %2371 = vmatprep.subr.bf16.mxu0 %v1649
  %2372 = vmatpush1.bf16.msra.mxu0 %v1648
  %2373 = vmatprep.mubr.bf16.mxu0 %v473
  %2374 = vmatmul.mubr.bf16.gmra.mrb[0].mxu0 %v472
  %v2375 = vpop.f32.mrb[0].mxu0
  %v2376 = vadd.f32 %v2323, %v2375
  %v2377 = vpop.f32.mrb[0].mxu0
  %v2378 = vadd.f32 %v2325, %v2377
  %v2379 = vpop.f32.mrb[0].mxu0
  %v2380 = vadd.f32 %v2327, %v2379
  %v2381 = vpop.f32.mrb[0].mxu0
  %v2382 = vadd.f32 %v2329, %v2381
  %2383 = vmatprep.mubr.bf16.mxu0 %v491
  %2384 = vmatmul.mubr.bf16.gmra.mrb[0].mxu0 %v490
  %v2385 = vpop.f32.mrb[0].mxu0
  %v2386 = vadd.f32 %v2333, %v2385
  %v2387 = vpop.f32.mrb[0].mxu0
  %v2388 = vadd.f32 %v2335, %v2387
  %v2389 = vpop.f32.mrb[0].mxu0
  %v2390 = vadd.f32 %v2337, %v2389
  %v2391 = vpop.f32.mrb[0].mxu0
  %v2392 = vadd.f32 %v2339, %v2391
  %2393 = vdwg.mxu0
  %2394 = vmatprep.subr.bf16.mxu0 %v1651
  %2395 = vmatpush1.bf16.msra.mxu0 %v1650
  %2396 = vmatprep.subr.bf16.mxu0 %v1653
  %2397 = vmatpush1.bf16.msra.mxu0 %v1652
  %2398 = vmatprep.subr.bf16.mxu0 %v1655
  %2399 = vmatpush1.bf16.msra.mxu0 %v1654
  %2400 = vmatprep.subr.bf16.mxu0 %v1657
  %2401 = vmatpush1.bf16.msra.mxu0 %v1656
  %2402 = vmatprep.subr.bf16.mxu0 %v1659
  %2403 = vmatpush1.bf16.msra.mxu0 %v1658
  %2404 = vmatprep.subr.bf16.mxu0 %v1661
  %2405 = vmatpush1.bf16.msra.mxu0 %v1660
  %2406 = vmatprep.subr.bf16.mxu0 %v1663
  %2407 = vmatpush1.bf16.msra.mxu0 %v1662
  %2408 = vmatprep.subr.bf16.mxu0 %v1665
  %2409 = vmatpush1.bf16.msra.mxu0 %v1664
  %2410 = vmatprep.subr.bf16.mxu0 %v1667
  %2411 = vmatpush1.bf16.msra.mxu0 %v1666
  %2412 = vmatprep.subr.bf16.mxu0 %v1669
  %2413 = vmatpush1.bf16.msra.mxu0 %v1668
  %2414 = vmatprep.subr.bf16.mxu0 %v1671
  %2415 = vmatpush1.bf16.msra.mxu0 %v1670
  %2416 = vmatprep.subr.bf16.mxu0 %v1673
  %2417 = vmatpush1.bf16.msra.mxu0 %v1672
  %2418 = vmatprep.subr.bf16.mxu0 %v1675
  %2419 = vmatpush1.bf16.msra.mxu0 %v1674
  %2420 = vmatprep.subr.bf16.mxu0 %v1677
  %2421 = vmatpush1.bf16.msra.mxu0 %v1676
  %2422 = vmatprep.subr.bf16.mxu0 %v1679
  %2423 = vmatpush1.bf16.msra.mxu0 %v1678
  %2424 = vmatprep.subr.bf16.mxu0 %v1681
  %2425 = vmatpush1.bf16.msra.mxu0 %v1680
  %2426 = vmatprep.mubr.bf16.mxu0 %v475
  %2427 = vmatmul.mubr.bf16.gmra.mrb[0].mxu0 %v474
  %v2428 = vpop.f32.mrb[0].mxu0
  %v2429 = vadd.f32 %v2376, %v2428
  %v2430 = vpop.f32.mrb[0].mxu0
  %v2431 = vadd.f32 %v2378, %v2430
  %v2432 = vpop.f32.mrb[0].mxu0
  %v2433 = vadd.f32 %v2380, %v2432
  %v2434 = vpop.f32.mrb[0].mxu0
  %v2435 = vadd.f32 %v2382, %v2434
  %2436 = vmatprep.mubr.bf16.mxu0 %v493
  %2437 = vmatmul.mubr.bf16.gmra.mrb[0].mxu0 %v492
  %v2438 = vpop.f32.mrb[0].mxu0
  %v2439 = vadd.f32 %v2386, %v2438
  %v2440 = vpop.f32.mrb[0].mxu0
  %v2441 = vadd.f32 %v2388, %v2440
  %v2442 = vpop.f32.mrb[0].mxu0
  %v2443 = vadd.f32 %v2390, %v2442
  %v2444 = vpop.f32.mrb[0].mxu0
  %v2445 = vadd.f32 %v2392, %v2444
  %2446 = vdwg.mxu0
  %v2447 = vmax.f32 %v2429, 0.0
  %v2448 = vmax.f32 %v2431, 0.0
  %v2449 = vmax.f32 %v2433, 0.0
  %v2450 = vmax.f32 %v2435, 0.0
  %v2451 = vmax.f32 %v2439, 0.0
  %v2452 = vmax.f32 %v2441, 0.0
  %v2453 = vmax.f32 %v2443, 0.0
  %v2454 = vmax.f32 %v2445, 0.0
  %v2455 = vpack.c.bf16 %v2449, %v2447
  %v2456 = vpack.c.bf16 %v2450, %v2448
  %v2457 = vpack.c.bf16 %v2453, %v2451
  %v2458 = vpack.c.bf16 %v2454, %v2452
  %v2463 = vunpack.c.l.b16 %v2455
  %v2464 = vunpack.c.l.b16 %v2456
  %v2465 = vunpack.c.h.b16 %v2455
  %v2466 = vunpack.c.h.b16 %v2456
  %v2467 = vunpack.c.l.b16 %v2457
  %v2468 = vunpack.c.l.b16 %v2458
  %v2469 = vunpack.c.h.b16 %v2457
  %v2470 = vunpack.c.h.b16 %v2458
  %v2471 = vpack.c.b16 %v2464, %v2463
  %v2472 = vpack.c.b16 %v2466, %v2465
  %v2473 = vpack.c.b16 %v2468, %v2467
  %v2474 = vpack.c.b16 %v2470, %v2469
  %2479 = vst [vmem:[%s3] sm:$0xff] %v2471
  %2480 = vst [vmem:[%s3 + $0x8] sm:$0xff] %v2472
  %2481 = vst [vmem:[%s3 + $0x10] sm:$0xff] %v2473
  %2482 = vst [vmem:[%s3 + $0x18] sm:$0xff] %v2474
  // Predicated region
  $region14: #{encoder_forward.6} parent=0 // pred_check
    _
  $region15: #{encoder_forward.6} parent=0 // pred_check_branch
    %2484 = sbr.rel (0) target = $region17
  $region16: #{encoder_forward.6} parent=0 // pred_region
    _
  $region17: #{encoder_forward.6} parent=0 // pred_fallthru
    _
  // Predicated region
  $region18: #{encoder_forward.6} parent=0 // pred_check
    _
  $region19: #{encoder_forward.6} parent=0 // pred_check_branch
    %2486 = sbr.rel (0) target = $region21
  $region20: #{encoder_forward.6} parent=0 // pred_region
    _
  $region21: #{encoder_forward.6} parent=0 // pred_fallthru
    _

// kernel: encoder_forward.7
$region0: #{encoder_forward.7}
  #allocation0 [shape = 'u32[]', space=smem, size = 0x4, offset = 0x4, fixed_abs, tag = 'smem constant byte address 0x4 - core index']
  #allocation1 [shape = 'u32[144,128]{1,0:T(1,128)}', space=vmem, size = 0x12000, scoped, tag = 'internal scratch']
  %s0 = inlined_call_operand.vmem [shape: bf16[8,4096], index: 0, kind: input, shape index: {}]
  %s1 = inlined_call_operand.vmem [shape: bf16[4096,128], index: 1, kind: input, shape index: {}]
  %s2 = inlined_call_operand.vmem [shape: f32[1,128], index: 2, kind: input, shape index: {}]
  %s3 = inlined_call_operand.vmem [shape: bf16[128,128], index: 3, kind: input, shape index: {}]
  %s4 = inlined_call_operand.vmem [shape: f32[1,128], index: 4, kind: input, shape index: {}]
  %s5 = inlined_call_operand.vmem [shape: f32[8,128], index: 5, kind: output, shape index: {}]
  %s6 = sld [smem:[#allocation0]]
  $region30: #{encoder_forward.7} parent=0
    _
  %s8 = ssub.s32 1, %s6
  %s9 = scalar_select 0, %s8, %s6
  // Predicated region
  $region2: #{encoder_forward.7} parent=0 // pred_check
    _
  $region3: #{encoder_forward.7} parent=0 // pred_check_branch
    %11 = sbr.rel (0) target = $region5
  $region4: #{encoder_forward.7} parent=0 // pred_region
    _
  $region5: #{encoder_forward.7} parent=0 // pred_fallthru
    _
  // Predicated region
  $region6: #{encoder_forward.7} parent=0 // pred_check
    _
  $region7: #{encoder_forward.7} parent=0 // pred_check_branch
    %13 = sbr.rel (0) target = $region9
  $region8: #{encoder_forward.7} parent=0 // pred_region
    _
  $region9: #{encoder_forward.7} parent=0 // pred_fallthru
    _
  // Predicated region
  $region10: #{encoder_forward.7} parent=0 // pred_check
    _
  $region11: #{encoder_forward.7} parent=0 // pred_check_branch
    %15 = sbr.rel (0) target = $region13
  $region12: #{encoder_forward.7} parent=0 // pred_region
    _
  $region13: #{encoder_forward.7} parent=0 // pred_fallthru
    _
  // Predicated region
  $region14: #{encoder_forward.7} parent=0 // pred_check
    _
  $region15: #{encoder_forward.7} parent=0 // pred_check_branch
    %17 = sbr.rel (0) target = $region17
  $region16: #{encoder_forward.7} parent=0 // pred_region
    _
  $region17: #{encoder_forward.7} parent=0 // pred_fallthru
    _
  // Predicated region
  $region18: #{encoder_forward.7} parent=0 // pred_check
    _
  $region19: #{encoder_forward.7} parent=0 // pred_check_branch
    %19 = sbr.rel (0) target = $region21
  $region20: #{encoder_forward.7} parent=0 // pred_region
    _
  $region21: #{encoder_forward.7} parent=0 // pred_fallthru
    _
  %v21 = vld [vmem:[%s0] sm:$0xff]
  %v22 = vld [vmem:[%s0 + $0x8] sm:$0xff]
  %v23 = vld [vmem:[%s0 + $0x10] sm:$0xff]
  %v24 = vld [vmem:[%s0 + $0x18] sm:$0xff]
  %v25 = vld [vmem:[%s0 + $0x20] sm:$0xff]
  %v26 = vld [vmem:[%s0 + $0x28] sm:$0xff]
  %v27 = vld [vmem:[%s0 + $0x30] sm:$0xff]
  %v28 = vld [vmem:[%s0 + $0x38] sm:$0xff]
  %v29 = vld [vmem:[%s0 + $0x40] sm:$0xff]
  %v30 = vld [vmem:[%s0 + $0x48] sm:$0xff]
  %v31 = vld [vmem:[%s0 + $0x50] sm:$0xff]
  %v32 = vld [vmem:[%s0 + $0x58] sm:$0xff]
  %v33 = vld [vmem:[%s0 + $0x60] sm:$0xff]
  %v34 = vld [vmem:[%s0 + $0x68] sm:$0xff]
  %v35 = vld [vmem:[%s0 + $0x70] sm:$0xff]
  %v36 = vld [vmem:[%s0 + $0x78] sm:$0xff]
  %v37 = vld [vmem:[%s1] sm:$0xf]
  %v38 = vld [vmem:[%s1 + $0x4] sm:$0xf]
  %v39 = vld [vmem:[%s1 + $0x8] sm:$0xf]
  %v40 = vld [vmem:[%s1 + $0xc] sm:$0xf]
  %v41 = vld [vmem:[%s1 + $0x10] sm:$0xf]
  %v42 = vld [vmem:[%s1 + $0x14] sm:$0xf]
  %v43 = vld [vmem:[%s1 + $0x18] sm:$0xf]
  %v44 = vld [vmem:[%s1 + $0x1c] sm:$0xf]
  %v45 = vld [vmem:[%s1 + $0x20] sm:$0xf]
  %v46 = vld [vmem:[%s1 + $0x24] sm:$0xf]
  %v47 = vld [vmem:[%s1 + $0x28] sm:$0xf]
  %v48 = vld [vmem:[%s1 + $0x2c] sm:$0xf]
  %v49 = vld [vmem:[%s1 + $0x30] sm:$0xf]
  %v50 = vld [vmem:[%s1 + $0x34] sm:$0xf]
  %v51 = vld [vmem:[%s1 + $0x38] sm:$0xf]
  %v52 = vld [vmem:[%s1 + $0x3c] sm:$0xf]
  %v53 = vld [vmem:[%s1 + $0x40] sm:$0xf]
  %v54 = vld [vmem:[%s1 + $0x44] sm:$0xf]
  %v55 = vld [vmem:[%s1 + $0x48] sm:$0xf]
  %v56 = vld [vmem:[%s1 + $0x4c] sm:$0xf]
  %v57 = vld [vmem:[%s1 + $0x50] sm:$0xf]
  %v58 = vld [vmem:[%s1 + $0x54] sm:$0xf]
  %v59 = vld [vmem:[%s1 + $0x58] sm:$0xf]
  %v60 = vld [vmem:[%s1 + $0x5c] sm:$0xf]
  %v61 = vld [vmem:[%s1 + $0x60] sm:$0xf]
  %v62 = vld [vmem:[%s1 + $0x64] sm:$0xf]
  %v63 = vld [vmem:[%s1 + $0x68] sm:$0xf]
  %v64 = vld [vmem:[%s1 + $0x6c] sm:$0xf]
  %v65 = vld [vmem:[%s1 + $0x70] sm:$0xf]
  %v66 = vld [vmem:[%s1 + $0x74] sm:$0xf]
  %v67 = vld [vmem:[%s1 + $0x78] sm:$0xf]
  %v68 = vld [vmem:[%s1 + $0x7c] sm:$0xf]
  %v69 = vld [vmem:[%s1 + $0x80] sm:$0xf]
  %v70 = vld [vmem:[%s1 + $0x84] sm:$0xf]
  %v71 = vld [vmem:[%s1 + $0x88] sm:$0xf]
  %v72 = vld [vmem:[%s1 + $0x8c] sm:$0xf]
  %v73 = vld [vmem:[%s1 + $0x90] sm:$0xf]
  %v74 = vld [vmem:[%s1 + $0x94] sm:$0xf]
  %v75 = vld [vmem:[%s1 + $0x98] sm:$0xf]
  %v76 = vld [vmem:[%s1 + $0x9c] sm:$0xf]
  %v77 = vld [vmem:[%s1 + $0xa0] sm:$0xf]
  %v78 = vld [vmem:[%s1 + $0xa4] sm:$0xf]
  %v79 = vld [vmem:[%s1 + $0xa8] sm:$0xf]
  %v80 = vld [vmem:[%s1 + $0xac] sm:$0xf]
  %v81 = vld [vmem:[%s1 + $0xb0] sm:$0xf]
  %v82 = vld [vmem:[%s1 + $0xb4] sm:$0xf]
  %v83 = vld [vmem:[%s1 + $0xb8] sm:$0xf]
  %v84 = vld [vmem:[%s1 + $0xbc] sm:$0xf]
  %v85 = vld [vmem:[%s1 + $0xc0] sm:$0xf]
  %v86 = vld [vmem:[%s1 + $0xc4] sm:$0xf]
  %v87 = vld [vmem:[%s1 + $0xc8] sm:$0xf]
  %v88 = vld [vmem:[%s1 + $0xcc] sm:$0xf]
  %v89 = vld [vmem:[%s1 + $0xd0] sm:$0xf]
  %v90 = vld [vmem:[%s1 + $0xd4] sm:$0xf]
  %v91 = vld [vmem:[%s1 + $0xd8] sm:$0xf]
  %v92 = vld [vmem:[%s1 + $0xdc] sm:$0xf]
  %v93 = vld [vmem:[%s1 + $0xe0] sm:$0xf]
  %v94 = vld [vmem:[%s1 + $0xe4] sm:$0xf]
  %v95 = vld [vmem:[%s1 + $0xe8] sm:$0xf]
  %v96 = vld [vmem:[%s1 + $0xec] sm:$0xf]
  %v97 = vld [vmem:[%s1 + $0xf0] sm:$0xf]
  %v98 = vld [vmem:[%s1 + $0xf4] sm:$0xf]
  %v99 = vld [vmem:[%s1 + $0xf8] sm:$0xf]
  %v100 = vld [vmem:[%s1 + $0xfc] sm:$0xf]
  %v101 = vld [vmem:[%s1 + $0x100] sm:$0xf]
  %v102 = vld [vmem:[%s1 + $0x104] sm:$0xf]
  %v103 = vld [vmem:[%s1 + $0x108] sm:$0xf]
  %v104 = vld [vmem:[%s1 + $0x10c] sm:$0xf]
  %v105 = vld [vmem:[%s1 + $0x110] sm:$0xf]
  %v106 = vld [vmem:[%s1 + $0x114] sm:$0xf]
  %v107 = vld [vmem:[%s1 + $0x118] sm:$0xf]
  %v108 = vld [vmem:[%s1 + $0x11c] sm:$0xf]
  %v109 = vld [vmem:[%s1 + $0x120] sm:$0xf]
  %v110 = vld [vmem:[%s1 + $0x124] sm:$0xf]
  %v111 = vld [vmem:[%s1 + $0x128] sm:$0xf]
  %v112 = vld [vmem:[%s1 + $0x12c] sm:$0xf]
  %v113 = vld [vmem:[%s1 + $0x130] sm:$0xf]
  %v114 = vld [vmem:[%s1 + $0x134] sm:$0xf]
  %v115 = vld [vmem:[%s1 + $0x138] sm:$0xf]
  %v116 = vld [vmem:[%s1 + $0x13c] sm:$0xf]
  %v117 = vld [vmem:[%s1 + $0x140] sm:$0xf]
  %v118 = vld [vmem:[%s1 + $0x144] sm:$0xf]
  %v119 = vld [vmem:[%s1 + $0x148] sm:$0xf]
  %v120 = vld [vmem:[%s1 + $0x14c] sm:$0xf]
  %v121 = vld [vmem:[%s1 + $0x150] sm:$0xf]
  %v122 = vld [vmem:[%s1 + $0x154] sm:$0xf]
  %v123 = vld [vmem:[%s1 + $0x158] sm:$0xf]
  %v124 = vld [vmem:[%s1 + $0x15c] sm:$0xf]
  %v125 = vld [vmem:[%s1 + $0x160] sm:$0xf]
  %v126 = vld [vmem:[%s1 + $0x164] sm:$0xf]
  %v127 = vld [vmem:[%s1 + $0x168] sm:$0xf]
  %v128 = vld [vmem:[%s1 + $0x16c] sm:$0xf]
  %v129 = vld [vmem:[%s1 + $0x170] sm:$0xf]
  %v130 = vld [vmem:[%s1 + $0x174] sm:$0xf]
  %v131 = vld [vmem:[%s1 + $0x178] sm:$0xf]
  %v132 = vld [vmem:[%s1 + $0x17c] sm:$0xf]
  %v133 = vld [vmem:[%s1 + $0x180] sm:$0xf]
  %v134 = vld [vmem:[%s1 + $0x184] sm:$0xf]
  %v135 = vld [vmem:[%s1 + $0x188] sm:$0xf]
  %v136 = vld [vmem:[%s1 + $0x18c] sm:$0xf]
  %v137 = vld [vmem:[%s1 + $0x190] sm:$0xf]
  %v138 = vld [vmem:[%s1 + $0x194] sm:$0xf]
  %v139 = vld [vmem:[%s1 + $0x198] sm:$0xf]
  %v140 = vld [vmem:[%s1 + $0x19c] sm:$0xf]
  %v141 = vld [vmem:[%s1 + $0x1a0] sm:$0xf]
  %v142 = vld [vmem:[%s1 + $0x1a4] sm:$0xf]
  %v143 = vld [vmem:[%s1 + $0x1a8] sm:$0xf]
  %v144 = vld [vmem:[%s1 + $0x1ac] sm:$0xf]
  %v145 = vld [vmem:[%s1 + $0x1b0] sm:$0xf]
  %v146 = vld [vmem:[%s1 + $0x1b4] sm:$0xf]
  %v147 = vld [vmem:[%s1 + $0x1b8] sm:$0xf]
  %v148 = vld [vmem:[%s1 + $0x1bc] sm:$0xf]
  %v149 = vld [vmem:[%s1 + $0x1c0] sm:$0xf]
  %v150 = vld [vmem:[%s1 + $0x1c4] sm:$0xf]
  %v151 = vld [vmem:[%s1 + $0x1c8] sm:$0xf]
  %v152 = vld [vmem:[%s1 + $0x1cc] sm:$0xf]
  %v153 = vld [vmem:[%s1 + $0x1d0] sm:$0xf]
  %v154 = vld [vmem:[%s1 + $0x1d4] sm:$0xf]
  %v155 = vld [vmem:[%s1 + $0x1d8] sm:$0xf]
  %v156 = vld [vmem:[%s1 + $0x1dc] sm:$0xf]
  %v157 = vld [vmem:[%s1 + $0x1e0] sm:$0xf]
  %v158 = vld [vmem:[%s1 + $0x1e4] sm:$0xf]
  %v159 = vld [vmem:[%s1 + $0x1e8] sm:$0xf]
  %v160 = vld [vmem:[%s1 + $0x1ec] sm:$0xf]
  %v161 = vld [vmem:[%s1 + $0x1f0] sm:$0xf]
  %v162 = vld [vmem:[%s1 + $0x1f4] sm:$0xf]
  %v163 = vld [vmem:[%s1 + $0x1f8] sm:$0xf]
  %v164 = vld [vmem:[%s1 + $0x1fc] sm:$0xf]
  %v165 = vld [vmem:[%s1 + $0x200] sm:$0xf]
  %v166 = vld [vmem:[%s1 + $0x204] sm:$0xf]
  %v167 = vld [vmem:[%s1 + $0x208] sm:$0xf]
  %v168 = vld [vmem:[%s1 + $0x20c] sm:$0xf]
  %v169 = vld [vmem:[%s1 + $0x210] sm:$0xf]
  %v170 = vld [vmem:[%s1 + $0x214] sm:$0xf]
  %v171 = vld [vmem:[%s1 + $0x218] sm:$0xf]
  %v172 = vld [vmem:[%s1 + $0x21c] sm:$0xf]
  %v173 = vld [vmem:[%s1 + $0x220] sm:$0xf]
  %v174 = vld [vmem:[%s1 + $0x224] sm:$0xf]
  %v175 = vld [vmem:[%s1 + $0x228] sm:$0xf]
  %v176 = vld [vmem:[%s1 + $0x22c] sm:$0xf]
  %v177 = vld [vmem:[%s1 + $0x230] sm:$0xf]
  %v178 = vld [vmem:[%s1 + $0x234] sm:$0xf]
  %v179 = vld [vmem:[%s1 + $0x238] sm:$0xf]
  %v180 = vld [vmem:[%s1 + $0x23c] sm:$0xf]
  %v181 = vld [vmem:[%s1 + $0x240] sm:$0xf]
  %v182 = vld [vmem:[%s1 + $0x244] sm:$0xf]
  %v183 = vld [vmem:[%s1 + $0x248] sm:$0xf]
  %v184 = vld [vmem:[%s1 + $0x24c] sm:$0xf]
  %v185 = vld [vmem:[%s1 + $0x250] sm:$0xf]
  %v186 = vld [vmem:[%s1 + $0x254] sm:$0xf]
  %v187 = vld [vmem:[%s1 + $0x258] sm:$0xf]
  %v188 = vld [vmem:[%s1 + $0x25c] sm:$0xf]
  %v189 = vld [vmem:[%s1 + $0x260] sm:$0xf]
  %v190 = vld [vmem:[%s1 + $0x264] sm:$0xf]
  %v191 = vld [vmem:[%s1 + $0x268] sm:$0xf]
  %v192 = vld [vmem:[%s1 + $0x26c] sm:$0xf]
  %v193 = vld [vmem:[%s1 + $0x270] sm:$0xf]
  %v194 = vld [vmem:[%s1 + $0x274] sm:$0xf]
  %v195 = vld [vmem:[%s1 + $0x278] sm:$0xf]
  %v196 = vld [vmem:[%s1 + $0x27c] sm:$0xf]
  %v197 = vld [vmem:[%s1 + $0x280] sm:$0xf]
  %v198 = vld [vmem:[%s1 + $0x284] sm:$0xf]
  %v199 = vld [vmem:[%s1 + $0x288] sm:$0xf]
  %v200 = vld [vmem:[%s1 + $0x28c] sm:$0xf]
  %v201 = vld [vmem:[%s1 + $0x290] sm:$0xf]
  %v202 = vld [vmem:[%s1 + $0x294] sm:$0xf]
  %v203 = vld [vmem:[%s1 + $0x298] sm:$0xf]
  %v204 = vld [vmem:[%s1 + $0x29c] sm:$0xf]
  %v205 = vld [vmem:[%s1 + $0x2a0] sm:$0xf]
  %v206 = vld [vmem:[%s1 + $0x2a4] sm:$0xf]
  %v207 = vld [vmem:[%s1 + $0x2a8] sm:$0xf]
  %v208 = vld [vmem:[%s1 + $0x2ac] sm:$0xf]
  %v209 = vld [vmem:[%s1 + $0x2b0] sm:$0xf]
  %v210 = vld [vmem:[%s1 + $0x2b4] sm:$0xf]
  %v211 = vld [vmem:[%s1 + $0x2b8] sm:$0xf]
  %v212 = vld [vmem:[%s1 + $0x2bc] sm:$0xf]
  %v213 = vld [vmem:[%s1 + $0x2c0] sm:$0xf]
  %v214 = vld [vmem:[%s1 + $0x2c4] sm:$0xf]
  %v215 = vld [vmem:[%s1 + $0x2c8] sm:$0xf]
  %v216 = vld [vmem:[%s1 + $0x2cc] sm:$0xf]
  %v217 = vld [vmem:[%s1 + $0x2d0] sm:$0xf]
  %v218 = vld [vmem:[%s1 + $0x2d4] sm:$0xf]
  %v219 = vld [vmem:[%s1 + $0x2d8] sm:$0xf]
  %v220 = vld [vmem:[%s1 + $0x2dc] sm:$0xf]
  %v221 = vld [vmem:[%s1 + $0x2e0] sm:$0xf]
  %v222 = vld [vmem:[%s1 + $0x2e4] sm:$0xf]
  %v223 = vld [vmem:[%s1 + $0x2e8] sm:$0xf]
  %v224 = vld [vmem:[%s1 + $0x2ec] sm:$0xf]
  %v225 = vld [vmem:[%s1 + $0x2f0] sm:$0xf]
  %v226 = vld [vmem:[%s1 + $0x2f4] sm:$0xf]
  %v227 = vld [vmem:[%s1 + $0x2f8] sm:$0xf]
  %v228 = vld [vmem:[%s1 + $0x2fc] sm:$0xf]
  %v229 = vld [vmem:[%s1 + $0x300] sm:$0xf]
  %v230 = vld [vmem:[%s1 + $0x304] sm:$0xf]
  %v231 = vld [vmem:[%s1 + $0x308] sm:$0xf]
  %v232 = vld [vmem:[%s1 + $0x30c] sm:$0xf]
  %v233 = vld [vmem:[%s1 + $0x310] sm:$0xf]
  %v234 = vld [vmem:[%s1 + $0x314] sm:$0xf]
  %v235 = vld [vmem:[%s1 + $0x318] sm:$0xf]
  %v236 = vld [vmem:[%s1 + $0x31c] sm:$0xf]
  %v237 = vld [vmem:[%s1 + $0x320] sm:$0xf]
  %v238 = vld [vmem:[%s1 + $0x324] sm:$0xf]
  %v239 = vld [vmem:[%s1 + $0x328] sm:$0xf]
  %v240 = vld [vmem:[%s1 + $0x32c] sm:$0xf]
  %v241 = vld [vmem:[%s1 + $0x330] sm:$0xf]
  %v242 = vld [vmem:[%s1 + $0x334] sm:$0xf]
  %v243 = vld [vmem:[%s1 + $0x338] sm:$0xf]
  %v244 = vld [vmem:[%s1 + $0x33c] sm:$0xf]
  %v245 = vld [vmem:[%s1 + $0x340] sm:$0xf]
  %v246 = vld [vmem:[%s1 + $0x344] sm:$0xf]
  %v247 = vld [vmem:[%s1 + $0x348] sm:$0xf]
  %v248 = vld [vmem:[%s1 + $0x34c] sm:$0xf]
  %v249 = vld [vmem:[%s1 + $0x350] sm:$0xf]
  %v250 = vld [vmem:[%s1 + $0x354] sm:$0xf]
  %v251 = vld [vmem:[%s1 + $0x358] sm:$0xf]
  %v252 = vld [vmem:[%s1 + $0x35c] sm:$0xf]
  %v253 = vld [vmem:[%s1 + $0x360] sm:$0xf]
  %v254 = vld [vmem:[%s1 + $0x364] sm:$0xf]
  %v255 = vld [vmem:[%s1 + $0x368] sm:$0xf]
  %v256 = vld [vmem:[%s1 + $0x36c] sm:$0xf]
  %v257 = vld [vmem:[%s1 + $0x370] sm:$0xf]
  %v258 = vld [vmem:[%s1 + $0x374] sm:$0xf]
  %v259 = vld [vmem:[%s1 + $0x378] sm:$0xf]
  %v260 = vld [vmem:[%s1 + $0x37c] sm:$0xf]
  %v261 = vld [vmem:[%s1 + $0x380] sm:$0xf]
  %v262 = vld [vmem:[%s1 + $0x384] sm:$0xf]
  %v263 = vld [vmem:[%s1 + $0x388] sm:$0xf]
  %v264 = vld [vmem:[%s1 + $0x38c] sm:$0xf]
  %v265 = vld [vmem:[%s1 + $0x390] sm:$0xf]
  %v266 = vld [vmem:[%s1 + $0x394] sm:$0xf]
  %v267 = vld [vmem:[%s1 + $0x398] sm:$0xf]
  %v268 = vld [vmem:[%s1 + $0x39c] sm:$0xf]
  %v269 = vld [vmem:[%s1 + $0x3a0] sm:$0xf]
  %v270 = vld [vmem:[%s1 + $0x3a4] sm:$0xf]
  %v271 = vld [vmem:[%s1 + $0x3a8] sm:$0xf]
  %v272 = vld [vmem:[%s1 + $0x3ac] sm:$0xf]
  %v273 = vld [vmem:[%s1 + $0x3b0] sm:$0xf]
  %v274 = vld [vmem:[%s1 + $0x3b4] sm:$0xf]
  %v275 = vld [vmem:[%s1 + $0x3b8] sm:$0xf]
  %v276 = vld [vmem:[%s1 + $0x3bc] sm:$0xf]
  %v277 = vld [vmem:[%s1 + $0x3c0] sm:$0xf]
  %v278 = vld [vmem:[%s1 + $0x3c4] sm:$0xf]
  %v279 = vld [vmem:[%s1 + $0x3c8] sm:$0xf]
  %v280 = vld [vmem:[%s1 + $0x3cc] sm:$0xf]
  %v281 = vld [vmem:[%s1 + $0x3d0] sm:$0xf]
  %v282 = vld [vmem:[%s1 + $0x3d4] sm:$0xf]
  %v283 = vld [vmem:[%s1 + $0x3d8] sm:$0xf]
  %v284 = vld [vmem:[%s1 + $0x3dc] sm:$0xf]
  %v285 = vld [vmem:[%s1 + $0x3e0] sm:$0xf]
  %v286 = vld [vmem:[%s1 + $0x3e4] sm:$0xf]
  %v287 = vld [vmem:[%s1 + $0x3e8] sm:$0xf]
  %v288 = vld [vmem:[%s1 + $0x3ec] sm:$0xf]
  %v289 = vld [vmem:[%s1 + $0x3f0] sm:$0xf]
  %v290 = vld [vmem:[%s1 + $0x3f4] sm:$0xf]
  %v291 = vld [vmem:[%s1 + $0x3f8] sm:$0xf]
  %v292 = vld [vmem:[%s1 + $0x3fc] sm:$0xf]
  %v293 = vld [vmem:[%s1 + $0x400] sm:$0xf]
  %v294 = vld [vmem:[%s1 + $0x404] sm:$0xf]
  %v295 = vld [vmem:[%s1 + $0x408] sm:$0xf]
  %v296 = vld [vmem:[%s1 + $0x40c] sm:$0xf]
  %v297 = vld [vmem:[%s1 + $0x410] sm:$0xf]
  %v298 = vld [vmem:[%s1 + $0x414] sm:$0xf]
  %v299 = vld [vmem:[%s1 + $0x418] sm:$0xf]
  %v300 = vld [vmem:[%s1 + $0x41c] sm:$0xf]
  %v301 = vld [vmem:[%s1 + $0x420] sm:$0xf]
  %v302 = vld [vmem:[%s1 + $0x424] sm:$0xf]
  %v303 = vld [vmem:[%s1 + $0x428] sm:$0xf]
  %v304 = vld [vmem:[%s1 + $0x42c] sm:$0xf]
  %v305 = vld [vmem:[%s1 + $0x430] sm:$0xf]
  %v306 = vld [vmem:[%s1 + $0x434] sm:$0xf]
  %v307 = vld [vmem:[%s1 + $0x438] sm:$0xf]
  %v308 = vld [vmem:[%s1 + $0x43c] sm:$0xf]
  %v309 = vld [vmem:[%s1 + $0x440] sm:$0xf]
  %v310 = vld [vmem:[%s1 + $0x444] sm:$0xf]
  %v311 = vld [vmem:[%s1 + $0x448] sm:$0xf]
  %v312 = vld [vmem:[%s1 + $0x44c] sm:$0xf]
  %v313 = vld [vmem:[%s1 + $0x450] sm:$0xf]
  %v314 = vld [vmem:[%s1 + $0x454] sm:$0xf]
  %v315 = vld [vmem:[%s1 + $0x458] sm:$0xf]
  %v316 = vld [vmem:[%s1 + $0x45c] sm:$0xf]
  %v317 = vld [vmem:[%s1 + $0x460] sm:$0xf]
  %v318 = vld [vmem:[%s1 + $0x464] sm:$0xf]
  %v319 = vld [vmem:[%s1 + $0x468] sm:$0xf]
  %v320 = vld [vmem:[%s1 + $0x46c] sm:$0xf]
  %v321 = vld [vmem:[%s1 + $0x470] sm:$0xf]
  %v322 = vld [vmem:[%s1 + $0x474] sm:$0xf]
  %v323 = vld [vmem:[%s1 + $0x478] sm:$0xf]
  %v324 = vld [vmem:[%s1 + $0x47c] sm:$0xf]
  %v325 = vld [vmem:[%s1 + $0x480] sm:$0xf]
  %v326 = vld [vmem:[%s1 + $0x484] sm:$0xf]
  %v327 = vld [vmem:[%s1 + $0x488] sm:$0xf]
  %v328 = vld [vmem:[%s1 + $0x48c] sm:$0xf]
  %v329 = vld [vmem:[%s1 + $0x490] sm:$0xf]
  %v330 = vld [vmem:[%s1 + $0x494] sm:$0xf]
  %v331 = vld [vmem:[%s1 + $0x498] sm:$0xf]
  %v332 = vld [vmem:[%s1 + $0x49c] sm:$0xf]
  %v333 = vld [vmem:[%s1 + $0x4a0] sm:$0xf]
  %v334 = vld [vmem:[%s1 + $0x4a4] sm:$0xf]
  %v335 = vld [vmem:[%s1 + $0x4a8] sm:$0xf]
  %v336 = vld [vmem:[%s1 + $0x4ac] sm:$0xf]
  %v337 = vld [vmem:[%s1 + $0x4b0] sm:$0xf]
  %v338 = vld [vmem:[%s1 + $0x4b4] sm:$0xf]
  %v339 = vld [vmem:[%s1 + $0x4b8] sm:$0xf]
  %v340 = vld [vmem:[%s1 + $0x4bc] sm:$0xf]
  %v341 = vld [vmem:[%s1 + $0x4c0] sm:$0xf]
  %v342 = vld [vmem:[%s1 + $0x4c4] sm:$0xf]
  %v343 = vld [vmem:[%s1 + $0x4c8] sm:$0xf]
  %v344 = vld [vmem:[%s1 + $0x4cc] sm:$0xf]
  %v345 = vld [vmem:[%s1 + $0x4d0] sm:$0xf]
  %v346 = vld [vmem:[%s1 + $0x4d4] sm:$0xf]
  %v347 = vld [vmem:[%s1 + $0x4d8] sm:$0xf]
  %v348 = vld [vmem:[%s1 + $0x4dc] sm:$0xf]
  %v349 = vld [vmem:[%s1 + $0x4e0] sm:$0xf]
  %v350 = vld [vmem:[%s1 + $0x4e4] sm:$0xf]
  %v351 = vld [vmem:[%s1 + $0x4e8] sm:$0xf]
  %v352 = vld [vmem:[%s1 + $0x4ec] sm:$0xf]
  %v353 = vld [vmem:[%s1 + $0x4f0] sm:$0xf]
  %v354 = vld [vmem:[%s1 + $0x4f4] sm:$0xf]
  %v355 = vld [vmem:[%s1 + $0x4f8] sm:$0xf]
  %v356 = vld [vmem:[%s1 + $0x4fc] sm:$0xf]
  %v357 = vld [vmem:[%s1 + $0x500] sm:$0xf]
  %v358 = vld [vmem:[%s1 + $0x504] sm:$0xf]
  %v359 = vld [vmem:[%s1 + $0x508] sm:$0xf]
  %v360 = vld [vmem:[%s1 + $0x50c] sm:$0xf]
  %v361 = vld [vmem:[%s1 + $0x510] sm:$0xf]
  %v362 = vld [vmem:[%s1 + $0x514] sm:$0xf]
  %v363 = vld [vmem:[%s1 + $0x518] sm:$0xf]
  %v364 = vld [vmem:[%s1 + $0x51c] sm:$0xf]
  %v365 = vld [vmem:[%s1 + $0x520] sm:$0xf]
  %v366 = vld [vmem:[%s1 + $0x524] sm:$0xf]
  %v367 = vld [vmem:[%s1 + $0x528] sm:$0xf]
  %v368 = vld [vmem:[%s1 + $0x52c] sm:$0xf]
  %v369 = vld [vmem:[%s1 + $0x530] sm:$0xf]
  %v370 = vld [vmem:[%s1 + $0x534] sm:$0xf]
  %v371 = vld [vmem:[%s1 + $0x538] sm:$0xf]
  %v372 = vld [vmem:[%s1 + $0x53c] sm:$0xf]
  %v373 = vld [vmem:[%s1 + $0x540] sm:$0xf]
  %v374 = vld [vmem:[%s1 + $0x544] sm:$0xf]
  %v375 = vld [vmem:[%s1 + $0x548] sm:$0xf]
  %v376 = vld [vmem:[%s1 + $0x54c] sm:$0xf]
  %v377 = vld [vmem:[%s1 + $0x550] sm:$0xf]
  %v378 = vld [vmem:[%s1 + $0x554] sm:$0xf]
  %v379 = vld [vmem:[%s1 + $0x558] sm:$0xf]
  %v380 = vld [vmem:[%s1 + $0x55c] sm:$0xf]
  %v381 = vld [vmem:[%s1 + $0x560] sm:$0xf]
  %v382 = vld [vmem:[%s1 + $0x564] sm:$0xf]
  %v383 = vld [vmem:[%s1 + $0x568] sm:$0xf]
  %v384 = vld [vmem:[%s1 + $0x56c] sm:$0xf]
  %v385 = vld [vmem:[%s1 + $0x570] sm:$0xf]
  %v386 = vld [vmem:[%s1 + $0x574] sm:$0xf]
  %v387 = vld [vmem:[%s1 + $0x578] sm:$0xf]
  %v388 = vld [vmem:[%s1 + $0x57c] sm:$0xf]
  %v389 = vld [vmem:[%s1 + $0x580] sm:$0xf]
  %v390 = vld [vmem:[%s1 + $0x584] sm:$0xf]
  %v391 = vld [vmem:[%s1 + $0x588] sm:$0xf]
  %v392 = vld [vmem:[%s1 + $0x58c] sm:$0xf]
  %v393 = vld [vmem:[%s1 + $0x590] sm:$0xf]
  %v394 = vld [vmem:[%s1 + $0x594] sm:$0xf]
  %v395 = vld [vmem:[%s1 + $0x598] sm:$0xf]
  %v396 = vld [vmem:[%s1 + $0x59c] sm:$0xf]
  %v397 = vld [vmem:[%s1 + $0x5a0] sm:$0xf]
  %v398 = vld [vmem:[%s1 + $0x5a4] sm:$0xf]
  %v399 = vld [vmem:[%s1 + $0x5a8] sm:$0xf]
  %v400 = vld [vmem:[%s1 + $0x5ac] sm:$0xf]
  %v401 = vld [vmem:[%s1 + $0x5b0] sm:$0xf]
  %v402 = vld [vmem:[%s1 + $0x5b4] sm:$0xf]
  %v403 = vld [vmem:[%s1 + $0x5b8] sm:$0xf]
  %v404 = vld [vmem:[%s1 + $0x5bc] sm:$0xf]
  %v405 = vld [vmem:[%s1 + $0x5c0] sm:$0xf]
  %v406 = vld [vmem:[%s1 + $0x5c4] sm:$0xf]
  %v407 = vld [vmem:[%s1 + $0x5c8] sm:$0xf]
  %v408 = vld [vmem:[%s1 + $0x5cc] sm:$0xf]
  %v409 = vld [vmem:[%s1 + $0x5d0] sm:$0xf]
  %v410 = vld [vmem:[%s1 + $0x5d4] sm:$0xf]
  %v411 = vld [vmem:[%s1 + $0x5d8] sm:$0xf]
  %v412 = vld [vmem:[%s1 + $0x5dc] sm:$0xf]
  %v413 = vld [vmem:[%s1 + $0x5e0] sm:$0xf]
  %v414 = vld [vmem:[%s1 + $0x5e4] sm:$0xf]
  %v415 = vld [vmem:[%s1 + $0x5e8] sm:$0xf]
  %v416 = vld [vmem:[%s1 + $0x5ec] sm:$0xf]
  %v417 = vld [vmem:[%s1 + $0x5f0] sm:$0xf]
  %v418 = vld [vmem:[%s1 + $0x5f4] sm:$0xf]
  %v419 = vld [vmem:[%s1 + $0x5f8] sm:$0xf]
  %v420 = vld [vmem:[%s1 + $0x5fc] sm:$0xf]
  %v421 = vld [vmem:[%s1 + $0x600] sm:$0xf]
  %v422 = vld [vmem:[%s1 + $0x604] sm:$0xf]
  %v423 = vld [vmem:[%s1 + $0x608] sm:$0xf]
  %v424 = vld [vmem:[%s1 + $0x60c] sm:$0xf]
  %v425 = vld [vmem:[%s1 + $0x610] sm:$0xf]
  %v426 = vld [vmem:[%s1 + $0x614] sm:$0xf]
  %v427 = vld [vmem:[%s1 + $0x618] sm:$0xf]
  %v428 = vld [vmem:[%s1 + $0x61c] sm:$0xf]
  %v429 = vld [vmem:[%s1 + $0x620] sm:$0xf]
  %v430 = vld [vmem:[%s1 + $0x624] sm:$0xf]
  %v431 = vld [vmem:[%s1 + $0x628] sm:$0xf]
  %v432 = vld [vmem:[%s1 + $0x62c] sm:$0xf]
  %v433 = vld [vmem:[%s1 + $0x630] sm:$0xf]
  %v434 = vld [vmem:[%s1 + $0x634] sm:$0xf]
  %v435 = vld [vmem:[%s1 + $0x638] sm:$0xf]
  %v436 = vld [vmem:[%s1 + $0x63c] sm:$0xf]
  %v437 = vld [vmem:[%s1 + $0x640] sm:$0xf]
  %v438 = vld [vmem:[%s1 + $0x644] sm:$0xf]
  %v439 = vld [vmem:[%s1 + $0x648] sm:$0xf]
  %v440 = vld [vmem:[%s1 + $0x64c] sm:$0xf]
  %v441 = vld [vmem:[%s1 + $0x650] sm:$0xf]
  %v442 = vld [vmem:[%s1 + $0x654] sm:$0xf]
  %v443 = vld [vmem:[%s1 + $0x658] sm:$0xf]
  %v444 = vld [vmem:[%s1 + $0x65c] sm:$0xf]
  %v445 = vld [vmem:[%s1 + $0x660] sm:$0xf]
  %v446 = vld [vmem:[%s1 + $0x664] sm:$0xf]
  %v447 = vld [vmem:[%s1 + $0x668] sm:$0xf]
  %v448 = vld [vmem:[%s1 + $0x66c] sm:$0xf]
  %v449 = vld [vmem:[%s1 + $0x670] sm:$0xf]
  %v450 = vld [vmem:[%s1 + $0x674] sm:$0xf]
  %v451 = vld [vmem:[%s1 + $0x678] sm:$0xf]
  %v452 = vld [vmem:[%s1 + $0x67c] sm:$0xf]
  %v453 = vld [vmem:[%s1 + $0x680] sm:$0xf]
  %v454 = vld [vmem:[%s1 + $0x684] sm:$0xf]
  %v455 = vld [vmem:[%s1 + $0x688] sm:$0xf]
  %v456 = vld [vmem:[%s1 + $0x68c] sm:$0xf]
  %v457 = vld [vmem:[%s1 + $0x690] sm:$0xf]
  %v458 = vld [vmem:[%s1 + $0x694] sm:$0xf]
  %v459 = vld [vmem:[%s1 + $0x698] sm:$0xf]
  %v460 = vld [vmem:[%s1 + $0x69c] sm:$0xf]
  %v461 = vld [vmem:[%s1 + $0x6a0] sm:$0xf]
  %v462 = vld [vmem:[%s1 + $0x6a4] sm:$0xf]
  %v463 = vld [vmem:[%s1 + $0x6a8] sm:$0xf]
  %v464 = vld [vmem:[%s1 + $0x6ac] sm:$0xf]
  %v465 = vld [vmem:[%s1 + $0x6b0] sm:$0xf]
  %v466 = vld [vmem:[%s1 + $0x6b4] sm:$0xf]
  %v467 = vld [vmem:[%s1 + $0x6b8] sm:$0xf]
  %v468 = vld [vmem:[%s1 + $0x6bc] sm:$0xf]
  %v469 = vld [vmem:[%s1 + $0x6c0] sm:$0xf]
  %v470 = vld [vmem:[%s1 + $0x6c4] sm:$0xf]
  %v471 = vld [vmem:[%s1 + $0x6c8] sm:$0xf]
  %v472 = vld [vmem:[%s1 + $0x6cc] sm:$0xf]
  %v473 = vld [vmem:[%s1 + $0x6d0] sm:$0xf]
  %v474 = vld [vmem:[%s1 + $0x6d4] sm:$0xf]
  %v475 = vld [vmem:[%s1 + $0x6d8] sm:$0xf]
  %v476 = vld [vmem:[%s1 + $0x6dc] sm:$0xf]
  %v477 = vld [vmem:[%s1 + $0x6e0] sm:$0xf]
  %v478 = vld [vmem:[%s1 + $0x6e4] sm:$0xf]
  %v479 = vld [vmem:[%s1 + $0x6e8] sm:$0xf]
  %v480 = vld [vmem:[%s1 + $0x6ec] sm:$0xf]
  %v481 = vld [vmem:[%s1 + $0x6f0] sm:$0xf]
  %v482 = vld [vmem:[%s1 + $0x6f4] sm:$0xf]
  %v483 = vld [vmem:[%s1 + $0x6f8] sm:$0xf]
  %v484 = vld [vmem:[%s1 + $0x6fc] sm:$0xf]
  %v485 = vld [vmem:[%s1 + $0x700] sm:$0xf]
  %v486 = vld [vmem:[%s1 + $0x704] sm:$0xf]
  %v487 = vld [vmem:[%s1 + $0x708] sm:$0xf]
  %v488 = vld [vmem:[%s1 + $0x70c] sm:$0xf]
  %v489 = vld [vmem:[%s1 + $0x710] sm:$0xf]
  %v490 = vld [vmem:[%s1 + $0x714] sm:$0xf]
  %v491 = vld [vmem:[%s1 + $0x718] sm:$0xf]
  %v492 = vld [vmem:[%s1 + $0x71c] sm:$0xf]
  %v493 = vld [vmem:[%s1 + $0x720] sm:$0xf]
  %v494 = vld [vmem:[%s1 + $0x724] sm:$0xf]
  %v495 = vld [vmem:[%s1 + $0x728] sm:$0xf]
  %v496 = vld [vmem:[%s1 + $0x72c] sm:$0xf]
  %v497 = vld [vmem:[%s1 + $0x730] sm:$0xf]
  %v498 = vld [vmem:[%s1 + $0x734] sm:$0xf]
  %v499 = vld [vmem:[%s1 + $0x738] sm:$0xf]
  %v500 = vld [vmem:[%s1 + $0x73c] sm:$0xf]
  %v501 = vld [vmem:[%s1 + $0x740] sm:$0xf]
  %v502 = vld [vmem:[%s1 + $0x744] sm:$0xf]
  %v503 = vld [vmem:[%s1 + $0x748] sm:$0xf]
  %v504 = vld [vmem:[%s1 + $0x74c] sm:$0xf]
  %v505 = vld [vmem:[%s1 + $0x750] sm:$0xf]
  %v506 = vld [vmem:[%s1 + $0x754] sm:$0xf]
  %v507 = vld [vmem:[%s1 + $0x758] sm:$0xf]
  %v508 = vld [vmem:[%s1 + $0x75c] sm:$0xf]
  %v509 = vld [vmem:[%s1 + $0x760] sm:$0xf]
  %v510 = vld [vmem:[%s1 + $0x764] sm:$0xf]
  %v511 = vld [vmem:[%s1 + $0x768] sm:$0xf]
  %v512 = vld [vmem:[%s1 + $0x76c] sm:$0xf]
  %v513 = vld [vmem:[%s1 + $0x770] sm:$0xf]
  %v514 = vld [vmem:[%s1 + $0x774] sm:$0xf]
  %v515 = vld [vmem:[%s1 + $0x778] sm:$0xf]
  %v516 = vld [vmem:[%s1 + $0x77c] sm:$0xf]
  %v517 = vld [vmem:[%s1 + $0x780] sm:$0xf]
  %v518 = vld [vmem:[%s1 + $0x784] sm:$0xf]
  %v519 = vld [vmem:[%s1 + $0x788] sm:$0xf]
  %v520 = vld [vmem:[%s1 + $0x78c] sm:$0xf]
  %v521 = vld [vmem:[%s1 + $0x790] sm:$0xf]
  %v522 = vld [vmem:[%s1 + $0x794] sm:$0xf]
  %v523 = vld [vmem:[%s1 + $0x798] sm:$0xf]
  %v524 = vld [vmem:[%s1 + $0x79c] sm:$0xf]
  %v525 = vld [vmem:[%s1 + $0x7a0] sm:$0xf]
  %v526 = vld [vmem:[%s1 + $0x7a4] sm:$0xf]
  %v527 = vld [vmem:[%s1 + $0x7a8] sm:$0xf]
  %v528 = vld [vmem:[%s1 + $0x7ac] sm:$0xf]
  %v529 = vld [vmem:[%s1 + $0x7b0] sm:$0xf]
  %v530 = vld [vmem:[%s1 + $0x7b4] sm:$0xf]
  %v531 = vld [vmem:[%s1 + $0x7b8] sm:$0xf]
  %v532 = vld [vmem:[%s1 + $0x7bc] sm:$0xf]
  %v533 = vld [vmem:[%s1 + $0x7c0] sm:$0xf]
  %v534 = vld [vmem:[%s1 + $0x7c4] sm:$0xf]
  %v535 = vld [vmem:[%s1 + $0x7c8] sm:$0xf]
  %v536 = vld [vmem:[%s1 + $0x7cc] sm:$0xf]
  %v537 = vld [vmem:[%s1 + $0x7d0] sm:$0xf]
  %v538 = vld [vmem:[%s1 + $0x7d4] sm:$0xf]
  %v539 = vld [vmem:[%s1 + $0x7d8] sm:$0xf]
  %v540 = vld [vmem:[%s1 + $0x7dc] sm:$0xf]
  %v541 = vld [vmem:[%s1 + $0x7e0] sm:$0xf]
  %v542 = vld [vmem:[%s1 + $0x7e4] sm:$0xf]
  %v543 = vld [vmem:[%s1 + $0x7e8] sm:$0xf]
  %v544 = vld [vmem:[%s1 + $0x7ec] sm:$0xf]
  %v545 = vld [vmem:[%s1 + $0x7f0] sm:$0xf]
  %v546 = vld [vmem:[%s1 + $0x7f4] sm:$0xf]
  %v547 = vld [vmem:[%s1 + $0x7f8] sm:$0xf]
  %v548 = vld [vmem:[%s1 + $0x7fc] sm:$0xf]
  %v549 = vld [vmem:[%s2] sm:$0x1]
  %v551 = vlaneseq
  %v552 = vshrl.u32 %v551, 7
  %v553 = vsub.s32 0, %v552
  %v554 = vrot.slane %v549, %v553
  %v572 = vunpack.c.l.b16 %v21
  %v573 = vunpack.c.h.b16 %v21
  %v574 = vunpack.c.l.b16 %v22
  %v575 = vunpack.c.h.b16 %v22
  %v576 = vunpack.c.l.b16 %v23
  %v577 = vunpack.c.h.b16 %v23
  %v578 = vunpack.c.l.b16 %v24
  %v579 = vunpack.c.h.b16 %v24
  %v580 = vunpack.c.l.b16 %v25
  %v581 = vunpack.c.h.b16 %v25
  %v582 = vunpack.c.l.b16 %v26
  %v583 = vunpack.c.h.b16 %v26
  %v584 = vunpack.c.l.b16 %v27
  %v585 = vunpack.c.h.b16 %v27
  %v586 = vunpack.c.l.b16 %v28
  %v587 = vunpack.c.h.b16 %v28
  %v588 = vunpack.c.l.b16 %v29
  %v589 = vunpack.c.h.b16 %v29
  %v590 = vunpack.c.l.b16 %v30
  %v591 = vunpack.c.h.b16 %v30
  %v592 = vunpack.c.l.b16 %v31
  %v593 = vunpack.c.h.b16 %v31
  %v594 = vunpack.c.l.b16 %v32
  %v595 = vunpack.c.h.b16 %v32
  %v596 = vunpack.c.l.b16 %v33
  %v597 = vunpack.c.h.b16 %v33
  %v598 = vunpack.c.l.b16 %v34
  %v599 = vunpack.c.h.b16 %v34
  %v600 = vunpack.c.l.b16 %v35
  %v601 = vunpack.c.h.b16 %v35
  %v602 = vunpack.c.l.b16 %v36
  %v603 = vunpack.c.h.b16 %v36
  %v604 = vpack.c.b16 %v572, %v572
  %v605 = vpack.c.b16 %v573, %v573
  %v606 = vpack.c.b16 %v574, %v574
  %v607 = vpack.c.b16 %v575, %v575
  %v608 = vpack.c.b16 %v576, %v576
  %v609 = vpack.c.b16 %v577, %v577
  %v610 = vpack.c.b16 %v578, %v578
  %v611 = vpack.c.b16 %v579, %v579
  %v612 = vpack.c.b16 %v580, %v580
  %v613 = vpack.c.b16 %v581, %v581
  %v614 = vpack.c.b16 %v582, %v582
  %v615 = vpack.c.b16 %v583, %v583
  %v616 = vpack.c.b16 %v584, %v584
  %v617 = vpack.c.b16 %v585, %v585
  %v618 = vpack.c.b16 %v586, %v586
  %v619 = vpack.c.b16 %v587, %v587
  %v620 = vpack.c.b16 %v588, %v588
  %v621 = vpack.c.b16 %v589, %v589
  %v622 = vpack.c.b16 %v590, %v590
  %v623 = vpack.c.b16 %v591, %v591
  %v624 = vpack.c.b16 %v592, %v592
  %v625 = vpack.c.b16 %v593, %v593
  %v626 = vpack.c.b16 %v594, %v594
  %v627 = vpack.c.b16 %v595, %v595
  %v628 = vpack.c.b16 %v596, %v596
  %v629 = vpack.c.b16 %v597, %v597
  %v630 = vpack.c.b16 %v598, %v598
  %v631 = vpack.c.b16 %v599, %v599
  %v632 = vpack.c.b16 %v600, %v600
  %v633 = vpack.c.b16 %v601, %v601
  %v634 = vpack.c.b16 %v602, %v602
  %v635 = vpack.c.b16 %v603, %v603
  %v1180 = vunpack.c.l.b16 %v37
  %v1181 = vunpack.c.l.b16 %v38
  %v1182 = vunpack.c.l.b16 %v39
  %v1183 = vunpack.c.l.b16 %v40
  %v1184 = vunpack.c.l.b16 %v41
  %v1185 = vunpack.c.l.b16 %v42
  %v1186 = vunpack.c.l.b16 %v43
  %v1187 = vunpack.c.l.b16 %v44
  %v1188 = vunpack.c.l.b16 %v45
  %v1189 = vunpack.c.l.b16 %v46
  %v1190 = vunpack.c.l.b16 %v47
  %v1191 = vunpack.c.l.b16 %v48
  %v1192 = vunpack.c.l.b16 %v49
  %v1193 = vunpack.c.l.b16 %v50
  %v1194 = vunpack.c.l.b16 %v51
  %v1195 = vunpack.c.l.b16 %v52
  %v1196 = vunpack.c.l.b16 %v53
  %v1197 = vunpack.c.l.b16 %v54
  %v1198 = vunpack.c.l.b16 %v55
  %v1199 = vunpack.c.l.b16 %v56
  %v1200 = vunpack.c.l.b16 %v57
  %v1201 = vunpack.c.l.b16 %v58
  %v1202 = vunpack.c.l.b16 %v59
  %v1203 = vunpack.c.l.b16 %v60
  %v1204 = vunpack.c.l.b16 %v61
  %v1205 = vunpack.c.l.b16 %v62
  %v1206 = vunpack.c.l.b16 %v63
  %v1207 = vunpack.c.l.b16 %v64
  %v1208 = vunpack.c.l.b16 %v65
  %v1209 = vunpack.c.l.b16 %v66
  %v1210 = vunpack.c.l.b16 %v67
  %v1211 = vunpack.c.l.b16 %v68
  %v1212 = vunpack.c.l.b16 %v69
  %v1213 = vunpack.c.l.b16 %v70
  %v1214 = vunpack.c.l.b16 %v71
  %v1215 = vunpack.c.l.b16 %v72
  %v1216 = vunpack.c.l.b16 %v73
  %v1217 = vunpack.c.l.b16 %v74
  %v1218 = vunpack.c.l.b16 %v75
  %v1219 = vunpack.c.l.b16 %v76
  %v1220 = vunpack.c.l.b16 %v77
  %v1221 = vunpack.c.l.b16 %v78
  %v1222 = vunpack.c.l.b16 %v79
  %v1223 = vunpack.c.l.b16 %v80
  %v1224 = vunpack.c.l.b16 %v81
  %v1225 = vunpack.c.l.b16 %v82
  %v1226 = vunpack.c.l.b16 %v83
  %v1227 = vunpack.c.l.b16 %v84
  %v1228 = vunpack.c.l.b16 %v85
  %v1229 = vunpack.c.l.b16 %v86
  %v1230 = vunpack.c.l.b16 %v87
  %v1231 = vunpack.c.l.b16 %v88
  %v1232 = vunpack.c.l.b16 %v89
  %v1233 = vunpack.c.l.b16 %v90
  %v1234 = vunpack.c.l.b16 %v91
  %v1235 = vunpack.c.l.b16 %v92
  %v1236 = vunpack.c.l.b16 %v93
  %v1237 = vunpack.c.l.b16 %v94
  %v1238 = vunpack.c.l.b16 %v95
  %v1239 = vunpack.c.l.b16 %v96
  %v1240 = vunpack.c.l.b16 %v97
  %v1241 = vunpack.c.l.b16 %v98
  %v1242 = vunpack.c.l.b16 %v99
  %v1243 = vunpack.c.l.b16 %v100
  %v1244 = vunpack.c.l.b16 %v101
  %v1245 = vunpack.c.l.b16 %v102
  %v1246 = vunpack.c.l.b16 %v103
  %v1247 = vunpack.c.l.b16 %v104
  %v1248 = vunpack.c.l.b16 %v105
  %v1249 = vunpack.c.l.b16 %v106
  %v1250 = vunpack.c.l.b16 %v107
  %v1251 = vunpack.c.l.b16 %v108
  %v1252 = vunpack.c.l.b16 %v109
  %v1253 = vunpack.c.l.b16 %v110
  %v1254 = vunpack.c.l.b16 %v111
  %v1255 = vunpack.c.l.b16 %v112
  %v1256 = vunpack.c.l.b16 %v113
  %v1257 = vunpack.c.l.b16 %v114
  %v1258 = vunpack.c.l.b16 %v115
  %v1259 = vunpack.c.l.b16 %v116
  %v1260 = vunpack.c.l.b16 %v117
  %v1261 = vunpack.c.l.b16 %v118
  %v1262 = vunpack.c.l.b16 %v119
  %v1263 = vunpack.c.l.b16 %v120
  %v1264 = vunpack.c.l.b16 %v121
  %v1265 = vunpack.c.l.b16 %v122
  %v1266 = vunpack.c.l.b16 %v123
  %v1267 = vunpack.c.l.b16 %v124
  %v1268 = vunpack.c.l.b16 %v125
  %v1269 = vunpack.c.l.b16 %v126
  %v1270 = vunpack.c.l.b16 %v127
  %v1271 = vunpack.c.l.b16 %v128
  %v1272 = vunpack.c.l.b16 %v129
  %v1273 = vunpack.c.l.b16 %v130
  %v1274 = vunpack.c.l.b16 %v131
  %v1275 = vunpack.c.l.b16 %v132
  %v1276 = vunpack.c.l.b16 %v133
  %v1277 = vunpack.c.l.b16 %v134
  %v1278 = vunpack.c.l.b16 %v135
  %v1279 = vunpack.c.l.b16 %v136
  %v1280 = vunpack.c.l.b16 %v137
  %v1281 = vunpack.c.l.b16 %v138
  %v1282 = vunpack.c.l.b16 %v139
  %v1283 = vunpack.c.l.b16 %v140
  %v1284 = vunpack.c.l.b16 %v141
  %v1285 = vunpack.c.l.b16 %v142
  %v1286 = vunpack.c.l.b16 %v143
  %v1287 = vunpack.c.l.b16 %v144
  %v1288 = vunpack.c.l.b16 %v145
  %v1289 = vunpack.c.l.b16 %v146
  %v1290 = vunpack.c.l.b16 %v147
  %v1291 = vunpack.c.l.b16 %v148
  %v1292 = vunpack.c.l.b16 %v149
  %v1293 = vunpack.c.l.b16 %v150
  %v1294 = vunpack.c.l.b16 %v151
  %v1295 = vunpack.c.l.b16 %v152
  %v1296 = vunpack.c.l.b16 %v153
  %v1297 = vunpack.c.l.b16 %v154
  %v1298 = vunpack.c.l.b16 %v155
  %v1299 = vunpack.c.l.b16 %v156
  %v1300 = vunpack.c.l.b16 %v157
  %v1301 = vunpack.c.l.b16 %v158
  %v1302 = vunpack.c.l.b16 %v159
  %v1303 = vunpack.c.l.b16 %v160
  %v1304 = vunpack.c.l.b16 %v161
  %v1305 = vunpack.c.l.b16 %v162
  %v1306 = vunpack.c.l.b16 %v163
  %v1307 = vunpack.c.l.b16 %v164
  %v1308 = vunpack.c.l.b16 %v165
  %v1309 = vunpack.c.l.b16 %v166
  %v1310 = vunpack.c.l.b16 %v167
  %v1311 = vunpack.c.l.b16 %v168
  %v1312 = vunpack.c.l.b16 %v169
  %v1313 = vunpack.c.l.b16 %v170
  %v1314 = vunpack.c.l.b16 %v171
  %v1315 = vunpack.c.l.b16 %v172
  %v1316 = vunpack.c.l.b16 %v173
  %v1317 = vunpack.c.l.b16 %v174
  %v1318 = vunpack.c.l.b16 %v175
  %v1319 = vunpack.c.l.b16 %v176
  %v1320 = vunpack.c.l.b16 %v177
  %v1321 = vunpack.c.l.b16 %v178
  %v1322 = vunpack.c.l.b16 %v179
  %v1323 = vunpack.c.l.b16 %v180
  %v1324 = vunpack.c.l.b16 %v181
  %v1325 = vunpack.c.l.b16 %v182
  %v1326 = vunpack.c.l.b16 %v183
  %v1327 = vunpack.c.l.b16 %v184
  %v1328 = vunpack.c.l.b16 %v185
  %v1329 = vunpack.c.l.b16 %v186
  %v1330 = vunpack.c.l.b16 %v187
  %v1331 = vunpack.c.l.b16 %v188
  %v1332 = vunpack.c.l.b16 %v189
  %v1333 = vunpack.c.l.b16 %v190
  %v1334 = vunpack.c.l.b16 %v191
  %v1335 = vunpack.c.l.b16 %v192
  %v1336 = vunpack.c.l.b16 %v193
  %v1337 = vunpack.c.l.b16 %v194
  %v1338 = vunpack.c.l.b16 %v195
  %v1339 = vunpack.c.l.b16 %v196
  %v1340 = vunpack.c.l.b16 %v197
  %v1341 = vunpack.c.l.b16 %v198
  %v1342 = vunpack.c.l.b16 %v199
  %v1343 = vunpack.c.l.b16 %v200
  %v1344 = vunpack.c.l.b16 %v201
  %v1345 = vunpack.c.l.b16 %v202
  %v1346 = vunpack.c.l.b16 %v203
  %v1347 = vunpack.c.l.b16 %v204
  %v1348 = vunpack.c.l.b16 %v205
  %v1349 = vunpack.c.l.b16 %v206
  %v1350 = vunpack.c.l.b16 %v207
  %v1351 = vunpack.c.l.b16 %v208
  %v1352 = vunpack.c.l.b16 %v209
  %v1353 = vunpack.c.l.b16 %v210
  %v1354 = vunpack.c.l.b16 %v211
  %v1355 = vunpack.c.l.b16 %v212
  %v1356 = vunpack.c.l.b16 %v213
  %v1357 = vunpack.c.l.b16 %v214
  %v1358 = vunpack.c.l.b16 %v215
  %v1359 = vunpack.c.l.b16 %v216
  %v1360 = vunpack.c.l.b16 %v217
  %v1361 = vunpack.c.l.b16 %v218
  %v1362 = vunpack.c.l.b16 %v219
  %v1363 = vunpack.c.l.b16 %v220
  %v1364 = vunpack.c.l.b16 %v221
  %v1365 = vunpack.c.l.b16 %v222
  %v1366 = vunpack.c.l.b16 %v223
  %v1367 = vunpack.c.l.b16 %v224
  %v1368 = vunpack.c.l.b16 %v225
  %v1369 = vunpack.c.l.b16 %v226
  %v1370 = vunpack.c.l.b16 %v227
  %v1371 = vunpack.c.l.b16 %v228
  %v1372 = vunpack.c.l.b16 %v229
  %v1373 = vunpack.c.l.b16 %v230
  %v1374 = vunpack.c.l.b16 %v231
  %v1375 = vunpack.c.l.b16 %v232
  %v1376 = vunpack.c.l.b16 %v233
  %v1377 = vunpack.c.l.b16 %v234
  %v1378 = vunpack.c.l.b16 %v235
  %v1379 = vunpack.c.l.b16 %v236
  %v1380 = vunpack.c.l.b16 %v237
  %v1381 = vunpack.c.l.b16 %v238
  %v1382 = vunpack.c.l.b16 %v239
  %v1383 = vunpack.c.l.b16 %v240
  %v1384 = vunpack.c.l.b16 %v241
  %v1385 = vunpack.c.l.b16 %v242
  %v1386 = vunpack.c.l.b16 %v243
  %v1387 = vunpack.c.l.b16 %v244
  %v1388 = vunpack.c.l.b16 %v245
  %v1389 = vunpack.c.l.b16 %v246
  %v1390 = vunpack.c.l.b16 %v247
  %v1391 = vunpack.c.l.b16 %v248
  %v1392 = vunpack.c.l.b16 %v249
  %v1393 = vunpack.c.l.b16 %v250
  %v1394 = vunpack.c.l.b16 %v251
  %v1395 = vunpack.c.l.b16 %v252
  %v1396 = vunpack.c.l.b16 %v253
  %v1397 = vunpack.c.l.b16 %v254
  %v1398 = vunpack.c.l.b16 %v255
  %v1399 = vunpack.c.l.b16 %v256
  %v1400 = vunpack.c.l.b16 %v257
  %v1401 = vunpack.c.l.b16 %v258
  %v1402 = vunpack.c.l.b16 %v259
  %v1403 = vunpack.c.l.b16 %v260
  %v1404 = vunpack.c.l.b16 %v261
  %v1405 = vunpack.c.l.b16 %v262
  %v1406 = vunpack.c.l.b16 %v263
  %v1407 = vunpack.c.l.b16 %v264
  %v1408 = vunpack.c.l.b16 %v265
  %v1409 = vunpack.c.l.b16 %v266
  %v1410 = vunpack.c.l.b16 %v267
  %v1411 = vunpack.c.l.b16 %v268
  %v1412 = vunpack.c.l.b16 %v269
  %v1413 = vunpack.c.l.b16 %v270
  %v1414 = vunpack.c.l.b16 %v271
  %v1415 = vunpack.c.l.b16 %v272
  %v1416 = vunpack.c.l.b16 %v273
  %v1417 = vunpack.c.l.b16 %v274
  %v1418 = vunpack.c.l.b16 %v275
  %v1419 = vunpack.c.l.b16 %v276
  %v1420 = vunpack.c.l.b16 %v277
  %v1421 = vunpack.c.l.b16 %v278
  %v1422 = vunpack.c.l.b16 %v279
  %v1423 = vunpack.c.l.b16 %v280
  %v1424 = vunpack.c.l.b16 %v281
  %v1425 = vunpack.c.l.b16 %v282
  %v1426 = vunpack.c.l.b16 %v283
  %v1427 = vunpack.c.l.b16 %v284
  %v1428 = vunpack.c.l.b16 %v285
  %v1429 = vunpack.c.l.b16 %v286
  %v1430 = vunpack.c.l.b16 %v287
  %v1431 = vunpack.c.l.b16 %v288
  %v1432 = vunpack.c.l.b16 %v289
  %v1433 = vunpack.c.l.b16 %v290
  %v1434 = vunpack.c.l.b16 %v291
  %v1435 = vunpack.c.l.b16 %v292
  %v1436 = vunpack.c.l.b16 %v293
  %v1437 = vunpack.c.l.b16 %v294
  %v1438 = vunpack.c.l.b16 %v295
  %v1439 = vunpack.c.l.b16 %v296
  %v1440 = vunpack.c.l.b16 %v297
  %v1441 = vunpack.c.l.b16 %v298
  %v1442 = vunpack.c.l.b16 %v299
  %v1443 = vunpack.c.l.b16 %v300
  %v1444 = vunpack.c.l.b16 %v301
  %v1445 = vunpack.c.l.b16 %v302
  %v1446 = vunpack.c.l.b16 %v303
  %v1447 = vunpack.c.l.b16 %v304
  %v1448 = vunpack.c.l.b16 %v305
  %v1449 = vunpack.c.l.b16 %v306
  %v1450 = vunpack.c.l.b16 %v307
  %v1451 = vunpack.c.l.b16 %v308
  %v1452 = vunpack.c.l.b16 %v309
  %v1453 = vunpack.c.l.b16 %v310
  %v1454 = vunpack.c.l.b16 %v311
  %v1455 = vunpack.c.l.b16 %v312
  %v1456 = vunpack.c.l.b16 %v313
  %v1457 = vunpack.c.l.b16 %v314
  %v1458 = vunpack.c.l.b16 %v315
  %v1459 = vunpack.c.l.b16 %v316
  %v1460 = vunpack.c.l.b16 %v317
  %v1461 = vunpack.c.l.b16 %v318
  %v1462 = vunpack.c.l.b16 %v319
  %v1463 = vunpack.c.l.b16 %v320
  %v1464 = vunpack.c.l.b16 %v321
  %v1465 = vunpack.c.l.b16 %v322
  %v1466 = vunpack.c.l.b16 %v323
  %v1467 = vunpack.c.l.b16 %v324
  %v1468 = vunpack.c.l.b16 %v325
  %v1469 = vunpack.c.l.b16 %v326
  %v1470 = vunpack.c.l.b16 %v327
  %v1471 = vunpack.c.l.b16 %v328
  %v1472 = vunpack.c.l.b16 %v329
  %v1473 = vunpack.c.l.b16 %v330
  %v1474 = vunpack.c.l.b16 %v331
  %v1475 = vunpack.c.l.b16 %v332
  %v1476 = vunpack.c.l.b16 %v333
  %v1477 = vunpack.c.l.b16 %v334
  %v1478 = vunpack.c.l.b16 %v335
  %v1479 = vunpack.c.l.b16 %v336
  %v1480 = vunpack.c.l.b16 %v337
  %v1481 = vunpack.c.l.b16 %v338
  %v1482 = vunpack.c.l.b16 %v339
  %v1483 = vunpack.c.l.b16 %v340
  %v1484 = vunpack.c.l.b16 %v341
  %v1485 = vunpack.c.l.b16 %v342
  %v1486 = vunpack.c.l.b16 %v343
  %v1487 = vunpack.c.l.b16 %v344
  %v1488 = vunpack.c.l.b16 %v345
  %v1489 = vunpack.c.l.b16 %v346
  %v1490 = vunpack.c.l.b16 %v347
  %v1491 = vunpack.c.l.b16 %v348
  %v1492 = vunpack.c.l.b16 %v349
  %v1493 = vunpack.c.l.b16 %v350
  %v1494 = vunpack.c.l.b16 %v351
  %v1495 = vunpack.c.l.b16 %v352
  %v1496 = vunpack.c.l.b16 %v353
  %v1497 = vunpack.c.l.b16 %v354
  %v1498 = vunpack.c.l.b16 %v355
  %v1499 = vunpack.c.l.b16 %v356
  %v1500 = vunpack.c.l.b16 %v357
  %v1501 = vunpack.c.l.b16 %v358
  %v1502 = vunpack.c.l.b16 %v359
  %v1503 = vunpack.c.l.b16 %v360
  %v1504 = vunpack.c.l.b16 %v361
  %v1505 = vunpack.c.l.b16 %v362
  %v1506 = vunpack.c.l.b16 %v363
  %v1507 = vunpack.c.l.b16 %v364
  %v1508 = vunpack.c.l.b16 %v365
  %v1509 = vunpack.c.l.b16 %v366
  %v1510 = vunpack.c.l.b16 %v367
  %v1511 = vunpack.c.l.b16 %v368
  %v1512 = vunpack.c.l.b16 %v369
  %v1513 = vunpack.c.l.b16 %v370
  %v1514 = vunpack.c.l.b16 %v371
  %v1515 = vunpack.c.l.b16 %v372
  %v1516 = vunpack.c.l.b16 %v373
  %v1517 = vunpack.c.l.b16 %v374
  %v1518 = vunpack.c.l.b16 %v375
  %v1519 = vunpack.c.l.b16 %v376
  %v1520 = vunpack.c.l.b16 %v377
  %v1521 = vunpack.c.l.b16 %v378
  %v1522 = vunpack.c.l.b16 %v379
  %v1523 = vunpack.c.l.b16 %v380
  %v1524 = vunpack.c.l.b16 %v381
  %v1525 = vunpack.c.l.b16 %v382
  %v1526 = vunpack.c.l.b16 %v383
  %v1527 = vunpack.c.l.b16 %v384
  %v1528 = vunpack.c.l.b16 %v385
  %v1529 = vunpack.c.l.b16 %v386
  %v1530 = vunpack.c.l.b16 %v387
  %v1531 = vunpack.c.l.b16 %v388
  %v1532 = vunpack.c.l.b16 %v389
  %v1533 = vunpack.c.l.b16 %v390
  %v1534 = vunpack.c.l.b16 %v391
  %v1535 = vunpack.c.l.b16 %v392
  %v1536 = vunpack.c.l.b16 %v393
  %v1537 = vunpack.c.l.b16 %v394
  %v1538 = vunpack.c.l.b16 %v395
  %v1539 = vunpack.c.l.b16 %v396
  %v1540 = vunpack.c.l.b16 %v397
  %v1541 = vunpack.c.l.b16 %v398
  %v1542 = vunpack.c.l.b16 %v399
  %v1543 = vunpack.c.l.b16 %v400
  %v1544 = vunpack.c.l.b16 %v401
  %v1545 = vunpack.c.l.b16 %v402
  %v1546 = vunpack.c.l.b16 %v403
  %v1547 = vunpack.c.l.b16 %v404
  %v1548 = vunpack.c.l.b16 %v405
  %v1549 = vunpack.c.l.b16 %v406
  %v1550 = vunpack.c.l.b16 %v407
  %v1551 = vunpack.c.l.b16 %v408
  %v1552 = vunpack.c.l.b16 %v409
  %v1553 = vunpack.c.l.b16 %v410
  %v1554 = vunpack.c.l.b16 %v411
  %v1555 = vunpack.c.l.b16 %v412
  %v1556 = vunpack.c.l.b16 %v413
  %v1557 = vunpack.c.l.b16 %v414
  %v1558 = vunpack.c.l.b16 %v415
  %v1559 = vunpack.c.l.b16 %v416
  %v1560 = vunpack.c.l.b16 %v417
  %v1561 = vunpack.c.l.b16 %v418
  %v1562 = vunpack.c.l.b16 %v419
  %v1563 = vunpack.c.l.b16 %v420
  %v1564 = vunpack.c.l.b16 %v421
  %v1565 = vunpack.c.l.b16 %v422
  %v1566 = vunpack.c.l.b16 %v423
  %v1567 = vunpack.c.l.b16 %v424
  %v1568 = vunpack.c.l.b16 %v425
  %v1569 = vunpack.c.l.b16 %v426
  %v1570 = vunpack.c.l.b16 %v427
  %v1571 = vunpack.c.l.b16 %v428
  %v1572 = vunpack.c.l.b16 %v429
  %v1573 = vunpack.c.l.b16 %v430
  %v1574 = vunpack.c.l.b16 %v431
  %v1575 = vunpack.c.l.b16 %v432
  %v1576 = vunpack.c.l.b16 %v433
  %v1577 = vunpack.c.l.b16 %v434
  %v1578 = vunpack.c.l.b16 %v435
  %v1579 = vunpack.c.l.b16 %v436
  %v1580 = vunpack.c.l.b16 %v437
  %v1581 = vunpack.c.l.b16 %v438
  %v1582 = vunpack.c.l.b16 %v439
  %v1583 = vunpack.c.l.b16 %v440
  %v1584 = vunpack.c.l.b16 %v441
  %v1585 = vunpack.c.l.b16 %v442
  %v1586 = vunpack.c.l.b16 %v443
  %v1587 = vunpack.c.l.b16 %v444
  %v1588 = vunpack.c.l.b16 %v445
  %v1589 = vunpack.c.l.b16 %v446
  %v1590 = vunpack.c.l.b16 %v447
  %v1591 = vunpack.c.l.b16 %v448
  %v1592 = vunpack.c.l.b16 %v449
  %v1593 = vunpack.c.l.b16 %v450
  %v1594 = vunpack.c.l.b16 %v451
  %v1595 = vunpack.c.l.b16 %v452
  %v1596 = vunpack.c.l.b16 %v453
  %v1597 = vunpack.c.l.b16 %v454
  %v1598 = vunpack.c.l.b16 %v455
  %v1599 = vunpack.c.l.b16 %v456
  %v1600 = vunpack.c.l.b16 %v457
  %v1601 = vunpack.c.l.b16 %v458
  %v1602 = vunpack.c.l.b16 %v459
  %v1603 = vunpack.c.l.b16 %v460
  %v1604 = vunpack.c.l.b16 %v461
  %v1605 = vunpack.c.l.b16 %v462
  %v1606 = vunpack.c.l.b16 %v463
  %v1607 = vunpack.c.l.b16 %v464
  %v1608 = vunpack.c.l.b16 %v465
  %v1609 = vunpack.c.l.b16 %v466
  %v1610 = vunpack.c.l.b16 %v467
  %v1611 = vunpack.c.l.b16 %v468
  %v1612 = vunpack.c.l.b16 %v469
  %v1613 = vunpack.c.l.b16 %v470
  %v1614 = vunpack.c.l.b16 %v471
  %v1615 = vunpack.c.l.b16 %v472
  %v1616 = vunpack.c.l.b16 %v473
  %v1617 = vunpack.c.l.b16 %v474
  %v1618 = vunpack.c.l.b16 %v475
  %v1619 = vunpack.c.l.b16 %v476
  %v1620 = vunpack.c.l.b16 %v477
  %v1621 = vunpack.c.l.b16 %v478
  %v1622 = vunpack.c.l.b16 %v479
  %v1623 = vunpack.c.l.b16 %v480
  %v1624 = vunpack.c.l.b16 %v481
  %v1625 = vunpack.c.l.b16 %v482
  %v1626 = vunpack.c.l.b16 %v483
  %v1627 = vunpack.c.l.b16 %v484
  %v1628 = vunpack.c.l.b16 %v485
  %v1629 = vunpack.c.l.b16 %v486
  %v1630 = vunpack.c.l.b16 %v487
  %v1631 = vunpack.c.l.b16 %v488
  %v1632 = vunpack.c.l.b16 %v489
  %v1633 = vunpack.c.l.b16 %v490
  %v1634 = vunpack.c.l.b16 %v491
  %v1635 = vunpack.c.l.b16 %v492
  %v1636 = vunpack.c.l.b16 %v493
  %v1637 = vunpack.c.l.b16 %v494
  %v1638 = vunpack.c.l.b16 %v495
  %v1639 = vunpack.c.l.b16 %v496
  %v1640 = vunpack.c.l.b16 %v497
  %v1641 = vunpack.c.l.b16 %v498
  %v1642 = vunpack.c.l.b16 %v499
  %v1643 = vunpack.c.l.b16 %v500
  %v1644 = vunpack.c.l.b16 %v501
  %v1645 = vunpack.c.l.b16 %v502
  %v1646 = vunpack.c.l.b16 %v503
  %v1647 = vunpack.c.l.b16 %v504
  %v1648 = vunpack.c.l.b16 %v505
  %v1649 = vunpack.c.l.b16 %v506
  %v1650 = vunpack.c.l.b16 %v507
  %v1651 = vunpack.c.l.b16 %v508
  %v1652 = vunpack.c.l.b16 %v509
  %v1653 = vunpack.c.l.b16 %v510
  %v1654 = vunpack.c.l.b16 %v511
  %v1655 = vunpack.c.l.b16 %v512
  %v1656 = vunpack.c.l.b16 %v513
  %v1657 = vunpack.c.l.b16 %v514
  %v1658 = vunpack.c.l.b16 %v515
  %v1659 = vunpack.c.l.b16 %v516
  %v1660 = vunpack.c.l.b16 %v517
  %v1661 = vunpack.c.l.b16 %v518
  %v1662 = vunpack.c.l.b16 %v519
  %v1663 = vunpack.c.l.b16 %v520
  %v1664 = vunpack.c.l.b16 %v521
  %v1665 = vunpack.c.l.b16 %v522
  %v1666 = vunpack.c.l.b16 %v523
  %v1667 = vunpack.c.l.b16 %v524
  %v1668 = vunpack.c.l.b16 %v525
  %v1669 = vunpack.c.l.b16 %v526
  %v1670 = vunpack.c.l.b16 %v527
  %v1671 = vunpack.c.l.b16 %v528
  %v1672 = vunpack.c.l.b16 %v529
  %v1673 = vunpack.c.l.b16 %v530
  %v1674 = vunpack.c.l.b16 %v531
  %v1675 = vunpack.c.l.b16 %v532
  %v1676 = vunpack.c.l.b16 %v533
  %v1677 = vunpack.c.l.b16 %v534
  %v1678 = vunpack.c.l.b16 %v535
  %v1679 = vunpack.c.l.b16 %v536
  %v1680 = vunpack.c.l.b16 %v537
  %v1681 = vunpack.c.l.b16 %v538
  %v1682 = vunpack.c.l.b16 %v539
  %v1683 = vunpack.c.l.b16 %v540
  %v1684 = vunpack.c.l.b16 %v541
  %v1685 = vunpack.c.l.b16 %v542
  %v1686 = vunpack.c.l.b16 %v543
  %v1687 = vunpack.c.l.b16 %v544
  %v1688 = vunpack.c.l.b16 %v545
  %v1689 = vunpack.c.l.b16 %v546
  %v1690 = vunpack.c.l.b16 %v547
  %v1691 = vunpack.c.l.b16 %v548
  %v1692 = vpack.c.b16 %v1181, %v1180
  %v1693 = vpack.c.b16 %v1183, %v1182
  %v1694 = vpack.c.b16 %v1185, %v1184
  %v1695 = vpack.c.b16 %v1187, %v1186
  %v1696 = vpack.c.b16 %v1189, %v1188
  %v1697 = vpack.c.b16 %v1191, %v1190
  %v1698 = vpack.c.b16 %v1193, %v1192
  %v1699 = vpack.c.b16 %v1195, %v1194
  %v1700 = vpack.c.b16 %v1197, %v1196
  %v1701 = vpack.c.b16 %v1199, %v1198
  %v1702 = vpack.c.b16 %v1201, %v1200
  %v1703 = vpack.c.b16 %v1203, %v1202
  %v1704 = vpack.c.b16 %v1205, %v1204
  %v1705 = vpack.c.b16 %v1207, %v1206
  %v1706 = vpack.c.b16 %v1209, %v1208
  %v1707 = vpack.c.b16 %v1211, %v1210
  %v1708 = vpack.c.b16 %v1213, %v1212
  %v1709 = vpack.c.b16 %v1215, %v1214
  %v1710 = vpack.c.b16 %v1217, %v1216
  %v1711 = vpack.c.b16 %v1219, %v1218
  %v1712 = vpack.c.b16 %v1221, %v1220
  %v1713 = vpack.c.b16 %v1223, %v1222
  %v1714 = vpack.c.b16 %v1225, %v1224
  %v1715 = vpack.c.b16 %v1227, %v1226
  %v1716 = vpack.c.b16 %v1229, %v1228
  %v1717 = vpack.c.b16 %v1231, %v1230
  %v1718 = vpack.c.b16 %v1233, %v1232
  %v1719 = vpack.c.b16 %v1235, %v1234
  %v1720 = vpack.c.b16 %v1237, %v1236
  %v1721 = vpack.c.b16 %v1239, %v1238
  %v1722 = vpack.c.b16 %v1241, %v1240
  %v1723 = vpack.c.b16 %v1243, %v1242
  %v1724 = vpack.c.b16 %v1245, %v1244
  %v1725 = vpack.c.b16 %v1247, %v1246
  %v1726 = vpack.c.b16 %v1249, %v1248
  %v1727 = vpack.c.b16 %v1251, %v1250
  %v1728 = vpack.c.b16 %v1253, %v1252
  %v1729 = vpack.c.b16 %v1255, %v1254
  %v1730 = vpack.c.b16 %v1257, %v1256
  %v1731 = vpack.c.b16 %v1259, %v1258
  %v1732 = vpack.c.b16 %v1261, %v1260
  %v1733 = vpack.c.b16 %v1263, %v1262
  %v1734 = vpack.c.b16 %v1265, %v1264
  %v1735 = vpack.c.b16 %v1267, %v1266
  %v1736 = vpack.c.b16 %v1269, %v1268
  %v1737 = vpack.c.b16 %v1271, %v1270
  %v1738 = vpack.c.b16 %v1273, %v1272
  %v1739 = vpack.c.b16 %v1275, %v1274
  %v1740 = vpack.c.b16 %v1277, %v1276
  %v1741 = vpack.c.b16 %v1279, %v1278
  %v1742 = vpack.c.b16 %v1281, %v1280
  %v1743 = vpack.c.b16 %v1283, %v1282
  %v1744 = vpack.c.b16 %v1285, %v1284
  %v1745 = vpack.c.b16 %v1287, %v1286
  %v1746 = vpack.c.b16 %v1289, %v1288
  %v1747 = vpack.c.b16 %v1291, %v1290
  %v1748 = vpack.c.b16 %v1293, %v1292
  %v1749 = vpack.c.b16 %v1295, %v1294
  %v1750 = vpack.c.b16 %v1297, %v1296
  %v1751 = vpack.c.b16 %v1299, %v1298
  %v1752 = vpack.c.b16 %v1301, %v1300
  %v1753 = vpack.c.b16 %v1303, %v1302
  %v1754 = vpack.c.b16 %v1305, %v1304
  %v1755 = vpack.c.b16 %v1307, %v1306
  %v1756 = vpack.c.b16 %v1309, %v1308
  %v1757 = vpack.c.b16 %v1311, %v1310
  %v1758 = vpack.c.b16 %v1313, %v1312
  %v1759 = vpack.c.b16 %v1315, %v1314
  %v1760 = vpack.c.b16 %v1317, %v1316
  %v1761 = vpack.c.b16 %v1319, %v1318
  %v1762 = vpack.c.b16 %v1321, %v1320
  %v1763 = vpack.c.b16 %v1323, %v1322
  %v1764 = vpack.c.b16 %v1325, %v1324
  %v1765 = vpack.c.b16 %v1327, %v1326
  %v1766 = vpack.c.b16 %v1329, %v1328
  %v1767 = vpack.c.b16 %v1331, %v1330
  %v1768 = vpack.c.b16 %v1333, %v1332
  %v1769 = vpack.c.b16 %v1335, %v1334
  %v1770 = vpack.c.b16 %v1337, %v1336
  %v1771 = vpack.c.b16 %v1339, %v1338
  %v1772 = vpack.c.b16 %v1341, %v1340
  %v1773 = vpack.c.b16 %v1343, %v1342
  %v1774 = vpack.c.b16 %v1345, %v1344
  %v1775 = vpack.c.b16 %v1347, %v1346
  %v1776 = vpack.c.b16 %v1349, %v1348
  %v1777 = vpack.c.b16 %v1351, %v1350
  %v1778 = vpack.c.b16 %v1353, %v1352
  %v1779 = vpack.c.b16 %v1355, %v1354
  %v1780 = vpack.c.b16 %v1357, %v1356
  %v1781 = vpack.c.b16 %v1359, %v1358
  %v1782 = vpack.c.b16 %v1361, %v1360
  %v1783 = vpack.c.b16 %v1363, %v1362
  %v1784 = vpack.c.b16 %v1365, %v1364
  %v1785 = vpack.c.b16 %v1367, %v1366
  %v1786 = vpack.c.b16 %v1369, %v1368
  %v1787 = vpack.c.b16 %v1371, %v1370
  %v1788 = vpack.c.b16 %v1373, %v1372
  %v1789 = vpack.c.b16 %v1375, %v1374
  %v1790 = vpack.c.b16 %v1377, %v1376
  %v1791 = vpack.c.b16 %v1379, %v1378
  %v1792 = vpack.c.b16 %v1381, %v1380
  %v1793 = vpack.c.b16 %v1383, %v1382
  %v1794 = vpack.c.b16 %v1385, %v1384
  %v1795 = vpack.c.b16 %v1387, %v1386
  %v1796 = vpack.c.b16 %v1389, %v1388
  %v1797 = vpack.c.b16 %v1391, %v1390
  %v1798 = vpack.c.b16 %v1393, %v1392
  %v1799 = vpack.c.b16 %v1395, %v1394
  %v1800 = vpack.c.b16 %v1397, %v1396
  %v1801 = vpack.c.b16 %v1399, %v1398
  %v1802 = vpack.c.b16 %v1401, %v1400
  %v1803 = vpack.c.b16 %v1403, %v1402
  %v1804 = vpack.c.b16 %v1405, %v1404
  %v1805 = vpack.c.b16 %v1407, %v1406
  %v1806 = vpack.c.b16 %v1409, %v1408
  %v1807 = vpack.c.b16 %v1411, %v1410
  %v1808 = vpack.c.b16 %v1413, %v1412
  %v1809 = vpack.c.b16 %v1415, %v1414
  %v1810 = vpack.c.b16 %v1417, %v1416
  %v1811 = vpack.c.b16 %v1419, %v1418
  %v1812 = vpack.c.b16 %v1421, %v1420
  %v1813 = vpack.c.b16 %v1423, %v1422
  %v1814 = vpack.c.b16 %v1425, %v1424
  %v1815 = vpack.c.b16 %v1427, %v1426
  %v1816 = vpack.c.b16 %v1429, %v1428
  %v1817 = vpack.c.b16 %v1431, %v1430
  %v1818 = vpack.c.b16 %v1433, %v1432
  %v1819 = vpack.c.b16 %v1435, %v1434
  %v1820 = vpack.c.b16 %v1437, %v1436
  %v1821 = vpack.c.b16 %v1439, %v1438
  %v1822 = vpack.c.b16 %v1441, %v1440
  %v1823 = vpack.c.b16 %v1443, %v1442
  %v1824 = vpack.c.b16 %v1445, %v1444
  %v1825 = vpack.c.b16 %v1447, %v1446
  %v1826 = vpack.c.b16 %v1449, %v1448
  %v1827 = vpack.c.b16 %v1451, %v1450
  %v1828 = vpack.c.b16 %v1453, %v1452
  %v1829 = vpack.c.b16 %v1455, %v1454
  %v1830 = vpack.c.b16 %v1457, %v1456
  %v1831 = vpack.c.b16 %v1459, %v1458
  %v1832 = vpack.c.b16 %v1461, %v1460
  %v1833 = vpack.c.b16 %v1463, %v1462
  %v1834 = vpack.c.b16 %v1465, %v1464
  %v1835 = vpack.c.b16 %v1467, %v1466
  %v1836 = vpack.c.b16 %v1469, %v1468
  %v1837 = vpack.c.b16 %v1471, %v1470
  %v1838 = vpack.c.b16 %v1473, %v1472
  %v1839 = vpack.c.b16 %v1475, %v1474
  %v1840 = vpack.c.b16 %v1477, %v1476
  %v1841 = vpack.c.b16 %v1479, %v1478
  %v1842 = vpack.c.b16 %v1481, %v1480
  %v1843 = vpack.c.b16 %v1483, %v1482
  %v1844 = vpack.c.b16 %v1485, %v1484
  %v1845 = vpack.c.b16 %v1487, %v1486
  %v1846 = vpack.c.b16 %v1489, %v1488
  %v1847 = vpack.c.b16 %v1491, %v1490
  %v1848 = vpack.c.b16 %v1493, %v1492
  %v1849 = vpack.c.b16 %v1495, %v1494
  %v1850 = vpack.c.b16 %v1497, %v1496
  %v1851 = vpack.c.b16 %v1499, %v1498
  %v1852 = vpack.c.b16 %v1501, %v1500
  %v1853 = vpack.c.b16 %v1503, %v1502
  %v1854 = vpack.c.b16 %v1505, %v1504
  %v1855 = vpack.c.b16 %v1507, %v1506
  %v1856 = vpack.c.b16 %v1509, %v1508
  %v1857 = vpack.c.b16 %v1511, %v1510
  %v1858 = vpack.c.b16 %v1513, %v1512
  %v1859 = vpack.c.b16 %v1515, %v1514
  %v1860 = vpack.c.b16 %v1517, %v1516
  %v1861 = vpack.c.b16 %v1519, %v1518
  %v1862 = vpack.c.b16 %v1521, %v1520
  %v1863 = vpack.c.b16 %v1523, %v1522
  %v1864 = vpack.c.b16 %v1525, %v1524
  %v1865 = vpack.c.b16 %v1527, %v1526
  %v1866 = vpack.c.b16 %v1529, %v1528
  %v1867 = vpack.c.b16 %v1531, %v1530
  %v1868 = vpack.c.b16 %v1533, %v1532
  %v1869 = vpack.c.b16 %v1535, %v1534
  %v1870 = vpack.c.b16 %v1537, %v1536
  %v1871 = vpack.c.b16 %v1539, %v1538
  %v1872 = vpack.c.b16 %v1541, %v1540
  %v1873 = vpack.c.b16 %v1543, %v1542
  %v1874 = vpack.c.b16 %v1545, %v1544
  %v1875 = vpack.c.b16 %v1547, %v1546
  %v1876 = vpack.c.b16 %v1549, %v1548
  %v1877 = vpack.c.b16 %v1551, %v1550
  %v1878 = vpack.c.b16 %v1553, %v1552
  %v1879 = vpack.c.b16 %v1555, %v1554
  %v1880 = vpack.c.b16 %v1557, %v1556
  %v1881 = vpack.c.b16 %v1559, %v1558
  %v1882 = vpack.c.b16 %v1561, %v1560
  %v1883 = vpack.c.b16 %v1563, %v1562
  %v1884 = vpack.c.b16 %v1565, %v1564
  %v1885 = vpack.c.b16 %v1567, %v1566
  %v1886 = vpack.c.b16 %v1569, %v1568
  %v1887 = vpack.c.b16 %v1571, %v1570
  %v1888 = vpack.c.b16 %v1573, %v1572
  %v1889 = vpack.c.b16 %v1575, %v1574
  %v1890 = vpack.c.b16 %v1577, %v1576
  %v1891 = vpack.c.b16 %v1579, %v1578
  %v1892 = vpack.c.b16 %v1581, %v1580
  %v1893 = vpack.c.b16 %v1583, %v1582
  %v1894 = vpack.c.b16 %v1585, %v1584
  %v1895 = vpack.c.b16 %v1587, %v1586
  %v1896 = vpack.c.b16 %v1589, %v1588
  %v1897 = vpack.c.b16 %v1591, %v1590
  %v1898 = vpack.c.b16 %v1593, %v1592
  %v1899 = vpack.c.b16 %v1595, %v1594
  %v1900 = vpack.c.b16 %v1597, %v1596
  %v1901 = vpack.c.b16 %v1599, %v1598
  %v1902 = vpack.c.b16 %v1601, %v1600
  %v1903 = vpack.c.b16 %v1603, %v1602
  %v1904 = vpack.c.b16 %v1605, %v1604
  %v1905 = vpack.c.b16 %v1607, %v1606
  %v1906 = vpack.c.b16 %v1609, %v1608
  %v1907 = vpack.c.b16 %v1611, %v1610
  %v1908 = vpack.c.b16 %v1613, %v1612
  %v1909 = vpack.c.b16 %v1615, %v1614
  %v1910 = vpack.c.b16 %v1617, %v1616
  %v1911 = vpack.c.b16 %v1619, %v1618
  %v1912 = vpack.c.b16 %v1621, %v1620
  %v1913 = vpack.c.b16 %v1623, %v1622
  %v1914 = vpack.c.b16 %v1625, %v1624
  %v1915 = vpack.c.b16 %v1627, %v1626
  %v1916 = vpack.c.b16 %v1629, %v1628
  %v1917 = vpack.c.b16 %v1631, %v1630
  %v1918 = vpack.c.b16 %v1633, %v1632
  %v1919 = vpack.c.b16 %v1635, %v1634
  %v1920 = vpack.c.b16 %v1637, %v1636
  %v1921 = vpack.c.b16 %v1639, %v1638
  %v1922 = vpack.c.b16 %v1641, %v1640
  %v1923 = vpack.c.b16 %v1643, %v1642
  %v1924 = vpack.c.b16 %v1645, %v1644
  %v1925 = vpack.c.b16 %v1647, %v1646
  %v1926 = vpack.c.b16 %v1649, %v1648
  %v1927 = vpack.c.b16 %v1651, %v1650
  %v1928 = vpack.c.b16 %v1653, %v1652
  %v1929 = vpack.c.b16 %v1655, %v1654
  %v1930 = vpack.c.b16 %v1657, %v1656
  %v1931 = vpack.c.b16 %v1659, %v1658
  %v1932 = vpack.c.b16 %v1661, %v1660
  %v1933 = vpack.c.b16 %v1663, %v1662
  %v1934 = vpack.c.b16 %v1665, %v1664
  %v1935 = vpack.c.b16 %v1667, %v1666
  %v1936 = vpack.c.b16 %v1669, %v1668
  %v1937 = vpack.c.b16 %v1671, %v1670
  %v1938 = vpack.c.b16 %v1673, %v1672
  %v1939 = vpack.c.b16 %v1675, %v1674
  %v1940 = vpack.c.b16 %v1677, %v1676
  %v1941 = vpack.c.b16 %v1679, %v1678
  %v1942 = vpack.c.b16 %v1681, %v1680
  %v1943 = vpack.c.b16 %v1683, %v1682
  %v1944 = vpack.c.b16 %v1685, %v1684
  %v1945 = vpack.c.b16 %v1687, %v1686
  %v1946 = vpack.c.b16 %v1689, %v1688
  %v1947 = vpack.c.b16 %v1691, %v1690
  %2204 = vmatprep.subr.bf16.mxu0 0
  %2205 = vmatpush1.bf16.msra.mxu0 %v1692
  %2206 = vmatprep.subr.bf16.mxu0 0
  %2207 = vmatpush1.bf16.msra.mxu0 %v1693
  %2208 = vmatprep.subr.bf16.mxu0 0
  %2209 = vmatpush1.bf16.msra.mxu0 %v1694
  %2210 = vmatprep.subr.bf16.mxu0 0
  %2211 = vmatpush1.bf16.msra.mxu0 %v1695
  %2212 = vmatprep.subr.bf16.mxu0 0
  %2213 = vmatpush1.bf16.msra.mxu0 %v1696
  %2214 = vmatprep.subr.bf16.mxu0 0
  %2215 = vmatpush1.bf16.msra.mxu0 %v1697
  %2216 = vmatprep.subr.bf16.mxu0 0
  %2217 = vmatpush1.bf16.msra.mxu0 %v1698
  %2218 = vmatprep.subr.bf16.mxu0 0
  %2219 = vmatpush1.bf16.msra.mxu0 %v1699
  %2220 = vmatprep.subr.bf16.mxu0 0
  %2221 = vmatpush1.bf16.msra.mxu0 %v1700
  %2222 = vmatprep.subr.bf16.mxu0 0
  %2223 = vmatpush1.bf16.msra.mxu0 %v1701
  %2224 = vmatprep.subr.bf16.mxu0 0
  %2225 = vmatpush1.bf16.msra.mxu0 %v1702
  %2226 = vmatprep.subr.bf16.mxu0 0
  %2227 = vmatpush1.bf16.msra.mxu0 %v1703
  %2228 = vmatprep.subr.bf16.mxu0 0
  %2229 = vmatpush1.bf16.msra.mxu0 %v1704
  %2230 = vmatprep.subr.bf16.mxu0 0
  %2231 = vmatpush1.bf16.msra.mxu0 %v1705
  %2232 = vmatprep.subr.bf16.mxu0 0
  %2233 = vmatpush1.bf16.msra.mxu0 %v1706
  %2234 = vmatprep.subr.bf16.mxu0 0
  %2235 = vmatpush1.bf16.msra.mxu0 %v1707
  %2236 = vmatprep.mubr.bf16.mxu0 %v605
  %2237 = vmatmul.mubr.bf16.gmra.mrb[0].mxu0 %v604
  %v2238 = vpop.f32.mrb[0].mxu0
  %v2239 = vadd.f32 %v554, %v2238
  %v2240 = vpop.f32.mrb[0].mxu0
  %v2241 = vpop.f32.mrb[0].mxu0
  %v2242 = vpop.f32.mrb[0].mxu0
  %2243 = vdwg.mxu0
  %2244 = vmatprep.subr.bf16.mxu0 0
  %2245 = vmatpush1.bf16.msra.mxu0 %v1708
  %2246 = vmatprep.subr.bf16.mxu0 0
  %2247 = vmatpush1.bf16.msra.mxu0 %v1709
  %2248 = vmatprep.subr.bf16.mxu0 0
  %2249 = vmatpush1.bf16.msra.mxu0 %v1710
  %2250 = vmatprep.subr.bf16.mxu0 0
  %2251 = vmatpush1.bf16.msra.mxu0 %v1711
  %2252 = vmatprep.subr.bf16.mxu0 0
  %2253 = vmatpush1.bf16.msra.mxu0 %v1712
  %2254 = vmatprep.subr.bf16.mxu0 0
  %2255 = vmatpush1.bf16.msra.mxu0 %v1713
  %2256 = vmatprep.subr.bf16.mxu0 0
  %2257 = vmatpush1.bf16.msra.mxu0 %v1714
  %2258 = vmatprep.subr.bf16.mxu0 0
  %2259 = vmatpush1.bf16.msra.mxu0 %v1715
  %2260 = vmatprep.subr.bf16.mxu0 0
  %2261 = vmatpush1.bf16.msra.mxu0 %v1716
  %2262 = vmatprep.subr.bf16.mxu0 0
  %2263 = vmatpush1.bf16.msra.mxu0 %v1717
  %2264 = vmatprep.subr.bf16.mxu0 0
  %2265 = vmatpush1.bf16.msra.mxu0 %v1718
  %2266 = vmatprep.subr.bf16.mxu0 0
  %2267 = vmatpush1.bf16.msra.mxu0 %v1719
  %2268 = vmatprep.subr.bf16.mxu0 0
  %2269 = vmatpush1.bf16.msra.mxu0 %v1720
  %2270 = vmatprep.subr.bf16.mxu0 0
  %2271 = vmatpush1.bf16.msra.mxu0 %v1721
  %2272 = vmatprep.subr.bf16.mxu0 0
  %2273 = vmatpush1.bf16.msra.mxu0 %v1722
  %2274 = vmatprep.subr.bf16.mxu0 0
  %2275 = vmatpush1.bf16.msra.mxu0 %v1723
  %2276 = vmatprep.mubr.bf16.mxu0 %v607
  %2277 = vmatmul.mubr.bf16.gmra.mrb[0].mxu0 %v606
  %v2278 = vpop.f32.mrb[0].mxu0
  %v2279 = vadd.f32 %v2239, %v2278
  %v2280 = vpop.f32.mrb[0].mxu0
  %v2281 = vpop.f32.mrb[0].mxu0
  %v2282 = vpop.f32.mrb[0].mxu0
  %2283 = vdwg.mxu0
  %2284 = vmatprep.subr.bf16.mxu0 0
  %2285 = vmatpush1.bf16.msra.mxu0 %v1724
  %2286 = vmatprep.subr.bf16.mxu0 0
  %2287 = vmatpush1.bf16.msra.mxu0 %v1725
  %2288 = vmatprep.subr.bf16.mxu0 0
  %2289 = vmatpush1.bf16.msra.mxu0 %v1726
  %2290 = vmatprep.subr.bf16.mxu0 0
  %2291 = vmatpush1.bf16.msra.mxu0 %v1727
  %2292 = vmatprep.subr.bf16.mxu0 0
  %2293 = vmatpush1.bf16.msra.mxu0 %v1728
  %2294 = vmatprep.subr.bf16.mxu0 0
  %2295 = vmatpush1.bf16.msra.mxu0 %v1729
  %2296 = vmatprep.subr.bf16.mxu0 0
  %2297 = vmatpush1.bf16.msra.mxu0 %v1730
  %2298 = vmatprep.subr.bf16.mxu0 0
  %2299 = vmatpush1.bf16.msra.mxu0 %v1731
  %2300 = vmatprep.subr.bf16.mxu0 0
  %2301 = vmatpush1.bf16.msra.mxu0 %v1732
  %2302 = vmatprep.subr.bf16.mxu0 0
  %2303 = vmatpush1.bf16.msra.mxu0 %v1733
  %2304 = vmatprep.subr.bf16.mxu0 0
  %2305 = vmatpush1.bf16.msra.mxu0 %v1734
  %2306 = vmatprep.subr.bf16.mxu0 0
  %2307 = vmatpush1.bf16.msra.mxu0 %v1735
  %2308 = vmatprep.subr.bf16.mxu0 0
  %2309 = vmatpush1.bf16.msra.mxu0 %v1736
  %2310 = vmatprep.subr.bf16.mxu0 0
  %2311 = vmatpush1.bf16.msra.mxu0 %v1737
  %2312 = vmatprep.subr.bf16.mxu0 0
  %2313 = vmatpush1.bf16.msra.mxu0 %v1738
  %2314 = vmatprep.subr.bf16.mxu0 0
  %2315 = vmatpush1.bf16.msra.mxu0 %v1739
  %2316 = vmatprep.mubr.bf16.mxu0 %v609
  %2317 = vmatmul.mubr.bf16.gmra.mrb[0].mxu0 %v608
  %v2318 = vpop.f32.mrb[0].mxu0
  %v2319 = vadd.f32 %v2279, %v2318
  %v2320 = vpop.f32.mrb[0].mxu0
  %v2321 = vpop.f32.mrb[0].mxu0
  %v2322 = vpop.f32.mrb[0].mxu0
  %2323 = vdwg.mxu0
  %2324 = vmatprep.subr.bf16.mxu0 0
  %2325 = vmatpush1.bf16.msra.mxu0 %v1740
  %2326 = vmatprep.subr.bf16.mxu0 0
  %2327 = vmatpush1.bf16.msra.mxu0 %v1741
  %2328 = vmatprep.subr.bf16.mxu0 0
  %2329 = vmatpush1.bf16.msra.mxu0 %v1742
  %2330 = vmatprep.subr.bf16.mxu0 0
  %2331 = vmatpush1.bf16.msra.mxu0 %v1743
  %2332 = vmatprep.subr.bf16.mxu0 0
  %2333 = vmatpush1.bf16.msra.mxu0 %v1744
  %2334 = vmatprep.subr.bf16.mxu0 0
  %2335 = vmatpush1.bf16.msra.mxu0 %v1745
  %2336 = vmatprep.subr.bf16.mxu0 0
  %2337 = vmatpush1.bf16.msra.mxu0 %v1746
  %2338 = vmatprep.subr.bf16.mxu0 0
  %2339 = vmatpush1.bf16.msra.mxu0 %v1747
  %2340 = vmatprep.subr.bf16.mxu0 0
  %2341 = vmatpush1.bf16.msra.mxu0 %v1748
  %2342 = vmatprep.subr.bf16.mxu0 0
  %2343 = vmatpush1.bf16.msra.mxu0 %v1749
  %2344 = vmatprep.subr.bf16.mxu0 0
  %2345 = vmatpush1.bf16.msra.mxu0 %v1750
  %2346 = vmatprep.subr.bf16.mxu0 0
  %2347 = vmatpush1.bf16.msra.mxu0 %v1751
  %2348 = vmatprep.subr.bf16.mxu0 0
  %2349 = vmatpush1.bf16.msra.mxu0 %v1752
  %2350 = vmatprep.subr.bf16.mxu0 0
  %2351 = vmatpush1.bf16.msra.mxu0 %v1753
  %2352 = vmatprep.subr.bf16.mxu0 0
  %2353 = vmatpush1.bf16.msra.mxu0 %v1754
  %2354 = vmatprep.subr.bf16.mxu0 0
  %2355 = vmatpush1.bf16.msra.mxu0 %v1755
  %2356 = vmatprep.mubr.bf16.mxu0 %v611
  %2357 = vmatmul.mubr.bf16.gmra.mrb[0].mxu0 %v610
  %v2358 = vpop.f32.mrb[0].mxu0
  %v2359 = vadd.f32 %v2319, %v2358
  %v2360 = vpop.f32.mrb[0].mxu0
  %v2361 = vpop.f32.mrb[0].mxu0
  %v2362 = vpop.f32.mrb[0].mxu0
  %2363 = vdwg.mxu0
  %2364 = vmatprep.subr.bf16.mxu0 0
  %2365 = vmatpush1.bf16.msra.mxu0 %v1756
  %2366 = vmatprep.subr.bf16.mxu0 0
  %2367 = vmatpush1.bf16.msra.mxu0 %v1757
  %2368 = vmatprep.subr.bf16.mxu0 0
  %2369 = vmatpush1.bf16.msra.mxu0 %v1758
  %2370 = vmatprep.subr.bf16.mxu0 0
  %2371 = vmatpush1.bf16.msra.mxu0 %v1759
  %2372 = vmatprep.subr.bf16.mxu0 0
  %2373 = vmatpush1.bf16.msra.mxu0 %v1760
  %2374 = vmatprep.subr.bf16.mxu0 0
  %2375 = vmatpush1.bf16.msra.mxu0 %v1761
  %2376 = vmatprep.subr.bf16.mxu0 0
  %2377 = vmatpush1.bf16.msra.mxu0 %v1762
  %2378 = vmatprep.subr.bf16.mxu0 0
  %2379 = vmatpush1.bf16.msra.mxu0 %v1763
  %2380 = vmatprep.subr.bf16.mxu0 0
  %2381 = vmatpush1.bf16.msra.mxu0 %v1764
  %2382 = vmatprep.subr.bf16.mxu0 0
  %2383 = vmatpush1.bf16.msra.mxu0 %v1765
  %2384 = vmatprep.subr.bf16.mxu0 0
  %2385 = vmatpush1.bf16.msra.mxu0 %v1766
  %2386 = vmatprep.subr.bf16.mxu0 0
  %2387 = vmatpush1.bf16.msra.mxu0 %v1767
  %2388 = vmatprep.subr.bf16.mxu0 0
  %2389 = vmatpush1.bf16.msra.mxu0 %v1768
  %2390 = vmatprep.subr.bf16.mxu0 0
  %2391 = vmatpush1.bf16.msra.mxu0 %v1769
  %2392 = vmatprep.subr.bf16.mxu0 0
  %2393 = vmatpush1.bf16.msra.mxu0 %v1770
  %2394 = vmatprep.subr.bf16.mxu0 0
  %2395 = vmatpush1.bf16.msra.mxu0 %v1771
  %2396 = vmatprep.mubr.bf16.mxu0 %v613
  %2397 = vmatmul.mubr.bf16.gmra.mrb[0].mxu0 %v612
  %v2398 = vpop.f32.mrb[0].mxu0
  %v2399 = vadd.f32 %v2359, %v2398
  %v2400 = vpop.f32.mrb[0].mxu0
  %v2401 = vpop.f32.mrb[0].mxu0
  %v2402 = vpop.f32.mrb[0].mxu0
  %2403 = vdwg.mxu0
  %2404 = vmatprep.subr.bf16.mxu0 0
  %2405 = vmatpush1.bf16.msra.mxu0 %v1772
  %2406 = vmatprep.subr.bf16.mxu0 0
  %2407 = vmatpush1.bf16.msra.mxu0 %v1773
  %2408 = vmatprep.subr.bf16.mxu0 0
  %2409 = vmatpush1.bf16.msra.mxu0 %v1774
  %2410 = vmatprep.subr.bf16.mxu0 0
  %2411 = vmatpush1.bf16.msra.mxu0 %v1775
  %2412 = vmatprep.subr.bf16.mxu0 0
  %2413 = vmatpush1.bf16.msra.mxu0 %v1776
  %2414 = vmatprep.subr.bf16.mxu0 0
  %2415 = vmatpush1.bf16.msra.mxu0 %v1777
  %2416 = vmatprep.subr.bf16.mxu0 0
  %2417 = vmatpush1.bf16.msra.mxu0 %v1778
  %2418 = vmatprep.subr.bf16.mxu0 0
  %2419 = vmatpush1.bf16.msra.mxu0 %v1779
  %2420 = vmatprep.subr.bf16.mxu0 0
  %2421 = vmatpush1.bf16.msra.mxu0 %v1780
  %2422 = vmatprep.subr.bf16.mxu0 0
  %2423 = vmatpush1.bf16.msra.mxu0 %v1781
  %2424 = vmatprep.subr.bf16.mxu0 0
  %2425 = vmatpush1.bf16.msra.mxu0 %v1782
  %2426 = vmatprep.subr.bf16.mxu0 0
  %2427 = vmatpush1.bf16.msra.mxu0 %v1783
  %2428 = vmatprep.subr.bf16.mxu0 0
  %2429 = vmatpush1.bf16.msra.mxu0 %v1784
  %2430 = vmatprep.subr.bf16.mxu0 0
  %2431 = vmatpush1.bf16.msra.mxu0 %v1785
  %2432 = vmatprep.subr.bf16.mxu0 0
  %2433 = vmatpush1.bf16.msra.mxu0 %v1786
  %2434 = vmatprep.subr.bf16.mxu0 0
  %2435 = vmatpush1.bf16.msra.mxu0 %v1787
  %2436 = vmatprep.mubr.bf16.mxu0 %v615
  %2437 = vmatmul.mubr.bf16.gmra.mrb[0].mxu0 %v614
  %v2438 = vpop.f32.mrb[0].mxu0
  %v2439 = vadd.f32 %v2399, %v2438
  %v2440 = vpop.f32.mrb[0].mxu0
  %v2441 = vpop.f32.mrb[0].mxu0
  %v2442 = vpop.f32.mrb[0].mxu0
  %2443 = vdwg.mxu0
  %2444 = vmatprep.subr.bf16.mxu0 0
  %2445 = vmatpush1.bf16.msra.mxu0 %v1788
  %2446 = vmatprep.subr.bf16.mxu0 0
  %2447 = vmatpush1.bf16.msra.mxu0 %v1789
  %2448 = vmatprep.subr.bf16.mxu0 0
  %2449 = vmatpush1.bf16.msra.mxu0 %v1790
  %2450 = vmatprep.subr.bf16.mxu0 0
  %2451 = vmatpush1.bf16.msra.mxu0 %v1791
  %2452 = vmatprep.subr.bf16.mxu0 0
  %2453 = vmatpush1.bf16.msra.mxu0 %v1792
  %2454 = vmatprep.subr.bf16.mxu0 0
  %2455 = vmatpush1.bf16.msra.mxu0 %v1793
  %2456 = vmatprep.subr.bf16.mxu0 0
  %2457 = vmatpush1.bf16.msra.mxu0 %v1794
  %2458 = vmatprep.subr.bf16.mxu0 0
  %2459 = vmatpush1.bf16.msra.mxu0 %v1795
  %2460 = vmatprep.subr.bf16.mxu0 0
  %2461 = vmatpush1.bf16.msra.mxu0 %v1796
  %2462 = vmatprep.subr.bf16.mxu0 0
  %2463 = vmatpush1.bf16.msra.mxu0 %v1797
  %2464 = vmatprep.subr.bf16.mxu0 0
  %2465 = vmatpush1.bf16.msra.mxu0 %v1798
  %2466 = vmatprep.subr.bf16.mxu0 0
  %2467 = vmatpush1.bf16.msra.mxu0 %v1799
  %2468 = vmatprep.subr.bf16.mxu0 0
  %2469 = vmatpush1.bf16.msra.mxu0 %v1800
  %2470 = vmatprep.subr.bf16.mxu0 0
  %2471 = vmatpush1.bf16.msra.mxu0 %v1801
  %2472 = vmatprep.subr.bf16.mxu0 0
  %2473 = vmatpush1.bf16.msra.mxu0 %v1802
  %2474 = vmatprep.subr.bf16.mxu0 0
  %2475 = vmatpush1.bf16.msra.mxu0 %v1803
  %2476 = vmatprep.mubr.bf16.mxu0 %v617
  %2477 = vmatmul.mubr.bf16.gmra.mrb[0].mxu0 %v616
  %v2478 = vpop.f32.mrb[0].mxu0
  %v2479 = vadd.f32 %v2439, %v2478
  %v2480 = vpop.f32.mrb[0].mxu0
  %v2481 = vpop.f32.mrb[0].mxu0
  %v2482 = vpop.f32.mrb[0].mxu0
  %2483 = vdwg.mxu0
  %2484 = vmatprep.subr.bf16.mxu0 0
  %2485 = vmatpush1.bf16.msra.mxu0 %v1804
  %2486 = vmatprep.subr.bf16.mxu0 0
  %2487 = vmatpush1.bf16.msra.mxu0 %v1805
  %2488 = vmatprep.subr.bf16.mxu0 0
  %2489 = vmatpush1.bf16.msra.mxu0 %v1806
  %2490 = vmatprep.subr.bf16.mxu0 0
  %2491 = vmatpush1.bf16.msra.mxu0 %v1807
  %2492 = vmatprep.subr.bf16.mxu0 0
  %2493 = vmatpush1.bf16.msra.mxu0 %v1808
  %2494 = vmatprep.subr.bf16.mxu0 0
  %2495 = vmatpush1.bf16.msra.mxu0 %v1809
  %2496 = vmatprep.subr.bf16.mxu0 0
  %2497 = vmatpush1.bf16.msra.mxu0 %v1810
  %2498 = vmatprep.subr.bf16.mxu0 0
  %2499 = vmatpush1.bf16.msra.mxu0 %v1811
  %2500 = vmatprep.subr.bf16.mxu0 0
  %2501 = vmatpush1.bf16.msra.mxu0 %v1812
  %2502 = vmatprep.subr.bf16.mxu0 0
  %2503 = vmatpush1.bf16.msra.mxu0 %v1813
  %2504 = vmatprep.subr.bf16.mxu0 0
  %2505 = vmatpush1.bf16.msra.mxu0 %v1814
  %2506 = vmatprep.subr.bf16.mxu0 0
  %2507 = vmatpush1.bf16.msra.mxu0 %v1815
  %2508 = vmatprep.subr.bf16.mxu0 0
  %2509 = vmatpush1.bf16.msra.mxu0 %v1816
  %2510 = vmatprep.subr.bf16.mxu0 0
  %2511 = vmatpush1.bf16.msra.mxu0 %v1817
  %2512 = vmatprep.subr.bf16.mxu0 0
  %2513 = vmatpush1.bf16.msra.mxu0 %v1818
  %2514 = vmatprep.subr.bf16.mxu0 0
  %2515 = vmatpush1.bf16.msra.mxu0 %v1819
  %2516 = vmatprep.mubr.bf16.mxu0 %v619
  %2517 = vmatmul.mubr.bf16.gmra.mrb[0].mxu0 %v618
  %v2518 = vpop.f32.mrb[0].mxu0
  %v2519 = vadd.f32 %v2479, %v2518
  %v2520 = vpop.f32.mrb[0].mxu0
  %v2521 = vpop.f32.mrb[0].mxu0
  %v2522 = vpop.f32.mrb[0].mxu0
  %2523 = vdwg.mxu0
  %2524 = vmatprep.subr.bf16.mxu0 0
  %2525 = vmatpush1.bf16.msra.mxu0 %v1820
  %2526 = vmatprep.subr.bf16.mxu0 0
  %2527 = vmatpush1.bf16.msra.mxu0 %v1821
  %2528 = vmatprep.subr.bf16.mxu0 0
  %2529 = vmatpush1.bf16.msra.mxu0 %v1822
  %2530 = vmatprep.subr.bf16.mxu0 0
  %2531 = vmatpush1.bf16.msra.mxu0 %v1823
  %2532 = vmatprep.subr.bf16.mxu0 0
  %2533 = vmatpush1.bf16.msra.mxu0 %v1824
  %2534 = vmatprep.subr.bf16.mxu0 0
  %2535 = vmatpush1.bf16.msra.mxu0 %v1825
  %2536 = vmatprep.subr.bf16.mxu0 0
  %2537 = vmatpush1.bf16.msra.mxu0 %v1826
  %2538 = vmatprep.subr.bf16.mxu0 0
  %2539 = vmatpush1.bf16.msra.mxu0 %v1827
  %2540 = vmatprep.subr.bf16.mxu0 0
  %2541 = vmatpush1.bf16.msra.mxu0 %v1828
  %2542 = vmatprep.subr.bf16.mxu0 0
  %2543 = vmatpush1.bf16.msra.mxu0 %v1829
  %2544 = vmatprep.subr.bf16.mxu0 0
  %2545 = vmatpush1.bf16.msra.mxu0 %v1830
  %2546 = vmatprep.subr.bf16.mxu0 0
  %2547 = vmatpush1.bf16.msra.mxu0 %v1831
  %2548 = vmatprep.subr.bf16.mxu0 0
  %2549 = vmatpush1.bf16.msra.mxu0 %v1832
  %2550 = vmatprep.subr.bf16.mxu0 0
  %2551 = vmatpush1.bf16.msra.mxu0 %v1833
  %2552 = vmatprep.subr.bf16.mxu0 0
  %2553 = vmatpush1.bf16.msra.mxu0 %v1834
  %2554 = vmatprep.subr.bf16.mxu0 0
  %2555 = vmatpush1.bf16.msra.mxu0 %v1835
  %2556 = vmatprep.mubr.bf16.mxu0 %v621
  %2557 = vmatmul.mubr.bf16.gmra.mrb[0].mxu0 %v620
  %v2558 = vpop.f32.mrb[0].mxu0
  %v2559 = vadd.f32 %v2519, %v2558
  %v2560 = vpop.f32.mrb[0].mxu0
  %v2561 = vpop.f32.mrb[0].mxu0
  %v2562 = vpop.f32.mrb[0].mxu0
  %2563 = vdwg.mxu0
  %2564 = vmatprep.subr.bf16.mxu0 0
  %2565 = vmatpush1.bf16.msra.mxu0 %v1836
  %2566 = vmatprep.subr.bf16.mxu0 0
  %2567 = vmatpush1.bf16.msra.mxu0 %v1837
  %2568 = vmatprep.subr.bf16.mxu0 0
  %2569 = vmatpush1.bf16.msra.mxu0 %v1838
  %2570 = vmatprep.subr.bf16.mxu0 0
  %2571 = vmatpush1.bf16.msra.mxu0 %v1839
  %2572 = vmatprep.subr.bf16.mxu0 0
  %2573 = vmatpush1.bf16.msra.mxu0 %v1840
  %2574 = vmatprep.subr.bf16.mxu0 0
  %2575 = vmatpush1.bf16.msra.mxu0 %v1841
  %2576 = vmatprep.subr.bf16.mxu0 0
  %2577 = vmatpush1.bf16.msra.mxu0 %v1842
  %2578 = vmatprep.subr.bf16.mxu0 0
  %2579 = vmatpush1.bf16.msra.mxu0 %v1843
  %2580 = vmatprep.subr.bf16.mxu0 0
  %2581 = vmatpush1.bf16.msra.mxu0 %v1844
  %2582 = vmatprep.subr.bf16.mxu0 0
  %2583 = vmatpush1.bf16.msra.mxu0 %v1845
  %2584 = vmatprep.subr.bf16.mxu0 0
  %2585 = vmatpush1.bf16.msra.mxu0 %v1846
  %2586 = vmatprep.subr.bf16.mxu0 0
  %2587 = vmatpush1.bf16.msra.mxu0 %v1847
  %2588 = vmatprep.subr.bf16.mxu0 0
  %2589 = vmatpush1.bf16.msra.mxu0 %v1848
  %2590 = vmatprep.subr.bf16.mxu0 0
  %2591 = vmatpush1.bf16.msra.mxu0 %v1849
  %2592 = vmatprep.subr.bf16.mxu0 0
  %2593 = vmatpush1.bf16.msra.mxu0 %v1850
  %2594 = vmatprep.subr.bf16.mxu0 0
  %2595 = vmatpush1.bf16.msra.mxu0 %v1851
  %2596 = vmatprep.mubr.bf16.mxu0 %v623
  %2597 = vmatmul.mubr.bf16.gmra.mrb[0].mxu0 %v622
  %v2598 = vpop.f32.mrb[0].mxu0
  %v2599 = vadd.f32 %v2559, %v2598
  %v2600 = vpop.f32.mrb[0].mxu0
  %v2601 = vpop.f32.mrb[0].mxu0
  %v2602 = vpop.f32.mrb[0].mxu0
  %2603 = vdwg.mxu0
  %2604 = vmatprep.subr.bf16.mxu0 0
  %2605 = vmatpush1.bf16.msra.mxu0 %v1852
  %2606 = vmatprep.subr.bf16.mxu0 0
  %2607 = vmatpush1.bf16.msra.mxu0 %v1853
  %2608 = vmatprep.subr.bf16.mxu0 0
  %2609 = vmatpush1.bf16.msra.mxu0 %v1854
  %2610 = vmatprep.subr.bf16.mxu0 0
  %2611 = vmatpush1.bf16.msra.mxu0 %v1855
  %2612 = vmatprep.subr.bf16.mxu0 0
  %2613 = vmatpush1.bf16.msra.mxu0 %v1856
  %2614 = vmatprep.subr.bf16.mxu0 0
  %2615 = vmatpush1.bf16.msra.mxu0 %v1857
  %2616 = vmatprep.subr.bf16.mxu0 0
  %2617 = vmatpush1.bf16.msra.mxu0 %v1858
  %2618 = vmatprep.subr.bf16.mxu0 0
  %2619 = vmatpush1.bf16.msra.mxu0 %v1859
  %2620 = vmatprep.subr.bf16.mxu0 0
  %2621 = vmatpush1.bf16.msra.mxu0 %v1860
  %2622 = vmatprep.subr.bf16.mxu0 0
  %2623 = vmatpush1.bf16.msra.mxu0 %v1861
  %2624 = vmatprep.subr.bf16.mxu0 0
  %2625 = vmatpush1.bf16.msra.mxu0 %v1862
  %2626 = vmatprep.subr.bf16.mxu0 0
  %2627 = vmatpush1.bf16.msra.mxu0 %v1863
  %2628 = vmatprep.subr.bf16.mxu0 0
  %2629 = vmatpush1.bf16.msra.mxu0 %v1864
  %2630 = vmatprep.subr.bf16.mxu0 0
  %2631 = vmatpush1.bf16.msra.mxu0 %v1865
  %2632 = vmatprep.subr.bf16.mxu0 0
  %2633 = vmatpush1.bf16.msra.mxu0 %v1866
  %2634 = vmatprep.subr.bf16.mxu0 0
  %2635 = vmatpush1.bf16.msra.mxu0 %v1867
  %2636 = vmatprep.mubr.bf16.mxu0 %v625
  %2637 = vmatmul.mubr.bf16.gmra.mrb[0].mxu0 %v624
  %v2638 = vpop.f32.mrb[0].mxu0
  %v2639 = vadd.f32 %v2599, %v2638
  %v2640 = vpop.f32.mrb[0].mxu0
  %v2641 = vpop.f32.mrb[0].mxu0
  %v2642 = vpop.f32.mrb[0].mxu0
  %2643 = vdwg.mxu0
  %2644 = vmatprep.subr.bf16.mxu0 0
  %2645 = vmatpush1.bf16.msra.mxu0 %v1868
  %2646 = vmatprep.subr.bf16.mxu0 0
  %2647 = vmatpush1.bf16.msra.mxu0 %v1869
  %2648 = vmatprep.subr.bf16.mxu0 0
  %2649 = vmatpush1.bf16.msra.mxu0 %v1870
  %2650 = vmatprep.subr.bf16.mxu0 0
  %2651 = vmatpush1.bf16.msra.mxu0 %v1871
  %2652 = vmatprep.subr.bf16.mxu0 0
  %2653 = vmatpush1.bf16.msra.mxu0 %v1872
  %2654 = vmatprep.subr.bf16.mxu0 0
  %2655 = vmatpush1.bf16.msra.mxu0 %v1873
  %2656 = vmatprep.subr.bf16.mxu0 0
  %2657 = vmatpush1.bf16.msra.mxu0 %v1874
  %2658 = vmatprep.subr.bf16.mxu0 0
  %2659 = vmatpush1.bf16.msra.mxu0 %v1875
  %2660 = vmatprep.subr.bf16.mxu0 0
  %2661 = vmatpush1.bf16.msra.mxu0 %v1876
  %2662 = vmatprep.subr.bf16.mxu0 0
  %2663 = vmatpush1.bf16.msra.mxu0 %v1877
  %2664 = vmatprep.subr.bf16.mxu0 0
  %2665 = vmatpush1.bf16.msra.mxu0 %v1878
  %2666 = vmatprep.subr.bf16.mxu0 0
  %2667 = vmatpush1.bf16.msra.mxu0 %v1879
  %2668 = vmatprep.subr.bf16.mxu0 0
  %2669 = vmatpush1.bf16.msra.mxu0 %v1880
  %2670 = vmatprep.subr.bf16.mxu0 0
  %2671 = vmatpush1.bf16.msra.mxu0 %v1881
  %2672 = vmatprep.subr.bf16.mxu0 0
  %2673 = vmatpush1.bf16.msra.mxu0 %v1882
  %2674 = vmatprep.subr.bf16.mxu0 0
  %2675 = vmatpush1.bf16.msra.mxu0 %v1883
  %2676 = vmatprep.mubr.bf16.mxu0 %v627
  %2677 = vmatmul.mubr.bf16.gmra.mrb[0].mxu0 %v626
  %v2678 = vpop.f32.mrb[0].mxu0
  %v2679 = vadd.f32 %v2639, %v2678
  %v2680 = vpop.f32.mrb[0].mxu0
  %v2681 = vpop.f32.mrb[0].mxu0
  %v2682 = vpop.f32.mrb[0].mxu0
  %2683 = vdwg.mxu0
  %2684 = vmatprep.subr.bf16.mxu0 0
  %2685 = vmatpush1.bf16.msra.mxu0 %v1884
  %2686 = vmatprep.subr.bf16.mxu0 0
  %2687 = vmatpush1.bf16.msra.mxu0 %v1885
  %2688 = vmatprep.subr.bf16.mxu0 0
  %2689 = vmatpush1.bf16.msra.mxu0 %v1886
  %2690 = vmatprep.subr.bf16.mxu0 0
  %2691 = vmatpush1.bf16.msra.mxu0 %v1887
  %2692 = vmatprep.subr.bf16.mxu0 0
  %2693 = vmatpush1.bf16.msra.mxu0 %v1888
  %2694 = vmatprep.subr.bf16.mxu0 0
  %2695 = vmatpush1.bf16.msra.mxu0 %v1889
  %2696 = vmatprep.subr.bf16.mxu0 0
  %2697 = vmatpush1.bf16.msra.mxu0 %v1890
  %2698 = vmatprep.subr.bf16.mxu0 0
  %2699 = vmatpush1.bf16.msra.mxu0 %v1891
  %2700 = vmatprep.subr.bf16.mxu0 0
  %2701 = vmatpush1.bf16.msra.mxu0 %v1892
  %2702 = vmatprep.subr.bf16.mxu0 0
  %2703 = vmatpush1.bf16.msra.mxu0 %v1893
  %2704 = vmatprep.subr.bf16.mxu0 0
  %2705 = vmatpush1.bf16.msra.mxu0 %v1894
  %2706 = vmatprep.subr.bf16.mxu0 0
  %2707 = vmatpush1.bf16.msra.mxu0 %v1895
  %2708 = vmatprep.subr.bf16.mxu0 0
  %2709 = vmatpush1.bf16.msra.mxu0 %v1896
  %2710 = vmatprep.subr.bf16.mxu0 0
  %2711 = vmatpush1.bf16.msra.mxu0 %v1897
  %2712 = vmatprep.subr.bf16.mxu0 0
  %2713 = vmatpush1.bf16.msra.mxu0 %v1898
  %2714 = vmatprep.subr.bf16.mxu0 0
  %2715 = vmatpush1.bf16.msra.mxu0 %v1899
  %2716 = vmatprep.mubr.bf16.mxu0 %v629
  %2717 = vmatmul.mubr.bf16.gmra.mrb[0].mxu0 %v628
  %v2718 = vpop.f32.mrb[0].mxu0
  %v2719 = vadd.f32 %v2679, %v2718
  %v2720 = vpop.f32.mrb[0].mxu0
  %v2721 = vpop.f32.mrb[0].mxu0
  %v2722 = vpop.f32.mrb[0].mxu0
  %2723 = vdwg.mxu0
  %2724 = vmatprep.subr.bf16.mxu0 0
  %2725 = vmatpush1.bf16.msra.mxu0 %v1900
  %2726 = vmatprep.subr.bf16.mxu0 0
  %2727 = vmatpush1.bf16.msra.mxu0 %v1901
  %2728 = vmatprep.subr.bf16.mxu0 0
  %2729 = vmatpush1.bf16.msra.mxu0 %v1902
  %2730 = vmatprep.subr.bf16.mxu0 0
  %2731 = vmatpush1.bf16.msra.mxu0 %v1903
  %2732 = vmatprep.subr.bf16.mxu0 0
  %2733 = vmatpush1.bf16.msra.mxu0 %v1904
  %2734 = vmatprep.subr.bf16.mxu0 0
  %2735 = vmatpush1.bf16.msra.mxu0 %v1905
  %2736 = vmatprep.subr.bf16.mxu0 0
  %2737 = vmatpush1.bf16.msra.mxu0 %v1906
  %2738 = vmatprep.subr.bf16.mxu0 0
  %2739 = vmatpush1.bf16.msra.mxu0 %v1907
  %2740 = vmatprep.subr.bf16.mxu0 0
  %2741 = vmatpush1.bf16.msra.mxu0 %v1908
  %2742 = vmatprep.subr.bf16.mxu0 0
  %2743 = vmatpush1.bf16.msra.mxu0 %v1909
  %2744 = vmatprep.subr.bf16.mxu0 0
  %2745 = vmatpush1.bf16.msra.mxu0 %v1910
  %2746 = vmatprep.subr.bf16.mxu0 0
  %2747 = vmatpush1.bf16.msra.mxu0 %v1911
  %2748 = vmatprep.subr.bf16.mxu0 0
  %2749 = vmatpush1.bf16.msra.mxu0 %v1912
  %2750 = vmatprep.subr.bf16.mxu0 0
  %2751 = vmatpush1.bf16.msra.mxu0 %v1913
  %2752 = vmatprep.subr.bf16.mxu0 0
  %2753 = vmatpush1.bf16.msra.mxu0 %v1914
  %2754 = vmatprep.subr.bf16.mxu0 0
  %2755 = vmatpush1.bf16.msra.mxu0 %v1915
  %2756 = vmatprep.mubr.bf16.mxu0 %v631
  %2757 = vmatmul.mubr.bf16.gmra.mrb[0].mxu0 %v630
  %v2758 = vpop.f32.mrb[0].mxu0
  %v2759 = vadd.f32 %v2719, %v2758
  %v2760 = vpop.f32.mrb[0].mxu0
  %v2761 = vpop.f32.mrb[0].mxu0
  %v2762 = vpop.f32.mrb[0].mxu0
  %2763 = vdwg.mxu0
  %2764 = vmatprep.subr.bf16.mxu0 0
  %2765 = vmatpush1.bf16.msra.mxu0 %v1916
  %2766 = vmatprep.subr.bf16.mxu0 0
  %2767 = vmatpush1.bf16.msra.mxu0 %v1917
  %2768 = vmatprep.subr.bf16.mxu0 0
  %2769 = vmatpush1.bf16.msra.mxu0 %v1918
  %2770 = vmatprep.subr.bf16.mxu0 0
  %2771 = vmatpush1.bf16.msra.mxu0 %v1919
  %2772 = vmatprep.subr.bf16.mxu0 0
  %2773 = vmatpush1.bf16.msra.mxu0 %v1920
  %2774 = vmatprep.subr.bf16.mxu0 0
  %2775 = vmatpush1.bf16.msra.mxu0 %v1921
  %2776 = vmatprep.subr.bf16.mxu0 0
  %2777 = vmatpush1.bf16.msra.mxu0 %v1922
  %2778 = vmatprep.subr.bf16.mxu0 0
  %2779 = vmatpush1.bf16.msra.mxu0 %v1923
  %2780 = vmatprep.subr.bf16.mxu0 0
  %2781 = vmatpush1.bf16.msra.mxu0 %v1924
  %2782 = vmatprep.subr.bf16.mxu0 0
  %2783 = vmatpush1.bf16.msra.mxu0 %v1925
  %2784 = vmatprep.subr.bf16.mxu0 0
  %2785 = vmatpush1.bf16.msra.mxu0 %v1926
  %2786 = vmatprep.subr.bf16.mxu0 0
  %2787 = vmatpush1.bf16.msra.mxu0 %v1927
  %2788 = vmatprep.subr.bf16.mxu0 0
  %2789 = vmatpush1.bf16.msra.mxu0 %v1928
  %2790 = vmatprep.subr.bf16.mxu0 0
  %2791 = vmatpush1.bf16.msra.mxu0 %v1929
  %2792 = vmatprep.subr.bf16.mxu0 0
  %2793 = vmatpush1.bf16.msra.mxu0 %v1930
  %2794 = vmatprep.subr.bf16.mxu0 0
  %2795 = vmatpush1.bf16.msra.mxu0 %v1931
  %2796 = vmatprep.mubr.bf16.mxu0 %v633
  %2797 = vmatmul.mubr.bf16.gmra.mrb[0].mxu0 %v632
  %v2798 = vpop.f32.mrb[0].mxu0
  %v2799 = vadd.f32 %v2759, %v2798
  %v2800 = vpop.f32.mrb[0].mxu0
  %v2801 = vpop.f32.mrb[0].mxu0
  %v2802 = vpop.f32.mrb[0].mxu0
  %2803 = vdwg.mxu0
  %2804 = vmatprep.subr.bf16.mxu0 0
  %2805 = vmatpush1.bf16.msra.mxu0 %v1932
  %2806 = vmatprep.subr.bf16.mxu0 0
  %2807 = vmatpush1.bf16.msra.mxu0 %v1933
  %2808 = vmatprep.subr.bf16.mxu0 0
  %2809 = vmatpush1.bf16.msra.mxu0 %v1934
  %2810 = vmatprep.subr.bf16.mxu0 0
  %2811 = vmatpush1.bf16.msra.mxu0 %v1935
  %2812 = vmatprep.subr.bf16.mxu0 0
  %2813 = vmatpush1.bf16.msra.mxu0 %v1936
  %2814 = vmatprep.subr.bf16.mxu0 0
  %2815 = vmatpush1.bf16.msra.mxu0 %v1937
  %2816 = vmatprep.subr.bf16.mxu0 0
  %2817 = vmatpush1.bf16.msra.mxu0 %v1938
  %2818 = vmatprep.subr.bf16.mxu0 0
  %2819 = vmatpush1.bf16.msra.mxu0 %v1939
  %2820 = vmatprep.subr.bf16.mxu0 0
  %2821 = vmatpush1.bf16.msra.mxu0 %v1940
  %2822 = vmatprep.subr.bf16.mxu0 0
  %2823 = vmatpush1.bf16.msra.mxu0 %v1941
  %2824 = vmatprep.subr.bf16.mxu0 0
  %2825 = vmatpush1.bf16.msra.mxu0 %v1942
  %2826 = vmatprep.subr.bf16.mxu0 0
  %2827 = vmatpush1.bf16.msra.mxu0 %v1943
  %2828 = vmatprep.subr.bf16.mxu0 0
  %2829 = vmatpush1.bf16.msra.mxu0 %v1944
  %2830 = vmatprep.subr.bf16.mxu0 0
  %2831 = vmatpush1.bf16.msra.mxu0 %v1945
  %2832 = vmatprep.subr.bf16.mxu0 0
  %2833 = vmatpush1.bf16.msra.mxu0 %v1946
  %2834 = vmatprep.subr.bf16.mxu0 0
  %2835 = vmatpush1.bf16.msra.mxu0 %v1947
  %2836 = vmatprep.mubr.bf16.mxu0 %v635
  %2837 = vmatmul.mubr.bf16.gmra.mrb[0].mxu0 %v634
  %v2838 = vpop.f32.mrb[0].mxu0
  %v2839 = vadd.f32 %v2799, %v2838
  %v2840 = vpop.f32.mrb[0].mxu0
  %v2841 = vpop.f32.mrb[0].mxu0
  %v2842 = vpop.f32.mrb[0].mxu0
  %2843 = vdwg.mxu0
  %v2844 = vmax.f32 %v2839, 0.0
  %v2845 = vpack.c.bf16 %v2844, %v2844
  %v2846 = vld [vmem:[%s3] sm:$0xf]
  %v2847 = vld [vmem:[%s3 + $0x4] sm:$0xf]
  %v2848 = vld [vmem:[%s3 + $0x8] sm:$0xf]
  %v2849 = vld [vmem:[%s3 + $0xc] sm:$0xf]
  %v2850 = vld [vmem:[%s3 + $0x10] sm:$0xf]
  %v2851 = vld [vmem:[%s3 + $0x14] sm:$0xf]
  %v2852 = vld [vmem:[%s3 + $0x18] sm:$0xf]
  %v2853 = vld [vmem:[%s3 + $0x1c] sm:$0xf]
  %v2854 = vld [vmem:[%s3 + $0x20] sm:$0xf]
  %v2855 = vld [vmem:[%s3 + $0x24] sm:$0xf]
  %v2856 = vld [vmem:[%s3 + $0x28] sm:$0xf]
  %v2857 = vld [vmem:[%s3 + $0x2c] sm:$0xf]
  %v2858 = vld [vmem:[%s3 + $0x30] sm:$0xf]
  %v2859 = vld [vmem:[%s3 + $0x34] sm:$0xf]
  %v2860 = vld [vmem:[%s3 + $0x38] sm:$0xf]
  %v2861 = vld [vmem:[%s3 + $0x3c] sm:$0xf]
  %v2862 = vld [vmem:[%s4] sm:$0x1]
  %v2864 = vlaneseq
  %v2865 = vshrl.u32 %v2864, 7
  %v2866 = vsub.s32 0, %v2865
  %v2867 = vrot.slane %v2862, %v2866
  %v2885 = vunpack.c.l.b16 %v2846
  %v2886 = vunpack.c.l.b16 %v2847
  %v2887 = vunpack.c.l.b16 %v2848
  %v2888 = vunpack.c.l.b16 %v2849
  %v2889 = vunpack.c.l.b16 %v2850
  %v2890 = vunpack.c.l.b16 %v2851
  %v2891 = vunpack.c.l.b16 %v2852
  %v2892 = vunpack.c.l.b16 %v2853
  %v2893 = vunpack.c.l.b16 %v2854
  %v2894 = vunpack.c.l.b16 %v2855
  %v2895 = vunpack.c.l.b16 %v2856
  %v2896 = vunpack.c.l.b16 %v2857
  %v2897 = vunpack.c.l.b16 %v2858
  %v2898 = vunpack.c.l.b16 %v2859
  %v2899 = vunpack.c.l.b16 %v2860
  %v2900 = vunpack.c.l.b16 %v2861
  %v2901 = vpack.c.b16 %v2886, %v2885
  %v2902 = vpack.c.b16 %v2888, %v2887
  %v2903 = vpack.c.b16 %v2890, %v2889
  %v2904 = vpack.c.b16 %v2892, %v2891
  %v2905 = vpack.c.b16 %v2894, %v2893
  %v2906 = vpack.c.b16 %v2896, %v2895
  %v2907 = vpack.c.b16 %v2898, %v2897
  %v2908 = vpack.c.b16 %v2900, %v2899
  %2917 = vmatprep.subr.bf16.mxu0 0
  %2918 = vmatpush1.bf16.msra.mxu0 %v2901
  %2919 = vmatprep.subr.bf16.mxu0 0
  %2920 = vmatpush1.bf16.msra.mxu0 %v2902
  %2921 = vmatprep.subr.bf16.mxu0 0
  %2922 = vmatpush1.bf16.msra.mxu0 %v2903
  %2923 = vmatprep.subr.bf16.mxu0 0
  %2924 = vmatpush1.bf16.msra.mxu0 %v2904
  %2925 = vmatprep.subr.bf16.mxu0 0
  %2926 = vmatpush1.bf16.msra.mxu0 %v2905
  %2927 = vmatprep.subr.bf16.mxu0 0
  %2928 = vmatpush1.bf16.msra.mxu0 %v2906
  %2929 = vmatprep.subr.bf16.mxu0 0
  %2930 = vmatpush1.bf16.msra.mxu0 %v2907
  %2931 = vmatprep.subr.bf16.mxu0 0
  %2932 = vmatpush1.bf16.msra.mxu0 %v2908
  %2933 = vmatprep.subr.bf16.mxu0 0
  %2934 = vmatpush1.bf16.msra.mxu0 0
  %2935 = vmatprep.subr.bf16.mxu0 0
  %2936 = vmatpush1.bf16.msra.mxu0 0
  %2937 = vmatprep.subr.bf16.mxu0 0
  %2938 = vmatpush1.bf16.msra.mxu0 0
  %2939 = vmatprep.subr.bf16.mxu0 0
  %2940 = vmatpush1.bf16.msra.mxu0 0
  %2941 = vmatprep.subr.bf16.mxu0 0
  %2942 = vmatpush1.bf16.msra.mxu0 0
  %2943 = vmatprep.subr.bf16.mxu0 0
  %2944 = vmatpush1.bf16.msra.mxu0 0
  %2945 = vmatprep.subr.bf16.mxu0 0
  %2946 = vmatpush1.bf16.msra.mxu0 0
  %2947 = vmatprep.subr.bf16.mxu0 0
  %2948 = vmatpush1.bf16.msra.mxu0 0
  %2949 = vmatprep.mubr.bf16.mxu0 0
  %2950 = vmatmul.mubr.bf16.gmra.mrb[0].mxu0 %v2845
  %v2951 = vpop.f32.mrb[0].mxu0
  %v2952 = vadd.f32 %v2867, %v2951
  %v2953 = vpop.f32.mrb[0].mxu0
  %v2954 = vpop.f32.mrb[0].mxu0
  %v2955 = vpop.f32.mrb[0].mxu0
  %2956 = vdwg.mxu0
  %v2957 = vmax.f32 %v2952, 0.0
  %2958 = vst [vmem:[%s5] sm:$0xff] %v2957
  // Predicated region
  $region22: #{encoder_forward.7} parent=0 // pred_check
    _
  $region23: #{encoder_forward.7} parent=0 // pred_check_branch
    %2960 = sbr.rel (0) target = $region25
  $region24: #{encoder_forward.7} parent=0 // pred_region
    _
  $region25: #{encoder_forward.7} parent=0 // pred_fallthru
    _
  // Predicated region
  $region26: #{encoder_forward.7} parent=0 // pred_check
    _
  $region27: #{encoder_forward.7} parent=0 // pred_check_branch
    %2962 = sbr.rel (0) target = $region29
  $region28: #{encoder_forward.7} parent=0 // pred_region
    _
  $region29: #{encoder_forward.7} parent=0 // pred_fallthru
    _

</llo_original>
